<compile_context>
chip_gen: v5e
topology: v5e:2x2
jax: 0.10.0
libtpu: 0.0.40
codegen_flags: <defaults>
</compile_context>

<pallas_src>
import functools

import numpy as np
import jax
import jax.numpy as jnp
from jax.experimental import pallas as pl
from jax.experimental.pallas import tpu as pltpu


# ----------------------------------------------------------------------------
# In-kernel helpers (channel-major: activations are (C, S))
# ----------------------------------------------------------------------------
def _layer_norm_cm(x_t, gamma_col, beta_col, eps=1e-5):
    """LayerNorm over channels (axis 0) of a (C, S) tile."""
    mu = jnp.mean(x_t, axis=0, keepdims=True)                      # (1, S)
    var = jnp.mean((x_t - mu) ** 2, axis=0, keepdims=True)         # (1, S)
    return (x_t - mu) * jax.lax.rsqrt(var + eps) * gamma_col + beta_col


def _mha_cm(xq_t, xv_t, wi, bi, wo, bo, mask, nhead):
    """nn.MultiheadAttention over masked token groups, channel-major.

    xq_t: (C, S) query/key input (already includes +pos).
    xv_t: (C, S) value input.
    wi:   (3C, C) in_proj_weight (PyTorch orientation).   bi: (3C, 1).
    wo:   (C, C)  out_proj.weight (PyTorch orientation).  bo: (C, 1).
    mask: (S, S) additive mask: 0 on same-group pairs, -1e30 elsewhere.
    """
    C, S = xq_t.shape
    dh = C // nhead
    scale = dh ** -0.5

    # Fused q/k projection (shared input) + value projection: 2 MXU pushes.
    qk_t = jnp.dot(wi[: 2 * C, :], xq_t,
                   preferred_element_type=jnp.float32) + bi[: 2 * C, :]   # (2C, S)
    v_t = jnp.dot(wi[2 * C:, :], xv_t,
                  preferred_element_type=jnp.float32) + bi[2 * C:, :]     # (C, S)
    q_t = qk_t[:C, :] * scale            # sublane slices: no lane shifts
    k_t = qk_t[C:, :]

    ctx_rows = []
    for h in range(nhead):
        rows = slice(h * dh, (h + 1) * dh)
        qh = q_t[rows, :]                # (dh, S)
        kh = k_t[rows, :]
        vh = v_t[rows, :]
        # scores[l, m] = sum_d qh[d, l] * kh[d, m]   -> (S, S), lane-dense.
        s = jax.lax.dot_general(qh, kh, (((0,), (0,)), ((), ())),
                                preferred_element_type=jnp.float32)
        s = s + mask                                           # additive, pre-max
        s = s - jnp.max(s, axis=-1, keepdims=True)
        e = jnp.exp(s)
        inv = pl.reciprocal(jnp.sum(e, axis=-1, keepdims=True), approx=True)
        p = e * inv
        # ctx_t[d, l] = sum_m vh[d, m] * p[l, m]     -> (dh, S)
        ctx_rows.append(jax.lax.dot_general(vh, p, (((1,), (1,)), ((), ())),
                                            preferred_element_type=jnp.float32))
    ctx_t = jnp.concatenate(ctx_rows, axis=0)                  # (C, S) sublane concat
    return jnp.dot(wo, ctx_t, preferred_element_type=jnp.float32) + bo


# ----------------------------------------------------------------------------
# Fused encoder-layer kernel
# ----------------------------------------------------------------------------
def fused_encoder_layer_kernel(x_ref, pos_ref, mask_long_ref, mask_short_ref,
                               lwi_ref, lbi_ref, lwo_ref, lbo_ref,
                               swi_ref, sbi_ref, swo_ref, sbo_ref,
                               w1_ref, b1_ref, w2_ref, b2_ref,
                               g1_ref, be1_ref, g2_ref, be2_ref,
                               o_ref, *, nhead):
    nt = x_ref.shape[0]
    mask_long = mask_long_ref[...]
    mask_short = mask_short_ref[...]
    lwi, lbi, lwo, lbo = lwi_ref[...], lbi_ref[...], lwo_ref[...], lbo_ref[...]
    swi, sbi, swo, sbo = swi_ref[...], sbi_ref[...], swo_ref[...], sbo_ref[...]
    w1, b1, w2, b2 = w1_ref[...], b1_ref[...], w2_ref[...], b2_ref[...]
    g1, be1, g2, be2 = g1_ref[...], be1_ref[...], g2_ref[...], be2_ref[...]

    for b in range(nt):                          # static (nt <= 2), unrolled
        x_t = x_ref[b]                           # (C, S)
        p_t = pos_ref[b]

        # ISABlock: long attention (query=key=src+pos, value=src), then short
        # attention on its output; token grouping handled by the masks.
        v_long = _mha_cm(x_t + p_t, x_t, lwi, lbi, lwo, lbo, mask_long, nhead)
        attn = _mha_cm(v_long + p_t, v_long, swi, sbi, swo, sbo, mask_short, nhead)

        # Residual + norm1 + Linear/ReLU/Linear + residual + norm2 (dropouts=id).
        h1 = _layer_norm_cm(x_t + attn, g1, be1)
        y = jnp.maximum(jnp.dot(w1, h1, preferred_element_type=jnp.float32) + b1, 0.0)
        y = jnp.dot(w2, y, preferred_element_type=jnp.float32) + b2
        o_ref[b] = _layer_norm_cm(h1 + y, g2, be2)        # (C, S) lane-dense store


# ----------------------------------------------------------------------------
# Wrapper
# ----------------------------------------------------------------------------
def _build_group_masks(t, bn_h, h_b, bn_w, w_b):
    """Static (S, S) additive masks equivalent to the ISABlock relayouts.

    Token flat order is (t, bn_h, h_b, bn_w, w_b), i.e. the natural flatten of
    (t, h, w).  Long attention groups tokens with equal within-block position
    (h_b, w_b); short attention groups tokens with equal block index (bn_h, bn_w).
    """
    tt, bh, hb, bw, wb = np.meshgrid(np.arange(t), np.arange(bn_h), np.arange(h_b),
                                     np.arange(bn_w), np.arange(w_b), indexing="ij")
    del tt
    g_long = (hb * w_b + wb).reshape(-1)
    g_short = (bh * bn_w + bw).reshape(-1)

    def additive(g):
        same = g[:, None] == g[None, :]
        return jnp.asarray(np.where(same, 0.0, -1e30).astype(np.float32))

    return additive(g_long), additive(g_short)


def _grid_steps(n):
    """>=2 parallel grid steps only pay off on dual-TensorCore parts."""
    try:
        kind = jax.devices()[0].device_kind.lower()
    except Exception:
        kind = ""
    dual_tc = any(tag in kind for tag in ("v4", "v5p", "v7"))
    return 2 if (dual_tc and n % 2 == 0) else 1


def prepare_kernel_params(p):
    """One-time repack: biases / LayerNorm params to (X, 1) columns.

    Weight matrices are consumed in their native PyTorch (out, in) orientation
    by the channel-major kernel, so no transposes are needed anywhere.
    """
    col = lambda v: jnp.reshape(v, (-1, 1))
    return dict(
        l_wi=p["long_wi"], l_bi=col(p["long_bi"]),
        l_wo=p["long_wo"], l_bo=col(p["long_bo"]),
        s_wi=p["short_wi"], s_bi=col(p["short_bi"]),
        s_wo=p["short_wo"], s_bo=col(p["short_bo"]),
        w1=p["w1"], b1=col(p["b1"]), w2=p["w2"], b2=col(p["b2"]),
        g1=col(p["g1"]), be1=col(p["be1"]), g2=col(p["g2"]), be2=col(p["be2"]),
    )


def transformer_encoder_layer_pallas(src, pos, kp, nhead, block_size):
    n, c, t, h, w = src.shape
    h_b, w_b = block_size
    assert h % h_b == 0 and w % w_b == 0 and c % nhead == 0
    bn_h, bn_w = h // h_b, w // w_b
    s_len = t * h * w

    mask_long, mask_short = _build_group_masks(t, bn_h, h_b, bn_w, w_b)

    # Channel-major token slabs: pure reshapes, no XLA transposes.
    x = src.reshape(n, c, s_len)
    p = pos.reshape(n, c, s_len)

    g = _grid_steps(n)
    nt = n // g
    seq_spec = pl.BlockSpec((nt, c, s_len), lambda i: (i, 0, 0))

    def full_spec(arr):
        return pl.BlockSpec(arr.shape, lambda i, nd=arr.ndim: (0,) * nd)

    weights = [kp["l_wi"], kp["l_bi"], kp["l_wo"], kp["l_bo"],
               kp["s_wi"], kp["s_bi"], kp["s_wo"], kp["s_bo"],
               kp["w1"], kp["b1"], kp["w2"], kp["b2"],
               kp["g1"], kp["be1"], kp["g2"], kp["be2"]]

    out = pl.pallas_call(
        functools.partial(fused_encoder_layer_kernel, nhead=nhead),
        out_shape=jax.ShapeDtypeStruct((n, c, s_len), jnp.float32),
        grid=(g,),
        in_specs=[seq_spec, seq_spec, full_spec(mask_long), full_spec(mask_short)]
                 + [full_spec(a) for a in weights],
        out_specs=seq_spec,
        compiler_params=pltpu.CompilerParams(dimension_semantics=("parallel",)),
    )(x, p, mask_long, mask_short, *weights)

    return out.reshape(n, c, t, h, w)


# ----------------------------------------------------------------------------
# Pure-JAX reference (mirrors the PyTorch module, for a numerical check)
# ----------------------------------------------------------------------------
def _layer_norm_rm(x, gamma, beta, eps=1e-5):
    mu = jnp.mean(x, axis=-1, keepdims=True)
    var = jnp.mean((x - mu) ** 2, axis=-1, keepdims=True)
    return (x - mu) * jax.lax.rsqrt(var + eps) * gamma + beta


def _mha_ref(x, pos, wi, bi, wo, bo, nhead):
    B, L, C = x.shape
    dh = C // nhead
    xqk = x + pos
    q = xqk @ wi[:C].T + bi[0, :C]
    k = xqk @ wi[C:2 * C].T + bi[0, C:2 * C]
    v = x @ wi[2 * C:].T + bi[0, 2 * C:]
    q = q.reshape(B, L, nhead, dh).transpose(0, 2, 1, 3) * dh ** -0.5
    k = k.reshape(B, L, nhead, dh).transpose(0, 2, 1, 3)
    v = v.reshape(B, L, nhead, dh).transpose(0, 2, 1, 3)
    s = jnp.einsum("bhld,bhmd->bhlm", q, k)
    p = jax.nn.softmax(s, axis=-1)
    o = jnp.einsum("bhlm,bhmd->bhld", p, v).transpose(0, 2, 1, 3).reshape(B, L, C)
    return o @ wo.T + bo[0]


def _to_long_bm(x, n, c, t, bn_h, h_b, bn_w, w_b):
    x = x.reshape(n, c, t, bn_h, h_b, bn_w, w_b)
    x = jnp.transpose(x, (0, 4, 6, 2, 3, 5, 1))
    return x.reshape(n * h_b * w_b, t * bn_h * bn_w, c)


def _long_bm_to_short_bm(x, n, c, t, bn_h, h_b, bn_w, w_b):
    x = x.reshape(n, h_b, w_b, t, bn_h, bn_w, c)
    x = jnp.transpose(x, (0, 4, 5, 3, 1, 2, 6))
    return x.reshape(n * bn_h * bn_w, t * h_b * w_b, c)


def _short_bm_to_nchw(x, n, c, t, bn_h, h_b, bn_w, w_b):
    x = x.reshape(n, bn_h, bn_w, t, h_b, w_b, c)
    x = jnp.transpose(x, (0, 6, 3, 1, 4, 2, 5))
    return x.reshape(n, c, t, bn_h * h_b, bn_w * w_b)


def transformer_encoder_layer_ref(src, pos, p, nhead, block_size):
    n, c, t, h, w = src.shape
    h_b, w_b = block_size
    bn_h, bn_w = h // h_b, w // w_b
    dims = (n, c, t, bn_h, h_b, bn_w, w_b)

    src_long = _to_long_bm(src, *dims)
    pos_long = _to_long_bm(pos, *dims)
    v_long = _mha_ref(src_long, pos_long,
                      p["long_wi"], p["long_bi"], p["long_wo"], p["long_bo"], nhead)
    v_short = _long_bm_to_short_bm(v_long, *dims)
    pos_short = _long_bm_to_short_bm(pos_long, *dims)
    out = _mha_ref(v_short, pos_short,
                   p["short_wi"], p["short_bi"], p["short_wo"], p["short_bo"], nhead)
    src2 = _short_bm_to_nchw(out, *dims)

    s_len = t * h * w
    x = jnp.transpose(src.reshape(n, c, s_len), (0, 2, 1))
    x2 = jnp.transpose(src2.reshape(n, c, s_len), (0, 2, 1))
    x = _layer_norm_rm(x + x2, p["g1"], p["be1"])
    y = jnp.maximum(x @ p["w1"].T + p["b1"], 0.0) @ p["w2"].T + p["b2"]
    x = _layer_norm_rm(x + y, p["g2"], p["be2"])
    return jnp.transpose(x, (0, 2, 1)).reshape(n, c, t, h, w)


# ----------------------------------------------------------------------------
# Deterministic parameter init (PyTorch layouts)
# ----------------------------------------------------------------------------
def init_params(key, c, dff):
    ks = jax.random.split(key, 8)
    f = lambda k, shp: jax.random.normal(k, shp, jnp.float32) * 0.05
    return dict(
        long_wi=f(ks[0], (3 * c, c)), long_bi=f(ks[1], (1, 3 * c)),
        long_wo=f(ks[2], (c, c)),     long_bo=jnp.zeros((1, c), jnp.float32),
        short_wi=f(ks[3], (3 * c, c)), short_bi=f(ks[4], (1, 3 * c)),
        short_wo=f(ks[5], (c, c)),     short_bo=jnp.zeros((1, c), jnp.float32),
        w1=f(ks[6], (dff, c)), b1=jnp.zeros((1, dff), jnp.float32),
        w2=f(ks[7], (c, dff)), b2=jnp.zeros((1, c), jnp.float32),
        g1=jnp.ones((1, c), jnp.float32), be1=jnp.zeros((1, c), jnp.float32),
        g2=jnp.ones((1, c), jnp.float32), be2=jnp.zeros((1, c), jnp.float32),
    )


# ----------------------------------------------------------------------------
if __name__ == "__main__":
    d_model, nhead, dff = 32, 4, 64
    block_size = (4, 4)
    n, t, h, w = 2, 2, 8, 8

    key = jax.random.PRNGKey(0)
    k_par, k_src, k_pos = jax.random.split(key, 3)
    params = init_params(k_par, d_model, dff)
    kparams = prepare_kernel_params(params)     # one-time repack, no per-call .T

    src = jax.random.normal(k_src, (n, d_model, t, h, w), jnp.float32)
    pos = jax.random.normal(k_pos, (n, d_model, t, h, w), jnp.float32)

    out = transformer_encoder_layer_pallas(src, pos, kparams, nhead, block_size)
    out = jax.block_until_ready(out)

    ref = transformer_encoder_layer_ref(src, pos, params, nhead, block_size)
    ref = jax.block_until_ready(ref)

    if out.shape != (n, d_model, t, h, w):
        raise RuntimeError(f"bad output shape {out.shape}")
    if not bool(jnp.allclose(out, ref, atol=2e-2, rtol=2e-2)):
        raise RuntimeError(
            f"mismatch vs reference, max abs diff = {float(jnp.max(jnp.abs(out - ref)))}")
    print("KERNEL_OK")
</pallas_src>

<mosaic_0001>
module attributes {stable_mosaic.version = 11 : i64} {
  func.func @fused_encoder_layer_kernel(%arg0: i32, %arg1: memref<2x32x128xf32, #tpu.memory_space<vmem>>, %arg2: memref<2x32x128xf32, #tpu.memory_space<vmem>>, %arg3: memref<128x128xf32, #tpu.memory_space<vmem>>, %arg4: memref<128x128xf32, #tpu.memory_space<vmem>>, %arg5: memref<96x32xf32, #tpu.memory_space<vmem>>, %arg6: memref<96x1xf32, #tpu.memory_space<vmem>>, %arg7: memref<32x32xf32, #tpu.memory_space<vmem>>, %arg8: memref<32x1xf32, #tpu.memory_space<vmem>>, %arg9: memref<96x32xf32, #tpu.memory_space<vmem>>, %arg10: memref<96x1xf32, #tpu.memory_space<vmem>>, %arg11: memref<32x32xf32, #tpu.memory_space<vmem>>, %arg12: memref<32x1xf32, #tpu.memory_space<vmem>>, %arg13: memref<64x32xf32, #tpu.memory_space<vmem>>, %arg14: memref<64x1xf32, #tpu.memory_space<vmem>>, %arg15: memref<32x64xf32, #tpu.memory_space<vmem>>, %arg16: memref<32x1xf32, #tpu.memory_space<vmem>>, %arg17: memref<32x1xf32, #tpu.memory_space<vmem>>, %arg18: memref<32x1xf32, #tpu.memory_space<vmem>>, %arg19: memref<32x1xf32, #tpu.memory_space<vmem>>, %arg20: memref<32x1xf32, #tpu.memory_space<vmem>>, %arg21: memref<2x32x128xf32, #tpu.memory_space<vmem>>) attributes {dimension_semantics = [#tpu.dimension_semantics<parallel>], iteration_bounds = array<i64: 1>, scalar_prefetch = 0 : i64, scratch_operands = 0 : i64, tpu.core_type = #tpu.core_type<tc>, window_params = [{transform_indices = @transform_0, window_bounds = array<i64: 2, 32, 128>}, {transform_indices = @transform_1, window_bounds = array<i64: 2, 32, 128>}, {pipeline_mode = #tpu.pipeline_mode<synchronous>, transform_indices = @transform_2, window_bounds = array<i64: 128, 128>}, {pipeline_mode = #tpu.pipeline_mode<synchronous>, transform_indices = @transform_3, window_bounds = array<i64: 128, 128>}, {pipeline_mode = #tpu.pipeline_mode<synchronous>, transform_indices = @transform_4, window_bounds = array<i64: 96, 32>}, {pipeline_mode = #tpu.pipeline_mode<synchronous>, transform_indices = @transform_5, window_bounds = array<i64: 96, 1>}, {pipeline_mode = #tpu.pipeline_mode<synchronous>, transform_indices = @transform_6, window_bounds = array<i64: 32, 32>}, {pipeline_mode = #tpu.pipeline_mode<synchronous>, transform_indices = @transform_7, window_bounds = array<i64: 32, 1>}, {pipeline_mode = #tpu.pipeline_mode<synchronous>, transform_indices = @transform_8, window_bounds = array<i64: 96, 32>}, {pipeline_mode = #tpu.pipeline_mode<synchronous>, transform_indices = @transform_9, window_bounds = array<i64: 96, 1>}, {pipeline_mode = #tpu.pipeline_mode<synchronous>, transform_indices = @transform_10, window_bounds = array<i64: 32, 32>}, {pipeline_mode = #tpu.pipeline_mode<synchronous>, transform_indices = @transform_11, window_bounds = array<i64: 32, 1>}, {pipeline_mode = #tpu.pipeline_mode<synchronous>, transform_indices = @transform_12, window_bounds = array<i64: 64, 32>}, {pipeline_mode = #tpu.pipeline_mode<synchronous>, transform_indices = @transform_13, window_bounds = array<i64: 64, 1>}, {pipeline_mode = #tpu.pipeline_mode<synchronous>, transform_indices = @transform_14, window_bounds = array<i64: 32, 64>}, {pipeline_mode = #tpu.pipeline_mode<synchronous>, transform_indices = @transform_15, window_bounds = array<i64: 32, 1>}, {pipeline_mode = #tpu.pipeline_mode<synchronous>, transform_indices = @transform_16, window_bounds = array<i64: 32, 1>}, {pipeline_mode = #tpu.pipeline_mode<synchronous>, transform_indices = @transform_17, window_bounds = array<i64: 32, 1>}, {pipeline_mode = #tpu.pipeline_mode<synchronous>, transform_indices = @transform_18, window_bounds = array<i64: 32, 1>}, {pipeline_mode = #tpu.pipeline_mode<synchronous>, transform_indices = @transform_19, window_bounds = array<i64: 32, 1>}, {transform_indices = @transform_20, window_bounds = array<i64: 2, 32, 128>}]} {
    %c0 = arith.constant 0 : index
    %c0_0 = arith.constant 0 : index
    %0 = vector.load %arg3[%c0, %c0_0] : memref<128x128xf32, #tpu.memory_space<vmem>>, vector<128x128xf32>
    %c0_1 = arith.constant 0 : index
    %c0_2 = arith.constant 0 : index
    %1 = vector.load %arg4[%c0_1, %c0_2] : memref<128x128xf32, #tpu.memory_space<vmem>>, vector<128x128xf32>
    %c0_3 = arith.constant 0 : index
    %c0_4 = arith.constant 0 : index
    %2 = vector.load %arg5[%c0_3, %c0_4] : memref<96x32xf32, #tpu.memory_space<vmem>>, vector<96x32xf32>
    %c0_5 = arith.constant 0 : index
    %c0_6 = arith.constant 0 : index
    %3 = vector.load %arg6[%c0_5, %c0_6] : memref<96x1xf32, #tpu.memory_space<vmem>>, vector<96x1xf32>
    %c0_7 = arith.constant 0 : index
    %c0_8 = arith.constant 0 : index
    %4 = vector.load %arg7[%c0_7, %c0_8] : memref<32x32xf32, #tpu.memory_space<vmem>>, vector<32x32xf32>
    %c0_9 = arith.constant 0 : index
    %c0_10 = arith.constant 0 : index
    %5 = vector.load %arg8[%c0_9, %c0_10] : memref<32x1xf32, #tpu.memory_space<vmem>>, vector<32x1xf32>
    %c0_11 = arith.constant 0 : index
    %c0_12 = arith.constant 0 : index
    %6 = vector.load %arg9[%c0_11, %c0_12] : memref<96x32xf32, #tpu.memory_space<vmem>>, vector<96x32xf32>
    %c0_13 = arith.constant 0 : index
    %c0_14 = arith.constant 0 : index
    %7 = vector.load %arg10[%c0_13, %c0_14] : memref<96x1xf32, #tpu.memory_space<vmem>>, vector<96x1xf32>
    %c0_15 = arith.constant 0 : index
    %c0_16 = arith.constant 0 : index
    %8 = vector.load %arg11[%c0_15, %c0_16] : memref<32x32xf32, #tpu.memory_space<vmem>>, vector<32x32xf32>
    %c0_17 = arith.constant 0 : index
    %c0_18 = arith.constant 0 : index
    %9 = vector.load %arg12[%c0_17, %c0_18] : memref<32x1xf32, #tpu.memory_space<vmem>>, vector<32x1xf32>
    %c0_19 = arith.constant 0 : index
    %c0_20 = arith.constant 0 : index
    %10 = vector.load %arg13[%c0_19, %c0_20] : memref<64x32xf32, #tpu.memory_space<vmem>>, vector<64x32xf32>
    %c0_21 = arith.constant 0 : index
    %c0_22 = arith.constant 0 : index
    %11 = vector.load %arg14[%c0_21, %c0_22] : memref<64x1xf32, #tpu.memory_space<vmem>>, vector<64x1xf32>
    %c0_23 = arith.constant 0 : index
    %c0_24 = arith.constant 0 : index
    %12 = vector.load %arg15[%c0_23, %c0_24] : memref<32x64xf32, #tpu.memory_space<vmem>>, vector<32x64xf32>
    %c0_25 = arith.constant 0 : index
    %c0_26 = arith.constant 0 : index
    %13 = vector.load %arg16[%c0_25, %c0_26] : memref<32x1xf32, #tpu.memory_space<vmem>>, vector<32x1xf32>
    %c0_27 = arith.constant 0 : index
    %c0_28 = arith.constant 0 : index
    %14 = vector.load %arg17[%c0_27, %c0_28] : memref<32x1xf32, #tpu.memory_space<vmem>>, vector<32x1xf32>
    %c0_29 = arith.constant 0 : index
    %c0_30 = arith.constant 0 : index
    %15 = vector.load %arg18[%c0_29, %c0_30] : memref<32x1xf32, #tpu.memory_space<vmem>>, vector<32x1xf32>
    %c0_31 = arith.constant 0 : index
    %c0_32 = arith.constant 0 : index
    %16 = vector.load %arg19[%c0_31, %c0_32] : memref<32x1xf32, #tpu.memory_space<vmem>>, vector<32x1xf32>
    %c0_33 = arith.constant 0 : index
    %c0_34 = arith.constant 0 : index
    %17 = vector.load %arg20[%c0_33, %c0_34] : memref<32x1xf32, #tpu.memory_space<vmem>>, vector<32x1xf32>
    %c0_35 = arith.constant 0 : index
    %c0_36 = arith.constant 0 : index
    %c0_37 = arith.constant 0 : index
    %18 = vector.load %arg1[%c0_35, %c0_36, %c0_37] : memref<2x32x128xf32, #tpu.memory_space<vmem>>, vector<1x32x128xf32>
    %19 = vector.shape_cast %18 : vector<1x32x128xf32> to vector<32x128xf32>
    %c0_38 = arith.constant 0 : index
    %c0_39 = arith.constant 0 : index
    %c0_40 = arith.constant 0 : index
    %20 = vector.load %arg2[%c0_38, %c0_39, %c0_40] : memref<2x32x128xf32, #tpu.memory_space<vmem>>, vector<1x32x128xf32>
    %21 = vector.shape_cast %20 : vector<1x32x128xf32> to vector<32x128xf32>
    %22 = arith.addf %19, %21 : vector<32x128xf32>
    %23 = vector.extract_strided_slice %2 {offsets = [0, 0], sizes = [64, 32], strides = [1, 1]} : vector<96x32xf32> to vector<64x32xf32>
    %cst = arith.constant dense<0.000000e+00> : vector<64x128xf32>
    %24 = tpu.matmul %23, %22, %cst {dimension_numbers = #tpu.dot_dimension_numbers<[1], [0], [0], [1], [0, 0, 1, 1], [], []>} : vector<64x32xf32>, vector<32x128xf32>, vector<64x128xf32> -> vector<64x128xf32>
    %25 = vector.extract_strided_slice %3 {offsets = [0, 0], sizes = [64, 1], strides = [1, 1]} : vector<96x1xf32> to vector<64x1xf32>
    %26 = vector.broadcast %25 : vector<64x1xf32> to vector<64x128xf32>
    %27 = arith.addf %24, %26 : vector<64x128xf32>
    %28 = vector.extract_strided_slice %2 {offsets = [64, 0], sizes = [32, 32], strides = [1, 1]} : vector<96x32xf32> to vector<32x32xf32>
    %cst_41 = arith.constant dense<0.000000e+00> : vector<32x128xf32>
    %29 = tpu.matmul %28, %19, %cst_41 {dimension_numbers = #tpu.dot_dimension_numbers<[1], [0], [0], [1], [0, 0, 1, 1], [], []>} : vector<32x32xf32>, vector<32x128xf32>, vector<32x128xf32> -> vector<32x128xf32>
    %30 = vector.extract_strided_slice %3 {offsets = [64, 0], sizes = [32, 1], strides = [1, 1]} : vector<96x1xf32> to vector<32x1xf32>
    %31 = vector.broadcast %30 : vector<32x1xf32> to vector<32x128xf32>
    %32 = arith.addf %29, %31 : vector<32x128xf32>
    %33 = vector.extract_strided_slice %27 {offsets = [0, 0], sizes = [32, 128], strides = [1, 1]} : vector<64x128xf32> to vector<32x128xf32>
    %cst_42 = arith.constant 0.353553385 : f32
    %34 = vector.broadcast %cst_42 : f32 to vector<32x128xf32>
    %35 = arith.mulf %33, %34 : vector<32x128xf32>
    %36 = vector.extract_strided_slice %27 {offsets = [32, 0], sizes = [32, 128], strides = [1, 1]} : vector<64x128xf32> to vector<32x128xf32>
    %37 = vector.extract_strided_slice %35 {offsets = [0, 0], sizes = [8, 128], strides = [1, 1]} : vector<32x128xf32> to vector<8x128xf32>
    %38 = vector.extract_strided_slice %36 {offsets = [0, 0], sizes = [8, 128], strides = [1, 1]} : vector<32x128xf32> to vector<8x128xf32>
    %39 = vector.extract_strided_slice %32 {offsets = [0, 0], sizes = [8, 128], strides = [1, 1]} : vector<32x128xf32> to vector<8x128xf32>
    %cst_43 = arith.constant dense<0.000000e+00> : vector<128x128xf32>
    %40 = tpu.matmul %37, %38, %cst_43 {dimension_numbers = #tpu.dot_dimension_numbers<[0], [0], [1], [1], [0, 1, 1, 1], [], []>} : vector<8x128xf32>, vector<8x128xf32>, vector<128x128xf32> -> vector<128x128xf32>
    %41 = arith.addf %40, %0 : vector<128x128xf32>
    %cst_44 = arith.constant dense<0xFF800000> : vector<128xf32>
    %42 = vector.multi_reduction <maximumf>, %41, %cst_44 [1] : vector<128x128xf32> to vector<128xf32>
    %43 = vector.shape_cast %42 : vector<128xf32> to vector<128x1xf32>
    %44 = vector.broadcast %43 : vector<128x1xf32> to vector<128x128xf32>
    %45 = arith.subf %41, %44 : vector<128x128xf32>
    %46 = math.exp %45 : vector<128x128xf32>
    %cst_45 = arith.constant dense<0.000000e+00> : vector<128xf32>
    %47 = vector.multi_reduction <add>, %46, %cst_45 [1] : vector<128x128xf32> to vector<128xf32>
    %48 = vector.shape_cast %47 : vector<128xf32> to vector<128x1xf32>
    %49 = tpu.reciprocal %48 {approx = true} : vector<128x1xf32> -> vector<128x1xf32>
    %50 = vector.broadcast %49 : vector<128x1xf32> to vector<128x128xf32>
    %51 = arith.mulf %46, %50 : vector<128x128xf32>
    %cst_46 = arith.constant dense<0.000000e+00> : vector<8x128xf32>
    %52 = tpu.matmul %39, %51, %cst_46 {dimension_numbers = #tpu.dot_dimension_numbers<[1], [1], [0], [0], [0, 0, 1, 0], [], []>} : vector<8x128xf32>, vector<128x128xf32>, vector<8x128xf32> -> vector<8x128xf32>
    %53 = vector.extract_strided_slice %35 {offsets = [8, 0], sizes = [8, 128], strides = [1, 1]} : vector<32x128xf32> to vector<8x128xf32>
    %54 = vector.extract_strided_slice %36 {offsets = [8, 0], sizes = [8, 128], strides = [1, 1]} : vector<32x128xf32> to vector<8x128xf32>
    %55 = vector.extract_strided_slice %32 {offsets = [8, 0], sizes = [8, 128], strides = [1, 1]} : vector<32x128xf32> to vector<8x128xf32>
    %cst_47 = arith.constant dense<0.000000e+00> : vector<128x128xf32>
    %56 = tpu.matmul %53, %54, %cst_47 {dimension_numbers = #tpu.dot_dimension_numbers<[0], [0], [1], [1], [0, 1, 1, 1], [], []>} : vector<8x128xf32>, vector<8x128xf32>, vector<128x128xf32> -> vector<128x128xf32>
    %57 = arith.addf %56, %0 : vector<128x128xf32>
    %cst_48 = arith.constant dense<0xFF800000> : vector<128xf32>
    %58 = vector.multi_reduction <maximumf>, %57, %cst_48 [1] : vector<128x128xf32> to vector<128xf32>
    %59 = vector.shape_cast %58 : vector<128xf32> to vector<128x1xf32>
    %60 = vector.broadcast %59 : vector<128x1xf32> to vector<128x128xf32>
    %61 = arith.subf %57, %60 : vector<128x128xf32>
    %62 = math.exp %61 : vector<128x128xf32>
    %cst_49 = arith.constant dense<0.000000e+00> : vector<128xf32>
    %63 = vector.multi_reduction <add>, %62, %cst_49 [1] : vector<128x128xf32> to vector<128xf32>
    %64 = vector.shape_cast %63 : vector<128xf32> to vector<128x1xf32>
    %65 = tpu.reciprocal %64 {approx = true} : vector<128x1xf32> -> vector<128x1xf32>
    %66 = vector.broadcast %65 : vector<128x1xf32> to vector<128x128xf32>
    %67 = arith.mulf %62, %66 : vector<128x128xf32>
    %cst_50 = arith.constant dense<0.000000e+00> : vector<8x128xf32>
    %68 = tpu.matmul %55, %67, %cst_50 {dimension_numbers = #tpu.dot_dimension_numbers<[1], [1], [0], [0], [0, 0, 1, 0], [], []>} : vector<8x128xf32>, vector<128x128xf32>, vector<8x128xf32> -> vector<8x128xf32>
    %69 = vector.extract_strided_slice %35 {offsets = [16, 0], sizes = [8, 128], strides = [1, 1]} : vector<32x128xf32> to vector<8x128xf32>
    %70 = vector.extract_strided_slice %36 {offsets = [16, 0], sizes = [8, 128], strides = [1, 1]} : vector<32x128xf32> to vector<8x128xf32>
    %71 = vector.extract_strided_slice %32 {offsets = [16, 0], sizes = [8, 128], strides = [1, 1]} : vector<32x128xf32> to vector<8x128xf32>
    %cst_51 = arith.constant dense<0.000000e+00> : vector<128x128xf32>
    %72 = tpu.matmul %69, %70, %cst_51 {dimension_numbers = #tpu.dot_dimension_numbers<[0], [0], [1], [1], [0, 1, 1, 1], [], []>} : vector<8x128xf32>, vector<8x128xf32>, vector<128x128xf32> -> vector<128x128xf32>
    %73 = arith.addf %72, %0 : vector<128x128xf32>
    %cst_52 = arith.constant dense<0xFF800000> : vector<128xf32>
    %74 = vector.multi_reduction <maximumf>, %73, %cst_52 [1] : vector<128x128xf32> to vector<128xf32>
    %75 = vector.shape_cast %74 : vector<128xf32> to vector<128x1xf32>
    %76 = vector.broadcast %75 : vector<128x1xf32> to vector<128x128xf32>
    %77 = arith.subf %73, %76 : vector<128x128xf32>
    %78 = math.exp %77 : vector<128x128xf32>
    %cst_53 = arith.constant dense<0.000000e+00> : vector<128xf32>
    %79 = vector.multi_reduction <add>, %78, %cst_53 [1] : vector<128x128xf32> to vector<128xf32>
    %80 = vector.shape_cast %79 : vector<128xf32> to vector<128x1xf32>
    %81 = tpu.reciprocal %80 {approx = true} : vector<128x1xf32> -> vector<128x1xf32>
    %82 = vector.broadcast %81 : vector<128x1xf32> to vector<128x128xf32>
    %83 = arith.mulf %78, %82 : vector<128x128xf32>
    %cst_54 = arith.constant dense<0.000000e+00> : vector<8x128xf32>
    %84 = tpu.matmul %71, %83, %cst_54 {dimension_numbers = #tpu.dot_dimension_numbers<[1], [1], [0], [0], [0, 0, 1, 0], [], []>} : vector<8x128xf32>, vector<128x128xf32>, vector<8x128xf32> -> vector<8x128xf32>
    %85 = vector.extract_strided_slice %35 {offsets = [24, 0], sizes = [8, 128], strides = [1, 1]} : vector<32x128xf32> to vector<8x128xf32>
    %86 = vector.extract_strided_slice %36 {offsets = [24, 0], sizes = [8, 128], strides = [1, 1]} : vector<32x128xf32> to vector<8x128xf32>
    %87 = vector.extract_strided_slice %32 {offsets = [24, 0], sizes = [8, 128], strides = [1, 1]} : vector<32x128xf32> to vector<8x128xf32>
    %cst_55 = arith.constant dense<0.000000e+00> : vector<128x128xf32>
    %88 = tpu.matmul %85, %86, %cst_55 {dimension_numbers = #tpu.dot_dimension_numbers<[0], [0], [1], [1], [0, 1, 1, 1], [], []>} : vector<8x128xf32>, vector<8x128xf32>, vector<128x128xf32> -> vector<128x128xf32>
    %89 = arith.addf %88, %0 : vector<128x128xf32>
    %cst_56 = arith.constant dense<0xFF800000> : vector<128xf32>
    %90 = vector.multi_reduction <maximumf>, %89, %cst_56 [1] : vector<128x128xf32> to vector<128xf32>
    %91 = vector.shape_cast %90 : vector<128xf32> to vector<128x1xf32>
    %92 = vector.broadcast %91 : vector<128x1xf32> to vector<128x128xf32>
    %93 = arith.subf %89, %92 : vector<128x128xf32>
    %94 = math.exp %93 : vector<128x128xf32>
    %cst_57 = arith.constant dense<0.000000e+00> : vector<128xf32>
    %95 = vector.multi_reduction <add>, %94, %cst_57 [1] : vector<128x128xf32> to vector<128xf32>
    %96 = vector.shape_cast %95 : vector<128xf32> to vector<128x1xf32>
    %97 = tpu.reciprocal %96 {approx = true} : vector<128x1xf32> -> vector<128x1xf32>
    %98 = vector.broadcast %97 : vector<128x1xf32> to vector<128x128xf32>
    %99 = arith.mulf %94, %98 : vector<128x128xf32>
    %cst_58 = arith.constant dense<0.000000e+00> : vector<8x128xf32>
    %100 = tpu.matmul %87, %99, %cst_58 {dimension_numbers = #tpu.dot_dimension_numbers<[1], [1], [0], [0], [0, 0, 1, 0], [], []>} : vector<8x128xf32>, vector<128x128xf32>, vector<8x128xf32> -> vector<8x128xf32>
    %101 = tpu.concatenate %52, %68, %84, %100 in 0 : vector<8x128xf32>, vector<8x128xf32>, vector<8x128xf32>, vector<8x128xf32> -> vector<32x128xf32>
    %cst_59 = arith.constant dense<0.000000e+00> : vector<32x128xf32>
    %102 = tpu.matmul %4, %101, %cst_59 {dimension_numbers = #tpu.dot_dimension_numbers<[1], [0], [0], [1], [0, 0, 1, 1], [], []>} : vector<32x32xf32>, vector<32x128xf32>, vector<32x128xf32> -> vector<32x128xf32>
    %103 = vector.broadcast %5 : vector<32x1xf32> to vector<32x128xf32>
    %104 = arith.addf %102, %103 : vector<32x128xf32>
    %105 = arith.addf %104, %21 : vector<32x128xf32>
    %106 = vector.extract_strided_slice %6 {offsets = [0, 0], sizes = [64, 32], strides = [1, 1]} : vector<96x32xf32> to vector<64x32xf32>
    %cst_60 = arith.constant dense<0.000000e+00> : vector<64x128xf32>
    %107 = tpu.matmul %106, %105, %cst_60 {dimension_numbers = #tpu.dot_dimension_numbers<[1], [0], [0], [1], [0, 0, 1, 1], [], []>} : vector<64x32xf32>, vector<32x128xf32>, vector<64x128xf32> -> vector<64x128xf32>
    %108 = vector.extract_strided_slice %7 {offsets = [0, 0], sizes = [64, 1], strides = [1, 1]} : vector<96x1xf32> to vector<64x1xf32>
    %109 = vector.broadcast %108 : vector<64x1xf32> to vector<64x128xf32>
    %110 = arith.addf %107, %109 : vector<64x128xf32>
    %111 = vector.extract_strided_slice %6 {offsets = [64, 0], sizes = [32, 32], strides = [1, 1]} : vector<96x32xf32> to vector<32x32xf32>
    %cst_61 = arith.constant dense<0.000000e+00> : vector<32x128xf32>
    %112 = tpu.matmul %111, %104, %cst_61 {dimension_numbers = #tpu.dot_dimension_numbers<[1], [0], [0], [1], [0, 0, 1, 1], [], []>} : vector<32x32xf32>, vector<32x128xf32>, vector<32x128xf32> -> vector<32x128xf32>
    %113 = vector.extract_strided_slice %7 {offsets = [64, 0], sizes = [32, 1], strides = [1, 1]} : vector<96x1xf32> to vector<32x1xf32>
    %114 = vector.broadcast %113 : vector<32x1xf32> to vector<32x128xf32>
    %115 = arith.addf %112, %114 : vector<32x128xf32>
    %116 = vector.extract_strided_slice %110 {offsets = [0, 0], sizes = [32, 128], strides = [1, 1]} : vector<64x128xf32> to vector<32x128xf32>
    %cst_62 = arith.constant 0.353553385 : f32
    %117 = vector.broadcast %cst_62 : f32 to vector<32x128xf32>
    %118 = arith.mulf %116, %117 : vector<32x128xf32>
    %119 = vector.extract_strided_slice %110 {offsets = [32, 0], sizes = [32, 128], strides = [1, 1]} : vector<64x128xf32> to vector<32x128xf32>
    %120 = vector.extract_strided_slice %118 {offsets = [0, 0], sizes = [8, 128], strides = [1, 1]} : vector<32x128xf32> to vector<8x128xf32>
    %121 = vector.extract_strided_slice %119 {offsets = [0, 0], sizes = [8, 128], strides = [1, 1]} : vector<32x128xf32> to vector<8x128xf32>
    %122 = vector.extract_strided_slice %115 {offsets = [0, 0], sizes = [8, 128], strides = [1, 1]} : vector<32x128xf32> to vector<8x128xf32>
    %cst_63 = arith.constant dense<0.000000e+00> : vector<128x128xf32>
    %123 = tpu.matmul %120, %121, %cst_63 {dimension_numbers = #tpu.dot_dimension_numbers<[0], [0], [1], [1], [0, 1, 1, 1], [], []>} : vector<8x128xf32>, vector<8x128xf32>, vector<128x128xf32> -> vector<128x128xf32>
    %124 = arith.addf %123, %1 : vector<128x128xf32>
    %cst_64 = arith.constant dense<0xFF800000> : vector<128xf32>
    %125 = vector.multi_reduction <maximumf>, %124, %cst_64 [1] : vector<128x128xf32> to vector<128xf32>
    %126 = vector.shape_cast %125 : vector<128xf32> to vector<128x1xf32>
    %127 = vector.broadcast %126 : vector<128x1xf32> to vector<128x128xf32>
    %128 = arith.subf %124, %127 : vector<128x128xf32>
    %129 = math.exp %128 : vector<128x128xf32>
    %cst_65 = arith.constant dense<0.000000e+00> : vector<128xf32>
    %130 = vector.multi_reduction <add>, %129, %cst_65 [1] : vector<128x128xf32> to vector<128xf32>
    %131 = vector.shape_cast %130 : vector<128xf32> to vector<128x1xf32>
    %132 = tpu.reciprocal %131 {approx = true} : vector<128x1xf32> -> vector<128x1xf32>
    %133 = vector.broadcast %132 : vector<128x1xf32> to vector<128x128xf32>
    %134 = arith.mulf %129, %133 : vector<128x128xf32>
    %cst_66 = arith.constant dense<0.000000e+00> : vector<8x128xf32>
    %135 = tpu.matmul %122, %134, %cst_66 {dimension_numbers = #tpu.dot_dimension_numbers<[1], [1], [0], [0], [0, 0, 1, 0], [], []>} : vector<8x128xf32>, vector<128x128xf32>, vector<8x128xf32> -> vector<8x128xf32>
    %136 = vector.extract_strided_slice %118 {offsets = [8, 0], sizes = [8, 128], strides = [1, 1]} : vector<32x128xf32> to vector<8x128xf32>
    %137 = vector.extract_strided_slice %119 {offsets = [8, 0], sizes = [8, 128], strides = [1, 1]} : vector<32x128xf32> to vector<8x128xf32>
    %138 = vector.extract_strided_slice %115 {offsets = [8, 0], sizes = [8, 128], strides = [1, 1]} : vector<32x128xf32> to vector<8x128xf32>
    %cst_67 = arith.constant dense<0.000000e+00> : vector<128x128xf32>
    %139 = tpu.matmul %136, %137, %cst_67 {dimension_numbers = #tpu.dot_dimension_numbers<[0], [0], [1], [1], [0, 1, 1, 1], [], []>} : vector<8x128xf32>, vector<8x128xf32>, vector<128x128xf32> -> vector<128x128xf32>
    %140 = arith.addf %139, %1 : vector<128x128xf32>
    %cst_68 = arith.constant dense<0xFF800000> : vector<128xf32>
    %141 = vector.multi_reduction <maximumf>, %140, %cst_68 [1] : vector<128x128xf32> to vector<128xf32>
    %142 = vector.shape_cast %141 : vector<128xf32> to vector<128x1xf32>
    %143 = vector.broadcast %142 : vector<128x1xf32> to vector<128x128xf32>
    %144 = arith.subf %140, %143 : vector<128x128xf32>
    %145 = math.exp %144 : vector<128x128xf32>
    %cst_69 = arith.constant dense<0.000000e+00> : vector<128xf32>
    %146 = vector.multi_reduction <add>, %145, %cst_69 [1] : vector<128x128xf32> to vector<128xf32>
    %147 = vector.shape_cast %146 : vector<128xf32> to vector<128x1xf32>
    %148 = tpu.reciprocal %147 {approx = true} : vector<128x1xf32> -> vector<128x1xf32>
    %149 = vector.broadcast %148 : vector<128x1xf32> to vector<128x128xf32>
    %150 = arith.mulf %145, %149 : vector<128x128xf32>
    %cst_70 = arith.constant dense<0.000000e+00> : vector<8x128xf32>
    %151 = tpu.matmul %138, %150, %cst_70 {dimension_numbers = #tpu.dot_dimension_numbers<[1], [1], [0], [0], [0, 0, 1, 0], [], []>} : vector<8x128xf32>, vector<128x128xf32>, vector<8x128xf32> -> vector<8x128xf32>
    %152 = vector.extract_strided_slice %118 {offsets = [16, 0], sizes = [8, 128], strides = [1, 1]} : vector<32x128xf32> to vector<8x128xf32>
    %153 = vector.extract_strided_slice %119 {offsets = [16, 0], sizes = [8, 128], strides = [1, 1]} : vector<32x128xf32> to vector<8x128xf32>
    %154 = vector.extract_strided_slice %115 {offsets = [16, 0], sizes = [8, 128], strides = [1, 1]} : vector<32x128xf32> to vector<8x128xf32>
    %cst_71 = arith.constant dense<0.000000e+00> : vector<128x128xf32>
    %155 = tpu.matmul %152, %153, %cst_71 {dimension_numbers = #tpu.dot_dimension_numbers<[0], [0], [1], [1], [0, 1, 1, 1], [], []>} : vector<8x128xf32>, vector<8x128xf32>, vector<128x128xf32> -> vector<128x128xf32>
    %156 = arith.addf %155, %1 : vector<128x128xf32>
    %cst_72 = arith.constant dense<0xFF800000> : vector<128xf32>
    %157 = vector.multi_reduction <maximumf>, %156, %cst_72 [1] : vector<128x128xf32> to vector<128xf32>
    %158 = vector.shape_cast %157 : vector<128xf32> to vector<128x1xf32>
    %159 = vector.broadcast %158 : vector<128x1xf32> to vector<128x128xf32>
    %160 = arith.subf %156, %159 : vector<128x128xf32>
    %161 = math.exp %160 : vector<128x128xf32>
    %cst_73 = arith.constant dense<0.000000e+00> : vector<128xf32>
    %162 = vector.multi_reduction <add>, %161, %cst_73 [1] : vector<128x128xf32> to vector<128xf32>
    %163 = vector.shape_cast %162 : vector<128xf32> to vector<128x1xf32>
    %164 = tpu.reciprocal %163 {approx = true} : vector<128x1xf32> -> vector<128x1xf32>
    %165 = vector.broadcast %164 : vector<128x1xf32> to vector<128x128xf32>
    %166 = arith.mulf %161, %165 : vector<128x128xf32>
    %cst_74 = arith.constant dense<0.000000e+00> : vector<8x128xf32>
    %167 = tpu.matmul %154, %166, %cst_74 {dimension_numbers = #tpu.dot_dimension_numbers<[1], [1], [0], [0], [0, 0, 1, 0], [], []>} : vector<8x128xf32>, vector<128x128xf32>, vector<8x128xf32> -> vector<8x128xf32>
    %168 = vector.extract_strided_slice %118 {offsets = [24, 0], sizes = [8, 128], strides = [1, 1]} : vector<32x128xf32> to vector<8x128xf32>
    %169 = vector.extract_strided_slice %119 {offsets = [24, 0], sizes = [8, 128], strides = [1, 1]} : vector<32x128xf32> to vector<8x128xf32>
    %170 = vector.extract_strided_slice %115 {offsets = [24, 0], sizes = [8, 128], strides = [1, 1]} : vector<32x128xf32> to vector<8x128xf32>
    %cst_75 = arith.constant dense<0.000000e+00> : vector<128x128xf32>
    %171 = tpu.matmul %168, %169, %cst_75 {dimension_numbers = #tpu.dot_dimension_numbers<[0], [0], [1], [1], [0, 1, 1, 1], [], []>} : vector<8x128xf32>, vector<8x128xf32>, vector<128x128xf32> -> vector<128x128xf32>
    %172 = arith.addf %171, %1 : vector<128x128xf32>
    %cst_76 = arith.constant dense<0xFF800000> : vector<128xf32>
    %173 = vector.multi_reduction <maximumf>, %172, %cst_76 [1] : vector<128x128xf32> to vector<128xf32>
    %174 = vector.shape_cast %173 : vector<128xf32> to vector<128x1xf32>
    %175 = vector.broadcast %174 : vector<128x1xf32> to vector<128x128xf32>
    %176 = arith.subf %172, %175 : vector<128x128xf32>
    %177 = math.exp %176 : vector<128x128xf32>
    %cst_77 = arith.constant dense<0.000000e+00> : vector<128xf32>
    %178 = vector.multi_reduction <add>, %177, %cst_77 [1] : vector<128x128xf32> to vector<128xf32>
    %179 = vector.shape_cast %178 : vector<128xf32> to vector<128x1xf32>
    %180 = tpu.reciprocal %179 {approx = true} : vector<128x1xf32> -> vector<128x1xf32>
    %181 = vector.broadcast %180 : vector<128x1xf32> to vector<128x128xf32>
    %182 = arith.mulf %177, %181 : vector<128x128xf32>
    %cst_78 = arith.constant dense<0.000000e+00> : vector<8x128xf32>
    %183 = tpu.matmul %170, %182, %cst_78 {dimension_numbers = #tpu.dot_dimension_numbers<[1], [1], [0], [0], [0, 0, 1, 0], [], []>} : vector<8x128xf32>, vector<128x128xf32>, vector<8x128xf32> -> vector<8x128xf32>
    %184 = tpu.concatenate %135, %151, %167, %183 in 0 : vector<8x128xf32>, vector<8x128xf32>, vector<8x128xf32>, vector<8x128xf32> -> vector<32x128xf32>
    %cst_79 = arith.constant dense<0.000000e+00> : vector<32x128xf32>
    %185 = tpu.matmul %8, %184, %cst_79 {dimension_numbers = #tpu.dot_dimension_numbers<[1], [0], [0], [1], [0, 0, 1, 1], [], []>} : vector<32x32xf32>, vector<32x128xf32>, vector<32x128xf32> -> vector<32x128xf32>
    %186 = vector.broadcast %9 : vector<32x1xf32> to vector<32x128xf32>
    %187 = arith.addf %185, %186 : vector<32x128xf32>
    %188 = arith.addf %19, %187 : vector<32x128xf32>
    %cst_80 = arith.constant dense<0.000000e+00> : vector<128xf32>
    %189 = vector.multi_reduction <add>, %188, %cst_80 [0] : vector<32x128xf32> to vector<128xf32>
    %190 = vector.shape_cast %189 : vector<128xf32> to vector<1x128xf32>
    %cst_81 = arith.constant 3.200000e+01 : f32
    %191 = vector.broadcast %cst_81 : f32 to vector<1x128xf32>
    %192 = arith.divf %190, %191 : vector<1x128xf32>
    %193 = vector.broadcast %192 : vector<1x128xf32> to vector<32x128xf32>
    %194 = arith.subf %188, %193 : vector<32x128xf32>
    %195 = arith.mulf %194, %194 : vector<32x128xf32>
    %cst_82 = arith.constant dense<0.000000e+00> : vector<128xf32>
    %196 = vector.multi_reduction <add>, %195, %cst_82 [0] : vector<32x128xf32> to vector<128xf32>
    %197 = vector.shape_cast %196 : vector<128xf32> to vector<1x128xf32>
    %cst_83 = arith.constant 3.200000e+01 : f32
    %198 = vector.broadcast %cst_83 : f32 to vector<1x128xf32>
    %199 = arith.divf %197, %198 : vector<1x128xf32>
    %200 = vector.broadcast %192 : vector<1x128xf32> to vector<32x128xf32>
    %201 = arith.subf %188, %200 : vector<32x128xf32>
    %cst_84 = arith.constant 9.99999974E-6 : f32
    %202 = vector.broadcast %cst_84 : f32 to vector<1x128xf32>
    %203 = arith.addf %199, %202 : vector<1x128xf32>
    %204 = math.rsqrt %203 : vector<1x128xf32>
    %205 = vector.broadcast %204 : vector<1x128xf32> to vector<32x128xf32>
    %206 = arith.mulf %201, %205 : vector<32x128xf32>
    %207 = vector.broadcast %14 : vector<32x1xf32> to vector<32x128xf32>
    %208 = arith.mulf %206, %207 : vector<32x128xf32>
    %209 = vector.broadcast %15 : vector<32x1xf32> to vector<32x128xf32>
    %210 = arith.addf %208, %209 : vector<32x128xf32>
    %cst_85 = arith.constant dense<0.000000e+00> : vector<64x128xf32>
    %211 = tpu.matmul %10, %210, %cst_85 {dimension_numbers = #tpu.dot_dimension_numbers<[1], [0], [0], [1], [0, 0, 1, 1], [], []>} : vector<64x32xf32>, vector<32x128xf32>, vector<64x128xf32> -> vector<64x128xf32>
    %212 = vector.broadcast %11 : vector<64x1xf32> to vector<64x128xf32>
    %213 = arith.addf %211, %212 : vector<64x128xf32>
    %cst_86 = arith.constant 0.000000e+00 : f32
    %214 = vector.broadcast %cst_86 : f32 to vector<64x128xf32>
    %215 = arith.maximumf %213, %214 : vector<64x128xf32>
    %cst_87 = arith.constant dense<0.000000e+00> : vector<32x128xf32>
    %216 = tpu.matmul %12, %215, %cst_87 {dimension_numbers = #tpu.dot_dimension_numbers<[1], [0], [0], [1], [0, 0, 1, 1], [], []>} : vector<32x64xf32>, vector<64x128xf32>, vector<32x128xf32> -> vector<32x128xf32>
    %217 = vector.broadcast %13 : vector<32x1xf32> to vector<32x128xf32>
    %218 = arith.addf %216, %217 : vector<32x128xf32>
    %219 = arith.addf %210, %218 : vector<32x128xf32>
    %cst_88 = arith.constant dense<0.000000e+00> : vector<128xf32>
    %220 = vector.multi_reduction <add>, %219, %cst_88 [0] : vector<32x128xf32> to vector<128xf32>
    %221 = vector.shape_cast %220 : vector<128xf32> to vector<1x128xf32>
    %cst_89 = arith.constant 3.200000e+01 : f32
    %222 = vector.broadcast %cst_89 : f32 to vector<1x128xf32>
    %223 = arith.divf %221, %222 : vector<1x128xf32>
    %224 = vector.broadcast %223 : vector<1x128xf32> to vector<32x128xf32>
    %225 = arith.subf %219, %224 : vector<32x128xf32>
    %226 = arith.mulf %225, %225 : vector<32x128xf32>
    %cst_90 = arith.constant dense<0.000000e+00> : vector<128xf32>
    %227 = vector.multi_reduction <add>, %226, %cst_90 [0] : vector<32x128xf32> to vector<128xf32>
    %228 = vector.shape_cast %227 : vector<128xf32> to vector<1x128xf32>
    %cst_91 = arith.constant 3.200000e+01 : f32
    %229 = vector.broadcast %cst_91 : f32 to vector<1x128xf32>
    %230 = arith.divf %228, %229 : vector<1x128xf32>
    %231 = vector.broadcast %223 : vector<1x128xf32> to vector<32x128xf32>
    %232 = arith.subf %219, %231 : vector<32x128xf32>
    %cst_92 = arith.constant 9.99999974E-6 : f32
    %233 = vector.broadcast %cst_92 : f32 to vector<1x128xf32>
    %234 = arith.addf %230, %233 : vector<1x128xf32>
    %235 = math.rsqrt %234 : vector<1x128xf32>
    %236 = vector.broadcast %235 : vector<1x128xf32> to vector<32x128xf32>
    %237 = arith.mulf %232, %236 : vector<32x128xf32>
    %238 = vector.broadcast %16 : vector<32x1xf32> to vector<32x128xf32>
    %239 = arith.mulf %237, %238 : vector<32x128xf32>
    %240 = vector.broadcast %17 : vector<32x1xf32> to vector<32x128xf32>
    %241 = arith.addf %239, %240 : vector<32x128xf32>
    %c0_93 = arith.constant 0 : index
    %c0_94 = arith.constant 0 : index
    %c0_95 = arith.constant 0 : index
    %242 = vector.load %arg21[%c0_93, %c0_94, %c0_95] : memref<2x32x128xf32, #tpu.memory_space<vmem>>, vector<1x32x128xf32>
    %243 = vector.shape_cast %242 : vector<1x32x128xf32> to vector<32x128xf32>
    %244 = vector.shape_cast %241 : vector<32x128xf32> to vector<1x32x128xf32>
    tpu.vector_store %arg21[%c0_93, %c0_94, %c0_95], %244 {strides = array<i32>} : memref<2x32x128xf32, #tpu.memory_space<vmem>>, vector<1x32x128xf32>,
    %c1 = arith.constant 1 : index
    %c0_96 = arith.constant 0 : index
    %c0_97 = arith.constant 0 : index
    %245 = vector.load %arg1[%c1, %c0_96, %c0_97] : memref<2x32x128xf32, #tpu.memory_space<vmem>>, vector<1x32x128xf32>
    %246 = vector.shape_cast %245 : vector<1x32x128xf32> to vector<32x128xf32>
    %c1_98 = arith.constant 1 : index
    %c0_99 = arith.constant 0 : index
    %c0_100 = arith.constant 0 : index
    %247 = vector.load %arg2[%c1_98, %c0_99, %c0_100] : memref<2x32x128xf32, #tpu.memory_space<vmem>>, vector<1x32x128xf32>
    %248 = vector.shape_cast %247 : vector<1x32x128xf32> to vector<32x128xf32>
    %249 = arith.addf %246, %248 : vector<32x128xf32>
    %250 = vector.extract_strided_slice %2 {offsets = [0, 0], sizes = [64, 32], strides = [1, 1]} : vector<96x32xf32> to vector<64x32xf32>
    %cst_101 = arith.constant dense<0.000000e+00> : vector<64x128xf32>
    %251 = tpu.matmul %250, %249, %cst_101 {dimension_numbers = #tpu.dot_dimension_numbers<[1], [0], [0], [1], [0, 0, 1, 1], [], []>} : vector<64x32xf32>, vector<32x128xf32>, vector<64x128xf32> -> vector<64x128xf32>
    %252 = vector.extract_strided_slice %3 {offsets = [0, 0], sizes = [64, 1], strides = [1, 1]} : vector<96x1xf32> to vector<64x1xf32>
    %253 = vector.broadcast %252 : vector<64x1xf32> to vector<64x128xf32>
    %254 = arith.addf %251, %253 : vector<64x128xf32>
    %255 = vector.extract_strided_slice %2 {offsets = [64, 0], sizes = [32, 32], strides = [1, 1]} : vector<96x32xf32> to vector<32x32xf32>
    %cst_102 = arith.constant dense<0.000000e+00> : vector<32x128xf32>
    %256 = tpu.matmul %255, %246, %cst_102 {dimension_numbers = #tpu.dot_dimension_numbers<[1], [0], [0], [1], [0, 0, 1, 1], [], []>} : vector<32x32xf32>, vector<32x128xf32>, vector<32x128xf32> -> vector<32x128xf32>
    %257 = vector.extract_strided_slice %3 {offsets = [64, 0], sizes = [32, 1], strides = [1, 1]} : vector<96x1xf32> to vector<32x1xf32>
    %258 = vector.broadcast %257 : vector<32x1xf32> to vector<32x128xf32>
    %259 = arith.addf %256, %258 : vector<32x128xf32>
    %260 = vector.extract_strided_slice %254 {offsets = [0, 0], sizes = [32, 128], strides = [1, 1]} : vector<64x128xf32> to vector<32x128xf32>
    %cst_103 = arith.constant 0.353553385 : f32
    %261 = vector.broadcast %cst_103 : f32 to vector<32x128xf32>
    %262 = arith.mulf %260, %261 : vector<32x128xf32>
    %263 = vector.extract_strided_slice %254 {offsets = [32, 0], sizes = [32, 128], strides = [1, 1]} : vector<64x128xf32> to vector<32x128xf32>
    %264 = vector.extract_strided_slice %262 {offsets = [0, 0], sizes = [8, 128], strides = [1, 1]} : vector<32x128xf32> to vector<8x128xf32>
    %265 = vector.extract_strided_slice %263 {offsets = [0, 0], sizes = [8, 128], strides = [1, 1]} : vector<32x128xf32> to vector<8x128xf32>
    %266 = vector.extract_strided_slice %259 {offsets = [0, 0], sizes = [8, 128], strides = [1, 1]} : vector<32x128xf32> to vector<8x128xf32>
    %cst_104 = arith.constant dense<0.000000e+00> : vector<128x128xf32>
    %267 = tpu.matmul %264, %265, %cst_104 {dimension_numbers = #tpu.dot_dimension_numbers<[0], [0], [1], [1], [0, 1, 1, 1], [], []>} : vector<8x128xf32>, vector<8x128xf32>, vector<128x128xf32> -> vector<128x128xf32>
    %268 = arith.addf %267, %0 : vector<128x128xf32>
    %cst_105 = arith.constant dense<0xFF800000> : vector<128xf32>
    %269 = vector.multi_reduction <maximumf>, %268, %cst_105 [1] : vector<128x128xf32> to vector<128xf32>
    %270 = vector.shape_cast %269 : vector<128xf32> to vector<128x1xf32>
    %271 = vector.broadcast %270 : vector<128x1xf32> to vector<128x128xf32>
    %272 = arith.subf %268, %271 : vector<128x128xf32>
    %273 = math.exp %272 : vector<128x128xf32>
    %cst_106 = arith.constant dense<0.000000e+00> : vector<128xf32>
    %274 = vector.multi_reduction <add>, %273, %cst_106 [1] : vector<128x128xf32> to vector<128xf32>
    %275 = vector.shape_cast %274 : vector<128xf32> to vector<128x1xf32>
    %276 = tpu.reciprocal %275 {approx = true} : vector<128x1xf32> -> vector<128x1xf32>
    %277 = vector.broadcast %276 : vector<128x1xf32> to vector<128x128xf32>
    %278 = arith.mulf %273, %277 : vector<128x128xf32>
    %cst_107 = arith.constant dense<0.000000e+00> : vector<8x128xf32>
    %279 = tpu.matmul %266, %278, %cst_107 {dimension_numbers = #tpu.dot_dimension_numbers<[1], [1], [0], [0], [0, 0, 1, 0], [], []>} : vector<8x128xf32>, vector<128x128xf32>, vector<8x128xf32> -> vector<8x128xf32>
    %280 = vector.extract_strided_slice %262 {offsets = [8, 0], sizes = [8, 128], strides = [1, 1]} : vector<32x128xf32> to vector<8x128xf32>
    %281 = vector.extract_strided_slice %263 {offsets = [8, 0], sizes = [8, 128], strides = [1, 1]} : vector<32x128xf32> to vector<8x128xf32>
    %282 = vector.extract_strided_slice %259 {offsets = [8, 0], sizes = [8, 128], strides = [1, 1]} : vector<32x128xf32> to vector<8x128xf32>
    %cst_108 = arith.constant dense<0.000000e+00> : vector<128x128xf32>
    %283 = tpu.matmul %280, %281, %cst_108 {dimension_numbers = #tpu.dot_dimension_numbers<[0], [0], [1], [1], [0, 1, 1, 1], [], []>} : vector<8x128xf32>, vector<8x128xf32>, vector<128x128xf32> -> vector<128x128xf32>
    %284 = arith.addf %283, %0 : vector<128x128xf32>
    %cst_109 = arith.constant dense<0xFF800000> : vector<128xf32>
    %285 = vector.multi_reduction <maximumf>, %284, %cst_109 [1] : vector<128x128xf32> to vector<128xf32>
    %286 = vector.shape_cast %285 : vector<128xf32> to vector<128x1xf32>
    %287 = vector.broadcast %286 : vector<128x1xf32> to vector<128x128xf32>
    %288 = arith.subf %284, %287 : vector<128x128xf32>
    %289 = math.exp %288 : vector<128x128xf32>
    %cst_110 = arith.constant dense<0.000000e+00> : vector<128xf32>
    %290 = vector.multi_reduction <add>, %289, %cst_110 [1] : vector<128x128xf32> to vector<128xf32>
    %291 = vector.shape_cast %290 : vector<128xf32> to vector<128x1xf32>
    %292 = tpu.reciprocal %291 {approx = true} : vector<128x1xf32> -> vector<128x1xf32>
    %293 = vector.broadcast %292 : vector<128x1xf32> to vector<128x128xf32>
    %294 = arith.mulf %289, %293 : vector<128x128xf32>
    %cst_111 = arith.constant dense<0.000000e+00> : vector<8x128xf32>
    %295 = tpu.matmul %282, %294, %cst_111 {dimension_numbers = #tpu.dot_dimension_numbers<[1], [1], [0], [0], [0, 0, 1, 0], [], []>} : vector<8x128xf32>, vector<128x128xf32>, vector<8x128xf32> -> vector<8x128xf32>
    %296 = vector.extract_strided_slice %262 {offsets = [16, 0], sizes = [8, 128], strides = [1, 1]} : vector<32x128xf32> to vector<8x128xf32>
    %297 = vector.extract_strided_slice %263 {offsets = [16, 0], sizes = [8, 128], strides = [1, 1]} : vector<32x128xf32> to vector<8x128xf32>
    %298 = vector.extract_strided_slice %259 {offsets = [16, 0], sizes = [8, 128], strides = [1, 1]} : vector<32x128xf32> to vector<8x128xf32>
    %cst_112 = arith.constant dense<0.000000e+00> : vector<128x128xf32>
    %299 = tpu.matmul %296, %297, %cst_112 {dimension_numbers = #tpu.dot_dimension_numbers<[0], [0], [1], [1], [0, 1, 1, 1], [], []>} : vector<8x128xf32>, vector<8x128xf32>, vector<128x128xf32> -> vector<128x128xf32>
    %300 = arith.addf %299, %0 : vector<128x128xf32>
    %cst_113 = arith.constant dense<0xFF800000> : vector<128xf32>
    %301 = vector.multi_reduction <maximumf>, %300, %cst_113 [1] : vector<128x128xf32> to vector<128xf32>
    %302 = vector.shape_cast %301 : vector<128xf32> to vector<128x1xf32>
    %303 = vector.broadcast %302 : vector<128x1xf32> to vector<128x128xf32>
    %304 = arith.subf %300, %303 : vector<128x128xf32>
    %305 = math.exp %304 : vector<128x128xf32>
    %cst_114 = arith.constant dense<0.000000e+00> : vector<128xf32>
    %306 = vector.multi_reduction <add>, %305, %cst_114 [1] : vector<128x128xf32> to vector<128xf32>
    %307 = vector.shape_cast %306 : vector<128xf32> to vector<128x1xf32>
    %308 = tpu.reciprocal %307 {approx = true} : vector<128x1xf32> -> vector<128x1xf32>
    %309 = vector.broadcast %308 : vector<128x1xf32> to vector<128x128xf32>
    %310 = arith.mulf %305, %309 : vector<128x128xf32>
    %cst_115 = arith.constant dense<0.000000e+00> : vector<8x128xf32>
    %311 = tpu.matmul %298, %310, %cst_115 {dimension_numbers = #tpu.dot_dimension_numbers<[1], [1], [0], [0], [0, 0, 1, 0], [], []>} : vector<8x128xf32>, vector<128x128xf32>, vector<8x128xf32> -> vector<8x128xf32>
    %312 = vector.extract_strided_slice %262 {offsets = [24, 0], sizes = [8, 128], strides = [1, 1]} : vector<32x128xf32> to vector<8x128xf32>
    %313 = vector.extract_strided_slice %263 {offsets = [24, 0], sizes = [8, 128], strides = [1, 1]} : vector<32x128xf32> to vector<8x128xf32>
    %314 = vector.extract_strided_slice %259 {offsets = [24, 0], sizes = [8, 128], strides = [1, 1]} : vector<32x128xf32> to vector<8x128xf32>
    %cst_116 = arith.constant dense<0.000000e+00> : vector<128x128xf32>
    %315 = tpu.matmul %312, %313, %cst_116 {dimension_numbers = #tpu.dot_dimension_numbers<[0], [0], [1], [1], [0, 1, 1, 1], [], []>} : vector<8x128xf32>, vector<8x128xf32>, vector<128x128xf32> -> vector<128x128xf32>
    %316 = arith.addf %315, %0 : vector<128x128xf32>
    %cst_117 = arith.constant dense<0xFF800000> : vector<128xf32>
    %317 = vector.multi_reduction <maximumf>, %316, %cst_117 [1] : vector<128x128xf32> to vector<128xf32>
    %318 = vector.shape_cast %317 : vector<128xf32> to vector<128x1xf32>
    %319 = vector.broadcast %318 : vector<128x1xf32> to vector<128x128xf32>
    %320 = arith.subf %316, %319 : vector<128x128xf32>
    %321 = math.exp %320 : vector<128x128xf32>
    %cst_118 = arith.constant dense<0.000000e+00> : vector<128xf32>
    %322 = vector.multi_reduction <add>, %321, %cst_118 [1] : vector<128x128xf32> to vector<128xf32>
    %323 = vector.shape_cast %322 : vector<128xf32> to vector<128x1xf32>
    %324 = tpu.reciprocal %323 {approx = true} : vector<128x1xf32> -> vector<128x1xf32>
    %325 = vector.broadcast %324 : vector<128x1xf32> to vector<128x128xf32>
    %326 = arith.mulf %321, %325 : vector<128x128xf32>
    %cst_119 = arith.constant dense<0.000000e+00> : vector<8x128xf32>
    %327 = tpu.matmul %314, %326, %cst_119 {dimension_numbers = #tpu.dot_dimension_numbers<[1], [1], [0], [0], [0, 0, 1, 0], [], []>} : vector<8x128xf32>, vector<128x128xf32>, vector<8x128xf32> -> vector<8x128xf32>
    %328 = tpu.concatenate %279, %295, %311, %327 in 0 : vector<8x128xf32>, vector<8x128xf32>, vector<8x128xf32>, vector<8x128xf32> -> vector<32x128xf32>
    %cst_120 = arith.constant dense<0.000000e+00> : vector<32x128xf32>
    %329 = tpu.matmul %4, %328, %cst_120 {dimension_numbers = #tpu.dot_dimension_numbers<[1], [0], [0], [1], [0, 0, 1, 1], [], []>} : vector<32x32xf32>, vector<32x128xf32>, vector<32x128xf32> -> vector<32x128xf32>
    %330 = vector.broadcast %5 : vector<32x1xf32> to vector<32x128xf32>
    %331 = arith.addf %329, %330 : vector<32x128xf32>
    %332 = arith.addf %331, %248 : vector<32x128xf32>
    %333 = vector.extract_strided_slice %6 {offsets = [0, 0], sizes = [64, 32], strides = [1, 1]} : vector<96x32xf32> to vector<64x32xf32>
    %cst_121 = arith.constant dense<0.000000e+00> : vector<64x128xf32>
    %334 = tpu.matmul %333, %332, %cst_121 {dimension_numbers = #tpu.dot_dimension_numbers<[1], [0], [0], [1], [0, 0, 1, 1], [], []>} : vector<64x32xf32>, vector<32x128xf32>, vector<64x128xf32> -> vector<64x128xf32>
    %335 = vector.extract_strided_slice %7 {offsets = [0, 0], sizes = [64, 1], strides = [1, 1]} : vector<96x1xf32> to vector<64x1xf32>
    %336 = vector.broadcast %335 : vector<64x1xf32> to vector<64x128xf32>
    %337 = arith.addf %334, %336 : vector<64x128xf32>
    %338 = vector.extract_strided_slice %6 {offsets = [64, 0], sizes = [32, 32], strides = [1, 1]} : vector<96x32xf32> to vector<32x32xf32>
    %cst_122 = arith.constant dense<0.000000e+00> : vector<32x128xf32>
    %339 = tpu.matmul %338, %331, %cst_122 {dimension_numbers = #tpu.dot_dimension_numbers<[1], [0], [0], [1], [0, 0, 1, 1], [], []>} : vector<32x32xf32>, vector<32x128xf32>, vector<32x128xf32> -> vector<32x128xf32>
    %340 = vector.extract_strided_slice %7 {offsets = [64, 0], sizes = [32, 1], strides = [1, 1]} : vector<96x1xf32> to vector<32x1xf32>
    %341 = vector.broadcast %340 : vector<32x1xf32> to vector<32x128xf32>
    %342 = arith.addf %339, %341 : vector<32x128xf32>
    %343 = vector.extract_strided_slice %337 {offsets = [0, 0], sizes = [32, 128], strides = [1, 1]} : vector<64x128xf32> to vector<32x128xf32>
    %cst_123 = arith.constant 0.353553385 : f32
    %344 = vector.broadcast %cst_123 : f32 to vector<32x128xf32>
    %345 = arith.mulf %343, %344 : vector<32x128xf32>
    %346 = vector.extract_strided_slice %337 {offsets = [32, 0], sizes = [32, 128], strides = [1, 1]} : vector<64x128xf32> to vector<32x128xf32>
    %347 = vector.extract_strided_slice %345 {offsets = [0, 0], sizes = [8, 128], strides = [1, 1]} : vector<32x128xf32> to vector<8x128xf32>
    %348 = vector.extract_strided_slice %346 {offsets = [0, 0], sizes = [8, 128], strides = [1, 1]} : vector<32x128xf32> to vector<8x128xf32>
    %349 = vector.extract_strided_slice %342 {offsets = [0, 0], sizes = [8, 128], strides = [1, 1]} : vector<32x128xf32> to vector<8x128xf32>
    %cst_124 = arith.constant dense<0.000000e+00> : vector<128x128xf32>
    %350 = tpu.matmul %347, %348, %cst_124 {dimension_numbers = #tpu.dot_dimension_numbers<[0], [0], [1], [1], [0, 1, 1, 1], [], []>} : vector<8x128xf32>, vector<8x128xf32>, vector<128x128xf32> -> vector<128x128xf32>
    %351 = arith.addf %350, %1 : vector<128x128xf32>
    %cst_125 = arith.constant dense<0xFF800000> : vector<128xf32>
    %352 = vector.multi_reduction <maximumf>, %351, %cst_125 [1] : vector<128x128xf32> to vector<128xf32>
    %353 = vector.shape_cast %352 : vector<128xf32> to vector<128x1xf32>
    %354 = vector.broadcast %353 : vector<128x1xf32> to vector<128x128xf32>
    %355 = arith.subf %351, %354 : vector<128x128xf32>
    %356 = math.exp %355 : vector<128x128xf32>
    %cst_126 = arith.constant dense<0.000000e+00> : vector<128xf32>
    %357 = vector.multi_reduction <add>, %356, %cst_126 [1] : vector<128x128xf32> to vector<128xf32>
    %358 = vector.shape_cast %357 : vector<128xf32> to vector<128x1xf32>
    %359 = tpu.reciprocal %358 {approx = true} : vector<128x1xf32> -> vector<128x1xf32>
    %360 = vector.broadcast %359 : vector<128x1xf32> to vector<128x128xf32>
    %361 = arith.mulf %356, %360 : vector<128x128xf32>
    %cst_127 = arith.constant dense<0.000000e+00> : vector<8x128xf32>
    %362 = tpu.matmul %349, %361, %cst_127 {dimension_numbers = #tpu.dot_dimension_numbers<[1], [1], [0], [0], [0, 0, 1, 0], [], []>} : vector<8x128xf32>, vector<128x128xf32>, vector<8x128xf32> -> vector<8x128xf32>
    %363 = vector.extract_strided_slice %345 {offsets = [8, 0], sizes = [8, 128], strides = [1, 1]} : vector<32x128xf32> to vector<8x128xf32>
    %364 = vector.extract_strided_slice %346 {offsets = [8, 0], sizes = [8, 128], strides = [1, 1]} : vector<32x128xf32> to vector<8x128xf32>
    %365 = vector.extract_strided_slice %342 {offsets = [8, 0], sizes = [8, 128], strides = [1, 1]} : vector<32x128xf32> to vector<8x128xf32>
    %cst_128 = arith.constant dense<0.000000e+00> : vector<128x128xf32>
    %366 = tpu.matmul %363, %364, %cst_128 {dimension_numbers = #tpu.dot_dimension_numbers<[0], [0], [1], [1], [0, 1, 1, 1], [], []>} : vector<8x128xf32>, vector<8x128xf32>, vector<128x128xf32> -> vector<128x128xf32>
    %367 = arith.addf %366, %1 : vector<128x128xf32>
    %cst_129 = arith.constant dense<0xFF800000> : vector<128xf32>
    %368 = vector.multi_reduction <maximumf>, %367, %cst_129 [1] : vector<128x128xf32> to vector<128xf32>
    %369 = vector.shape_cast %368 : vector<128xf32> to vector<128x1xf32>
    %370 = vector.broadcast %369 : vector<128x1xf32> to vector<128x128xf32>
    %371 = arith.subf %367, %370 : vector<128x128xf32>
    %372 = math.exp %371 : vector<128x128xf32>
    %cst_130 = arith.constant dense<0.000000e+00> : vector<128xf32>
    %373 = vector.multi_reduction <add>, %372, %cst_130 [1] : vector<128x128xf32> to vector<128xf32>
    %374 = vector.shape_cast %373 : vector<128xf32> to vector<128x1xf32>
    %375 = tpu.reciprocal %374 {approx = true} : vector<128x1xf32> -> vector<128x1xf32>
    %376 = vector.broadcast %375 : vector<128x1xf32> to vector<128x128xf32>
    %377 = arith.mulf %372, %376 : vector<128x128xf32>
    %cst_131 = arith.constant dense<0.000000e+00> : vector<8x128xf32>
    %378 = tpu.matmul %365, %377, %cst_131 {dimension_numbers = #tpu.dot_dimension_numbers<[1], [1], [0], [0], [0, 0, 1, 0], [], []>} : vector<8x128xf32>, vector<128x128xf32>, vector<8x128xf32> -> vector<8x128xf32>
    %379 = vector.extract_strided_slice %345 {offsets = [16, 0], sizes = [8, 128], strides = [1, 1]} : vector<32x128xf32> to vector<8x128xf32>
    %380 = vector.extract_strided_slice %346 {offsets = [16, 0], sizes = [8, 128], strides = [1, 1]} : vector<32x128xf32> to vector<8x128xf32>
    %381 = vector.extract_strided_slice %342 {offsets = [16, 0], sizes = [8, 128], strides = [1, 1]} : vector<32x128xf32> to vector<8x128xf32>
    %cst_132 = arith.constant dense<0.000000e+00> : vector<128x128xf32>
    %382 = tpu.matmul %379, %380, %cst_132 {dimension_numbers = #tpu.dot_dimension_numbers<[0], [0], [1], [1], [0, 1, 1, 1], [], []>} : vector<8x128xf32>, vector<8x128xf32>, vector<128x128xf32> -> vector<128x128xf32>
    %383 = arith.addf %382, %1 : vector<128x128xf32>
    %cst_133 = arith.constant dense<0xFF800000> : vector<128xf32>
    %384 = vector.multi_reduction <maximumf>, %383, %cst_133 [1] : vector<128x128xf32> to vector<128xf32>
    %385 = vector.shape_cast %384 : vector<128xf32> to vector<128x1xf32>
    %386 = vector.broadcast %385 : vector<128x1xf32> to vector<128x128xf32>
    %387 = arith.subf %383, %386 : vector<128x128xf32>
    %388 = math.exp %387 : vector<128x128xf32>
    %cst_134 = arith.constant dense<0.000000e+00> : vector<128xf32>
    %389 = vector.multi_reduction <add>, %388, %cst_134 [1] : vector<128x128xf32> to vector<128xf32>
    %390 = vector.shape_cast %389 : vector<128xf32> to vector<128x1xf32>
    %391 = tpu.reciprocal %390 {approx = true} : vector<128x1xf32> -> vector<128x1xf32>
    %392 = vector.broadcast %391 : vector<128x1xf32> to vector<128x128xf32>
    %393 = arith.mulf %388, %392 : vector<128x128xf32>
    %cst_135 = arith.constant dense<0.000000e+00> : vector<8x128xf32>
    %394 = tpu.matmul %381, %393, %cst_135 {dimension_numbers = #tpu.dot_dimension_numbers<[1], [1], [0], [0], [0, 0, 1, 0], [], []>} : vector<8x128xf32>, vector<128x128xf32>, vector<8x128xf32> -> vector<8x128xf32>
    %395 = vector.extract_strided_slice %345 {offsets = [24, 0], sizes = [8, 128], strides = [1, 1]} : vector<32x128xf32> to vector<8x128xf32>
    %396 = vector.extract_strided_slice %346 {offsets = [24, 0], sizes = [8, 128], strides = [1, 1]} : vector<32x128xf32> to vector<8x128xf32>
    %397 = vector.extract_strided_slice %342 {offsets = [24, 0], sizes = [8, 128], strides = [1, 1]} : vector<32x128xf32> to vector<8x128xf32>
    %cst_136 = arith.constant dense<0.000000e+00> : vector<128x128xf32>
    %398 = tpu.matmul %395, %396, %cst_136 {dimension_numbers = #tpu.dot_dimension_numbers<[0], [0], [1], [1], [0, 1, 1, 1], [], []>} : vector<8x128xf32>, vector<8x128xf32>, vector<128x128xf32> -> vector<128x128xf32>
    %399 = arith.addf %398, %1 : vector<128x128xf32>
    %cst_137 = arith.constant dense<0xFF800000> : vector<128xf32>
    %400 = vector.multi_reduction <maximumf>, %399, %cst_137 [1] : vector<128x128xf32> to vector<128xf32>
    %401 = vector.shape_cast %400 : vector<128xf32> to vector<128x1xf32>
    %402 = vector.broadcast %401 : vector<128x1xf32> to vector<128x128xf32>
    %403 = arith.subf %399, %402 : vector<128x128xf32>
    %404 = math.exp %403 : vector<128x128xf32>
    %cst_138 = arith.constant dense<0.000000e+00> : vector<128xf32>
    %405 = vector.multi_reduction <add>, %404, %cst_138 [1] : vector<128x128xf32> to vector<128xf32>
    %406 = vector.shape_cast %405 : vector<128xf32> to vector<128x1xf32>
    %407 = tpu.reciprocal %406 {approx = true} : vector<128x1xf32> -> vector<128x1xf32>
    %408 = vector.broadcast %407 : vector<128x1xf32> to vector<128x128xf32>
    %409 = arith.mulf %404, %408 : vector<128x128xf32>
    %cst_139 = arith.constant dense<0.000000e+00> : vector<8x128xf32>
    %410 = tpu.matmul %397, %409, %cst_139 {dimension_numbers = #tpu.dot_dimension_numbers<[1], [1], [0], [0], [0, 0, 1, 0], [], []>} : vector<8x128xf32>, vector<128x128xf32>, vector<8x128xf32> -> vector<8x128xf32>
    %411 = tpu.concatenate %362, %378, %394, %410 in 0 : vector<8x128xf32>, vector<8x128xf32>, vector<8x128xf32>, vector<8x128xf32> -> vector<32x128xf32>
    %cst_140 = arith.constant dense<0.000000e+00> : vector<32x128xf32>
    %412 = tpu.matmul %8, %411, %cst_140 {dimension_numbers = #tpu.dot_dimension_numbers<[1], [0], [0], [1], [0, 0, 1, 1], [], []>} : vector<32x32xf32>, vector<32x128xf32>, vector<32x128xf32> -> vector<32x128xf32>
    %413 = vector.broadcast %9 : vector<32x1xf32> to vector<32x128xf32>
    %414 = arith.addf %412, %413 : vector<32x128xf32>
    %415 = arith.addf %246, %414 : vector<32x128xf32>
    %cst_141 = arith.constant dense<0.000000e+00> : vector<128xf32>
    %416 = vector.multi_reduction <add>, %415, %cst_141 [0] : vector<32x128xf32> to vector<128xf32>
    %417 = vector.shape_cast %416 : vector<128xf32> to vector<1x128xf32>
    %cst_142 = arith.constant 3.200000e+01 : f32
    %418 = vector.broadcast %cst_142 : f32 to vector<1x128xf32>
    %419 = arith.divf %417, %418 : vector<1x128xf32>
    %420 = vector.broadcast %419 : vector<1x128xf32> to vector<32x128xf32>
    %421 = arith.subf %415, %420 : vector<32x128xf32>
    %422 = arith.mulf %421, %421 : vector<32x128xf32>
    %cst_143 = arith.constant dense<0.000000e+00> : vector<128xf32>
    %423 = vector.multi_reduction <add>, %422, %cst_143 [0] : vector<32x128xf32> to vector<128xf32>
    %424 = vector.shape_cast %423 : vector<128xf32> to vector<1x128xf32>
    %cst_144 = arith.constant 3.200000e+01 : f32
    %425 = vector.broadcast %cst_144 : f32 to vector<1x128xf32>
    %426 = arith.divf %424, %425 : vector<1x128xf32>
    %427 = vector.broadcast %419 : vector<1x128xf32> to vector<32x128xf32>
    %428 = arith.subf %415, %427 : vector<32x128xf32>
    %cst_145 = arith.constant 9.99999974E-6 : f32
    %429 = vector.broadcast %cst_145 : f32 to vector<1x128xf32>
    %430 = arith.addf %426, %429 : vector<1x128xf32>
    %431 = math.rsqrt %430 : vector<1x128xf32>
    %432 = vector.broadcast %431 : vector<1x128xf32> to vector<32x128xf32>
    %433 = arith.mulf %428, %432 : vector<32x128xf32>
    %434 = vector.broadcast %14 : vector<32x1xf32> to vector<32x128xf32>
    %435 = arith.mulf %433, %434 : vector<32x128xf32>
    %436 = vector.broadcast %15 : vector<32x1xf32> to vector<32x128xf32>
    %437 = arith.addf %435, %436 : vector<32x128xf32>
    %cst_146 = arith.constant dense<0.000000e+00> : vector<64x128xf32>
    %438 = tpu.matmul %10, %437, %cst_146 {dimension_numbers = #tpu.dot_dimension_numbers<[1], [0], [0], [1], [0, 0, 1, 1], [], []>} : vector<64x32xf32>, vector<32x128xf32>, vector<64x128xf32> -> vector<64x128xf32>
    %439 = vector.broadcast %11 : vector<64x1xf32> to vector<64x128xf32>
    %440 = arith.addf %438, %439 : vector<64x128xf32>
    %cst_147 = arith.constant 0.000000e+00 : f32
    %441 = vector.broadcast %cst_147 : f32 to vector<64x128xf32>
    %442 = arith.maximumf %440, %441 : vector<64x128xf32>
    %cst_148 = arith.constant dense<0.000000e+00> : vector<32x128xf32>
    %443 = tpu.matmul %12, %442, %cst_148 {dimension_numbers = #tpu.dot_dimension_numbers<[1], [0], [0], [1], [0, 0, 1, 1], [], []>} : vector<32x64xf32>, vector<64x128xf32>, vector<32x128xf32> -> vector<32x128xf32>
    %444 = vector.broadcast %13 : vector<32x1xf32> to vector<32x128xf32>
    %445 = arith.addf %443, %444 : vector<32x128xf32>
    %446 = arith.addf %437, %445 : vector<32x128xf32>
    %cst_149 = arith.constant dense<0.000000e+00> : vector<128xf32>
    %447 = vector.multi_reduction <add>, %446, %cst_149 [0] : vector<32x128xf32> to vector<128xf32>
    %448 = vector.shape_cast %447 : vector<128xf32> to vector<1x128xf32>
    %cst_150 = arith.constant 3.200000e+01 : f32
    %449 = vector.broadcast %cst_150 : f32 to vector<1x128xf32>
    %450 = arith.divf %448, %449 : vector<1x128xf32>
    %451 = vector.broadcast %450 : vector<1x128xf32> to vector<32x128xf32>
    %452 = arith.subf %446, %451 : vector<32x128xf32>
    %453 = arith.mulf %452, %452 : vector<32x128xf32>
    %cst_151 = arith.constant dense<0.000000e+00> : vector<128xf32>
    %454 = vector.multi_reduction <add>, %453, %cst_151 [0] : vector<32x128xf32> to vector<128xf32>
    %455 = vector.shape_cast %454 : vector<128xf32> to vector<1x128xf32>
    %cst_152 = arith.constant 3.200000e+01 : f32
    %456 = vector.broadcast %cst_152 : f32 to vector<1x128xf32>
    %457 = arith.divf %455, %456 : vector<1x128xf32>
    %458 = vector.broadcast %450 : vector<1x128xf32> to vector<32x128xf32>
    %459 = arith.subf %446, %458 : vector<32x128xf32>
    %cst_153 = arith.constant 9.99999974E-6 : f32
    %460 = vector.broadcast %cst_153 : f32 to vector<1x128xf32>
    %461 = arith.addf %457, %460 : vector<1x128xf32>
    %462 = math.rsqrt %461 : vector<1x128xf32>
    %463 = vector.broadcast %462 : vector<1x128xf32> to vector<32x128xf32>
    %464 = arith.mulf %459, %463 : vector<32x128xf32>
    %465 = vector.broadcast %16 : vector<32x1xf32> to vector<32x128xf32>
    %466 = arith.mulf %464, %465 : vector<32x128xf32>
    %467 = vector.broadcast %17 : vector<32x1xf32> to vector<32x128xf32>
    %468 = arith.addf %466, %467 : vector<32x128xf32>
    %c1_154 = arith.constant 1 : index
    %c0_155 = arith.constant 0 : index
    %c0_156 = arith.constant 0 : index
    %469 = vector.load %arg21[%c1_154, %c0_155, %c0_156] : memref<2x32x128xf32, #tpu.memory_space<vmem>>, vector<1x32x128xf32>
    %470 = vector.shape_cast %469 : vector<1x32x128xf32> to vector<32x128xf32>
    %471 = vector.shape_cast %468 : vector<32x128xf32> to vector<1x32x128xf32>
    tpu.vector_store %arg21[%c1_154, %c0_155, %c0_156], %471 {strides = array<i32>} : memref<2x32x128xf32, #tpu.memory_space<vmem>>, vector<1x32x128xf32>,
    return
  }
  func.func @transform_0(%arg0: i32) -> (i32, i32, i32) {
    %c0_i32 = arith.constant 0 : i32
    %c0_i32_0 = arith.constant 0 : i32
    %c0_i32_1 = arith.constant 0 : i32
    return %arg0, %c0_i32, %c0_i32_0 : i32, i32, i32
  }
  func.func @transform_1(%arg0: i32) -> (i32, i32, i32) {
    %c0_i32 = arith.constant 0 : i32
    %c0_i32_0 = arith.constant 0 : i32
    %c0_i32_1 = arith.constant 0 : i32
    return %arg0, %c0_i32, %c0_i32_0 : i32, i32, i32
  }
  func.func @transform_2(%arg0: i32) -> (i32, i32) {
    %c0_i32 = arith.constant 0 : i32
    %c0_i32_0 = arith.constant 0 : i32
    %c0_i32_1 = arith.constant 0 : i32
    return %c0_i32, %c0_i32_0 : i32, i32
  }
  func.func @transform_3(%arg0: i32) -> (i32, i32) {
    %c0_i32 = arith.constant 0 : i32
    %c0_i32_0 = arith.constant 0 : i32
    %c0_i32_1 = arith.constant 0 : i32
    return %c0_i32, %c0_i32_0 : i32, i32
  }
  func.func @transform_4(%arg0: i32) -> (i32, i32) {
    %c0_i32 = arith.constant 0 : i32
    %c0_i32_0 = arith.constant 0 : i32
    %c0_i32_1 = arith.constant 0 : i32
    return %c0_i32, %c0_i32_0 : i32, i32
  }
  func.func @transform_5(%arg0: i32) -> (i32, i32) {
    %c0_i32 = arith.constant 0 : i32
    %c0_i32_0 = arith.constant 0 : i32
    %c0_i32_1 = arith.constant 0 : i32
    return %c0_i32, %c0_i32_0 : i32, i32
  }
  func.func @transform_6(%arg0: i32) -> (i32, i32) {
    %c0_i32 = arith.constant 0 : i32
    %c0_i32_0 = arith.constant 0 : i32
    %c0_i32_1 = arith.constant 0 : i32
    return %c0_i32, %c0_i32_0 : i32, i32
  }
  func.func @transform_7(%arg0: i32) -> (i32, i32) {
    %c0_i32 = arith.constant 0 : i32
    %c0_i32_0 = arith.constant 0 : i32
    %c0_i32_1 = arith.constant 0 : i32
    return %c0_i32, %c0_i32_0 : i32, i32
  }
  func.func @transform_8(%arg0: i32) -> (i32, i32) {
    %c0_i32 = arith.constant 0 : i32
    %c0_i32_0 = arith.constant 0 : i32
    %c0_i32_1 = arith.constant 0 : i32
    return %c0_i32, %c0_i32_0 : i32, i32
  }
  func.func @transform_9(%arg0: i32) -> (i32, i32) {
    %c0_i32 = arith.constant 0 : i32
    %c0_i32_0 = arith.constant 0 : i32
    %c0_i32_1 = arith.constant 0 : i32
    return %c0_i32, %c0_i32_0 : i32, i32
  }
  func.func @transform_10(%arg0: i32) -> (i32, i32) {
    %c0_i32 = arith.constant 0 : i32
    %c0_i32_0 = arith.constant 0 : i32
    %c0_i32_1 = arith.constant 0 : i32
    return %c0_i32, %c0_i32_0 : i32, i32
  }
  func.func @transform_11(%arg0: i32) -> (i32, i32) {
    %c0_i32 = arith.constant 0 : i32
    %c0_i32_0 = arith.constant 0 : i32
    %c0_i32_1 = arith.constant 0 : i32
    return %c0_i32, %c0_i32_0 : i32, i32
  }
  func.func @transform_12(%arg0: i32) -> (i32, i32) {
    %c0_i32 = arith.constant 0 : i32
    %c0_i32_0 = arith.constant 0 : i32
    %c0_i32_1 = arith.constant 0 : i32
    return %c0_i32, %c0_i32_0 : i32, i32
  }
  func.func @transform_13(%arg0: i32) -> (i32, i32) {
    %c0_i32 = arith.constant 0 : i32
    %c0_i32_0 = arith.constant 0 : i32
    %c0_i32_1 = arith.constant 0 : i32
    return %c0_i32, %c0_i32_0 : i32, i32
  }
  func.func @transform_14(%arg0: i32) -> (i32, i32) {
    %c0_i32 = arith.constant 0 : i32
    %c0_i32_0 = arith.constant 0 : i32
    %c0_i32_1 = arith.constant 0 : i32
    return %c0_i32, %c0_i32_0 : i32, i32
  }
  func.func @transform_15(%arg0: i32) -> (i32, i32) {
    %c0_i32 = arith.constant 0 : i32
    %c0_i32_0 = arith.constant 0 : i32
    %c0_i32_1 = arith.constant 0 : i32
    return %c0_i32, %c0_i32_0 : i32, i32
  }
  func.func @transform_16(%arg0: i32) -> (i32, i32) {
    %c0_i32 = arith.constant 0 : i32
    %c0_i32_0 = arith.constant 0 : i32
    %c0_i32_1 = arith.constant 0 : i32
    return %c0_i32, %c0_i32_0 : i32, i32
  }
  func.func @transform_17(%arg0: i32) -> (i32, i32) {
    %c0_i32 = arith.constant 0 : i32
    %c0_i32_0 = arith.constant 0 : i32
    %c0_i32_1 = arith.constant 0 : i32
    return %c0_i32, %c0_i32_0 : i32, i32
  }
  func.func @transform_18(%arg0: i32) -> (i32, i32) {
    %c0_i32 = arith.constant 0 : i32
    %c0_i32_0 = arith.constant 0 : i32
    %c0_i32_1 = arith.constant 0 : i32
    return %c0_i32, %c0_i32_0 : i32, i32
  }
  func.func @transform_19(%arg0: i32) -> (i32, i32) {
    %c0_i32 = arith.constant 0 : i32
    %c0_i32_0 = arith.constant 0 : i32
    %c0_i32_1 = arith.constant 0 : i32
    return %c0_i32, %c0_i32_0 : i32, i32
  }
  func.func @transform_20(%arg0: i32) -> (i32, i32, i32) {
    %c0_i32 = arith.constant 0 : i32
    %c0_i32_0 = arith.constant 0 : i32
    %c0_i32_1 = arith.constant 0 : i32
    return %arg0, %c0_i32, %c0_i32_0 : i32, i32, i32
  }
}

</mosaic_0001>

<llo_original>
// kernel: tpu_custom_call.1
$region0: #{tpu_custom_call.1}
  #allocation0 [shape = 'u32[]', space=smem, size = 0x4, offset = 0x4, fixed_abs, tag = 'smem constant byte address 0x4 - core index']
  #allocation1 [shape = 'u32[72,128]{1,0:T(1,128)}', space=vmem, size = 0x9000, scoped, tag = 'internal scratch']
  %s0 = inlined_call_operand.vmem [shape: f32[2,32,128], index: 0, kind: input, shape index: {}]
  %s1 = inlined_call_operand.vmem [shape: f32[2,32,128], index: 1, kind: input, shape index: {}]
  %s2 = inlined_call_operand.vmem [shape: f32[128,128], index: 2, kind: input, shape index: {}]
  %s3 = inlined_call_operand.vmem [shape: f32[128,128], index: 3, kind: input, shape index: {}]
  %s4 = inlined_call_operand.vmem [shape: f32[96,32], index: 4, kind: input, shape index: {}]
  %s5 = inlined_call_operand.vmem [shape: f32[96,1], index: 5, kind: input, shape index: {}]
  %s6 = inlined_call_operand.vmem [shape: f32[32,32], index: 6, kind: input, shape index: {}]
  %s7 = inlined_call_operand.vmem [shape: f32[32,1], index: 7, kind: input, shape index: {}]
  %s8 = inlined_call_operand.vmem [shape: f32[96,32], index: 8, kind: input, shape index: {}]
  %s9 = inlined_call_operand.vmem [shape: f32[96,1], index: 9, kind: input, shape index: {}]
  %s10 = inlined_call_operand.vmem [shape: f32[32,32], index: 10, kind: input, shape index: {}]
  %s11 = inlined_call_operand.vmem [shape: f32[32,1], index: 11, kind: input, shape index: {}]
  %s12 = inlined_call_operand.vmem [shape: f32[64,32], index: 12, kind: input, shape index: {}]
  %s13 = inlined_call_operand.vmem [shape: f32[64,1], index: 13, kind: input, shape index: {}]
  %s14 = inlined_call_operand.vmem [shape: f32[32,64], index: 14, kind: input, shape index: {}]
  %s15 = inlined_call_operand.vmem [shape: f32[32,1], index: 15, kind: input, shape index: {}]
  %s16 = inlined_call_operand.vmem [shape: f32[32,1], index: 16, kind: input, shape index: {}]
  %s17 = inlined_call_operand.vmem [shape: f32[32,1], index: 17, kind: input, shape index: {}]
  %s18 = inlined_call_operand.vmem [shape: f32[32,1], index: 18, kind: input, shape index: {}]
  %s19 = inlined_call_operand.vmem [shape: f32[32,1], index: 19, kind: input, shape index: {}]
  %s20 = inlined_call_operand.hbm [shape: f32[2,32,128], index: 20, kind: output, shape index: {}]
  %s21 = sld [smem:[#allocation0]]
  $region90: #{tpu_custom_call.1} parent=0
    _
  %s23 = ssub.s32 1, %s21
  %s24 = scalar_select 0, %s23, %s21
  $region1: #{tpu_custom_call.1} parent=0
    #allocation2 [shape = 'u8[32768]{0}', space=vmem, size = 0x8000, scoped, tag = 'output window, operand 0, single buffered']
    #allocation3 [shape = 's32[1]{0}', space=sflag, size = 0x4, scoped, tag = 'scoped memory for tpu_custom_call.1']
    %25 = vsyncpa [#allocation3], 0
    // Predicated region
    $region2: #{tpu_custom_call.1} parent=1 // pred_check
      _
    $region3: #{tpu_custom_call.1} parent=1 // pred_check_branch
      %27 = sbr.rel (0) target = $region5
    $region4: #{tpu_custom_call.1} parent=1 // pred_region
      _
    $region5: #{tpu_custom_call.1} parent=1 // pred_fallthru
      _
    // Predicated region
    $region6: #{tpu_custom_call.1} parent=1 // pred_check
      _
    $region7: #{tpu_custom_call.1} parent=1 // pred_check_branch
      %29 = sbr.rel (0) target = $region9
    $region8: #{tpu_custom_call.1} parent=1 // pred_region
      _
    $region9: #{tpu_custom_call.1} parent=1 // pred_fallthru
      _
    // Predicated region
    $region10: #{tpu_custom_call.1} parent=1 // pred_check
      _
    $region11: #{tpu_custom_call.1} parent=1 // pred_check_branch
      %31 = sbr.rel (0) target = $region13
    $region12: #{tpu_custom_call.1} parent=1 // pred_region
      _
    $region13: #{tpu_custom_call.1} parent=1 // pred_fallthru
      _
    // Predicated region
    $region14: #{tpu_custom_call.1} parent=1 // pred_check
      _
    $region15: #{tpu_custom_call.1} parent=1 // pred_check_branch
      %33 = sbr.rel (0) target = $region17
    $region16: #{tpu_custom_call.1} parent=1 // pred_region
      _
    $region17: #{tpu_custom_call.1} parent=1 // pred_fallthru
      _
    // Predicated region
    $region18: #{tpu_custom_call.1} parent=1 // pred_check
      _
    $region19: #{tpu_custom_call.1} parent=1 // pred_check_branch
      %35 = sbr.rel (0) target = $region21
    $region20: #{tpu_custom_call.1} parent=1 // pred_region
      _
    $region21: #{tpu_custom_call.1} parent=1 // pred_fallthru
      _
    // Predicated region
    $region22: #{tpu_custom_call.1} parent=1 // pred_check
      _
    $region23: #{tpu_custom_call.1} parent=1 // pred_check_branch
      %37 = sbr.rel (0) target = $region25
    $region24: #{tpu_custom_call.1} parent=1 // pred_region
      _
    $region25: #{tpu_custom_call.1} parent=1 // pred_fallthru
      _
    // Predicated region
    $region26: #{tpu_custom_call.1} parent=1 // pred_check
      _
    $region27: #{tpu_custom_call.1} parent=1 // pred_check_branch
      %39 = sbr.rel (0) target = $region29
    $region28: #{tpu_custom_call.1} parent=1 // pred_region
      _
    $region29: #{tpu_custom_call.1} parent=1 // pred_fallthru
      _
    // Predicated region
    $region30: #{tpu_custom_call.1} parent=1 // pred_check
      _
    $region31: #{tpu_custom_call.1} parent=1 // pred_check_branch
      %41 = sbr.rel (0) target = $region33
    $region32: #{tpu_custom_call.1} parent=1 // pred_region
      _
    $region33: #{tpu_custom_call.1} parent=1 // pred_fallthru
      _
    // Predicated region
    $region34: #{tpu_custom_call.1} parent=1 // pred_check
      _
    $region35: #{tpu_custom_call.1} parent=1 // pred_check_branch
      %43 = sbr.rel (0) target = $region37
    $region36: #{tpu_custom_call.1} parent=1 // pred_region
      _
    $region37: #{tpu_custom_call.1} parent=1 // pred_fallthru
      _
    // Predicated region
    $region38: #{tpu_custom_call.1} parent=1 // pred_check
      _
    $region39: #{tpu_custom_call.1} parent=1 // pred_check_branch
      %45 = sbr.rel (0) target = $region41
    $region40: #{tpu_custom_call.1} parent=1 // pred_region
      _
    $region41: #{tpu_custom_call.1} parent=1 // pred_fallthru
      _
    // Predicated region
    $region42: #{tpu_custom_call.1} parent=1 // pred_check
      _
    $region43: #{tpu_custom_call.1} parent=1 // pred_check_branch
      %47 = sbr.rel (0) target = $region45
    $region44: #{tpu_custom_call.1} parent=1 // pred_region
      _
    $region45: #{tpu_custom_call.1} parent=1 // pred_fallthru
      _
    // Predicated region
    $region46: #{tpu_custom_call.1} parent=1 // pred_check
      _
    $region47: #{tpu_custom_call.1} parent=1 // pred_check_branch
      %49 = sbr.rel (0) target = $region49
    $region48: #{tpu_custom_call.1} parent=1 // pred_region
      _
    $region49: #{tpu_custom_call.1} parent=1 // pred_fallthru
      _
    // Predicated region
    $region50: #{tpu_custom_call.1} parent=1 // pred_check
      _
    $region51: #{tpu_custom_call.1} parent=1 // pred_check_branch
      %51 = sbr.rel (0) target = $region53
    $region52: #{tpu_custom_call.1} parent=1 // pred_region
      _
    $region53: #{tpu_custom_call.1} parent=1 // pred_fallthru
      _
    // Predicated region
    $region54: #{tpu_custom_call.1} parent=1 // pred_check
      _
    $region55: #{tpu_custom_call.1} parent=1 // pred_check_branch
      %53 = sbr.rel (0) target = $region57
    $region56: #{tpu_custom_call.1} parent=1 // pred_region
      _
    $region57: #{tpu_custom_call.1} parent=1 // pred_fallthru
      _
    // Predicated region
    $region58: #{tpu_custom_call.1} parent=1 // pred_check
      _
    $region59: #{tpu_custom_call.1} parent=1 // pred_check_branch
      %55 = sbr.rel (0) target = $region61
    $region60: #{tpu_custom_call.1} parent=1 // pred_region
      _
    $region61: #{tpu_custom_call.1} parent=1 // pred_fallthru
      _
    // Predicated region
    $region62: #{tpu_custom_call.1} parent=1 // pred_check
      _
    $region63: #{tpu_custom_call.1} parent=1 // pred_check_branch
      %57 = sbr.rel (0) target = $region65
    $region64: #{tpu_custom_call.1} parent=1 // pred_region
      _
    $region65: #{tpu_custom_call.1} parent=1 // pred_fallthru
      _
    // Predicated region
    $region66: #{tpu_custom_call.1} parent=1 // pred_check
      _
    $region67: #{tpu_custom_call.1} parent=1 // pred_check_branch
      %59 = sbr.rel (0) target = $region69
    $region68: #{tpu_custom_call.1} parent=1 // pred_region
      _
    $region69: #{tpu_custom_call.1} parent=1 // pred_fallthru
      _
    // Predicated region
    $region70: #{tpu_custom_call.1} parent=1 // pred_check
      _
    $region71: #{tpu_custom_call.1} parent=1 // pred_check_branch
      %61 = sbr.rel (0) target = $region73
    $region72: #{tpu_custom_call.1} parent=1 // pred_region
      _
    $region73: #{tpu_custom_call.1} parent=1 // pred_fallthru
      _
    // Predicated region
    $region74: #{tpu_custom_call.1} parent=1 // pred_check
      _
    $region75: #{tpu_custom_call.1} parent=1 // pred_check_branch
      %63 = sbr.rel (0) target = $region77
    $region76: #{tpu_custom_call.1} parent=1 // pred_region
      _
    $region77: #{tpu_custom_call.1} parent=1 // pred_fallthru
      _
    // Predicated region
    $region78: #{tpu_custom_call.1} parent=1 // pred_check
      _
    $region79: #{tpu_custom_call.1} parent=1 // pred_check_branch
      %65 = sbr.rel (0) target = $region81
    $region80: #{tpu_custom_call.1} parent=1 // pred_region
      _
    $region81: #{tpu_custom_call.1} parent=1 // pred_fallthru
      _
    %v66 = vld [vmem:[%s2] sm:$0xff]
    %v67 = vld [vmem:[%s2 + $0x8] sm:$0xff]
    %v68 = vld [vmem:[%s2 + $0x10] sm:$0xff]
    %v69 = vld [vmem:[%s2 + $0x18] sm:$0xff]
    %v70 = vld [vmem:[%s2 + $0x20] sm:$0xff]
    %v71 = vld [vmem:[%s2 + $0x28] sm:$0xff]
    %v72 = vld [vmem:[%s2 + $0x30] sm:$0xff]
    %v73 = vld [vmem:[%s2 + $0x38] sm:$0xff]
    %v74 = vld [vmem:[%s2 + $0x40] sm:$0xff]
    %v75 = vld [vmem:[%s2 + $0x48] sm:$0xff]
    %v76 = vld [vmem:[%s2 + $0x50] sm:$0xff]
    %v77 = vld [vmem:[%s2 + $0x58] sm:$0xff]
    %v78 = vld [vmem:[%s2 + $0x60] sm:$0xff]
    %v79 = vld [vmem:[%s2 + $0x68] sm:$0xff]
    %v80 = vld [vmem:[%s2 + $0x70] sm:$0xff]
    %v81 = vld [vmem:[%s2 + $0x78] sm:$0xff]
    %v82 = vld [vmem:[%s3] sm:$0xff]
    %v83 = vld [vmem:[%s3 + $0x8] sm:$0xff]
    %v84 = vld [vmem:[%s3 + $0x10] sm:$0xff]
    %v85 = vld [vmem:[%s3 + $0x18] sm:$0xff]
    %v86 = vld [vmem:[%s3 + $0x20] sm:$0xff]
    %v87 = vld [vmem:[%s3 + $0x28] sm:$0xff]
    %v88 = vld [vmem:[%s3 + $0x30] sm:$0xff]
    %v89 = vld [vmem:[%s3 + $0x38] sm:$0xff]
    %v90 = vld [vmem:[%s3 + $0x40] sm:$0xff]
    %v91 = vld [vmem:[%s3 + $0x48] sm:$0xff]
    %v92 = vld [vmem:[%s3 + $0x50] sm:$0xff]
    %v93 = vld [vmem:[%s3 + $0x58] sm:$0xff]
    %v94 = vld [vmem:[%s3 + $0x60] sm:$0xff]
    %v95 = vld [vmem:[%s3 + $0x68] sm:$0xff]
    %v96 = vld [vmem:[%s3 + $0x70] sm:$0xff]
    %v97 = vld [vmem:[%s3 + $0x78] sm:$0xff]
    %v98 = vld [vmem:[%s4] sm:$0xff]
    %v99 = vld [vmem:[%s4 + $0x8] sm:$0xff]
    %v100 = vld [vmem:[%s4 + $0x10] sm:$0xff]
    %v101 = vld [vmem:[%s4 + $0x18] sm:$0xff]
    %v102 = vld [vmem:[%s4 + $0x20] sm:$0xff]
    %v103 = vld [vmem:[%s4 + $0x28] sm:$0xff]
    %v104 = vld [vmem:[%s4 + $0x30] sm:$0xff]
    %v105 = vld [vmem:[%s4 + $0x38] sm:$0xff]
    %v106 = vld [vmem:[%s4 + $0x40] sm:$0xff]
    %v107 = vld [vmem:[%s4 + $0x48] sm:$0xff]
    %v108 = vld [vmem:[%s4 + $0x50] sm:$0xff]
    %v109 = vld [vmem:[%s4 + $0x58] sm:$0xff]
    %v110 = vld [vmem:[%s5] sm:$0xff]
    %v111 = vld [vmem:[%s5 + $0x8] sm:$0xff]
    %v112 = vld [vmem:[%s5 + $0x10] sm:$0xff]
    %v113 = vld [vmem:[%s5 + $0x18] sm:$0xff]
    %v114 = vld [vmem:[%s5 + $0x20] sm:$0xff]
    %v115 = vld [vmem:[%s5 + $0x28] sm:$0xff]
    %v116 = vld [vmem:[%s5 + $0x30] sm:$0xff]
    %v117 = vld [vmem:[%s5 + $0x38] sm:$0xff]
    %v118 = vld [vmem:[%s5 + $0x40] sm:$0xff]
    %v119 = vld [vmem:[%s5 + $0x48] sm:$0xff]
    %v120 = vld [vmem:[%s5 + $0x50] sm:$0xff]
    %v121 = vld [vmem:[%s5 + $0x58] sm:$0xff]
    %v122 = vld [vmem:[%s6] sm:$0xff]
    %v123 = vld [vmem:[%s6 + $0x8] sm:$0xff]
    %v124 = vld [vmem:[%s6 + $0x10] sm:$0xff]
    %v125 = vld [vmem:[%s6 + $0x18] sm:$0xff]
    %v126 = vld [vmem:[%s7] sm:$0xff]
    %v127 = vld [vmem:[%s7 + $0x8] sm:$0xff]
    %v128 = vld [vmem:[%s7 + $0x10] sm:$0xff]
    %v129 = vld [vmem:[%s7 + $0x18] sm:$0xff]
    %v130 = vld [vmem:[%s8] sm:$0xff]
    %v131 = vld [vmem:[%s8 + $0x8] sm:$0xff]
    %v132 = vld [vmem:[%s8 + $0x10] sm:$0xff]
    %v133 = vld [vmem:[%s8 + $0x18] sm:$0xff]
    %v134 = vld [vmem:[%s8 + $0x20] sm:$0xff]
    %v135 = vld [vmem:[%s8 + $0x28] sm:$0xff]
    %v136 = vld [vmem:[%s8 + $0x30] sm:$0xff]
    %v137 = vld [vmem:[%s8 + $0x38] sm:$0xff]
    %v138 = vld [vmem:[%s8 + $0x40] sm:$0xff]
    %v139 = vld [vmem:[%s8 + $0x48] sm:$0xff]
    %v140 = vld [vmem:[%s8 + $0x50] sm:$0xff]
    %v141 = vld [vmem:[%s8 + $0x58] sm:$0xff]
    %v142 = vld [vmem:[%s9] sm:$0xff]
    %v143 = vld [vmem:[%s9 + $0x8] sm:$0xff]
    %v144 = vld [vmem:[%s9 + $0x10] sm:$0xff]
    %v145 = vld [vmem:[%s9 + $0x18] sm:$0xff]
    %v146 = vld [vmem:[%s9 + $0x20] sm:$0xff]
    %v147 = vld [vmem:[%s9 + $0x28] sm:$0xff]
    %v148 = vld [vmem:[%s9 + $0x30] sm:$0xff]
    %v149 = vld [vmem:[%s9 + $0x38] sm:$0xff]
    %v150 = vld [vmem:[%s9 + $0x40] sm:$0xff]
    %v151 = vld [vmem:[%s9 + $0x48] sm:$0xff]
    %v152 = vld [vmem:[%s9 + $0x50] sm:$0xff]
    %v153 = vld [vmem:[%s9 + $0x58] sm:$0xff]
    %v154 = vld [vmem:[%s10] sm:$0xff]
    %v155 = vld [vmem:[%s10 + $0x8] sm:$0xff]
    %v156 = vld [vmem:[%s10 + $0x10] sm:$0xff]
    %v157 = vld [vmem:[%s10 + $0x18] sm:$0xff]
    %v158 = vld [vmem:[%s11] sm:$0xff]
    %v159 = vld [vmem:[%s11 + $0x8] sm:$0xff]
    %v160 = vld [vmem:[%s11 + $0x10] sm:$0xff]
    %v161 = vld [vmem:[%s11 + $0x18] sm:$0xff]
    %v162 = vld [vmem:[%s12] sm:$0xff]
    %v163 = vld [vmem:[%s12 + $0x8] sm:$0xff]
    %v164 = vld [vmem:[%s12 + $0x10] sm:$0xff]
    %v165 = vld [vmem:[%s12 + $0x18] sm:$0xff]
    %v166 = vld [vmem:[%s12 + $0x20] sm:$0xff]
    %v167 = vld [vmem:[%s12 + $0x28] sm:$0xff]
    %v168 = vld [vmem:[%s12 + $0x30] sm:$0xff]
    %v169 = vld [vmem:[%s12 + $0x38] sm:$0xff]
    %v170 = vld [vmem:[%s13] sm:$0xff]
    %v171 = vld [vmem:[%s13 + $0x8] sm:$0xff]
    %v172 = vld [vmem:[%s13 + $0x10] sm:$0xff]
    %v173 = vld [vmem:[%s13 + $0x18] sm:$0xff]
    %v174 = vld [vmem:[%s13 + $0x20] sm:$0xff]
    %v175 = vld [vmem:[%s13 + $0x28] sm:$0xff]
    %v176 = vld [vmem:[%s13 + $0x30] sm:$0xff]
    %v177 = vld [vmem:[%s13 + $0x38] sm:$0xff]
    %v178 = vld [vmem:[%s14] sm:$0xff]
    %v179 = vld [vmem:[%s14 + $0x8] sm:$0xff]
    %v180 = vld [vmem:[%s14 + $0x10] sm:$0xff]
    %v181 = vld [vmem:[%s14 + $0x18] sm:$0xff]
    %v182 = vld [vmem:[%s15] sm:$0xff]
    %v183 = vld [vmem:[%s15 + $0x8] sm:$0xff]
    %v184 = vld [vmem:[%s15 + $0x10] sm:$0xff]
    %v185 = vld [vmem:[%s15 + $0x18] sm:$0xff]
    %v186 = vld [vmem:[%s16] sm:$0xff]
    %v187 = vld [vmem:[%s16 + $0x8] sm:$0xff]
    %v188 = vld [vmem:[%s16 + $0x10] sm:$0xff]
    %v189 = vld [vmem:[%s16 + $0x18] sm:$0xff]
    %v190 = vld [vmem:[%s17] sm:$0xff]
    %v191 = vld [vmem:[%s17 + $0x8] sm:$0xff]
    %v192 = vld [vmem:[%s17 + $0x10] sm:$0xff]
    %v193 = vld [vmem:[%s17 + $0x18] sm:$0xff]
    %v194 = vld [vmem:[%s18] sm:$0xff]
    %v195 = vld [vmem:[%s18 + $0x8] sm:$0xff]
    %v196 = vld [vmem:[%s18 + $0x10] sm:$0xff]
    %v197 = vld [vmem:[%s18 + $0x18] sm:$0xff]
    %v198 = vld [vmem:[%s19] sm:$0xff]
    %v199 = vld [vmem:[%s19 + $0x8] sm:$0xff]
    %v200 = vld [vmem:[%s19 + $0x10] sm:$0xff]
    %v201 = vld [vmem:[%s19 + $0x18] sm:$0xff]
    %v202 = vld [vmem:[%s0] sm:$0xff]
    %v203 = vld [vmem:[%s0 + $0x8] sm:$0xff]
    %v204 = vld [vmem:[%s0 + $0x10] sm:$0xff]
    %v205 = vld [vmem:[%s0 + $0x18] sm:$0xff]
    %v206 = vld [vmem:[%s1] sm:$0xff]
    %v207 = vld [vmem:[%s1 + $0x8] sm:$0xff]
    %v208 = vld [vmem:[%s1 + $0x10] sm:$0xff]
    %v209 = vld [vmem:[%s1 + $0x18] sm:$0xff]
    %v210 = vadd.f32 %v202, %v206
    %v211 = vadd.f32 %v203, %v207
    %v212 = vadd.f32 %v204, %v208
    %v213 = vadd.f32 %v205, %v209
    %215 = vset.pattern.permute.xlu0 0
    %216 = vperm.xlu0 %215, %v110
    %v217 = vpop.permute.xlu0 %216
    %220 = vset.pattern.permute.xlu0 0
    %221 = vperm.xlu0 %220, %v111
    %v222 = vpop.permute.xlu0 %221
    %225 = vset.pattern.permute.xlu0 0
    %226 = vperm.xlu0 %225, %v112
    %v227 = vpop.permute.xlu0 %226
    %230 = vset.pattern.permute.xlu0 0
    %231 = vperm.xlu0 %230, %v113
    %v232 = vpop.permute.xlu0 %231
    %235 = vset.pattern.permute.xlu0 0
    %236 = vperm.xlu0 %235, %v114
    %v237 = vpop.permute.xlu0 %236
    %240 = vset.pattern.permute.xlu0 0
    %241 = vperm.xlu0 %240, %v115
    %v242 = vpop.permute.xlu0 %241
    %245 = vset.pattern.permute.xlu0 0
    %246 = vperm.xlu0 %245, %v116
    %v247 = vpop.permute.xlu0 %246
    %250 = vset.pattern.permute.xlu0 0
    %251 = vperm.xlu0 %250, %v117
    %v252 = vpop.permute.xlu0 %251
    %vm254 = vcmask 261120
    %v256 = vsel %vm254, %v98, 0
    %v259 = vsel %vm254, %v99, 0
    %v262 = vsel %vm254, %v100, 0
    %v265 = vsel %vm254, %v101, 0
    %v268 = vsel %vm254, %v102, 0
    %v271 = vsel %vm254, %v103, 0
    %v274 = vsel %vm254, %v104, 0
    %v277 = vsel %vm254, %v105, 0
    %279 = vmatpush.msra.mxu0 0.0
    %280 = vmatpush.msra.mxu0 0.0
    %281 = vmatpush.msra.mxu0 0.0
    %282 = vmatpush.msra.mxu0 0.0
    %283 = vmatpush.msra.mxu0 0.0
    %284 = vmatpush.msra.mxu0 0.0
    %285 = vmatpush.msra.mxu0 0.0
    %286 = vmatpush.msra.mxu0 0.0
    %287 = vmatpush.msra.mxu0 0.0
    %288 = vmatpush.msra.mxu0 0.0
    %289 = vmatpush.msra.mxu0 0.0
    %290 = vmatpush.msra.mxu0 0.0
    %291 = vmatpush.msra.mxu0 %v213
    %292 = vmatpush.msra.mxu0 %v212
    %293 = vmatpush.msra.mxu0 %v211
    %294 = vmatpush.msra.mxu0 %v210
    %295 = vmatmul.f32.gmra.mxu0 %v256
    %v296 = vpop.f32.mrf.mxu0
    %v297 = vadd.f32 %v217, %v296
    %298 = vmatmul.f32.gmra.mxu0 %v259
    %v299 = vpop.f32.mrf.mxu0
    %v300 = vadd.f32 %v222, %v299
    %301 = vmatmul.f32.gmra.mxu0 %v262
    %v302 = vpop.f32.mrf.mxu0
    %v303 = vadd.f32 %v227, %v302
    %304 = vmatmul.f32.gmra.mxu0 %v265
    %v305 = vpop.f32.mrf.mxu0
    %v306 = vadd.f32 %v232, %v305
    %307 = vmatmul.f32.gmra.mxu0 %v268
    %v308 = vpop.f32.mrf.mxu0
    %v309 = vadd.f32 %v237, %v308
    %310 = vmatmul.f32.gmra.mxu0 %v271
    %v311 = vpop.f32.mrf.mxu0
    %v312 = vadd.f32 %v242, %v311
    %313 = vmatmul.f32.gmra.mxu0 %v274
    %v314 = vpop.f32.mrf.mxu0
    %v315 = vadd.f32 %v247, %v314
    %316 = vmatmul.f32.gmra.mxu0 %v277
    %v317 = vpop.f32.mrf.mxu0
    %v318 = vadd.f32 %v252, %v317
    %319 = vdwg.mxu0
    %321 = vset.pattern.permute.xlu0 0
    %322 = vperm.xlu0 %321, %v118
    %v323 = vpop.permute.xlu0 %322
    %326 = vset.pattern.permute.xlu0 0
    %327 = vperm.xlu0 %326, %v119
    %v328 = vpop.permute.xlu0 %327
    %331 = vset.pattern.permute.xlu0 0
    %332 = vperm.xlu0 %331, %v120
    %v333 = vpop.permute.xlu0 %332
    %336 = vset.pattern.permute.xlu0 0
    %337 = vperm.xlu0 %336, %v121
    %v338 = vpop.permute.xlu0 %337
    %v341 = vsel %vm254, %v106, 0
    %v344 = vsel %vm254, %v107, 0
    %v347 = vsel %vm254, %v108, 0
    %v350 = vsel %vm254, %v109, 0
    %352 = vmatpush.msra.mxu0 0.0
    %353 = vmatpush.msra.mxu0 0.0
    %354 = vmatpush.msra.mxu0 0.0
    %355 = vmatpush.msra.mxu0 0.0
    %356 = vmatpush.msra.mxu0 0.0
    %357 = vmatpush.msra.mxu0 0.0
    %358 = vmatpush.msra.mxu0 0.0
    %359 = vmatpush.msra.mxu0 0.0
    %360 = vmatpush.msra.mxu0 0.0
    %361 = vmatpush.msra.mxu0 0.0
    %362 = vmatpush.msra.mxu0 0.0
    %363 = vmatpush.msra.mxu0 0.0
    %364 = vmatpush.msra.mxu0 %v205
    %365 = vmatpush.msra.mxu0 %v204
    %366 = vmatpush.msra.mxu0 %v203
    %367 = vmatpush.msra.mxu0 %v202
    %368 = vmatmul.f32.gmra.mxu0 %v341
    %v369 = vpop.f32.mrf.mxu0
    %v370 = vadd.f32 %v323, %v369
    %371 = vmatmul.f32.gmra.mxu0 %v344
    %v372 = vpop.f32.mrf.mxu0
    %v373 = vadd.f32 %v328, %v372
    %374 = vmatmul.f32.gmra.mxu0 %v347
    %v375 = vpop.f32.mrf.mxu0
    %v376 = vadd.f32 %v333, %v375
    %377 = vmatmul.f32.gmra.mxu0 %v350
    %v378 = vpop.f32.mrf.mxu0
    %v379 = vadd.f32 %v338, %v378
    %380 = vdwg.mxu0
    %v381 = vmul.f32 %v297, 0.35355338
    %v382 = vmul.f32 %v300, 0.35355338
    %v383 = vmul.f32 %v303, 0.35355338
    %v384 = vmul.f32 %v306, 0.35355338
    %385 = vxpose.xlu0.b32.start [1/16] %v381, 128
    %386 = vxpose.xlu0.b32.cont [2/16] 0.0, 128
    %387 = vxpose.xlu0.b32.cont [3/16] 0.0, 128
    %388 = vxpose.xlu0.b32.cont [4/16] 0.0, 128
    %389 = vxpose.xlu0.b32.cont [5/16] 0.0, 128
    %390 = vxpose.xlu0.b32.cont [6/16] 0.0, 128
    %391 = vxpose.xlu0.b32.cont [7/16] 0.0, 128
    %392 = vxpose.xlu0.b32.cont [8/16] 0.0, 128
    %393 = vxpose.xlu0.b32.cont [9/16] 0.0, 128
    %394 = vxpose.xlu0.b32.cont [10/16] 0.0, 128
    %395 = vxpose.xlu0.b32.cont [11/16] 0.0, 128
    %396 = vxpose.xlu0.b32.cont [12/16] 0.0, 128
    %397 = vxpose.xlu0.b32.cont [13/16] 0.0, 128
    %398 = vxpose.xlu0.b32.cont [14/16] 0.0, 128
    %399 = vxpose.xlu0.b32.cont [15/16] 0.0, 128
    %400 = vxpose.xlu0.b32.end [16/16] 0.0, 128
    %v401 = vpop.trf.xlu0
    %v402 = vpop.trf.xlu0
    %v403 = vpop.trf.xlu0
    %v404 = vpop.trf.xlu0
    %v405 = vpop.trf.xlu0
    %v406 = vpop.trf.xlu0
    %v407 = vpop.trf.xlu0
    %v408 = vpop.trf.xlu0
    %v409 = vpop.trf.xlu0
    %v410 = vpop.trf.xlu0
    %v411 = vpop.trf.xlu0
    %v412 = vpop.trf.xlu0
    %v413 = vpop.trf.xlu0
    %v414 = vpop.trf.xlu0
    %v415 = vpop.trf.xlu0
    %v416 = vpop.trf.xlu0
    %vm417 = vcmask 64512
    %v419 = vsel %vm417, %v401, 0
    %v422 = vsel %vm417, %v402, 0
    %v425 = vsel %vm417, %v403, 0
    %v428 = vsel %vm417, %v404, 0
    %v431 = vsel %vm417, %v405, 0
    %v434 = vsel %vm417, %v406, 0
    %v437 = vsel %vm417, %v407, 0
    %v440 = vsel %vm417, %v408, 0
    %v443 = vsel %vm417, %v409, 0
    %v446 = vsel %vm417, %v410, 0
    %v449 = vsel %vm417, %v411, 0
    %v452 = vsel %vm417, %v412, 0
    %v455 = vsel %vm417, %v413, 0
    %v458 = vsel %vm417, %v414, 0
    %v461 = vsel %vm417, %v415, 0
    %v464 = vsel %vm417, %v416, 0
    %466 = vmatpush.msra.mxu0 0.0
    %467 = vmatpush.msra.mxu0 0.0
    %468 = vmatpush.msra.mxu0 0.0
    %469 = vmatpush.msra.mxu0 0.0
    %470 = vmatpush.msra.mxu0 0.0
    %471 = vmatpush.msra.mxu0 0.0
    %472 = vmatpush.msra.mxu0 0.0
    %473 = vmatpush.msra.mxu0 0.0
    %474 = vmatpush.msra.mxu0 0.0
    %475 = vmatpush.msra.mxu0 0.0
    %476 = vmatpush.msra.mxu0 0.0
    %477 = vmatpush.msra.mxu0 0.0
    %478 = vmatpush.msra.mxu0 0.0
    %479 = vmatpush.msra.mxu0 0.0
    %480 = vmatpush.msra.mxu0 0.0
    %481 = vmatpush.msra.mxu0 %v309
    %482 = vmatmul.f32.gmra.mxu0 %v419
    %v483 = vpop.f32.mrf.mxu0
    %v484 = vadd.f32 %v66, %v483
    %485 = vmatmul.f32.gmra.mxu0 %v422
    %v486 = vpop.f32.mrf.mxu0
    %v487 = vadd.f32 %v67, %v486
    %488 = vmatmul.f32.gmra.mxu0 %v425
    %v489 = vpop.f32.mrf.mxu0
    %v490 = vadd.f32 %v68, %v489
    %491 = vmatmul.f32.gmra.mxu0 %v428
    %v492 = vpop.f32.mrf.mxu0
    %v493 = vadd.f32 %v69, %v492
    %494 = vmatmul.f32.gmra.mxu0 %v431
    %v495 = vpop.f32.mrf.mxu0
    %v496 = vadd.f32 %v70, %v495
    %497 = vmatmul.f32.gmra.mxu0 %v434
    %v498 = vpop.f32.mrf.mxu0
    %v499 = vadd.f32 %v71, %v498
    %500 = vmatmul.f32.gmra.mxu0 %v437
    %v501 = vpop.f32.mrf.mxu0
    %v502 = vadd.f32 %v72, %v501
    %503 = vmatmul.f32.gmra.mxu0 %v440
    %v504 = vpop.f32.mrf.mxu0
    %v505 = vadd.f32 %v73, %v504
    %506 = vmatmul.f32.gmra.mxu0 %v443
    %v507 = vpop.f32.mrf.mxu0
    %v508 = vadd.f32 %v74, %v507
    %509 = vmatmul.f32.gmra.mxu0 %v446
    %v510 = vpop.f32.mrf.mxu0
    %v511 = vadd.f32 %v75, %v510
    %512 = vmatmul.f32.gmra.mxu0 %v449
    %v513 = vpop.f32.mrf.mxu0
    %v514 = vadd.f32 %v76, %v513
    %515 = vmatmul.f32.gmra.mxu0 %v452
    %v516 = vpop.f32.mrf.mxu0
    %v517 = vadd.f32 %v77, %v516
    %518 = vmatmul.f32.gmra.mxu0 %v455
    %v519 = vpop.f32.mrf.mxu0
    %v520 = vadd.f32 %v78, %v519
    %521 = vmatmul.f32.gmra.mxu0 %v458
    %v522 = vpop.f32.mrf.mxu0
    %v523 = vadd.f32 %v79, %v522
    %524 = vmatmul.f32.gmra.mxu0 %v461
    %v525 = vpop.f32.mrf.mxu0
    %v526 = vadd.f32 %v80, %v525
    %527 = vmatmul.f32.gmra.mxu0 %v464
    %v528 = vpop.f32.mrf.mxu0
    %v529 = vadd.f32 %v81, %v528
    %530 = vdwg.mxu0
    %531 = vmax.xlane.f32.xlu0 %v484
    %v532 = vpop.xlane.xlu0 %531
    %533 = vmax.xlane.f32.xlu0 %v487
    %v534 = vpop.xlane.xlu0 %533
    %535 = vmax.xlane.f32.xlu0 %v490
    %v536 = vpop.xlane.xlu0 %535
    %537 = vmax.xlane.f32.xlu0 %v493
    %v538 = vpop.xlane.xlu0 %537
    %539 = vmax.xlane.f32.xlu0 %v496
    %v540 = vpop.xlane.xlu0 %539
    %541 = vmax.xlane.f32.xlu0 %v499
    %v542 = vpop.xlane.xlu0 %541
    %543 = vmax.xlane.f32.xlu0 %v502
    %v544 = vpop.xlane.xlu0 %543
    %545 = vmax.xlane.f32.xlu0 %v505
    %v546 = vpop.xlane.xlu0 %545
    %547 = vmax.xlane.f32.xlu0 %v508
    %v548 = vpop.xlane.xlu0 %547
    %549 = vmax.xlane.f32.xlu0 %v511
    %v550 = vpop.xlane.xlu0 %549
    %551 = vmax.xlane.f32.xlu0 %v514
    %v552 = vpop.xlane.xlu0 %551
    %553 = vmax.xlane.f32.xlu0 %v517
    %v554 = vpop.xlane.xlu0 %553
    %555 = vmax.xlane.f32.xlu0 %v520
    %v556 = vpop.xlane.xlu0 %555
    %557 = vmax.xlane.f32.xlu0 %v523
    %v558 = vpop.xlane.xlu0 %557
    %559 = vmax.xlane.f32.xlu0 %v526
    %v560 = vpop.xlane.xlu0 %559
    %561 = vmax.xlane.f32.xlu0 %v529
    %v562 = vpop.xlane.xlu0 %561
    %v563 = vsub.f32 %v484, %v532
    %v564 = vsub.f32 %v487, %v534
    %v565 = vsub.f32 %v490, %v536
    %v566 = vsub.f32 %v493, %v538
    %v567 = vsub.f32 %v496, %v540
    %v568 = vsub.f32 %v499, %v542
    %v569 = vsub.f32 %v502, %v544
    %v570 = vsub.f32 %v505, %v546
    %v571 = vsub.f32 %v508, %v548
    %v572 = vsub.f32 %v511, %v550
    %v573 = vsub.f32 %v514, %v552
    %v574 = vsub.f32 %v517, %v554
    %v575 = vsub.f32 %v520, %v556
    %v576 = vsub.f32 %v523, %v558
    %v577 = vsub.f32 %v526, %v560
    %v578 = vsub.f32 %v529, %v562
    %v579 = vmul.f32 %v563, 1.442695
    %v580 = vpow.pop %v579
    %v581 = vmul.f32 %v564, 1.442695
    %v582 = vpow.pop %v581
    %v583 = vmul.f32 %v565, 1.442695
    %v584 = vpow.pop %v583
    %v585 = vmul.f32 %v566, 1.442695
    %v586 = vpow.pop %v585
    %v587 = vmul.f32 %v567, 1.442695
    %v588 = vpow.pop %v587
    %v589 = vmul.f32 %v568, 1.442695
    %v590 = vpow.pop %v589
    %v591 = vmul.f32 %v569, 1.442695
    %v592 = vpow.pop %v591
    %v593 = vmul.f32 %v570, 1.442695
    %v594 = vpow.pop %v593
    %v595 = vmul.f32 %v571, 1.442695
    %v596 = vpow.pop %v595
    %v597 = vmul.f32 %v572, 1.442695
    %v598 = vpow.pop %v597
    %v599 = vmul.f32 %v573, 1.442695
    %v600 = vpow.pop %v599
    %v601 = vmul.f32 %v574, 1.442695
    %v602 = vpow.pop %v601
    %v603 = vmul.f32 %v575, 1.442695
    %v604 = vpow.pop %v603
    %v605 = vmul.f32 %v576, 1.442695
    %v606 = vpow.pop %v605
    %v607 = vmul.f32 %v577, 1.442695
    %v608 = vpow.pop %v607
    %v609 = vmul.f32 %v578, 1.442695
    %v610 = vpow.pop %v609
    %611 = vadd.xlane.f32.xlu0 %v580
    %v612 = vpop.xlane.xlu0 %611
    %613 = vadd.xlane.f32.xlu0 %v582
    %v614 = vpop.xlane.xlu0 %613
    %615 = vadd.xlane.f32.xlu0 %v584
    %v616 = vpop.xlane.xlu0 %615
    %617 = vadd.xlane.f32.xlu0 %v586
    %v618 = vpop.xlane.xlu0 %617
    %619 = vadd.xlane.f32.xlu0 %v588
    %v620 = vpop.xlane.xlu0 %619
    %621 = vadd.xlane.f32.xlu0 %v590
    %v622 = vpop.xlane.xlu0 %621
    %623 = vadd.xlane.f32.xlu0 %v592
    %v624 = vpop.xlane.xlu0 %623
    %625 = vadd.xlane.f32.xlu0 %v594
    %v626 = vpop.xlane.xlu0 %625
    %627 = vadd.xlane.f32.xlu0 %v596
    %v628 = vpop.xlane.xlu0 %627
    %629 = vadd.xlane.f32.xlu0 %v598
    %v630 = vpop.xlane.xlu0 %629
    %631 = vadd.xlane.f32.xlu0 %v600
    %v632 = vpop.xlane.xlu0 %631
    %633 = vadd.xlane.f32.xlu0 %v602
    %v634 = vpop.xlane.xlu0 %633
    %635 = vadd.xlane.f32.xlu0 %v604
    %v636 = vpop.xlane.xlu0 %635
    %637 = vadd.xlane.f32.xlu0 %v606
    %v638 = vpop.xlane.xlu0 %637
    %639 = vadd.xlane.f32.xlu0 %v608
    %v640 = vpop.xlane.xlu0 %639
    %641 = vadd.xlane.f32.xlu0 %v610
    %v642 = vpop.xlane.xlu0 %641
    %v643 = vrcp.pop %v612
    %v644 = vrcp.pop %v614
    %v645 = vrcp.pop %v616
    %v646 = vrcp.pop %v618
    %v647 = vrcp.pop %v620
    %v648 = vrcp.pop %v622
    %v649 = vrcp.pop %v624
    %v650 = vrcp.pop %v626
    %v651 = vrcp.pop %v628
    %v652 = vrcp.pop %v630
    %v653 = vrcp.pop %v632
    %v654 = vrcp.pop %v634
    %v655 = vrcp.pop %v636
    %v656 = vrcp.pop %v638
    %v657 = vrcp.pop %v640
    %v658 = vrcp.pop %v642
    %v659 = vmul.f32 %v580, %v643
    %v660 = vmul.f32 %v582, %v644
    %v661 = vmul.f32 %v584, %v645
    %v662 = vmul.f32 %v586, %v646
    %v663 = vmul.f32 %v588, %v647
    %v664 = vmul.f32 %v590, %v648
    %v665 = vmul.f32 %v592, %v649
    %v666 = vmul.f32 %v594, %v650
    %v667 = vmul.f32 %v596, %v651
    %v668 = vmul.f32 %v598, %v652
    %v669 = vmul.f32 %v600, %v653
    %v670 = vmul.f32 %v602, %v654
    %v671 = vmul.f32 %v604, %v655
    %v672 = vmul.f32 %v606, %v656
    %v673 = vmul.f32 %v608, %v657
    %v674 = vmul.f32 %v610, %v658
    %675 = vmatpush.xpose.msra.mxu0 %v674
    %676 = vmatpush.xpose.msra.mxu0 %v673
    %677 = vmatpush.xpose.msra.mxu0 %v672
    %678 = vmatpush.xpose.msra.mxu0 %v671
    %679 = vmatpush.xpose.msra.mxu0 %v670
    %680 = vmatpush.xpose.msra.mxu0 %v669
    %681 = vmatpush.xpose.msra.mxu0 %v668
    %682 = vmatpush.xpose.msra.mxu0 %v667
    %683 = vmatpush.xpose.msra.mxu0 %v666
    %684 = vmatpush.xpose.msra.mxu0 %v665
    %685 = vmatpush.xpose.msra.mxu0 %v664
    %686 = vmatpush.xpose.msra.mxu0 %v663
    %687 = vmatpush.xpose.msra.mxu0 %v662
    %688 = vmatpush.xpose.msra.mxu0 %v661
    %689 = vmatpush.xpose.msra.mxu0 %v660
    %690 = vmatpush.xpose.msra.mxu0 %v659
    %691 = vmatmul.f32.gmra.mxu0 %v370
    %v692 = vpop.f32.mrf.mxu0
    %v693 = vadd.f32 0.0, %v692
    %694 = vdwg.mxu0
    %695 = vxpose.xlu0.b32.start [1/16] %v382, 128
    %696 = vxpose.xlu0.b32.cont [2/16] 0.0, 128
    %697 = vxpose.xlu0.b32.cont [3/16] 0.0, 128
    %698 = vxpose.xlu0.b32.cont [4/16] 0.0, 128
    %699 = vxpose.xlu0.b32.cont [5/16] 0.0, 128
    %700 = vxpose.xlu0.b32.cont [6/16] 0.0, 128
    %701 = vxpose.xlu0.b32.cont [7/16] 0.0, 128
    %702 = vxpose.xlu0.b32.cont [8/16] 0.0, 128
    %703 = vxpose.xlu0.b32.cont [9/16] 0.0, 128
    %704 = vxpose.xlu0.b32.cont [10/16] 0.0, 128
    %705 = vxpose.xlu0.b32.cont [11/16] 0.0, 128
    %706 = vxpose.xlu0.b32.cont [12/16] 0.0, 128
    %707 = vxpose.xlu0.b32.cont [13/16] 0.0, 128
    %708 = vxpose.xlu0.b32.cont [14/16] 0.0, 128
    %709 = vxpose.xlu0.b32.cont [15/16] 0.0, 128
    %710 = vxpose.xlu0.b32.end [16/16] 0.0, 128
    %v711 = vpop.trf.xlu0
    %v712 = vpop.trf.xlu0
    %v713 = vpop.trf.xlu0
    %v714 = vpop.trf.xlu0
    %v715 = vpop.trf.xlu0
    %v716 = vpop.trf.xlu0
    %v717 = vpop.trf.xlu0
    %v718 = vpop.trf.xlu0
    %v719 = vpop.trf.xlu0
    %v720 = vpop.trf.xlu0
    %v721 = vpop.trf.xlu0
    %v722 = vpop.trf.xlu0
    %v723 = vpop.trf.xlu0
    %v724 = vpop.trf.xlu0
    %v725 = vpop.trf.xlu0
    %v726 = vpop.trf.xlu0
    %v728 = vsel %vm417, %v711, 0
    %v731 = vsel %vm417, %v712, 0
    %v734 = vsel %vm417, %v713, 0
    %v737 = vsel %vm417, %v714, 0
    %v740 = vsel %vm417, %v715, 0
    %v743 = vsel %vm417, %v716, 0
    %v746 = vsel %vm417, %v717, 0
    %v749 = vsel %vm417, %v718, 0
    %v752 = vsel %vm417, %v719, 0
    %v755 = vsel %vm417, %v720, 0
    %v758 = vsel %vm417, %v721, 0
    %v761 = vsel %vm417, %v722, 0
    %v764 = vsel %vm417, %v723, 0
    %v767 = vsel %vm417, %v724, 0
    %v770 = vsel %vm417, %v725, 0
    %v773 = vsel %vm417, %v726, 0
    %775 = vmatpush.msra.mxu0 0.0
    %776 = vmatpush.msra.mxu0 0.0
    %777 = vmatpush.msra.mxu0 0.0
    %778 = vmatpush.msra.mxu0 0.0
    %779 = vmatpush.msra.mxu0 0.0
    %780 = vmatpush.msra.mxu0 0.0
    %781 = vmatpush.msra.mxu0 0.0
    %782 = vmatpush.msra.mxu0 0.0
    %783 = vmatpush.msra.mxu0 0.0
    %784 = vmatpush.msra.mxu0 0.0
    %785 = vmatpush.msra.mxu0 0.0
    %786 = vmatpush.msra.mxu0 0.0
    %787 = vmatpush.msra.mxu0 0.0
    %788 = vmatpush.msra.mxu0 0.0
    %789 = vmatpush.msra.mxu0 0.0
    %790 = vmatpush.msra.mxu0 %v312
    %791 = vmatmul.f32.gmra.mxu0 %v728
    %v792 = vpop.f32.mrf.mxu0
    %v793 = vadd.f32 %v66, %v792
    %794 = vmatmul.f32.gmra.mxu0 %v731
    %v795 = vpop.f32.mrf.mxu0
    %v796 = vadd.f32 %v67, %v795
    %797 = vmatmul.f32.gmra.mxu0 %v734
    %v798 = vpop.f32.mrf.mxu0
    %v799 = vadd.f32 %v68, %v798
    %800 = vmatmul.f32.gmra.mxu0 %v737
    %v801 = vpop.f32.mrf.mxu0
    %v802 = vadd.f32 %v69, %v801
    %803 = vmatmul.f32.gmra.mxu0 %v740
    %v804 = vpop.f32.mrf.mxu0
    %v805 = vadd.f32 %v70, %v804
    %806 = vmatmul.f32.gmra.mxu0 %v743
    %v807 = vpop.f32.mrf.mxu0
    %v808 = vadd.f32 %v71, %v807
    %809 = vmatmul.f32.gmra.mxu0 %v746
    %v810 = vpop.f32.mrf.mxu0
    %v811 = vadd.f32 %v72, %v810
    %812 = vmatmul.f32.gmra.mxu0 %v749
    %v813 = vpop.f32.mrf.mxu0
    %v814 = vadd.f32 %v73, %v813
    %815 = vmatmul.f32.gmra.mxu0 %v752
    %v816 = vpop.f32.mrf.mxu0
    %v817 = vadd.f32 %v74, %v816
    %818 = vmatmul.f32.gmra.mxu0 %v755
    %v819 = vpop.f32.mrf.mxu0
    %v820 = vadd.f32 %v75, %v819
    %821 = vmatmul.f32.gmra.mxu0 %v758
    %v822 = vpop.f32.mrf.mxu0
    %v823 = vadd.f32 %v76, %v822
    %824 = vmatmul.f32.gmra.mxu0 %v761
    %v825 = vpop.f32.mrf.mxu0
    %v826 = vadd.f32 %v77, %v825
    %827 = vmatmul.f32.gmra.mxu0 %v764
    %v828 = vpop.f32.mrf.mxu0
    %v829 = vadd.f32 %v78, %v828
    %830 = vmatmul.f32.gmra.mxu0 %v767
    %v831 = vpop.f32.mrf.mxu0
    %v832 = vadd.f32 %v79, %v831
    %833 = vmatmul.f32.gmra.mxu0 %v770
    %v834 = vpop.f32.mrf.mxu0
    %v835 = vadd.f32 %v80, %v834
    %836 = vmatmul.f32.gmra.mxu0 %v773
    %v837 = vpop.f32.mrf.mxu0
    %v838 = vadd.f32 %v81, %v837
    %839 = vdwg.mxu0
    %840 = vmax.xlane.f32.xlu0 %v793
    %v841 = vpop.xlane.xlu0 %840
    %842 = vmax.xlane.f32.xlu0 %v796
    %v843 = vpop.xlane.xlu0 %842
    %844 = vmax.xlane.f32.xlu0 %v799
    %v845 = vpop.xlane.xlu0 %844
    %846 = vmax.xlane.f32.xlu0 %v802
    %v847 = vpop.xlane.xlu0 %846
    %848 = vmax.xlane.f32.xlu0 %v805
    %v849 = vpop.xlane.xlu0 %848
    %850 = vmax.xlane.f32.xlu0 %v808
    %v851 = vpop.xlane.xlu0 %850
    %852 = vmax.xlane.f32.xlu0 %v811
    %v853 = vpop.xlane.xlu0 %852
    %854 = vmax.xlane.f32.xlu0 %v814
    %v855 = vpop.xlane.xlu0 %854
    %856 = vmax.xlane.f32.xlu0 %v817
    %v857 = vpop.xlane.xlu0 %856
    %858 = vmax.xlane.f32.xlu0 %v820
    %v859 = vpop.xlane.xlu0 %858
    %860 = vmax.xlane.f32.xlu0 %v823
    %v861 = vpop.xlane.xlu0 %860
    %862 = vmax.xlane.f32.xlu0 %v826
    %v863 = vpop.xlane.xlu0 %862
    %864 = vmax.xlane.f32.xlu0 %v829
    %v865 = vpop.xlane.xlu0 %864
    %866 = vmax.xlane.f32.xlu0 %v832
    %v867 = vpop.xlane.xlu0 %866
    %868 = vmax.xlane.f32.xlu0 %v835
    %v869 = vpop.xlane.xlu0 %868
    %870 = vmax.xlane.f32.xlu0 %v838
    %v871 = vpop.xlane.xlu0 %870
    %v872 = vsub.f32 %v793, %v841
    %v873 = vsub.f32 %v796, %v843
    %v874 = vsub.f32 %v799, %v845
    %v875 = vsub.f32 %v802, %v847
    %v876 = vsub.f32 %v805, %v849
    %v877 = vsub.f32 %v808, %v851
    %v878 = vsub.f32 %v811, %v853
    %v879 = vsub.f32 %v814, %v855
    %v880 = vsub.f32 %v817, %v857
    %v881 = vsub.f32 %v820, %v859
    %v882 = vsub.f32 %v823, %v861
    %v883 = vsub.f32 %v826, %v863
    %v884 = vsub.f32 %v829, %v865
    %v885 = vsub.f32 %v832, %v867
    %v886 = vsub.f32 %v835, %v869
    %v887 = vsub.f32 %v838, %v871
    %v888 = vmul.f32 %v872, 1.442695
    %v889 = vpow.pop %v888
    %v890 = vmul.f32 %v873, 1.442695
    %v891 = vpow.pop %v890
    %v892 = vmul.f32 %v874, 1.442695
    %v893 = vpow.pop %v892
    %v894 = vmul.f32 %v875, 1.442695
    %v895 = vpow.pop %v894
    %v896 = vmul.f32 %v876, 1.442695
    %v897 = vpow.pop %v896
    %v898 = vmul.f32 %v877, 1.442695
    %v899 = vpow.pop %v898
    %v900 = vmul.f32 %v878, 1.442695
    %v901 = vpow.pop %v900
    %v902 = vmul.f32 %v879, 1.442695
    %v903 = vpow.pop %v902
    %v904 = vmul.f32 %v880, 1.442695
    %v905 = vpow.pop %v904
    %v906 = vmul.f32 %v881, 1.442695
    %v907 = vpow.pop %v906
    %v908 = vmul.f32 %v882, 1.442695
    %v909 = vpow.pop %v908
    %v910 = vmul.f32 %v883, 1.442695
    %v911 = vpow.pop %v910
    %v912 = vmul.f32 %v884, 1.442695
    %v913 = vpow.pop %v912
    %v914 = vmul.f32 %v885, 1.442695
    %v915 = vpow.pop %v914
    %v916 = vmul.f32 %v886, 1.442695
    %v917 = vpow.pop %v916
    %v918 = vmul.f32 %v887, 1.442695
    %v919 = vpow.pop %v918
    %920 = vadd.xlane.f32.xlu0 %v889
    %v921 = vpop.xlane.xlu0 %920
    %922 = vadd.xlane.f32.xlu0 %v891
    %v923 = vpop.xlane.xlu0 %922
    %924 = vadd.xlane.f32.xlu0 %v893
    %v925 = vpop.xlane.xlu0 %924
    %926 = vadd.xlane.f32.xlu0 %v895
    %v927 = vpop.xlane.xlu0 %926
    %928 = vadd.xlane.f32.xlu0 %v897
    %v929 = vpop.xlane.xlu0 %928
    %930 = vadd.xlane.f32.xlu0 %v899
    %v931 = vpop.xlane.xlu0 %930
    %932 = vadd.xlane.f32.xlu0 %v901
    %v933 = vpop.xlane.xlu0 %932
    %934 = vadd.xlane.f32.xlu0 %v903
    %v935 = vpop.xlane.xlu0 %934
    %936 = vadd.xlane.f32.xlu0 %v905
    %v937 = vpop.xlane.xlu0 %936
    %938 = vadd.xlane.f32.xlu0 %v907
    %v939 = vpop.xlane.xlu0 %938
    %940 = vadd.xlane.f32.xlu0 %v909
    %v941 = vpop.xlane.xlu0 %940
    %942 = vadd.xlane.f32.xlu0 %v911
    %v943 = vpop.xlane.xlu0 %942
    %944 = vadd.xlane.f32.xlu0 %v913
    %v945 = vpop.xlane.xlu0 %944
    %946 = vadd.xlane.f32.xlu0 %v915
    %v947 = vpop.xlane.xlu0 %946
    %948 = vadd.xlane.f32.xlu0 %v917
    %v949 = vpop.xlane.xlu0 %948
    %950 = vadd.xlane.f32.xlu0 %v919
    %v951 = vpop.xlane.xlu0 %950
    %v952 = vrcp.pop %v921
    %v953 = vrcp.pop %v923
    %v954 = vrcp.pop %v925
    %v955 = vrcp.pop %v927
    %v956 = vrcp.pop %v929
    %v957 = vrcp.pop %v931
    %v958 = vrcp.pop %v933
    %v959 = vrcp.pop %v935
    %v960 = vrcp.pop %v937
    %v961 = vrcp.pop %v939
    %v962 = vrcp.pop %v941
    %v963 = vrcp.pop %v943
    %v964 = vrcp.pop %v945
    %v965 = vrcp.pop %v947
    %v966 = vrcp.pop %v949
    %v967 = vrcp.pop %v951
    %v968 = vmul.f32 %v889, %v952
    %v969 = vmul.f32 %v891, %v953
    %v970 = vmul.f32 %v893, %v954
    %v971 = vmul.f32 %v895, %v955
    %v972 = vmul.f32 %v897, %v956
    %v973 = vmul.f32 %v899, %v957
    %v974 = vmul.f32 %v901, %v958
    %v975 = vmul.f32 %v903, %v959
    %v976 = vmul.f32 %v905, %v960
    %v977 = vmul.f32 %v907, %v961
    %v978 = vmul.f32 %v909, %v962
    %v979 = vmul.f32 %v911, %v963
    %v980 = vmul.f32 %v913, %v964
    %v981 = vmul.f32 %v915, %v965
    %v982 = vmul.f32 %v917, %v966
    %v983 = vmul.f32 %v919, %v967
    %984 = vmatpush.xpose.msra.mxu0 %v983
    %985 = vmatpush.xpose.msra.mxu0 %v982
    %986 = vmatpush.xpose.msra.mxu0 %v981
    %987 = vmatpush.xpose.msra.mxu0 %v980
    %988 = vmatpush.xpose.msra.mxu0 %v979
    %989 = vmatpush.xpose.msra.mxu0 %v978
    %990 = vmatpush.xpose.msra.mxu0 %v977
    %991 = vmatpush.xpose.msra.mxu0 %v976
    %992 = vmatpush.xpose.msra.mxu0 %v975
    %993 = vmatpush.xpose.msra.mxu0 %v974
    %994 = vmatpush.xpose.msra.mxu0 %v973
    %995 = vmatpush.xpose.msra.mxu0 %v972
    %996 = vmatpush.xpose.msra.mxu0 %v971
    %997 = vmatpush.xpose.msra.mxu0 %v970
    %998 = vmatpush.xpose.msra.mxu0 %v969
    %999 = vmatpush.xpose.msra.mxu0 %v968
    %1000 = vmatmul.f32.gmra.mxu0 %v373
    %v1001 = vpop.f32.mrf.mxu0
    %v1002 = vadd.f32 0.0, %v1001
    %1003 = vdwg.mxu0
    %1004 = vxpose.xlu0.b32.start [1/16] %v383, 128
    %1005 = vxpose.xlu0.b32.cont [2/16] 0.0, 128
    %1006 = vxpose.xlu0.b32.cont [3/16] 0.0, 128
    %1007 = vxpose.xlu0.b32.cont [4/16] 0.0, 128
    %1008 = vxpose.xlu0.b32.cont [5/16] 0.0, 128
    %1009 = vxpose.xlu0.b32.cont [6/16] 0.0, 128
    %1010 = vxpose.xlu0.b32.cont [7/16] 0.0, 128
    %1011 = vxpose.xlu0.b32.cont [8/16] 0.0, 128
    %1012 = vxpose.xlu0.b32.cont [9/16] 0.0, 128
    %1013 = vxpose.xlu0.b32.cont [10/16] 0.0, 128
    %1014 = vxpose.xlu0.b32.cont [11/16] 0.0, 128
    %1015 = vxpose.xlu0.b32.cont [12/16] 0.0, 128
    %1016 = vxpose.xlu0.b32.cont [13/16] 0.0, 128
    %1017 = vxpose.xlu0.b32.cont [14/16] 0.0, 128
    %1018 = vxpose.xlu0.b32.cont [15/16] 0.0, 128
    %1019 = vxpose.xlu0.b32.end [16/16] 0.0, 128
    %v1020 = vpop.trf.xlu0
    %v1021 = vpop.trf.xlu0
    %v1022 = vpop.trf.xlu0
    %v1023 = vpop.trf.xlu0
    %v1024 = vpop.trf.xlu0
    %v1025 = vpop.trf.xlu0
    %v1026 = vpop.trf.xlu0
    %v1027 = vpop.trf.xlu0
    %v1028 = vpop.trf.xlu0
    %v1029 = vpop.trf.xlu0
    %v1030 = vpop.trf.xlu0
    %v1031 = vpop.trf.xlu0
    %v1032 = vpop.trf.xlu0
    %v1033 = vpop.trf.xlu0
    %v1034 = vpop.trf.xlu0
    %v1035 = vpop.trf.xlu0
    %v1037 = vsel %vm417, %v1020, 0
    %v1040 = vsel %vm417, %v1021, 0
    %v1043 = vsel %vm417, %v1022, 0
    %v1046 = vsel %vm417, %v1023, 0
    %v1049 = vsel %vm417, %v1024, 0
    %v1052 = vsel %vm417, %v1025, 0
    %v1055 = vsel %vm417, %v1026, 0
    %v1058 = vsel %vm417, %v1027, 0
    %v1061 = vsel %vm417, %v1028, 0
    %v1064 = vsel %vm417, %v1029, 0
    %v1067 = vsel %vm417, %v1030, 0
    %v1070 = vsel %vm417, %v1031, 0
    %v1073 = vsel %vm417, %v1032, 0
    %v1076 = vsel %vm417, %v1033, 0
    %v1079 = vsel %vm417, %v1034, 0
    %v1082 = vsel %vm417, %v1035, 0
    %1084 = vmatpush.msra.mxu0 0.0
    %1085 = vmatpush.msra.mxu0 0.0
    %1086 = vmatpush.msra.mxu0 0.0
    %1087 = vmatpush.msra.mxu0 0.0
    %1088 = vmatpush.msra.mxu0 0.0
    %1089 = vmatpush.msra.mxu0 0.0
    %1090 = vmatpush.msra.mxu0 0.0
    %1091 = vmatpush.msra.mxu0 0.0
    %1092 = vmatpush.msra.mxu0 0.0
    %1093 = vmatpush.msra.mxu0 0.0
    %1094 = vmatpush.msra.mxu0 0.0
    %1095 = vmatpush.msra.mxu0 0.0
    %1096 = vmatpush.msra.mxu0 0.0
    %1097 = vmatpush.msra.mxu0 0.0
    %1098 = vmatpush.msra.mxu0 0.0
    %1099 = vmatpush.msra.mxu0 %v315
    %1100 = vmatmul.f32.gmra.mxu0 %v1037
    %v1101 = vpop.f32.mrf.mxu0
    %v1102 = vadd.f32 %v66, %v1101
    %1103 = vmatmul.f32.gmra.mxu0 %v1040
    %v1104 = vpop.f32.mrf.mxu0
    %v1105 = vadd.f32 %v67, %v1104
    %1106 = vmatmul.f32.gmra.mxu0 %v1043
    %v1107 = vpop.f32.mrf.mxu0
    %v1108 = vadd.f32 %v68, %v1107
    %1109 = vmatmul.f32.gmra.mxu0 %v1046
    %v1110 = vpop.f32.mrf.mxu0
    %v1111 = vadd.f32 %v69, %v1110
    %1112 = vmatmul.f32.gmra.mxu0 %v1049
    %v1113 = vpop.f32.mrf.mxu0
    %v1114 = vadd.f32 %v70, %v1113
    %1115 = vmatmul.f32.gmra.mxu0 %v1052
    %v1116 = vpop.f32.mrf.mxu0
    %v1117 = vadd.f32 %v71, %v1116
    %1118 = vmatmul.f32.gmra.mxu0 %v1055
    %v1119 = vpop.f32.mrf.mxu0
    %v1120 = vadd.f32 %v72, %v1119
    %1121 = vmatmul.f32.gmra.mxu0 %v1058
    %v1122 = vpop.f32.mrf.mxu0
    %v1123 = vadd.f32 %v73, %v1122
    %1124 = vmatmul.f32.gmra.mxu0 %v1061
    %v1125 = vpop.f32.mrf.mxu0
    %v1126 = vadd.f32 %v74, %v1125
    %1127 = vmatmul.f32.gmra.mxu0 %v1064
    %v1128 = vpop.f32.mrf.mxu0
    %v1129 = vadd.f32 %v75, %v1128
    %1130 = vmatmul.f32.gmra.mxu0 %v1067
    %v1131 = vpop.f32.mrf.mxu0
    %v1132 = vadd.f32 %v76, %v1131
    %1133 = vmatmul.f32.gmra.mxu0 %v1070
    %v1134 = vpop.f32.mrf.mxu0
    %v1135 = vadd.f32 %v77, %v1134
    %1136 = vmatmul.f32.gmra.mxu0 %v1073
    %v1137 = vpop.f32.mrf.mxu0
    %v1138 = vadd.f32 %v78, %v1137
    %1139 = vmatmul.f32.gmra.mxu0 %v1076
    %v1140 = vpop.f32.mrf.mxu0
    %v1141 = vadd.f32 %v79, %v1140
    %1142 = vmatmul.f32.gmra.mxu0 %v1079
    %v1143 = vpop.f32.mrf.mxu0
    %v1144 = vadd.f32 %v80, %v1143
    %1145 = vmatmul.f32.gmra.mxu0 %v1082
    %v1146 = vpop.f32.mrf.mxu0
    %v1147 = vadd.f32 %v81, %v1146
    %1148 = vdwg.mxu0
    %1149 = vmax.xlane.f32.xlu0 %v1102
    %v1150 = vpop.xlane.xlu0 %1149
    %1151 = vmax.xlane.f32.xlu0 %v1105
    %v1152 = vpop.xlane.xlu0 %1151
    %1153 = vmax.xlane.f32.xlu0 %v1108
    %v1154 = vpop.xlane.xlu0 %1153
    %1155 = vmax.xlane.f32.xlu0 %v1111
    %v1156 = vpop.xlane.xlu0 %1155
    %1157 = vmax.xlane.f32.xlu0 %v1114
    %v1158 = vpop.xlane.xlu0 %1157
    %1159 = vmax.xlane.f32.xlu0 %v1117
    %v1160 = vpop.xlane.xlu0 %1159
    %1161 = vmax.xlane.f32.xlu0 %v1120
    %v1162 = vpop.xlane.xlu0 %1161
    %1163 = vmax.xlane.f32.xlu0 %v1123
    %v1164 = vpop.xlane.xlu0 %1163
    %1165 = vmax.xlane.f32.xlu0 %v1126
    %v1166 = vpop.xlane.xlu0 %1165
    %1167 = vmax.xlane.f32.xlu0 %v1129
    %v1168 = vpop.xlane.xlu0 %1167
    %1169 = vmax.xlane.f32.xlu0 %v1132
    %v1170 = vpop.xlane.xlu0 %1169
    %1171 = vmax.xlane.f32.xlu0 %v1135
    %v1172 = vpop.xlane.xlu0 %1171
    %1173 = vmax.xlane.f32.xlu0 %v1138
    %v1174 = vpop.xlane.xlu0 %1173
    %1175 = vmax.xlane.f32.xlu0 %v1141
    %v1176 = vpop.xlane.xlu0 %1175
    %1177 = vmax.xlane.f32.xlu0 %v1144
    %v1178 = vpop.xlane.xlu0 %1177
    %1179 = vmax.xlane.f32.xlu0 %v1147
    %v1180 = vpop.xlane.xlu0 %1179
    %v1181 = vsub.f32 %v1102, %v1150
    %v1182 = vsub.f32 %v1105, %v1152
    %v1183 = vsub.f32 %v1108, %v1154
    %v1184 = vsub.f32 %v1111, %v1156
    %v1185 = vsub.f32 %v1114, %v1158
    %v1186 = vsub.f32 %v1117, %v1160
    %v1187 = vsub.f32 %v1120, %v1162
    %v1188 = vsub.f32 %v1123, %v1164
    %v1189 = vsub.f32 %v1126, %v1166
    %v1190 = vsub.f32 %v1129, %v1168
    %v1191 = vsub.f32 %v1132, %v1170
    %v1192 = vsub.f32 %v1135, %v1172
    %v1193 = vsub.f32 %v1138, %v1174
    %v1194 = vsub.f32 %v1141, %v1176
    %v1195 = vsub.f32 %v1144, %v1178
    %v1196 = vsub.f32 %v1147, %v1180
    %v1197 = vmul.f32 %v1181, 1.442695
    %v1198 = vpow.pop %v1197
    %v1199 = vmul.f32 %v1182, 1.442695
    %v1200 = vpow.pop %v1199
    %v1201 = vmul.f32 %v1183, 1.442695
    %v1202 = vpow.pop %v1201
    %v1203 = vmul.f32 %v1184, 1.442695
    %v1204 = vpow.pop %v1203
    %v1205 = vmul.f32 %v1185, 1.442695
    %v1206 = vpow.pop %v1205
    %v1207 = vmul.f32 %v1186, 1.442695
    %v1208 = vpow.pop %v1207
    %v1209 = vmul.f32 %v1187, 1.442695
    %v1210 = vpow.pop %v1209
    %v1211 = vmul.f32 %v1188, 1.442695
    %v1212 = vpow.pop %v1211
    %v1213 = vmul.f32 %v1189, 1.442695
    %v1214 = vpow.pop %v1213
    %v1215 = vmul.f32 %v1190, 1.442695
    %v1216 = vpow.pop %v1215
    %v1217 = vmul.f32 %v1191, 1.442695
    %v1218 = vpow.pop %v1217
    %v1219 = vmul.f32 %v1192, 1.442695
    %v1220 = vpow.pop %v1219
    %v1221 = vmul.f32 %v1193, 1.442695
    %v1222 = vpow.pop %v1221
    %v1223 = vmul.f32 %v1194, 1.442695
    %v1224 = vpow.pop %v1223
    %v1225 = vmul.f32 %v1195, 1.442695
    %v1226 = vpow.pop %v1225
    %v1227 = vmul.f32 %v1196, 1.442695
    %v1228 = vpow.pop %v1227
    %1229 = vadd.xlane.f32.xlu0 %v1198
    %v1230 = vpop.xlane.xlu0 %1229
    %1231 = vadd.xlane.f32.xlu0 %v1200
    %v1232 = vpop.xlane.xlu0 %1231
    %1233 = vadd.xlane.f32.xlu0 %v1202
    %v1234 = vpop.xlane.xlu0 %1233
    %1235 = vadd.xlane.f32.xlu0 %v1204
    %v1236 = vpop.xlane.xlu0 %1235
    %1237 = vadd.xlane.f32.xlu0 %v1206
    %v1238 = vpop.xlane.xlu0 %1237
    %1239 = vadd.xlane.f32.xlu0 %v1208
    %v1240 = vpop.xlane.xlu0 %1239
    %1241 = vadd.xlane.f32.xlu0 %v1210
    %v1242 = vpop.xlane.xlu0 %1241
    %1243 = vadd.xlane.f32.xlu0 %v1212
    %v1244 = vpop.xlane.xlu0 %1243
    %1245 = vadd.xlane.f32.xlu0 %v1214
    %v1246 = vpop.xlane.xlu0 %1245
    %1247 = vadd.xlane.f32.xlu0 %v1216
    %v1248 = vpop.xlane.xlu0 %1247
    %1249 = vadd.xlane.f32.xlu0 %v1218
    %v1250 = vpop.xlane.xlu0 %1249
    %1251 = vadd.xlane.f32.xlu0 %v1220
    %v1252 = vpop.xlane.xlu0 %1251
    %1253 = vadd.xlane.f32.xlu0 %v1222
    %v1254 = vpop.xlane.xlu0 %1253
    %1255 = vadd.xlane.f32.xlu0 %v1224
    %v1256 = vpop.xlane.xlu0 %1255
    %1257 = vadd.xlane.f32.xlu0 %v1226
    %v1258 = vpop.xlane.xlu0 %1257
    %1259 = vadd.xlane.f32.xlu0 %v1228
    %v1260 = vpop.xlane.xlu0 %1259
    %v1261 = vrcp.pop %v1230
    %v1262 = vrcp.pop %v1232
    %v1263 = vrcp.pop %v1234
    %v1264 = vrcp.pop %v1236
    %v1265 = vrcp.pop %v1238
    %v1266 = vrcp.pop %v1240
    %v1267 = vrcp.pop %v1242
    %v1268 = vrcp.pop %v1244
    %v1269 = vrcp.pop %v1246
    %v1270 = vrcp.pop %v1248
    %v1271 = vrcp.pop %v1250
    %v1272 = vrcp.pop %v1252
    %v1273 = vrcp.pop %v1254
    %v1274 = vrcp.pop %v1256
    %v1275 = vrcp.pop %v1258
    %v1276 = vrcp.pop %v1260
    %v1277 = vmul.f32 %v1198, %v1261
    %v1278 = vmul.f32 %v1200, %v1262
    %v1279 = vmul.f32 %v1202, %v1263
    %v1280 = vmul.f32 %v1204, %v1264
    %v1281 = vmul.f32 %v1206, %v1265
    %v1282 = vmul.f32 %v1208, %v1266
    %v1283 = vmul.f32 %v1210, %v1267
    %v1284 = vmul.f32 %v1212, %v1268
    %v1285 = vmul.f32 %v1214, %v1269
    %v1286 = vmul.f32 %v1216, %v1270
    %v1287 = vmul.f32 %v1218, %v1271
    %v1288 = vmul.f32 %v1220, %v1272
    %v1289 = vmul.f32 %v1222, %v1273
    %v1290 = vmul.f32 %v1224, %v1274
    %v1291 = vmul.f32 %v1226, %v1275
    %v1292 = vmul.f32 %v1228, %v1276
    %1293 = vmatpush.xpose.msra.mxu0 %v1292
    %1294 = vmatpush.xpose.msra.mxu0 %v1291
    %1295 = vmatpush.xpose.msra.mxu0 %v1290
    %1296 = vmatpush.xpose.msra.mxu0 %v1289
    %1297 = vmatpush.xpose.msra.mxu0 %v1288
    %1298 = vmatpush.xpose.msra.mxu0 %v1287
    %1299 = vmatpush.xpose.msra.mxu0 %v1286
    %1300 = vmatpush.xpose.msra.mxu0 %v1285
    %1301 = vmatpush.xpose.msra.mxu0 %v1284
    %1302 = vmatpush.xpose.msra.mxu0 %v1283
    %1303 = vmatpush.xpose.msra.mxu0 %v1282
    %1304 = vmatpush.xpose.msra.mxu0 %v1281
    %1305 = vmatpush.xpose.msra.mxu0 %v1280
    %1306 = vmatpush.xpose.msra.mxu0 %v1279
    %1307 = vmatpush.xpose.msra.mxu0 %v1278
    %1308 = vmatpush.xpose.msra.mxu0 %v1277
    %1309 = vmatmul.f32.gmra.mxu0 %v376
    %v1310 = vpop.f32.mrf.mxu0
    %v1311 = vadd.f32 0.0, %v1310
    %1312 = vdwg.mxu0
    %1313 = vxpose.xlu0.b32.start [1/16] %v384, 128
    %1314 = vxpose.xlu0.b32.cont [2/16] 0.0, 128
    %1315 = vxpose.xlu0.b32.cont [3/16] 0.0, 128
    %1316 = vxpose.xlu0.b32.cont [4/16] 0.0, 128
    %1317 = vxpose.xlu0.b32.cont [5/16] 0.0, 128
    %1318 = vxpose.xlu0.b32.cont [6/16] 0.0, 128
    %1319 = vxpose.xlu0.b32.cont [7/16] 0.0, 128
    %1320 = vxpose.xlu0.b32.cont [8/16] 0.0, 128
    %1321 = vxpose.xlu0.b32.cont [9/16] 0.0, 128
    %1322 = vxpose.xlu0.b32.cont [10/16] 0.0, 128
    %1323 = vxpose.xlu0.b32.cont [11/16] 0.0, 128
    %1324 = vxpose.xlu0.b32.cont [12/16] 0.0, 128
    %1325 = vxpose.xlu0.b32.cont [13/16] 0.0, 128
    %1326 = vxpose.xlu0.b32.cont [14/16] 0.0, 128
    %1327 = vxpose.xlu0.b32.cont [15/16] 0.0, 128
    %1328 = vxpose.xlu0.b32.end [16/16] 0.0, 128
    %v1329 = vpop.trf.xlu0
    %v1330 = vpop.trf.xlu0
    %v1331 = vpop.trf.xlu0
    %v1332 = vpop.trf.xlu0
    %v1333 = vpop.trf.xlu0
    %v1334 = vpop.trf.xlu0
    %v1335 = vpop.trf.xlu0
    %v1336 = vpop.trf.xlu0
    %v1337 = vpop.trf.xlu0
    %v1338 = vpop.trf.xlu0
    %v1339 = vpop.trf.xlu0
    %v1340 = vpop.trf.xlu0
    %v1341 = vpop.trf.xlu0
    %v1342 = vpop.trf.xlu0
    %v1343 = vpop.trf.xlu0
    %v1344 = vpop.trf.xlu0
    %v1346 = vsel %vm417, %v1329, 0
    %v1349 = vsel %vm417, %v1330, 0
    %v1352 = vsel %vm417, %v1331, 0
    %v1355 = vsel %vm417, %v1332, 0
    %v1358 = vsel %vm417, %v1333, 0
    %v1361 = vsel %vm417, %v1334, 0
    %v1364 = vsel %vm417, %v1335, 0
    %v1367 = vsel %vm417, %v1336, 0
    %v1370 = vsel %vm417, %v1337, 0
    %v1373 = vsel %vm417, %v1338, 0
    %v1376 = vsel %vm417, %v1339, 0
    %v1379 = vsel %vm417, %v1340, 0
    %v1382 = vsel %vm417, %v1341, 0
    %v1385 = vsel %vm417, %v1342, 0
    %v1388 = vsel %vm417, %v1343, 0
    %v1391 = vsel %vm417, %v1344, 0
    %1393 = vmatpush.msra.mxu0 0.0
    %1394 = vmatpush.msra.mxu0 0.0
    %1395 = vmatpush.msra.mxu0 0.0
    %1396 = vmatpush.msra.mxu0 0.0
    %1397 = vmatpush.msra.mxu0 0.0
    %1398 = vmatpush.msra.mxu0 0.0
    %1399 = vmatpush.msra.mxu0 0.0
    %1400 = vmatpush.msra.mxu0 0.0
    %1401 = vmatpush.msra.mxu0 0.0
    %1402 = vmatpush.msra.mxu0 0.0
    %1403 = vmatpush.msra.mxu0 0.0
    %1404 = vmatpush.msra.mxu0 0.0
    %1405 = vmatpush.msra.mxu0 0.0
    %1406 = vmatpush.msra.mxu0 0.0
    %1407 = vmatpush.msra.mxu0 0.0
    %1408 = vmatpush.msra.mxu0 %v318
    %1409 = vmatmul.f32.gmra.mxu0 %v1346
    %v1410 = vpop.f32.mrf.mxu0
    %v1411 = vadd.f32 %v66, %v1410
    %1412 = vmatmul.f32.gmra.mxu0 %v1349
    %v1413 = vpop.f32.mrf.mxu0
    %v1414 = vadd.f32 %v67, %v1413
    %1415 = vmatmul.f32.gmra.mxu0 %v1352
    %v1416 = vpop.f32.mrf.mxu0
    %v1417 = vadd.f32 %v68, %v1416
    %1418 = vmatmul.f32.gmra.mxu0 %v1355
    %v1419 = vpop.f32.mrf.mxu0
    %v1420 = vadd.f32 %v69, %v1419
    %1421 = vmatmul.f32.gmra.mxu0 %v1358
    %v1422 = vpop.f32.mrf.mxu0
    %v1423 = vadd.f32 %v70, %v1422
    %1424 = vmatmul.f32.gmra.mxu0 %v1361
    %v1425 = vpop.f32.mrf.mxu0
    %v1426 = vadd.f32 %v71, %v1425
    %1427 = vmatmul.f32.gmra.mxu0 %v1364
    %v1428 = vpop.f32.mrf.mxu0
    %v1429 = vadd.f32 %v72, %v1428
    %1430 = vmatmul.f32.gmra.mxu0 %v1367
    %v1431 = vpop.f32.mrf.mxu0
    %v1432 = vadd.f32 %v73, %v1431
    %1433 = vmatmul.f32.gmra.mxu0 %v1370
    %v1434 = vpop.f32.mrf.mxu0
    %v1435 = vadd.f32 %v74, %v1434
    %1436 = vmatmul.f32.gmra.mxu0 %v1373
    %v1437 = vpop.f32.mrf.mxu0
    %v1438 = vadd.f32 %v75, %v1437
    %1439 = vmatmul.f32.gmra.mxu0 %v1376
    %v1440 = vpop.f32.mrf.mxu0
    %v1441 = vadd.f32 %v76, %v1440
    %1442 = vmatmul.f32.gmra.mxu0 %v1379
    %v1443 = vpop.f32.mrf.mxu0
    %v1444 = vadd.f32 %v77, %v1443
    %1445 = vmatmul.f32.gmra.mxu0 %v1382
    %v1446 = vpop.f32.mrf.mxu0
    %v1447 = vadd.f32 %v78, %v1446
    %1448 = vmatmul.f32.gmra.mxu0 %v1385
    %v1449 = vpop.f32.mrf.mxu0
    %v1450 = vadd.f32 %v79, %v1449
    %1451 = vmatmul.f32.gmra.mxu0 %v1388
    %v1452 = vpop.f32.mrf.mxu0
    %v1453 = vadd.f32 %v80, %v1452
    %1454 = vmatmul.f32.gmra.mxu0 %v1391
    %v1455 = vpop.f32.mrf.mxu0
    %v1456 = vadd.f32 %v81, %v1455
    %1457 = vdwg.mxu0
    %1458 = vmax.xlane.f32.xlu0 %v1411
    %v1459 = vpop.xlane.xlu0 %1458
    %1460 = vmax.xlane.f32.xlu0 %v1414
    %v1461 = vpop.xlane.xlu0 %1460
    %1462 = vmax.xlane.f32.xlu0 %v1417
    %v1463 = vpop.xlane.xlu0 %1462
    %1464 = vmax.xlane.f32.xlu0 %v1420
    %v1465 = vpop.xlane.xlu0 %1464
    %1466 = vmax.xlane.f32.xlu0 %v1423
    %v1467 = vpop.xlane.xlu0 %1466
    %1468 = vmax.xlane.f32.xlu0 %v1426
    %v1469 = vpop.xlane.xlu0 %1468
    %1470 = vmax.xlane.f32.xlu0 %v1429
    %v1471 = vpop.xlane.xlu0 %1470
    %1472 = vmax.xlane.f32.xlu0 %v1432
    %v1473 = vpop.xlane.xlu0 %1472
    %1474 = vmax.xlane.f32.xlu0 %v1435
    %v1475 = vpop.xlane.xlu0 %1474
    %1476 = vmax.xlane.f32.xlu0 %v1438
    %v1477 = vpop.xlane.xlu0 %1476
    %1478 = vmax.xlane.f32.xlu0 %v1441
    %v1479 = vpop.xlane.xlu0 %1478
    %1480 = vmax.xlane.f32.xlu0 %v1444
    %v1481 = vpop.xlane.xlu0 %1480
    %1482 = vmax.xlane.f32.xlu0 %v1447
    %v1483 = vpop.xlane.xlu0 %1482
    %1484 = vmax.xlane.f32.xlu0 %v1450
    %v1485 = vpop.xlane.xlu0 %1484
    %1486 = vmax.xlane.f32.xlu0 %v1453
    %v1487 = vpop.xlane.xlu0 %1486
    %1488 = vmax.xlane.f32.xlu0 %v1456
    %v1489 = vpop.xlane.xlu0 %1488
    %v1490 = vsub.f32 %v1411, %v1459
    %v1491 = vsub.f32 %v1414, %v1461
    %v1492 = vsub.f32 %v1417, %v1463
    %v1493 = vsub.f32 %v1420, %v1465
    %v1494 = vsub.f32 %v1423, %v1467
    %v1495 = vsub.f32 %v1426, %v1469
    %v1496 = vsub.f32 %v1429, %v1471
    %v1497 = vsub.f32 %v1432, %v1473
    %v1498 = vsub.f32 %v1435, %v1475
    %v1499 = vsub.f32 %v1438, %v1477
    %v1500 = vsub.f32 %v1441, %v1479
    %v1501 = vsub.f32 %v1444, %v1481
    %v1502 = vsub.f32 %v1447, %v1483
    %v1503 = vsub.f32 %v1450, %v1485
    %v1504 = vsub.f32 %v1453, %v1487
    %v1505 = vsub.f32 %v1456, %v1489
    %v1506 = vmul.f32 %v1490, 1.442695
    %v1507 = vpow.pop %v1506
    %v1508 = vmul.f32 %v1491, 1.442695
    %v1509 = vpow.pop %v1508
    %v1510 = vmul.f32 %v1492, 1.442695
    %v1511 = vpow.pop %v1510
    %v1512 = vmul.f32 %v1493, 1.442695
    %v1513 = vpow.pop %v1512
    %v1514 = vmul.f32 %v1494, 1.442695
    %v1515 = vpow.pop %v1514
    %v1516 = vmul.f32 %v1495, 1.442695
    %v1517 = vpow.pop %v1516
    %v1518 = vmul.f32 %v1496, 1.442695
    %v1519 = vpow.pop %v1518
    %v1520 = vmul.f32 %v1497, 1.442695
    %v1521 = vpow.pop %v1520
    %v1522 = vmul.f32 %v1498, 1.442695
    %v1523 = vpow.pop %v1522
    %v1524 = vmul.f32 %v1499, 1.442695
    %v1525 = vpow.pop %v1524
    %v1526 = vmul.f32 %v1500, 1.442695
    %v1527 = vpow.pop %v1526
    %v1528 = vmul.f32 %v1501, 1.442695
    %v1529 = vpow.pop %v1528
    %v1530 = vmul.f32 %v1502, 1.442695
    %v1531 = vpow.pop %v1530
    %v1532 = vmul.f32 %v1503, 1.442695
    %v1533 = vpow.pop %v1532
    %v1534 = vmul.f32 %v1504, 1.442695
    %v1535 = vpow.pop %v1534
    %v1536 = vmul.f32 %v1505, 1.442695
    %v1537 = vpow.pop %v1536
    %1538 = vadd.xlane.f32.xlu0 %v1507
    %v1539 = vpop.xlane.xlu0 %1538
    %1540 = vadd.xlane.f32.xlu0 %v1509
    %v1541 = vpop.xlane.xlu0 %1540
    %1542 = vadd.xlane.f32.xlu0 %v1511
    %v1543 = vpop.xlane.xlu0 %1542
    %1544 = vadd.xlane.f32.xlu0 %v1513
    %v1545 = vpop.xlane.xlu0 %1544
    %1546 = vadd.xlane.f32.xlu0 %v1515
    %v1547 = vpop.xlane.xlu0 %1546
    %1548 = vadd.xlane.f32.xlu0 %v1517
    %v1549 = vpop.xlane.xlu0 %1548
    %1550 = vadd.xlane.f32.xlu0 %v1519
    %v1551 = vpop.xlane.xlu0 %1550
    %1552 = vadd.xlane.f32.xlu0 %v1521
    %v1553 = vpop.xlane.xlu0 %1552
    %1554 = vadd.xlane.f32.xlu0 %v1523
    %v1555 = vpop.xlane.xlu0 %1554
    %1556 = vadd.xlane.f32.xlu0 %v1525
    %v1557 = vpop.xlane.xlu0 %1556
    %1558 = vadd.xlane.f32.xlu0 %v1527
    %v1559 = vpop.xlane.xlu0 %1558
    %1560 = vadd.xlane.f32.xlu0 %v1529
    %v1561 = vpop.xlane.xlu0 %1560
    %1562 = vadd.xlane.f32.xlu0 %v1531
    %v1563 = vpop.xlane.xlu0 %1562
    %1564 = vadd.xlane.f32.xlu0 %v1533
    %v1565 = vpop.xlane.xlu0 %1564
    %1566 = vadd.xlane.f32.xlu0 %v1535
    %v1567 = vpop.xlane.xlu0 %1566
    %1568 = vadd.xlane.f32.xlu0 %v1537
    %v1569 = vpop.xlane.xlu0 %1568
    %v1570 = vrcp.pop %v1539
    %v1571 = vrcp.pop %v1541
    %v1572 = vrcp.pop %v1543
    %v1573 = vrcp.pop %v1545
    %v1574 = vrcp.pop %v1547
    %v1575 = vrcp.pop %v1549
    %v1576 = vrcp.pop %v1551
    %v1577 = vrcp.pop %v1553
    %v1578 = vrcp.pop %v1555
    %v1579 = vrcp.pop %v1557
    %v1580 = vrcp.pop %v1559
    %v1581 = vrcp.pop %v1561
    %v1582 = vrcp.pop %v1563
    %v1583 = vrcp.pop %v1565
    %v1584 = vrcp.pop %v1567
    %v1585 = vrcp.pop %v1569
    %v1586 = vmul.f32 %v1507, %v1570
    %v1587 = vmul.f32 %v1509, %v1571
    %v1588 = vmul.f32 %v1511, %v1572
    %v1589 = vmul.f32 %v1513, %v1573
    %v1590 = vmul.f32 %v1515, %v1574
    %v1591 = vmul.f32 %v1517, %v1575
    %v1592 = vmul.f32 %v1519, %v1576
    %v1593 = vmul.f32 %v1521, %v1577
    %v1594 = vmul.f32 %v1523, %v1578
    %v1595 = vmul.f32 %v1525, %v1579
    %v1596 = vmul.f32 %v1527, %v1580
    %v1597 = vmul.f32 %v1529, %v1581
    %v1598 = vmul.f32 %v1531, %v1582
    %v1599 = vmul.f32 %v1533, %v1583
    %v1600 = vmul.f32 %v1535, %v1584
    %v1601 = vmul.f32 %v1537, %v1585
    %1602 = vmatpush.xpose.msra.mxu0 %v1601
    %1603 = vmatpush.xpose.msra.mxu0 %v1600
    %1604 = vmatpush.xpose.msra.mxu0 %v1599
    %1605 = vmatpush.xpose.msra.mxu0 %v1598
    %1606 = vmatpush.xpose.msra.mxu0 %v1597
    %1607 = vmatpush.xpose.msra.mxu0 %v1596
    %1608 = vmatpush.xpose.msra.mxu0 %v1595
    %1609 = vmatpush.xpose.msra.mxu0 %v1594
    %1610 = vmatpush.xpose.msra.mxu0 %v1593
    %1611 = vmatpush.xpose.msra.mxu0 %v1592
    %1612 = vmatpush.xpose.msra.mxu0 %v1591
    %1613 = vmatpush.xpose.msra.mxu0 %v1590
    %1614 = vmatpush.xpose.msra.mxu0 %v1589
    %1615 = vmatpush.xpose.msra.mxu0 %v1588
    %1616 = vmatpush.xpose.msra.mxu0 %v1587
    %1617 = vmatpush.xpose.msra.mxu0 %v1586
    %1618 = vmatmul.f32.gmra.mxu0 %v379
    %v1619 = vpop.f32.mrf.mxu0
    %v1620 = vadd.f32 0.0, %v1619
    %1621 = vdwg.mxu0
    %1623 = vset.pattern.permute.xlu0 0
    %1624 = vperm.xlu0 %1623, %v126
    %v1625 = vpop.permute.xlu0 %1624
    %1628 = vset.pattern.permute.xlu0 0
    %1629 = vperm.xlu0 %1628, %v127
    %v1630 = vpop.permute.xlu0 %1629
    %1633 = vset.pattern.permute.xlu0 0
    %1634 = vperm.xlu0 %1633, %v128
    %v1635 = vpop.permute.xlu0 %1634
    %1638 = vset.pattern.permute.xlu0 0
    %1639 = vperm.xlu0 %1638, %v129
    %v1640 = vpop.permute.xlu0 %1639
    %v1643 = vsel %vm254, %v122, 0
    %v1646 = vsel %vm254, %v123, 0
    %v1649 = vsel %vm254, %v124, 0
    %v1652 = vsel %vm254, %v125, 0
    %1654 = vmatpush.msra.mxu0 0.0
    %1655 = vmatpush.msra.mxu0 0.0
    %1656 = vmatpush.msra.mxu0 0.0
    %1657 = vmatpush.msra.mxu0 0.0
    %1658 = vmatpush.msra.mxu0 0.0
    %1659 = vmatpush.msra.mxu0 0.0
    %1660 = vmatpush.msra.mxu0 0.0
    %1661 = vmatpush.msra.mxu0 0.0
    %1662 = vmatpush.msra.mxu0 0.0
    %1663 = vmatpush.msra.mxu0 0.0
    %1664 = vmatpush.msra.mxu0 0.0
    %1665 = vmatpush.msra.mxu0 0.0
    %1666 = vmatpush.msra.mxu0 %v1620
    %1667 = vmatpush.msra.mxu0 %v1311
    %1668 = vmatpush.msra.mxu0 %v1002
    %1669 = vmatpush.msra.mxu0 %v693
    %1670 = vmatmul.f32.gmra.mxu0 %v1643
    %v1671 = vpop.f32.mrf.mxu0
    %v1672 = vadd.f32 %v1625, %v1671
    %1673 = vmatmul.f32.gmra.mxu0 %v1646
    %v1674 = vpop.f32.mrf.mxu0
    %v1675 = vadd.f32 %v1630, %v1674
    %1676 = vmatmul.f32.gmra.mxu0 %v1649
    %v1677 = vpop.f32.mrf.mxu0
    %v1678 = vadd.f32 %v1635, %v1677
    %1679 = vmatmul.f32.gmra.mxu0 %v1652
    %v1680 = vpop.f32.mrf.mxu0
    %v1681 = vadd.f32 %v1640, %v1680
    %1682 = vdwg.mxu0
    %v1683 = vadd.f32 %v1672, %v206
    %v1684 = vadd.f32 %v1675, %v207
    %v1685 = vadd.f32 %v1678, %v208
    %v1686 = vadd.f32 %v1681, %v209
    %1688 = vset.pattern.permute.xlu0 0
    %1689 = vperm.xlu0 %1688, %v142
    %v1690 = vpop.permute.xlu0 %1689
    %1693 = vset.pattern.permute.xlu0 0
    %1694 = vperm.xlu0 %1693, %v143
    %v1695 = vpop.permute.xlu0 %1694
    %1698 = vset.pattern.permute.xlu0 0
    %1699 = vperm.xlu0 %1698, %v144
    %v1700 = vpop.permute.xlu0 %1699
    %1703 = vset.pattern.permute.xlu0 0
    %1704 = vperm.xlu0 %1703, %v145
    %v1705 = vpop.permute.xlu0 %1704
    %1708 = vset.pattern.permute.xlu0 0
    %1709 = vperm.xlu0 %1708, %v146
    %v1710 = vpop.permute.xlu0 %1709
    %1713 = vset.pattern.permute.xlu0 0
    %1714 = vperm.xlu0 %1713, %v147
    %v1715 = vpop.permute.xlu0 %1714
    %1718 = vset.pattern.permute.xlu0 0
    %1719 = vperm.xlu0 %1718, %v148
    %v1720 = vpop.permute.xlu0 %1719
    %1723 = vset.pattern.permute.xlu0 0
    %1724 = vperm.xlu0 %1723, %v149
    %v1725 = vpop.permute.xlu0 %1724
    %v1728 = vsel %vm254, %v130, 0
    %v1731 = vsel %vm254, %v131, 0
    %v1734 = vsel %vm254, %v132, 0
    %v1737 = vsel %vm254, %v133, 0
    %v1740 = vsel %vm254, %v134, 0
    %v1743 = vsel %vm254, %v135, 0
    %v1746 = vsel %vm254, %v136, 0
    %v1749 = vsel %vm254, %v137, 0
    %1751 = vmatpush.msra.mxu0 0.0
    %1752 = vmatpush.msra.mxu0 0.0
    %1753 = vmatpush.msra.mxu0 0.0
    %1754 = vmatpush.msra.mxu0 0.0
    %1755 = vmatpush.msra.mxu0 0.0
    %1756 = vmatpush.msra.mxu0 0.0
    %1757 = vmatpush.msra.mxu0 0.0
    %1758 = vmatpush.msra.mxu0 0.0
    %1759 = vmatpush.msra.mxu0 0.0
    %1760 = vmatpush.msra.mxu0 0.0
    %1761 = vmatpush.msra.mxu0 0.0
    %1762 = vmatpush.msra.mxu0 0.0
    %1763 = vmatpush.msra.mxu0 %v1686
    %1764 = vmatpush.msra.mxu0 %v1685
    %1765 = vmatpush.msra.mxu0 %v1684
    %1766 = vmatpush.msra.mxu0 %v1683
    %1767 = vmatmul.f32.gmra.mxu0 %v1728
    %v1768 = vpop.f32.mrf.mxu0
    %v1769 = vadd.f32 %v1690, %v1768
    %1770 = vmatmul.f32.gmra.mxu0 %v1731
    %v1771 = vpop.f32.mrf.mxu0
    %v1772 = vadd.f32 %v1695, %v1771
    %1773 = vmatmul.f32.gmra.mxu0 %v1734
    %v1774 = vpop.f32.mrf.mxu0
    %v1775 = vadd.f32 %v1700, %v1774
    %1776 = vmatmul.f32.gmra.mxu0 %v1737
    %v1777 = vpop.f32.mrf.mxu0
    %v1778 = vadd.f32 %v1705, %v1777
    %1779 = vmatmul.f32.gmra.mxu0 %v1740
    %v1780 = vpop.f32.mrf.mxu0
    %v1781 = vadd.f32 %v1710, %v1780
    %1782 = vmatmul.f32.gmra.mxu0 %v1743
    %v1783 = vpop.f32.mrf.mxu0
    %v1784 = vadd.f32 %v1715, %v1783
    %1785 = vmatmul.f32.gmra.mxu0 %v1746
    %v1786 = vpop.f32.mrf.mxu0
    %v1787 = vadd.f32 %v1720, %v1786
    %1788 = vmatmul.f32.gmra.mxu0 %v1749
    %v1789 = vpop.f32.mrf.mxu0
    %v1790 = vadd.f32 %v1725, %v1789
    %1791 = vdwg.mxu0
    %1793 = vset.pattern.permute.xlu0 0
    %1794 = vperm.xlu0 %1793, %v150
    %v1795 = vpop.permute.xlu0 %1794
    %1798 = vset.pattern.permute.xlu0 0
    %1799 = vperm.xlu0 %1798, %v151
    %v1800 = vpop.permute.xlu0 %1799
    %1803 = vset.pattern.permute.xlu0 0
    %1804 = vperm.xlu0 %1803, %v152
    %v1805 = vpop.permute.xlu0 %1804
    %1808 = vset.pattern.permute.xlu0 0
    %1809 = vperm.xlu0 %1808, %v153
    %v1810 = vpop.permute.xlu0 %1809
    %v1813 = vsel %vm254, %v138, 0
    %v1816 = vsel %vm254, %v139, 0
    %v1819 = vsel %vm254, %v140, 0
    %v1822 = vsel %vm254, %v141, 0
    %1824 = vmatpush.msra.mxu0 0.0
    %1825 = vmatpush.msra.mxu0 0.0
    %1826 = vmatpush.msra.mxu0 0.0
    %1827 = vmatpush.msra.mxu0 0.0
    %1828 = vmatpush.msra.mxu0 0.0
    %1829 = vmatpush.msra.mxu0 0.0
    %1830 = vmatpush.msra.mxu0 0.0
    %1831 = vmatpush.msra.mxu0 0.0
    %1832 = vmatpush.msra.mxu0 0.0
    %1833 = vmatpush.msra.mxu0 0.0
    %1834 = vmatpush.msra.mxu0 0.0
    %1835 = vmatpush.msra.mxu0 0.0
    %1836 = vmatpush.msra.mxu0 %v1681
    %1837 = vmatpush.msra.mxu0 %v1678
    %1838 = vmatpush.msra.mxu0 %v1675
    %1839 = vmatpush.msra.mxu0 %v1672
    %1840 = vmatmul.f32.gmra.mxu0 %v1813
    %v1841 = vpop.f32.mrf.mxu0
    %v1842 = vadd.f32 %v1795, %v1841
    %1843 = vmatmul.f32.gmra.mxu0 %v1816
    %v1844 = vpop.f32.mrf.mxu0
    %v1845 = vadd.f32 %v1800, %v1844
    %1846 = vmatmul.f32.gmra.mxu0 %v1819
    %v1847 = vpop.f32.mrf.mxu0
    %v1848 = vadd.f32 %v1805, %v1847
    %1849 = vmatmul.f32.gmra.mxu0 %v1822
    %v1850 = vpop.f32.mrf.mxu0
    %v1851 = vadd.f32 %v1810, %v1850
    %1852 = vdwg.mxu0
    %v1853 = vmul.f32 %v1769, 0.35355338
    %v1854 = vmul.f32 %v1772, 0.35355338
    %v1855 = vmul.f32 %v1775, 0.35355338
    %v1856 = vmul.f32 %v1778, 0.35355338
    %1857 = vxpose.xlu0.b32.start [1/16] %v1853, 128
    %1858 = vxpose.xlu0.b32.cont [2/16] 0.0, 128
    %1859 = vxpose.xlu0.b32.cont [3/16] 0.0, 128
    %1860 = vxpose.xlu0.b32.cont [4/16] 0.0, 128
    %1861 = vxpose.xlu0.b32.cont [5/16] 0.0, 128
    %1862 = vxpose.xlu0.b32.cont [6/16] 0.0, 128
    %1863 = vxpose.xlu0.b32.cont [7/16] 0.0, 128
    %1864 = vxpose.xlu0.b32.cont [8/16] 0.0, 128
    %1865 = vxpose.xlu0.b32.cont [9/16] 0.0, 128
    %1866 = vxpose.xlu0.b32.cont [10/16] 0.0, 128
    %1867 = vxpose.xlu0.b32.cont [11/16] 0.0, 128
    %1868 = vxpose.xlu0.b32.cont [12/16] 0.0, 128
    %1869 = vxpose.xlu0.b32.cont [13/16] 0.0, 128
    %1870 = vxpose.xlu0.b32.cont [14/16] 0.0, 128
    %1871 = vxpose.xlu0.b32.cont [15/16] 0.0, 128
    %1872 = vxpose.xlu0.b32.end [16/16] 0.0, 128
    %v1873 = vpop.trf.xlu0
    %v1874 = vpop.trf.xlu0
    %v1875 = vpop.trf.xlu0
    %v1876 = vpop.trf.xlu0
    %v1877 = vpop.trf.xlu0
    %v1878 = vpop.trf.xlu0
    %v1879 = vpop.trf.xlu0
    %v1880 = vpop.trf.xlu0
    %v1881 = vpop.trf.xlu0
    %v1882 = vpop.trf.xlu0
    %v1883 = vpop.trf.xlu0
    %v1884 = vpop.trf.xlu0
    %v1885 = vpop.trf.xlu0
    %v1886 = vpop.trf.xlu0
    %v1887 = vpop.trf.xlu0
    %v1888 = vpop.trf.xlu0
    %v1890 = vsel %vm417, %v1873, 0
    %v1893 = vsel %vm417, %v1874, 0
    %v1896 = vsel %vm417, %v1875, 0
    %v1899 = vsel %vm417, %v1876, 0
    %v1902 = vsel %vm417, %v1877, 0
    %v1905 = vsel %vm417, %v1878, 0
    %v1908 = vsel %vm417, %v1879, 0
    %v1911 = vsel %vm417, %v1880, 0
    %v1914 = vsel %vm417, %v1881, 0
    %v1917 = vsel %vm417, %v1882, 0
    %v1920 = vsel %vm417, %v1883, 0
    %v1923 = vsel %vm417, %v1884, 0
    %v1926 = vsel %vm417, %v1885, 0
    %v1929 = vsel %vm417, %v1886, 0
    %v1932 = vsel %vm417, %v1887, 0
    %v1935 = vsel %vm417, %v1888, 0
    %1937 = vmatpush.msra.mxu0 0.0
    %1938 = vmatpush.msra.mxu0 0.0
    %1939 = vmatpush.msra.mxu0 0.0
    %1940 = vmatpush.msra.mxu0 0.0
    %1941 = vmatpush.msra.mxu0 0.0
    %1942 = vmatpush.msra.mxu0 0.0
    %1943 = vmatpush.msra.mxu0 0.0
    %1944 = vmatpush.msra.mxu0 0.0
    %1945 = vmatpush.msra.mxu0 0.0
    %1946 = vmatpush.msra.mxu0 0.0
    %1947 = vmatpush.msra.mxu0 0.0
    %1948 = vmatpush.msra.mxu0 0.0
    %1949 = vmatpush.msra.mxu0 0.0
    %1950 = vmatpush.msra.mxu0 0.0
    %1951 = vmatpush.msra.mxu0 0.0
    %1952 = vmatpush.msra.mxu0 %v1781
    %1953 = vmatmul.f32.gmra.mxu0 %v1890
    %v1954 = vpop.f32.mrf.mxu0
    %v1955 = vadd.f32 %v82, %v1954
    %1956 = vmatmul.f32.gmra.mxu0 %v1893
    %v1957 = vpop.f32.mrf.mxu0
    %v1958 = vadd.f32 %v83, %v1957
    %1959 = vmatmul.f32.gmra.mxu0 %v1896
    %v1960 = vpop.f32.mrf.mxu0
    %v1961 = vadd.f32 %v84, %v1960
    %1962 = vmatmul.f32.gmra.mxu0 %v1899
    %v1963 = vpop.f32.mrf.mxu0
    %v1964 = vadd.f32 %v85, %v1963
    %1965 = vmatmul.f32.gmra.mxu0 %v1902
    %v1966 = vpop.f32.mrf.mxu0
    %v1967 = vadd.f32 %v86, %v1966
    %1968 = vmatmul.f32.gmra.mxu0 %v1905
    %v1969 = vpop.f32.mrf.mxu0
    %v1970 = vadd.f32 %v87, %v1969
    %1971 = vmatmul.f32.gmra.mxu0 %v1908
    %v1972 = vpop.f32.mrf.mxu0
    %v1973 = vadd.f32 %v88, %v1972
    %1974 = vmatmul.f32.gmra.mxu0 %v1911
    %v1975 = vpop.f32.mrf.mxu0
    %v1976 = vadd.f32 %v89, %v1975
    %1977 = vmatmul.f32.gmra.mxu0 %v1914
    %v1978 = vpop.f32.mrf.mxu0
    %v1979 = vadd.f32 %v90, %v1978
    %1980 = vmatmul.f32.gmra.mxu0 %v1917
    %v1981 = vpop.f32.mrf.mxu0
    %v1982 = vadd.f32 %v91, %v1981
    %1983 = vmatmul.f32.gmra.mxu0 %v1920
    %v1984 = vpop.f32.mrf.mxu0
    %v1985 = vadd.f32 %v92, %v1984
    %1986 = vmatmul.f32.gmra.mxu0 %v1923
    %v1987 = vpop.f32.mrf.mxu0
    %v1988 = vadd.f32 %v93, %v1987
    %1989 = vmatmul.f32.gmra.mxu0 %v1926
    %v1990 = vpop.f32.mrf.mxu0
    %v1991 = vadd.f32 %v94, %v1990
    %1992 = vmatmul.f32.gmra.mxu0 %v1929
    %v1993 = vpop.f32.mrf.mxu0
    %v1994 = vadd.f32 %v95, %v1993
    %1995 = vmatmul.f32.gmra.mxu0 %v1932
    %v1996 = vpop.f32.mrf.mxu0
    %v1997 = vadd.f32 %v96, %v1996
    %1998 = vmatmul.f32.gmra.mxu0 %v1935
    %v1999 = vpop.f32.mrf.mxu0
    %v2000 = vadd.f32 %v97, %v1999
    %2001 = vdwg.mxu0
    %2002 = vmax.xlane.f32.xlu0 %v1955
    %v2003 = vpop.xlane.xlu0 %2002
    %2004 = vmax.xlane.f32.xlu0 %v1958
    %v2005 = vpop.xlane.xlu0 %2004
    %2006 = vmax.xlane.f32.xlu0 %v1961
    %v2007 = vpop.xlane.xlu0 %2006
    %2008 = vmax.xlane.f32.xlu0 %v1964
    %v2009 = vpop.xlane.xlu0 %2008
    %2010 = vmax.xlane.f32.xlu0 %v1967
    %v2011 = vpop.xlane.xlu0 %2010
    %2012 = vmax.xlane.f32.xlu0 %v1970
    %v2013 = vpop.xlane.xlu0 %2012
    %2014 = vmax.xlane.f32.xlu0 %v1973
    %v2015 = vpop.xlane.xlu0 %2014
    %2016 = vmax.xlane.f32.xlu0 %v1976
    %v2017 = vpop.xlane.xlu0 %2016
    %2018 = vmax.xlane.f32.xlu0 %v1979
    %v2019 = vpop.xlane.xlu0 %2018
    %2020 = vmax.xlane.f32.xlu0 %v1982
    %v2021 = vpop.xlane.xlu0 %2020
    %2022 = vmax.xlane.f32.xlu0 %v1985
    %v2023 = vpop.xlane.xlu0 %2022
    %2024 = vmax.xlane.f32.xlu0 %v1988
    %v2025 = vpop.xlane.xlu0 %2024
    %2026 = vmax.xlane.f32.xlu0 %v1991
    %v2027 = vpop.xlane.xlu0 %2026
    %2028 = vmax.xlane.f32.xlu0 %v1994
    %v2029 = vpop.xlane.xlu0 %2028
    %2030 = vmax.xlane.f32.xlu0 %v1997
    %v2031 = vpop.xlane.xlu0 %2030
    %2032 = vmax.xlane.f32.xlu0 %v2000
    %v2033 = vpop.xlane.xlu0 %2032
    %v2034 = vsub.f32 %v1955, %v2003
    %v2035 = vsub.f32 %v1958, %v2005
    %v2036 = vsub.f32 %v1961, %v2007
    %v2037 = vsub.f32 %v1964, %v2009
    %v2038 = vsub.f32 %v1967, %v2011
    %v2039 = vsub.f32 %v1970, %v2013
    %v2040 = vsub.f32 %v1973, %v2015
    %v2041 = vsub.f32 %v1976, %v2017
    %v2042 = vsub.f32 %v1979, %v2019
    %v2043 = vsub.f32 %v1982, %v2021
    %v2044 = vsub.f32 %v1985, %v2023
    %v2045 = vsub.f32 %v1988, %v2025
    %v2046 = vsub.f32 %v1991, %v2027
    %v2047 = vsub.f32 %v1994, %v2029
    %v2048 = vsub.f32 %v1997, %v2031
    %v2049 = vsub.f32 %v2000, %v2033
    %v2050 = vmul.f32 %v2034, 1.442695
    %v2051 = vpow.pop %v2050
    %v2052 = vmul.f32 %v2035, 1.442695
    %v2053 = vpow.pop %v2052
    %v2054 = vmul.f32 %v2036, 1.442695
    %v2055 = vpow.pop %v2054
    %v2056 = vmul.f32 %v2037, 1.442695
    %v2057 = vpow.pop %v2056
    %v2058 = vmul.f32 %v2038, 1.442695
    %v2059 = vpow.pop %v2058
    %v2060 = vmul.f32 %v2039, 1.442695
    %v2061 = vpow.pop %v2060
    %v2062 = vmul.f32 %v2040, 1.442695
    %v2063 = vpow.pop %v2062
    %v2064 = vmul.f32 %v2041, 1.442695
    %v2065 = vpow.pop %v2064
    %v2066 = vmul.f32 %v2042, 1.442695
    %v2067 = vpow.pop %v2066
    %v2068 = vmul.f32 %v2043, 1.442695
    %v2069 = vpow.pop %v2068
    %v2070 = vmul.f32 %v2044, 1.442695
    %v2071 = vpow.pop %v2070
    %v2072 = vmul.f32 %v2045, 1.442695
    %v2073 = vpow.pop %v2072
    %v2074 = vmul.f32 %v2046, 1.442695
    %v2075 = vpow.pop %v2074
    %v2076 = vmul.f32 %v2047, 1.442695
    %v2077 = vpow.pop %v2076
    %v2078 = vmul.f32 %v2048, 1.442695
    %v2079 = vpow.pop %v2078
    %v2080 = vmul.f32 %v2049, 1.442695
    %v2081 = vpow.pop %v2080
    %2082 = vadd.xlane.f32.xlu0 %v2051
    %v2083 = vpop.xlane.xlu0 %2082
    %2084 = vadd.xlane.f32.xlu0 %v2053
    %v2085 = vpop.xlane.xlu0 %2084
    %2086 = vadd.xlane.f32.xlu0 %v2055
    %v2087 = vpop.xlane.xlu0 %2086
    %2088 = vadd.xlane.f32.xlu0 %v2057
    %v2089 = vpop.xlane.xlu0 %2088
    %2090 = vadd.xlane.f32.xlu0 %v2059
    %v2091 = vpop.xlane.xlu0 %2090
    %2092 = vadd.xlane.f32.xlu0 %v2061
    %v2093 = vpop.xlane.xlu0 %2092
    %2094 = vadd.xlane.f32.xlu0 %v2063
    %v2095 = vpop.xlane.xlu0 %2094
    %2096 = vadd.xlane.f32.xlu0 %v2065
    %v2097 = vpop.xlane.xlu0 %2096
    %2098 = vadd.xlane.f32.xlu0 %v2067
    %v2099 = vpop.xlane.xlu0 %2098
    %2100 = vadd.xlane.f32.xlu0 %v2069
    %v2101 = vpop.xlane.xlu0 %2100
    %2102 = vadd.xlane.f32.xlu0 %v2071
    %v2103 = vpop.xlane.xlu0 %2102
    %2104 = vadd.xlane.f32.xlu0 %v2073
    %v2105 = vpop.xlane.xlu0 %2104
    %2106 = vadd.xlane.f32.xlu0 %v2075
    %v2107 = vpop.xlane.xlu0 %2106
    %2108 = vadd.xlane.f32.xlu0 %v2077
    %v2109 = vpop.xlane.xlu0 %2108
    %2110 = vadd.xlane.f32.xlu0 %v2079
    %v2111 = vpop.xlane.xlu0 %2110
    %2112 = vadd.xlane.f32.xlu0 %v2081
    %v2113 = vpop.xlane.xlu0 %2112
    %v2114 = vrcp.pop %v2083
    %v2115 = vrcp.pop %v2085
    %v2116 = vrcp.pop %v2087
    %v2117 = vrcp.pop %v2089
    %v2118 = vrcp.pop %v2091
    %v2119 = vrcp.pop %v2093
    %v2120 = vrcp.pop %v2095
    %v2121 = vrcp.pop %v2097
    %v2122 = vrcp.pop %v2099
    %v2123 = vrcp.pop %v2101
    %v2124 = vrcp.pop %v2103
    %v2125 = vrcp.pop %v2105
    %v2126 = vrcp.pop %v2107
    %v2127 = vrcp.pop %v2109
    %v2128 = vrcp.pop %v2111
    %v2129 = vrcp.pop %v2113
    %v2130 = vmul.f32 %v2051, %v2114
    %v2131 = vmul.f32 %v2053, %v2115
    %v2132 = vmul.f32 %v2055, %v2116
    %v2133 = vmul.f32 %v2057, %v2117
    %v2134 = vmul.f32 %v2059, %v2118
    %v2135 = vmul.f32 %v2061, %v2119
    %v2136 = vmul.f32 %v2063, %v2120
    %v2137 = vmul.f32 %v2065, %v2121
    %v2138 = vmul.f32 %v2067, %v2122
    %v2139 = vmul.f32 %v2069, %v2123
    %v2140 = vmul.f32 %v2071, %v2124
    %v2141 = vmul.f32 %v2073, %v2125
    %v2142 = vmul.f32 %v2075, %v2126
    %v2143 = vmul.f32 %v2077, %v2127
    %v2144 = vmul.f32 %v2079, %v2128
    %v2145 = vmul.f32 %v2081, %v2129
    %2146 = vmatpush.xpose.msra.mxu0 %v2145
    %2147 = vmatpush.xpose.msra.mxu0 %v2144
    %2148 = vmatpush.xpose.msra.mxu0 %v2143
    %2149 = vmatpush.xpose.msra.mxu0 %v2142
    %2150 = vmatpush.xpose.msra.mxu0 %v2141
    %2151 = vmatpush.xpose.msra.mxu0 %v2140
    %2152 = vmatpush.xpose.msra.mxu0 %v2139
    %2153 = vmatpush.xpose.msra.mxu0 %v2138
    %2154 = vmatpush.xpose.msra.mxu0 %v2137
    %2155 = vmatpush.xpose.msra.mxu0 %v2136
    %2156 = vmatpush.xpose.msra.mxu0 %v2135
    %2157 = vmatpush.xpose.msra.mxu0 %v2134
    %2158 = vmatpush.xpose.msra.mxu0 %v2133
    %2159 = vmatpush.xpose.msra.mxu0 %v2132
    %2160 = vmatpush.xpose.msra.mxu0 %v2131
    %2161 = vmatpush.xpose.msra.mxu0 %v2130
    %2162 = vmatmul.f32.gmra.mxu0 %v1842
    %v2163 = vpop.f32.mrf.mxu0
    %v2164 = vadd.f32 0.0, %v2163
    %2165 = vdwg.mxu0
    %2166 = vxpose.xlu0.b32.start [1/16] %v1854, 128
    %2167 = vxpose.xlu0.b32.cont [2/16] 0.0, 128
    %2168 = vxpose.xlu0.b32.cont [3/16] 0.0, 128
    %2169 = vxpose.xlu0.b32.cont [4/16] 0.0, 128
    %2170 = vxpose.xlu0.b32.cont [5/16] 0.0, 128
    %2171 = vxpose.xlu0.b32.cont [6/16] 0.0, 128
    %2172 = vxpose.xlu0.b32.cont [7/16] 0.0, 128
    %2173 = vxpose.xlu0.b32.cont [8/16] 0.0, 128
    %2174 = vxpose.xlu0.b32.cont [9/16] 0.0, 128
    %2175 = vxpose.xlu0.b32.cont [10/16] 0.0, 128
    %2176 = vxpose.xlu0.b32.cont [11/16] 0.0, 128
    %2177 = vxpose.xlu0.b32.cont [12/16] 0.0, 128
    %2178 = vxpose.xlu0.b32.cont [13/16] 0.0, 128
    %2179 = vxpose.xlu0.b32.cont [14/16] 0.0, 128
    %2180 = vxpose.xlu0.b32.cont [15/16] 0.0, 128
    %2181 = vxpose.xlu0.b32.end [16/16] 0.0, 128
    %v2182 = vpop.trf.xlu0
    %v2183 = vpop.trf.xlu0
    %v2184 = vpop.trf.xlu0
    %v2185 = vpop.trf.xlu0
    %v2186 = vpop.trf.xlu0
    %v2187 = vpop.trf.xlu0
    %v2188 = vpop.trf.xlu0
    %v2189 = vpop.trf.xlu0
    %v2190 = vpop.trf.xlu0
    %v2191 = vpop.trf.xlu0
    %v2192 = vpop.trf.xlu0
    %v2193 = vpop.trf.xlu0
    %v2194 = vpop.trf.xlu0
    %v2195 = vpop.trf.xlu0
    %v2196 = vpop.trf.xlu0
    %v2197 = vpop.trf.xlu0
    %v2199 = vsel %vm417, %v2182, 0
    %v2202 = vsel %vm417, %v2183, 0
    %v2205 = vsel %vm417, %v2184, 0
    %v2208 = vsel %vm417, %v2185, 0
    %v2211 = vsel %vm417, %v2186, 0
    %v2214 = vsel %vm417, %v2187, 0
    %v2217 = vsel %vm417, %v2188, 0
    %v2220 = vsel %vm417, %v2189, 0
    %v2223 = vsel %vm417, %v2190, 0
    %v2226 = vsel %vm417, %v2191, 0
    %v2229 = vsel %vm417, %v2192, 0
    %v2232 = vsel %vm417, %v2193, 0
    %v2235 = vsel %vm417, %v2194, 0
    %v2238 = vsel %vm417, %v2195, 0
    %v2241 = vsel %vm417, %v2196, 0
    %v2244 = vsel %vm417, %v2197, 0
    %2246 = vmatpush.msra.mxu0 0.0
    %2247 = vmatpush.msra.mxu0 0.0
    %2248 = vmatpush.msra.mxu0 0.0
    %2249 = vmatpush.msra.mxu0 0.0
    %2250 = vmatpush.msra.mxu0 0.0
    %2251 = vmatpush.msra.mxu0 0.0
    %2252 = vmatpush.msra.mxu0 0.0
    %2253 = vmatpush.msra.mxu0 0.0
    %2254 = vmatpush.msra.mxu0 0.0
    %2255 = vmatpush.msra.mxu0 0.0
    %2256 = vmatpush.msra.mxu0 0.0
    %2257 = vmatpush.msra.mxu0 0.0
    %2258 = vmatpush.msra.mxu0 0.0
    %2259 = vmatpush.msra.mxu0 0.0
    %2260 = vmatpush.msra.mxu0 0.0
    %2261 = vmatpush.msra.mxu0 %v1784
    %2262 = vmatmul.f32.gmra.mxu0 %v2199
    %v2263 = vpop.f32.mrf.mxu0
    %v2264 = vadd.f32 %v82, %v2263
    %2265 = vmatmul.f32.gmra.mxu0 %v2202
    %v2266 = vpop.f32.mrf.mxu0
    %v2267 = vadd.f32 %v83, %v2266
    %2268 = vmatmul.f32.gmra.mxu0 %v2205
    %v2269 = vpop.f32.mrf.mxu0
    %v2270 = vadd.f32 %v84, %v2269
    %2271 = vmatmul.f32.gmra.mxu0 %v2208
    %v2272 = vpop.f32.mrf.mxu0
    %v2273 = vadd.f32 %v85, %v2272
    %2274 = vmatmul.f32.gmra.mxu0 %v2211
    %v2275 = vpop.f32.mrf.mxu0
    %v2276 = vadd.f32 %v86, %v2275
    %2277 = vmatmul.f32.gmra.mxu0 %v2214
    %v2278 = vpop.f32.mrf.mxu0
    %v2279 = vadd.f32 %v87, %v2278
    %2280 = vmatmul.f32.gmra.mxu0 %v2217
    %v2281 = vpop.f32.mrf.mxu0
    %v2282 = vadd.f32 %v88, %v2281
    %2283 = vmatmul.f32.gmra.mxu0 %v2220
    %v2284 = vpop.f32.mrf.mxu0
    %v2285 = vadd.f32 %v89, %v2284
    %2286 = vmatmul.f32.gmra.mxu0 %v2223
    %v2287 = vpop.f32.mrf.mxu0
    %v2288 = vadd.f32 %v90, %v2287
    %2289 = vmatmul.f32.gmra.mxu0 %v2226
    %v2290 = vpop.f32.mrf.mxu0
    %v2291 = vadd.f32 %v91, %v2290
    %2292 = vmatmul.f32.gmra.mxu0 %v2229
    %v2293 = vpop.f32.mrf.mxu0
    %v2294 = vadd.f32 %v92, %v2293
    %2295 = vmatmul.f32.gmra.mxu0 %v2232
    %v2296 = vpop.f32.mrf.mxu0
    %v2297 = vadd.f32 %v93, %v2296
    %2298 = vmatmul.f32.gmra.mxu0 %v2235
    %v2299 = vpop.f32.mrf.mxu0
    %v2300 = vadd.f32 %v94, %v2299
    %2301 = vmatmul.f32.gmra.mxu0 %v2238
    %v2302 = vpop.f32.mrf.mxu0
    %v2303 = vadd.f32 %v95, %v2302
    %2304 = vmatmul.f32.gmra.mxu0 %v2241
    %v2305 = vpop.f32.mrf.mxu0
    %v2306 = vadd.f32 %v96, %v2305
    %2307 = vmatmul.f32.gmra.mxu0 %v2244
    %v2308 = vpop.f32.mrf.mxu0
    %v2309 = vadd.f32 %v97, %v2308
    %2310 = vdwg.mxu0
    %2311 = vmax.xlane.f32.xlu0 %v2264
    %v2312 = vpop.xlane.xlu0 %2311
    %2313 = vmax.xlane.f32.xlu0 %v2267
    %v2314 = vpop.xlane.xlu0 %2313
    %2315 = vmax.xlane.f32.xlu0 %v2270
    %v2316 = vpop.xlane.xlu0 %2315
    %2317 = vmax.xlane.f32.xlu0 %v2273
    %v2318 = vpop.xlane.xlu0 %2317
    %2319 = vmax.xlane.f32.xlu0 %v2276
    %v2320 = vpop.xlane.xlu0 %2319
    %2321 = vmax.xlane.f32.xlu0 %v2279
    %v2322 = vpop.xlane.xlu0 %2321
    %2323 = vmax.xlane.f32.xlu0 %v2282
    %v2324 = vpop.xlane.xlu0 %2323
    %2325 = vmax.xlane.f32.xlu0 %v2285
    %v2326 = vpop.xlane.xlu0 %2325
    %2327 = vmax.xlane.f32.xlu0 %v2288
    %v2328 = vpop.xlane.xlu0 %2327
    %2329 = vmax.xlane.f32.xlu0 %v2291
    %v2330 = vpop.xlane.xlu0 %2329
    %2331 = vmax.xlane.f32.xlu0 %v2294
    %v2332 = vpop.xlane.xlu0 %2331
    %2333 = vmax.xlane.f32.xlu0 %v2297
    %v2334 = vpop.xlane.xlu0 %2333
    %2335 = vmax.xlane.f32.xlu0 %v2300
    %v2336 = vpop.xlane.xlu0 %2335
    %2337 = vmax.xlane.f32.xlu0 %v2303
    %v2338 = vpop.xlane.xlu0 %2337
    %2339 = vmax.xlane.f32.xlu0 %v2306
    %v2340 = vpop.xlane.xlu0 %2339
    %2341 = vmax.xlane.f32.xlu0 %v2309
    %v2342 = vpop.xlane.xlu0 %2341
    %v2343 = vsub.f32 %v2264, %v2312
    %v2344 = vsub.f32 %v2267, %v2314
    %v2345 = vsub.f32 %v2270, %v2316
    %v2346 = vsub.f32 %v2273, %v2318
    %v2347 = vsub.f32 %v2276, %v2320
    %v2348 = vsub.f32 %v2279, %v2322
    %v2349 = vsub.f32 %v2282, %v2324
    %v2350 = vsub.f32 %v2285, %v2326
    %v2351 = vsub.f32 %v2288, %v2328
    %v2352 = vsub.f32 %v2291, %v2330
    %v2353 = vsub.f32 %v2294, %v2332
    %v2354 = vsub.f32 %v2297, %v2334
    %v2355 = vsub.f32 %v2300, %v2336
    %v2356 = vsub.f32 %v2303, %v2338
    %v2357 = vsub.f32 %v2306, %v2340
    %v2358 = vsub.f32 %v2309, %v2342
    %v2359 = vmul.f32 %v2343, 1.442695
    %v2360 = vpow.pop %v2359
    %v2361 = vmul.f32 %v2344, 1.442695
    %v2362 = vpow.pop %v2361
    %v2363 = vmul.f32 %v2345, 1.442695
    %v2364 = vpow.pop %v2363
    %v2365 = vmul.f32 %v2346, 1.442695
    %v2366 = vpow.pop %v2365
    %v2367 = vmul.f32 %v2347, 1.442695
    %v2368 = vpow.pop %v2367
    %v2369 = vmul.f32 %v2348, 1.442695
    %v2370 = vpow.pop %v2369
    %v2371 = vmul.f32 %v2349, 1.442695
    %v2372 = vpow.pop %v2371
    %v2373 = vmul.f32 %v2350, 1.442695
    %v2374 = vpow.pop %v2373
    %v2375 = vmul.f32 %v2351, 1.442695
    %v2376 = vpow.pop %v2375
    %v2377 = vmul.f32 %v2352, 1.442695
    %v2378 = vpow.pop %v2377
    %v2379 = vmul.f32 %v2353, 1.442695
    %v2380 = vpow.pop %v2379
    %v2381 = vmul.f32 %v2354, 1.442695
    %v2382 = vpow.pop %v2381
    %v2383 = vmul.f32 %v2355, 1.442695
    %v2384 = vpow.pop %v2383
    %v2385 = vmul.f32 %v2356, 1.442695
    %v2386 = vpow.pop %v2385
    %v2387 = vmul.f32 %v2357, 1.442695
    %v2388 = vpow.pop %v2387
    %v2389 = vmul.f32 %v2358, 1.442695
    %v2390 = vpow.pop %v2389
    %2391 = vadd.xlane.f32.xlu0 %v2360
    %v2392 = vpop.xlane.xlu0 %2391
    %2393 = vadd.xlane.f32.xlu0 %v2362
    %v2394 = vpop.xlane.xlu0 %2393
    %2395 = vadd.xlane.f32.xlu0 %v2364
    %v2396 = vpop.xlane.xlu0 %2395
    %2397 = vadd.xlane.f32.xlu0 %v2366
    %v2398 = vpop.xlane.xlu0 %2397
    %2399 = vadd.xlane.f32.xlu0 %v2368
    %v2400 = vpop.xlane.xlu0 %2399
    %2401 = vadd.xlane.f32.xlu0 %v2370
    %v2402 = vpop.xlane.xlu0 %2401
    %2403 = vadd.xlane.f32.xlu0 %v2372
    %v2404 = vpop.xlane.xlu0 %2403
    %2405 = vadd.xlane.f32.xlu0 %v2374
    %v2406 = vpop.xlane.xlu0 %2405
    %2407 = vadd.xlane.f32.xlu0 %v2376
    %v2408 = vpop.xlane.xlu0 %2407
    %2409 = vadd.xlane.f32.xlu0 %v2378
    %v2410 = vpop.xlane.xlu0 %2409
    %2411 = vadd.xlane.f32.xlu0 %v2380
    %v2412 = vpop.xlane.xlu0 %2411
    %2413 = vadd.xlane.f32.xlu0 %v2382
    %v2414 = vpop.xlane.xlu0 %2413
    %2415 = vadd.xlane.f32.xlu0 %v2384
    %v2416 = vpop.xlane.xlu0 %2415
    %2417 = vadd.xlane.f32.xlu0 %v2386
    %v2418 = vpop.xlane.xlu0 %2417
    %2419 = vadd.xlane.f32.xlu0 %v2388
    %v2420 = vpop.xlane.xlu0 %2419
    %2421 = vadd.xlane.f32.xlu0 %v2390
    %v2422 = vpop.xlane.xlu0 %2421
    %v2423 = vrcp.pop %v2392
    %v2424 = vrcp.pop %v2394
    %v2425 = vrcp.pop %v2396
    %v2426 = vrcp.pop %v2398
    %v2427 = vrcp.pop %v2400
    %v2428 = vrcp.pop %v2402
    %v2429 = vrcp.pop %v2404
    %v2430 = vrcp.pop %v2406
    %v2431 = vrcp.pop %v2408
    %v2432 = vrcp.pop %v2410
    %v2433 = vrcp.pop %v2412
    %v2434 = vrcp.pop %v2414
    %v2435 = vrcp.pop %v2416
    %v2436 = vrcp.pop %v2418
    %v2437 = vrcp.pop %v2420
    %v2438 = vrcp.pop %v2422
    %v2439 = vmul.f32 %v2360, %v2423
    %v2440 = vmul.f32 %v2362, %v2424
    %v2441 = vmul.f32 %v2364, %v2425
    %v2442 = vmul.f32 %v2366, %v2426
    %v2443 = vmul.f32 %v2368, %v2427
    %v2444 = vmul.f32 %v2370, %v2428
    %v2445 = vmul.f32 %v2372, %v2429
    %v2446 = vmul.f32 %v2374, %v2430
    %v2447 = vmul.f32 %v2376, %v2431
    %v2448 = vmul.f32 %v2378, %v2432
    %v2449 = vmul.f32 %v2380, %v2433
    %v2450 = vmul.f32 %v2382, %v2434
    %v2451 = vmul.f32 %v2384, %v2435
    %v2452 = vmul.f32 %v2386, %v2436
    %v2453 = vmul.f32 %v2388, %v2437
    %v2454 = vmul.f32 %v2390, %v2438
    %2455 = vmatpush.xpose.msra.mxu0 %v2454
    %2456 = vmatpush.xpose.msra.mxu0 %v2453
    %2457 = vmatpush.xpose.msra.mxu0 %v2452
    %2458 = vmatpush.xpose.msra.mxu0 %v2451
    %2459 = vmatpush.xpose.msra.mxu0 %v2450
    %2460 = vmatpush.xpose.msra.mxu0 %v2449
    %2461 = vmatpush.xpose.msra.mxu0 %v2448
    %2462 = vmatpush.xpose.msra.mxu0 %v2447
    %2463 = vmatpush.xpose.msra.mxu0 %v2446
    %2464 = vmatpush.xpose.msra.mxu0 %v2445
    %2465 = vmatpush.xpose.msra.mxu0 %v2444
    %2466 = vmatpush.xpose.msra.mxu0 %v2443
    %2467 = vmatpush.xpose.msra.mxu0 %v2442
    %2468 = vmatpush.xpose.msra.mxu0 %v2441
    %2469 = vmatpush.xpose.msra.mxu0 %v2440
    %2470 = vmatpush.xpose.msra.mxu0 %v2439
    %2471 = vmatmul.f32.gmra.mxu0 %v1845
    %v2472 = vpop.f32.mrf.mxu0
    %v2473 = vadd.f32 0.0, %v2472
    %2474 = vdwg.mxu0
    %2475 = vxpose.xlu0.b32.start [1/16] %v1855, 128
    %2476 = vxpose.xlu0.b32.cont [2/16] 0.0, 128
    %2477 = vxpose.xlu0.b32.cont [3/16] 0.0, 128
    %2478 = vxpose.xlu0.b32.cont [4/16] 0.0, 128
    %2479 = vxpose.xlu0.b32.cont [5/16] 0.0, 128
    %2480 = vxpose.xlu0.b32.cont [6/16] 0.0, 128
    %2481 = vxpose.xlu0.b32.cont [7/16] 0.0, 128
    %2482 = vxpose.xlu0.b32.cont [8/16] 0.0, 128
    %2483 = vxpose.xlu0.b32.cont [9/16] 0.0, 128
    %2484 = vxpose.xlu0.b32.cont [10/16] 0.0, 128
    %2485 = vxpose.xlu0.b32.cont [11/16] 0.0, 128
    %2486 = vxpose.xlu0.b32.cont [12/16] 0.0, 128
    %2487 = vxpose.xlu0.b32.cont [13/16] 0.0, 128
    %2488 = vxpose.xlu0.b32.cont [14/16] 0.0, 128
    %2489 = vxpose.xlu0.b32.cont [15/16] 0.0, 128
    %2490 = vxpose.xlu0.b32.end [16/16] 0.0, 128
    %v2491 = vpop.trf.xlu0
    %v2492 = vpop.trf.xlu0
    %v2493 = vpop.trf.xlu0
    %v2494 = vpop.trf.xlu0
    %v2495 = vpop.trf.xlu0
    %v2496 = vpop.trf.xlu0
    %v2497 = vpop.trf.xlu0
    %v2498 = vpop.trf.xlu0
    %v2499 = vpop.trf.xlu0
    %v2500 = vpop.trf.xlu0
    %v2501 = vpop.trf.xlu0
    %v2502 = vpop.trf.xlu0
    %v2503 = vpop.trf.xlu0
    %v2504 = vpop.trf.xlu0
    %v2505 = vpop.trf.xlu0
    %v2506 = vpop.trf.xlu0
    %v2508 = vsel %vm417, %v2491, 0
    %v2511 = vsel %vm417, %v2492, 0
    %v2514 = vsel %vm417, %v2493, 0
    %v2517 = vsel %vm417, %v2494, 0
    %v2520 = vsel %vm417, %v2495, 0
    %v2523 = vsel %vm417, %v2496, 0
    %v2526 = vsel %vm417, %v2497, 0
    %v2529 = vsel %vm417, %v2498, 0
    %v2532 = vsel %vm417, %v2499, 0
    %v2535 = vsel %vm417, %v2500, 0
    %v2538 = vsel %vm417, %v2501, 0
    %v2541 = vsel %vm417, %v2502, 0
    %v2544 = vsel %vm417, %v2503, 0
    %v2547 = vsel %vm417, %v2504, 0
    %v2550 = vsel %vm417, %v2505, 0
    %v2553 = vsel %vm417, %v2506, 0
    %2555 = vmatpush.msra.mxu0 0.0
    %2556 = vmatpush.msra.mxu0 0.0
    %2557 = vmatpush.msra.mxu0 0.0
    %2558 = vmatpush.msra.mxu0 0.0
    %2559 = vmatpush.msra.mxu0 0.0
    %2560 = vmatpush.msra.mxu0 0.0
    %2561 = vmatpush.msra.mxu0 0.0
    %2562 = vmatpush.msra.mxu0 0.0
    %2563 = vmatpush.msra.mxu0 0.0
    %2564 = vmatpush.msra.mxu0 0.0
    %2565 = vmatpush.msra.mxu0 0.0
    %2566 = vmatpush.msra.mxu0 0.0
    %2567 = vmatpush.msra.mxu0 0.0
    %2568 = vmatpush.msra.mxu0 0.0
    %2569 = vmatpush.msra.mxu0 0.0
    %2570 = vmatpush.msra.mxu0 %v1787
    %2571 = vmatmul.f32.gmra.mxu0 %v2508
    %v2572 = vpop.f32.mrf.mxu0
    %v2573 = vadd.f32 %v82, %v2572
    %2574 = vmatmul.f32.gmra.mxu0 %v2511
    %v2575 = vpop.f32.mrf.mxu0
    %v2576 = vadd.f32 %v83, %v2575
    %2577 = vmatmul.f32.gmra.mxu0 %v2514
    %v2578 = vpop.f32.mrf.mxu0
    %v2579 = vadd.f32 %v84, %v2578
    %2580 = vmatmul.f32.gmra.mxu0 %v2517
    %v2581 = vpop.f32.mrf.mxu0
    %v2582 = vadd.f32 %v85, %v2581
    %2583 = vmatmul.f32.gmra.mxu0 %v2520
    %v2584 = vpop.f32.mrf.mxu0
    %v2585 = vadd.f32 %v86, %v2584
    %2586 = vmatmul.f32.gmra.mxu0 %v2523
    %v2587 = vpop.f32.mrf.mxu0
    %v2588 = vadd.f32 %v87, %v2587
    %2589 = vmatmul.f32.gmra.mxu0 %v2526
    %v2590 = vpop.f32.mrf.mxu0
    %v2591 = vadd.f32 %v88, %v2590
    %2592 = vmatmul.f32.gmra.mxu0 %v2529
    %v2593 = vpop.f32.mrf.mxu0
    %v2594 = vadd.f32 %v89, %v2593
    %2595 = vmatmul.f32.gmra.mxu0 %v2532
    %v2596 = vpop.f32.mrf.mxu0
    %v2597 = vadd.f32 %v90, %v2596
    %2598 = vmatmul.f32.gmra.mxu0 %v2535
    %v2599 = vpop.f32.mrf.mxu0
    %v2600 = vadd.f32 %v91, %v2599
    %2601 = vmatmul.f32.gmra.mxu0 %v2538
    %v2602 = vpop.f32.mrf.mxu0
    %v2603 = vadd.f32 %v92, %v2602
    %2604 = vmatmul.f32.gmra.mxu0 %v2541
    %v2605 = vpop.f32.mrf.mxu0
    %v2606 = vadd.f32 %v93, %v2605
    %2607 = vmatmul.f32.gmra.mxu0 %v2544
    %v2608 = vpop.f32.mrf.mxu0
    %v2609 = vadd.f32 %v94, %v2608
    %2610 = vmatmul.f32.gmra.mxu0 %v2547
    %v2611 = vpop.f32.mrf.mxu0
    %v2612 = vadd.f32 %v95, %v2611
    %2613 = vmatmul.f32.gmra.mxu0 %v2550
    %v2614 = vpop.f32.mrf.mxu0
    %v2615 = vadd.f32 %v96, %v2614
    %2616 = vmatmul.f32.gmra.mxu0 %v2553
    %v2617 = vpop.f32.mrf.mxu0
    %v2618 = vadd.f32 %v97, %v2617
    %2619 = vdwg.mxu0
    %2620 = vmax.xlane.f32.xlu0 %v2573
    %v2621 = vpop.xlane.xlu0 %2620
    %2622 = vmax.xlane.f32.xlu0 %v2576
    %v2623 = vpop.xlane.xlu0 %2622
    %2624 = vmax.xlane.f32.xlu0 %v2579
    %v2625 = vpop.xlane.xlu0 %2624
    %2626 = vmax.xlane.f32.xlu0 %v2582
    %v2627 = vpop.xlane.xlu0 %2626
    %2628 = vmax.xlane.f32.xlu0 %v2585
    %v2629 = vpop.xlane.xlu0 %2628
    %2630 = vmax.xlane.f32.xlu0 %v2588
    %v2631 = vpop.xlane.xlu0 %2630
    %2632 = vmax.xlane.f32.xlu0 %v2591
    %v2633 = vpop.xlane.xlu0 %2632
    %2634 = vmax.xlane.f32.xlu0 %v2594
    %v2635 = vpop.xlane.xlu0 %2634
    %2636 = vmax.xlane.f32.xlu0 %v2597
    %v2637 = vpop.xlane.xlu0 %2636
    %2638 = vmax.xlane.f32.xlu0 %v2600
    %v2639 = vpop.xlane.xlu0 %2638
    %2640 = vmax.xlane.f32.xlu0 %v2603
    %v2641 = vpop.xlane.xlu0 %2640
    %2642 = vmax.xlane.f32.xlu0 %v2606
    %v2643 = vpop.xlane.xlu0 %2642
    %2644 = vmax.xlane.f32.xlu0 %v2609
    %v2645 = vpop.xlane.xlu0 %2644
    %2646 = vmax.xlane.f32.xlu0 %v2612
    %v2647 = vpop.xlane.xlu0 %2646
    %2648 = vmax.xlane.f32.xlu0 %v2615
    %v2649 = vpop.xlane.xlu0 %2648
    %2650 = vmax.xlane.f32.xlu0 %v2618
    %v2651 = vpop.xlane.xlu0 %2650
    %v2652 = vsub.f32 %v2573, %v2621
    %v2653 = vsub.f32 %v2576, %v2623
    %v2654 = vsub.f32 %v2579, %v2625
    %v2655 = vsub.f32 %v2582, %v2627
    %v2656 = vsub.f32 %v2585, %v2629
    %v2657 = vsub.f32 %v2588, %v2631
    %v2658 = vsub.f32 %v2591, %v2633
    %v2659 = vsub.f32 %v2594, %v2635
    %v2660 = vsub.f32 %v2597, %v2637
    %v2661 = vsub.f32 %v2600, %v2639
    %v2662 = vsub.f32 %v2603, %v2641
    %v2663 = vsub.f32 %v2606, %v2643
    %v2664 = vsub.f32 %v2609, %v2645
    %v2665 = vsub.f32 %v2612, %v2647
    %v2666 = vsub.f32 %v2615, %v2649
    %v2667 = vsub.f32 %v2618, %v2651
    %v2668 = vmul.f32 %v2652, 1.442695
    %v2669 = vpow.pop %v2668
    %v2670 = vmul.f32 %v2653, 1.442695
    %v2671 = vpow.pop %v2670
    %v2672 = vmul.f32 %v2654, 1.442695
    %v2673 = vpow.pop %v2672
    %v2674 = vmul.f32 %v2655, 1.442695
    %v2675 = vpow.pop %v2674
    %v2676 = vmul.f32 %v2656, 1.442695
    %v2677 = vpow.pop %v2676
    %v2678 = vmul.f32 %v2657, 1.442695
    %v2679 = vpow.pop %v2678
    %v2680 = vmul.f32 %v2658, 1.442695
    %v2681 = vpow.pop %v2680
    %v2682 = vmul.f32 %v2659, 1.442695
    %v2683 = vpow.pop %v2682
    %v2684 = vmul.f32 %v2660, 1.442695
    %v2685 = vpow.pop %v2684
    %v2686 = vmul.f32 %v2661, 1.442695
    %v2687 = vpow.pop %v2686
    %v2688 = vmul.f32 %v2662, 1.442695
    %v2689 = vpow.pop %v2688
    %v2690 = vmul.f32 %v2663, 1.442695
    %v2691 = vpow.pop %v2690
    %v2692 = vmul.f32 %v2664, 1.442695
    %v2693 = vpow.pop %v2692
    %v2694 = vmul.f32 %v2665, 1.442695
    %v2695 = vpow.pop %v2694
    %v2696 = vmul.f32 %v2666, 1.442695
    %v2697 = vpow.pop %v2696
    %v2698 = vmul.f32 %v2667, 1.442695
    %v2699 = vpow.pop %v2698
    %2700 = vadd.xlane.f32.xlu0 %v2669
    %v2701 = vpop.xlane.xlu0 %2700
    %2702 = vadd.xlane.f32.xlu0 %v2671
    %v2703 = vpop.xlane.xlu0 %2702
    %2704 = vadd.xlane.f32.xlu0 %v2673
    %v2705 = vpop.xlane.xlu0 %2704
    %2706 = vadd.xlane.f32.xlu0 %v2675
    %v2707 = vpop.xlane.xlu0 %2706
    %2708 = vadd.xlane.f32.xlu0 %v2677
    %v2709 = vpop.xlane.xlu0 %2708
    %2710 = vadd.xlane.f32.xlu0 %v2679
    %v2711 = vpop.xlane.xlu0 %2710
    %2712 = vadd.xlane.f32.xlu0 %v2681
    %v2713 = vpop.xlane.xlu0 %2712
    %2714 = vadd.xlane.f32.xlu0 %v2683
    %v2715 = vpop.xlane.xlu0 %2714
    %2716 = vadd.xlane.f32.xlu0 %v2685
    %v2717 = vpop.xlane.xlu0 %2716
    %2718 = vadd.xlane.f32.xlu0 %v2687
    %v2719 = vpop.xlane.xlu0 %2718
    %2720 = vadd.xlane.f32.xlu0 %v2689
    %v2721 = vpop.xlane.xlu0 %2720
    %2722 = vadd.xlane.f32.xlu0 %v2691
    %v2723 = vpop.xlane.xlu0 %2722
    %2724 = vadd.xlane.f32.xlu0 %v2693
    %v2725 = vpop.xlane.xlu0 %2724
    %2726 = vadd.xlane.f32.xlu0 %v2695
    %v2727 = vpop.xlane.xlu0 %2726
    %2728 = vadd.xlane.f32.xlu0 %v2697
    %v2729 = vpop.xlane.xlu0 %2728
    %2730 = vadd.xlane.f32.xlu0 %v2699
    %v2731 = vpop.xlane.xlu0 %2730
    %v2732 = vrcp.pop %v2701
    %v2733 = vrcp.pop %v2703
    %v2734 = vrcp.pop %v2705
    %v2735 = vrcp.pop %v2707
    %v2736 = vrcp.pop %v2709
    %v2737 = vrcp.pop %v2711
    %v2738 = vrcp.pop %v2713
    %v2739 = vrcp.pop %v2715
    %v2740 = vrcp.pop %v2717
    %v2741 = vrcp.pop %v2719
    %v2742 = vrcp.pop %v2721
    %v2743 = vrcp.pop %v2723
    %v2744 = vrcp.pop %v2725
    %v2745 = vrcp.pop %v2727
    %v2746 = vrcp.pop %v2729
    %v2747 = vrcp.pop %v2731
    %v2748 = vmul.f32 %v2669, %v2732
    %v2749 = vmul.f32 %v2671, %v2733
    %v2750 = vmul.f32 %v2673, %v2734
    %v2751 = vmul.f32 %v2675, %v2735
    %v2752 = vmul.f32 %v2677, %v2736
    %v2753 = vmul.f32 %v2679, %v2737
    %v2754 = vmul.f32 %v2681, %v2738
    %v2755 = vmul.f32 %v2683, %v2739
    %v2756 = vmul.f32 %v2685, %v2740
    %v2757 = vmul.f32 %v2687, %v2741
    %v2758 = vmul.f32 %v2689, %v2742
    %v2759 = vmul.f32 %v2691, %v2743
    %v2760 = vmul.f32 %v2693, %v2744
    %v2761 = vmul.f32 %v2695, %v2745
    %v2762 = vmul.f32 %v2697, %v2746
    %v2763 = vmul.f32 %v2699, %v2747
    %2764 = vmatpush.xpose.msra.mxu0 %v2763
    %2765 = vmatpush.xpose.msra.mxu0 %v2762
    %2766 = vmatpush.xpose.msra.mxu0 %v2761
    %2767 = vmatpush.xpose.msra.mxu0 %v2760
    %2768 = vmatpush.xpose.msra.mxu0 %v2759
    %2769 = vmatpush.xpose.msra.mxu0 %v2758
    %2770 = vmatpush.xpose.msra.mxu0 %v2757
    %2771 = vmatpush.xpose.msra.mxu0 %v2756
    %2772 = vmatpush.xpose.msra.mxu0 %v2755
    %2773 = vmatpush.xpose.msra.mxu0 %v2754
    %2774 = vmatpush.xpose.msra.mxu0 %v2753
    %2775 = vmatpush.xpose.msra.mxu0 %v2752
    %2776 = vmatpush.xpose.msra.mxu0 %v2751
    %2777 = vmatpush.xpose.msra.mxu0 %v2750
    %2778 = vmatpush.xpose.msra.mxu0 %v2749
    %2779 = vmatpush.xpose.msra.mxu0 %v2748
    %2780 = vmatmul.f32.gmra.mxu0 %v1848
    %v2781 = vpop.f32.mrf.mxu0
    %v2782 = vadd.f32 0.0, %v2781
    %2783 = vdwg.mxu0
    %2784 = vxpose.xlu0.b32.start [1/16] %v1856, 128
    %2785 = vxpose.xlu0.b32.cont [2/16] 0.0, 128
    %2786 = vxpose.xlu0.b32.cont [3/16] 0.0, 128
    %2787 = vxpose.xlu0.b32.cont [4/16] 0.0, 128
    %2788 = vxpose.xlu0.b32.cont [5/16] 0.0, 128
    %2789 = vxpose.xlu0.b32.cont [6/16] 0.0, 128
    %2790 = vxpose.xlu0.b32.cont [7/16] 0.0, 128
    %2791 = vxpose.xlu0.b32.cont [8/16] 0.0, 128
    %2792 = vxpose.xlu0.b32.cont [9/16] 0.0, 128
    %2793 = vxpose.xlu0.b32.cont [10/16] 0.0, 128
    %2794 = vxpose.xlu0.b32.cont [11/16] 0.0, 128
    %2795 = vxpose.xlu0.b32.cont [12/16] 0.0, 128
    %2796 = vxpose.xlu0.b32.cont [13/16] 0.0, 128
    %2797 = vxpose.xlu0.b32.cont [14/16] 0.0, 128
    %2798 = vxpose.xlu0.b32.cont [15/16] 0.0, 128
    %2799 = vxpose.xlu0.b32.end [16/16] 0.0, 128
    %v2800 = vpop.trf.xlu0
    %v2801 = vpop.trf.xlu0
    %v2802 = vpop.trf.xlu0
    %v2803 = vpop.trf.xlu0
    %v2804 = vpop.trf.xlu0
    %v2805 = vpop.trf.xlu0
    %v2806 = vpop.trf.xlu0
    %v2807 = vpop.trf.xlu0
    %v2808 = vpop.trf.xlu0
    %v2809 = vpop.trf.xlu0
    %v2810 = vpop.trf.xlu0
    %v2811 = vpop.trf.xlu0
    %v2812 = vpop.trf.xlu0
    %v2813 = vpop.trf.xlu0
    %v2814 = vpop.trf.xlu0
    %v2815 = vpop.trf.xlu0
    %v2817 = vsel %vm417, %v2800, 0
    %v2820 = vsel %vm417, %v2801, 0
    %v2823 = vsel %vm417, %v2802, 0
    %v2826 = vsel %vm417, %v2803, 0
    %v2829 = vsel %vm417, %v2804, 0
    %v2832 = vsel %vm417, %v2805, 0
    %v2835 = vsel %vm417, %v2806, 0
    %v2838 = vsel %vm417, %v2807, 0
    %v2841 = vsel %vm417, %v2808, 0
    %v2844 = vsel %vm417, %v2809, 0
    %v2847 = vsel %vm417, %v2810, 0
    %v2850 = vsel %vm417, %v2811, 0
    %v2853 = vsel %vm417, %v2812, 0
    %v2856 = vsel %vm417, %v2813, 0
    %v2859 = vsel %vm417, %v2814, 0
    %v2862 = vsel %vm417, %v2815, 0
    %2864 = vmatpush.msra.mxu0 0.0
    %2865 = vmatpush.msra.mxu0 0.0
    %2866 = vmatpush.msra.mxu0 0.0
    %2867 = vmatpush.msra.mxu0 0.0
    %2868 = vmatpush.msra.mxu0 0.0
    %2869 = vmatpush.msra.mxu0 0.0
    %2870 = vmatpush.msra.mxu0 0.0
    %2871 = vmatpush.msra.mxu0 0.0
    %2872 = vmatpush.msra.mxu0 0.0
    %2873 = vmatpush.msra.mxu0 0.0
    %2874 = vmatpush.msra.mxu0 0.0
    %2875 = vmatpush.msra.mxu0 0.0
    %2876 = vmatpush.msra.mxu0 0.0
    %2877 = vmatpush.msra.mxu0 0.0
    %2878 = vmatpush.msra.mxu0 0.0
    %2879 = vmatpush.msra.mxu0 %v1790
    %2880 = vmatmul.f32.gmra.mxu0 %v2817
    %v2881 = vpop.f32.mrf.mxu0
    %v2882 = vadd.f32 %v82, %v2881
    %2883 = vmatmul.f32.gmra.mxu0 %v2820
    %v2884 = vpop.f32.mrf.mxu0
    %v2885 = vadd.f32 %v83, %v2884
    %2886 = vmatmul.f32.gmra.mxu0 %v2823
    %v2887 = vpop.f32.mrf.mxu0
    %v2888 = vadd.f32 %v84, %v2887
    %2889 = vmatmul.f32.gmra.mxu0 %v2826
    %v2890 = vpop.f32.mrf.mxu0
    %v2891 = vadd.f32 %v85, %v2890
    %2892 = vmatmul.f32.gmra.mxu0 %v2829
    %v2893 = vpop.f32.mrf.mxu0
    %v2894 = vadd.f32 %v86, %v2893
    %2895 = vmatmul.f32.gmra.mxu0 %v2832
    %v2896 = vpop.f32.mrf.mxu0
    %v2897 = vadd.f32 %v87, %v2896
    %2898 = vmatmul.f32.gmra.mxu0 %v2835
    %v2899 = vpop.f32.mrf.mxu0
    %v2900 = vadd.f32 %v88, %v2899
    %2901 = vmatmul.f32.gmra.mxu0 %v2838
    %v2902 = vpop.f32.mrf.mxu0
    %v2903 = vadd.f32 %v89, %v2902
    %2904 = vmatmul.f32.gmra.mxu0 %v2841
    %v2905 = vpop.f32.mrf.mxu0
    %v2906 = vadd.f32 %v90, %v2905
    %2907 = vmatmul.f32.gmra.mxu0 %v2844
    %v2908 = vpop.f32.mrf.mxu0
    %v2909 = vadd.f32 %v91, %v2908
    %2910 = vmatmul.f32.gmra.mxu0 %v2847
    %v2911 = vpop.f32.mrf.mxu0
    %v2912 = vadd.f32 %v92, %v2911
    %2913 = vmatmul.f32.gmra.mxu0 %v2850
    %v2914 = vpop.f32.mrf.mxu0
    %v2915 = vadd.f32 %v93, %v2914
    %2916 = vmatmul.f32.gmra.mxu0 %v2853
    %v2917 = vpop.f32.mrf.mxu0
    %v2918 = vadd.f32 %v94, %v2917
    %2919 = vmatmul.f32.gmra.mxu0 %v2856
    %v2920 = vpop.f32.mrf.mxu0
    %v2921 = vadd.f32 %v95, %v2920
    %2922 = vmatmul.f32.gmra.mxu0 %v2859
    %v2923 = vpop.f32.mrf.mxu0
    %v2924 = vadd.f32 %v96, %v2923
    %2925 = vmatmul.f32.gmra.mxu0 %v2862
    %v2926 = vpop.f32.mrf.mxu0
    %v2927 = vadd.f32 %v97, %v2926
    %2928 = vdwg.mxu0
    %2929 = vmax.xlane.f32.xlu0 %v2882
    %v2930 = vpop.xlane.xlu0 %2929
    %2931 = vmax.xlane.f32.xlu0 %v2885
    %v2932 = vpop.xlane.xlu0 %2931
    %2933 = vmax.xlane.f32.xlu0 %v2888
    %v2934 = vpop.xlane.xlu0 %2933
    %2935 = vmax.xlane.f32.xlu0 %v2891
    %v2936 = vpop.xlane.xlu0 %2935
    %2937 = vmax.xlane.f32.xlu0 %v2894
    %v2938 = vpop.xlane.xlu0 %2937
    %2939 = vmax.xlane.f32.xlu0 %v2897
    %v2940 = vpop.xlane.xlu0 %2939
    %2941 = vmax.xlane.f32.xlu0 %v2900
    %v2942 = vpop.xlane.xlu0 %2941
    %2943 = vmax.xlane.f32.xlu0 %v2903
    %v2944 = vpop.xlane.xlu0 %2943
    %2945 = vmax.xlane.f32.xlu0 %v2906
    %v2946 = vpop.xlane.xlu0 %2945
    %2947 = vmax.xlane.f32.xlu0 %v2909
    %v2948 = vpop.xlane.xlu0 %2947
    %2949 = vmax.xlane.f32.xlu0 %v2912
    %v2950 = vpop.xlane.xlu0 %2949
    %2951 = vmax.xlane.f32.xlu0 %v2915
    %v2952 = vpop.xlane.xlu0 %2951
    %2953 = vmax.xlane.f32.xlu0 %v2918
    %v2954 = vpop.xlane.xlu0 %2953
    %2955 = vmax.xlane.f32.xlu0 %v2921
    %v2956 = vpop.xlane.xlu0 %2955
    %2957 = vmax.xlane.f32.xlu0 %v2924
    %v2958 = vpop.xlane.xlu0 %2957
    %2959 = vmax.xlane.f32.xlu0 %v2927
    %v2960 = vpop.xlane.xlu0 %2959
    %v2961 = vsub.f32 %v2882, %v2930
    %v2962 = vsub.f32 %v2885, %v2932
    %v2963 = vsub.f32 %v2888, %v2934
    %v2964 = vsub.f32 %v2891, %v2936
    %v2965 = vsub.f32 %v2894, %v2938
    %v2966 = vsub.f32 %v2897, %v2940
    %v2967 = vsub.f32 %v2900, %v2942
    %v2968 = vsub.f32 %v2903, %v2944
    %v2969 = vsub.f32 %v2906, %v2946
    %v2970 = vsub.f32 %v2909, %v2948
    %v2971 = vsub.f32 %v2912, %v2950
    %v2972 = vsub.f32 %v2915, %v2952
    %v2973 = vsub.f32 %v2918, %v2954
    %v2974 = vsub.f32 %v2921, %v2956
    %v2975 = vsub.f32 %v2924, %v2958
    %v2976 = vsub.f32 %v2927, %v2960
    %v2977 = vmul.f32 %v2961, 1.442695
    %v2978 = vpow.pop %v2977
    %v2979 = vmul.f32 %v2962, 1.442695
    %v2980 = vpow.pop %v2979
    %v2981 = vmul.f32 %v2963, 1.442695
    %v2982 = vpow.pop %v2981
    %v2983 = vmul.f32 %v2964, 1.442695
    %v2984 = vpow.pop %v2983
    %v2985 = vmul.f32 %v2965, 1.442695
    %v2986 = vpow.pop %v2985
    %v2987 = vmul.f32 %v2966, 1.442695
    %v2988 = vpow.pop %v2987
    %v2989 = vmul.f32 %v2967, 1.442695
    %v2990 = vpow.pop %v2989
    %v2991 = vmul.f32 %v2968, 1.442695
    %v2992 = vpow.pop %v2991
    %v2993 = vmul.f32 %v2969, 1.442695
    %v2994 = vpow.pop %v2993
    %v2995 = vmul.f32 %v2970, 1.442695
    %v2996 = vpow.pop %v2995
    %v2997 = vmul.f32 %v2971, 1.442695
    %v2998 = vpow.pop %v2997
    %v2999 = vmul.f32 %v2972, 1.442695
    %v3000 = vpow.pop %v2999
    %v3001 = vmul.f32 %v2973, 1.442695
    %v3002 = vpow.pop %v3001
    %v3003 = vmul.f32 %v2974, 1.442695
    %v3004 = vpow.pop %v3003
    %v3005 = vmul.f32 %v2975, 1.442695
    %v3006 = vpow.pop %v3005
    %v3007 = vmul.f32 %v2976, 1.442695
    %v3008 = vpow.pop %v3007
    %3009 = vadd.xlane.f32.xlu0 %v2978
    %v3010 = vpop.xlane.xlu0 %3009
    %3011 = vadd.xlane.f32.xlu0 %v2980
    %v3012 = vpop.xlane.xlu0 %3011
    %3013 = vadd.xlane.f32.xlu0 %v2982
    %v3014 = vpop.xlane.xlu0 %3013
    %3015 = vadd.xlane.f32.xlu0 %v2984
    %v3016 = vpop.xlane.xlu0 %3015
    %3017 = vadd.xlane.f32.xlu0 %v2986
    %v3018 = vpop.xlane.xlu0 %3017
    %3019 = vadd.xlane.f32.xlu0 %v2988
    %v3020 = vpop.xlane.xlu0 %3019
    %3021 = vadd.xlane.f32.xlu0 %v2990
    %v3022 = vpop.xlane.xlu0 %3021
    %3023 = vadd.xlane.f32.xlu0 %v2992
    %v3024 = vpop.xlane.xlu0 %3023
    %3025 = vadd.xlane.f32.xlu0 %v2994
    %v3026 = vpop.xlane.xlu0 %3025
    %3027 = vadd.xlane.f32.xlu0 %v2996
    %v3028 = vpop.xlane.xlu0 %3027
    %3029 = vadd.xlane.f32.xlu0 %v2998
    %v3030 = vpop.xlane.xlu0 %3029
    %3031 = vadd.xlane.f32.xlu0 %v3000
    %v3032 = vpop.xlane.xlu0 %3031
    %3033 = vadd.xlane.f32.xlu0 %v3002
    %v3034 = vpop.xlane.xlu0 %3033
    %3035 = vadd.xlane.f32.xlu0 %v3004
    %v3036 = vpop.xlane.xlu0 %3035
    %3037 = vadd.xlane.f32.xlu0 %v3006
    %v3038 = vpop.xlane.xlu0 %3037
    %3039 = vadd.xlane.f32.xlu0 %v3008
    %v3040 = vpop.xlane.xlu0 %3039
    %v3041 = vrcp.pop %v3010
    %v3042 = vrcp.pop %v3012
    %v3043 = vrcp.pop %v3014
    %v3044 = vrcp.pop %v3016
    %v3045 = vrcp.pop %v3018
    %v3046 = vrcp.pop %v3020
    %v3047 = vrcp.pop %v3022
    %v3048 = vrcp.pop %v3024
    %v3049 = vrcp.pop %v3026
    %v3050 = vrcp.pop %v3028
    %v3051 = vrcp.pop %v3030
    %v3052 = vrcp.pop %v3032
    %v3053 = vrcp.pop %v3034
    %v3054 = vrcp.pop %v3036
    %v3055 = vrcp.pop %v3038
    %v3056 = vrcp.pop %v3040
    %v3057 = vmul.f32 %v2978, %v3041
    %v3058 = vmul.f32 %v2980, %v3042
    %v3059 = vmul.f32 %v2982, %v3043
    %v3060 = vmul.f32 %v2984, %v3044
    %v3061 = vmul.f32 %v2986, %v3045
    %v3062 = vmul.f32 %v2988, %v3046
    %v3063 = vmul.f32 %v2990, %v3047
    %v3064 = vmul.f32 %v2992, %v3048
    %v3065 = vmul.f32 %v2994, %v3049
    %v3066 = vmul.f32 %v2996, %v3050
    %v3067 = vmul.f32 %v2998, %v3051
    %v3068 = vmul.f32 %v3000, %v3052
    %v3069 = vmul.f32 %v3002, %v3053
    %v3070 = vmul.f32 %v3004, %v3054
    %v3071 = vmul.f32 %v3006, %v3055
    %v3072 = vmul.f32 %v3008, %v3056
    %3073 = vmatpush.xpose.msra.mxu0 %v3072
    %3074 = vmatpush.xpose.msra.mxu0 %v3071
    %3075 = vmatpush.xpose.msra.mxu0 %v3070
    %3076 = vmatpush.xpose.msra.mxu0 %v3069
    %3077 = vmatpush.xpose.msra.mxu0 %v3068
    %3078 = vmatpush.xpose.msra.mxu0 %v3067
    %3079 = vmatpush.xpose.msra.mxu0 %v3066
    %3080 = vmatpush.xpose.msra.mxu0 %v3065
    %3081 = vmatpush.xpose.msra.mxu0 %v3064
    %3082 = vmatpush.xpose.msra.mxu0 %v3063
    %3083 = vmatpush.xpose.msra.mxu0 %v3062
    %3084 = vmatpush.xpose.msra.mxu0 %v3061
    %3085 = vmatpush.xpose.msra.mxu0 %v3060
    %3086 = vmatpush.xpose.msra.mxu0 %v3059
    %3087 = vmatpush.xpose.msra.mxu0 %v3058
    %3088 = vmatpush.xpose.msra.mxu0 %v3057
    %3089 = vmatmul.f32.gmra.mxu0 %v1851
    %v3090 = vpop.f32.mrf.mxu0
    %v3091 = vadd.f32 0.0, %v3090
    %3092 = vdwg.mxu0
    %3094 = vset.pattern.permute.xlu0 0
    %3095 = vperm.xlu0 %3094, %v158
    %v3096 = vpop.permute.xlu0 %3095
    %3099 = vset.pattern.permute.xlu0 0
    %3100 = vperm.xlu0 %3099, %v159
    %v3101 = vpop.permute.xlu0 %3100
    %3104 = vset.pattern.permute.xlu0 0
    %3105 = vperm.xlu0 %3104, %v160
    %v3106 = vpop.permute.xlu0 %3105
    %3109 = vset.pattern.permute.xlu0 0
    %3110 = vperm.xlu0 %3109, %v161
    %v3111 = vpop.permute.xlu0 %3110
    %v3114 = vsel %vm254, %v154, 0
    %v3117 = vsel %vm254, %v155, 0
    %v3120 = vsel %vm254, %v156, 0
    %v3123 = vsel %vm254, %v157, 0
    %3125 = vmatpush.msra.mxu0 0.0
    %3126 = vmatpush.msra.mxu0 0.0
    %3127 = vmatpush.msra.mxu0 0.0
    %3128 = vmatpush.msra.mxu0 0.0
    %3129 = vmatpush.msra.mxu0 0.0
    %3130 = vmatpush.msra.mxu0 0.0
    %3131 = vmatpush.msra.mxu0 0.0
    %3132 = vmatpush.msra.mxu0 0.0
    %3133 = vmatpush.msra.mxu0 0.0
    %3134 = vmatpush.msra.mxu0 0.0
    %3135 = vmatpush.msra.mxu0 0.0
    %3136 = vmatpush.msra.mxu0 0.0
    %3137 = vmatpush.msra.mxu0 %v3091
    %3138 = vmatpush.msra.mxu0 %v2782
    %3139 = vmatpush.msra.mxu0 %v2473
    %3140 = vmatpush.msra.mxu0 %v2164
    %3141 = vmatmul.f32.gmra.mxu0 %v3114
    %v3142 = vpop.f32.mrf.mxu0
    %v3143 = vadd.f32 %v3096, %v3142
    %3144 = vmatmul.f32.gmra.mxu0 %v3117
    %v3145 = vpop.f32.mrf.mxu0
    %v3146 = vadd.f32 %v3101, %v3145
    %3147 = vmatmul.f32.gmra.mxu0 %v3120
    %v3148 = vpop.f32.mrf.mxu0
    %v3149 = vadd.f32 %v3106, %v3148
    %3150 = vmatmul.f32.gmra.mxu0 %v3123
    %v3151 = vpop.f32.mrf.mxu0
    %v3152 = vadd.f32 %v3111, %v3151
    %3153 = vdwg.mxu0
    %v3154 = vadd.f32 %v202, %v3143
    %v3155 = vadd.f32 %v203, %v3146
    %v3156 = vadd.f32 %v204, %v3149
    %v3157 = vadd.f32 %v205, %v3152
    %v3158 = vadd.f32 %v3154, %v3155
    %v3159 = vadd.f32 %v3158, %v3156
    %v3160 = vadd.f32 %v3159, %v3157
    %v3161 = vrot.slane %v3160, 4
    %v3162 = vadd.f32 %v3160, %v3161
    %v3163 = vrot.slane %v3162, 2
    %v3164 = vadd.f32 %v3162, %v3163
    %v3165 = vrot.slane %v3164, 1
    %v3166 = vadd.f32 %v3164, %v3165
    %v3167 = vrcp.pop 32.0
    %v3168 = vmul.f32 32.0, %v3167
    %v3169 = vsub.f32 1.0, %v3168
    %v3170 = vmul.f32 %v3167, %v3169
    %v3171 = vadd.f32 %v3167, %v3170
    %vm3172 = vweird.f32 %v3167
    %v3173 = vsel %vm3172, %v3167, %v3171
    %v3174 = vmul.f32 %v3166, %v3173
    %v3175 = vsub.f32 %v3154, %v3174
    %v3176 = vsub.f32 %v3155, %v3174
    %v3177 = vsub.f32 %v3156, %v3174
    %v3178 = vsub.f32 %v3157, %v3174
    %v3179 = vmul.f32 %v3175, %v3175
    %v3180 = vmul.f32 %v3176, %v3176
    %v3181 = vmul.f32 %v3177, %v3177
    %v3182 = vmul.f32 %v3178, %v3178
    %v3183 = vadd.f32 %v3179, %v3180
    %v3184 = vadd.f32 %v3183, %v3181
    %v3185 = vadd.f32 %v3184, %v3182
    %v3186 = vrot.slane %v3185, 4
    %v3187 = vadd.f32 %v3185, %v3186
    %v3188 = vrot.slane %v3187, 2
    %v3189 = vadd.f32 %v3187, %v3188
    %v3190 = vrot.slane %v3189, 1
    %v3191 = vadd.f32 %v3189, %v3190
    %v3192 = vmul.f32 %v3191, %v3173
    %v3193 = vadd.f32 %v3192, 1e-05
    %v3194 = vrsqrt.pop %v3193
    %v3195 = vmul.f32 %v3194, %v3193
    %v3196 = vmul.f32 %v3195, %v3194
    %v3197 = vmul.f32 0.5, %v3196
    %v3198 = vsub.f32 1.5, %v3197
    %v3199 = vmul.f32 %v3194, %v3198
    %vm3200 = vweird.f32 %v3193
    %vm3201 = vweird.f32 %v3194
    %vm3202 = vmor %vm3200, %vm3201
    %v3203 = vsel %vm3202, %v3194, %v3199
    %v3204 = vmul.f32 %v3175, %v3203
    %v3205 = vmul.f32 %v3176, %v3203
    %v3206 = vmul.f32 %v3177, %v3203
    %v3207 = vmul.f32 %v3178, %v3203
    %3209 = vset.pattern.permute.xlu0 0
    %3210 = vperm.xlu0 %3209, %v186
    %v3211 = vpop.permute.xlu0 %3210
    %3214 = vset.pattern.permute.xlu0 0
    %3215 = vperm.xlu0 %3214, %v187
    %v3216 = vpop.permute.xlu0 %3215
    %3219 = vset.pattern.permute.xlu0 0
    %3220 = vperm.xlu0 %3219, %v188
    %v3221 = vpop.permute.xlu0 %3220
    %3224 = vset.pattern.permute.xlu0 0
    %3225 = vperm.xlu0 %3224, %v189
    %v3226 = vpop.permute.xlu0 %3225
    %v3228 = vmul.f32 %v3204, %v3211
    %v3229 = vmul.f32 %v3205, %v3216
    %v3230 = vmul.f32 %v3206, %v3221
    %v3231 = vmul.f32 %v3207, %v3226
    %3233 = vset.pattern.permute.xlu0 0
    %3234 = vperm.xlu0 %3233, %v190
    %v3235 = vpop.permute.xlu0 %3234
    %3238 = vset.pattern.permute.xlu0 0
    %3239 = vperm.xlu0 %3238, %v191
    %v3240 = vpop.permute.xlu0 %3239
    %3243 = vset.pattern.permute.xlu0 0
    %3244 = vperm.xlu0 %3243, %v192
    %v3245 = vpop.permute.xlu0 %3244
    %3248 = vset.pattern.permute.xlu0 0
    %3249 = vperm.xlu0 %3248, %v193
    %v3250 = vpop.permute.xlu0 %3249
    %v3252 = vadd.f32 %v3228, %v3235
    %v3253 = vadd.f32 %v3229, %v3240
    %v3254 = vadd.f32 %v3230, %v3245
    %v3255 = vadd.f32 %v3231, %v3250
    %3257 = vset.pattern.permute.xlu0 0
    %3258 = vperm.xlu0 %3257, %v170
    %v3259 = vpop.permute.xlu0 %3258
    %3262 = vset.pattern.permute.xlu0 0
    %3263 = vperm.xlu0 %3262, %v171
    %v3264 = vpop.permute.xlu0 %3263
    %3267 = vset.pattern.permute.xlu0 0
    %3268 = vperm.xlu0 %3267, %v172
    %v3269 = vpop.permute.xlu0 %3268
    %3272 = vset.pattern.permute.xlu0 0
    %3273 = vperm.xlu0 %3272, %v173
    %v3274 = vpop.permute.xlu0 %3273
    %3277 = vset.pattern.permute.xlu0 0
    %3278 = vperm.xlu0 %3277, %v174
    %v3279 = vpop.permute.xlu0 %3278
    %3282 = vset.pattern.permute.xlu0 0
    %3283 = vperm.xlu0 %3282, %v175
    %v3284 = vpop.permute.xlu0 %3283
    %3287 = vset.pattern.permute.xlu0 0
    %3288 = vperm.xlu0 %3287, %v176
    %v3289 = vpop.permute.xlu0 %3288
    %3292 = vset.pattern.permute.xlu0 0
    %3293 = vperm.xlu0 %3292, %v177
    %v3294 = vpop.permute.xlu0 %3293
    %v3297 = vsel %vm254, %v162, 0
    %v3300 = vsel %vm254, %v163, 0
    %v3303 = vsel %vm254, %v164, 0
    %v3306 = vsel %vm254, %v165, 0
    %v3309 = vsel %vm254, %v166, 0
    %v3312 = vsel %vm254, %v167, 0
    %v3315 = vsel %vm254, %v168, 0
    %v3318 = vsel %vm254, %v169, 0
    %3320 = vmatpush.msra.mxu0 0.0
    %3321 = vmatpush.msra.mxu0 0.0
    %3322 = vmatpush.msra.mxu0 0.0
    %3323 = vmatpush.msra.mxu0 0.0
    %3324 = vmatpush.msra.mxu0 0.0
    %3325 = vmatpush.msra.mxu0 0.0
    %3326 = vmatpush.msra.mxu0 0.0
    %3327 = vmatpush.msra.mxu0 0.0
    %3328 = vmatpush.msra.mxu0 0.0
    %3329 = vmatpush.msra.mxu0 0.0
    %3330 = vmatpush.msra.mxu0 0.0
    %3331 = vmatpush.msra.mxu0 0.0
    %3332 = vmatpush.msra.mxu0 %v3255
    %3333 = vmatpush.msra.mxu0 %v3254
    %3334 = vmatpush.msra.mxu0 %v3253
    %3335 = vmatpush.msra.mxu0 %v3252
    %3336 = vmatmul.f32.gmra.mxu0 %v3297
    %v3337 = vpop.f32.mrf.mxu0
    %v3338 = vadd.f32 %v3259, %v3337
    %3339 = vmatmul.f32.gmra.mxu0 %v3300
    %v3340 = vpop.f32.mrf.mxu0
    %v3341 = vadd.f32 %v3264, %v3340
    %3342 = vmatmul.f32.gmra.mxu0 %v3303
    %v3343 = vpop.f32.mrf.mxu0
    %v3344 = vadd.f32 %v3269, %v3343
    %3345 = vmatmul.f32.gmra.mxu0 %v3306
    %v3346 = vpop.f32.mrf.mxu0
    %v3347 = vadd.f32 %v3274, %v3346
    %3348 = vmatmul.f32.gmra.mxu0 %v3309
    %v3349 = vpop.f32.mrf.mxu0
    %v3350 = vadd.f32 %v3279, %v3349
    %3351 = vmatmul.f32.gmra.mxu0 %v3312
    %v3352 = vpop.f32.mrf.mxu0
    %v3353 = vadd.f32 %v3284, %v3352
    %3354 = vmatmul.f32.gmra.mxu0 %v3315
    %v3355 = vpop.f32.mrf.mxu0
    %v3356 = vadd.f32 %v3289, %v3355
    %3357 = vmatmul.f32.gmra.mxu0 %v3318
    %v3358 = vpop.f32.mrf.mxu0
    %v3359 = vadd.f32 %v3294, %v3358
    %3360 = vdwg.mxu0
    %v3361 = vmax.f32 %v3338, 0.0
    %v3362 = vmax.f32 %v3341, 0.0
    %v3363 = vmax.f32 %v3344, 0.0
    %v3364 = vmax.f32 %v3347, 0.0
    %v3365 = vmax.f32 %v3350, 0.0
    %v3366 = vmax.f32 %v3353, 0.0
    %v3367 = vmax.f32 %v3356, 0.0
    %v3368 = vmax.f32 %v3359, 0.0
    %3370 = vset.pattern.permute.xlu0 0
    %3371 = vperm.xlu0 %3370, %v182
    %v3372 = vpop.permute.xlu0 %3371
    %3375 = vset.pattern.permute.xlu0 0
    %3376 = vperm.xlu0 %3375, %v183
    %v3377 = vpop.permute.xlu0 %3376
    %3380 = vset.pattern.permute.xlu0 0
    %3381 = vperm.xlu0 %3380, %v184
    %v3382 = vpop.permute.xlu0 %3381
    %3385 = vset.pattern.permute.xlu0 0
    %3386 = vperm.xlu0 %3385, %v185
    %v3387 = vpop.permute.xlu0 %3386
    %vm3389 = vcmask 523264
    %v3391 = vsel %vm3389, %v178, 0
    %v3394 = vsel %vm3389, %v179, 0
    %v3397 = vsel %vm3389, %v180, 0
    %v3400 = vsel %vm3389, %v181, 0
    %3402 = vmatpush.msra.mxu0 0.0
    %3403 = vmatpush.msra.mxu0 0.0
    %3404 = vmatpush.msra.mxu0 0.0
    %3405 = vmatpush.msra.mxu0 0.0
    %3406 = vmatpush.msra.mxu0 0.0
    %3407 = vmatpush.msra.mxu0 0.0
    %3408 = vmatpush.msra.mxu0 0.0
    %3409 = vmatpush.msra.mxu0 0.0
    %3410 = vmatpush.msra.mxu0 %v3368
    %3411 = vmatpush.msra.mxu0 %v3367
    %3412 = vmatpush.msra.mxu0 %v3366
    %3413 = vmatpush.msra.mxu0 %v3365
    %3414 = vmatpush.msra.mxu0 %v3364
    %3415 = vmatpush.msra.mxu0 %v3363
    %3416 = vmatpush.msra.mxu0 %v3362
    %3417 = vmatpush.msra.mxu0 %v3361
    %3418 = vmatmul.f32.gmra.mxu0 %v3391
    %v3419 = vpop.f32.mrf.mxu0
    %v3420 = vadd.f32 %v3372, %v3419
    %3421 = vmatmul.f32.gmra.mxu0 %v3394
    %v3422 = vpop.f32.mrf.mxu0
    %v3423 = vadd.f32 %v3377, %v3422
    %3424 = vmatmul.f32.gmra.mxu0 %v3397
    %v3425 = vpop.f32.mrf.mxu0
    %v3426 = vadd.f32 %v3382, %v3425
    %3427 = vmatmul.f32.gmra.mxu0 %v3400
    %v3428 = vpop.f32.mrf.mxu0
    %v3429 = vadd.f32 %v3387, %v3428
    %3430 = vdwg.mxu0
    %v3431 = vadd.f32 %v3252, %v3420
    %v3432 = vadd.f32 %v3253, %v3423
    %v3433 = vadd.f32 %v3254, %v3426
    %v3434 = vadd.f32 %v3255, %v3429
    %v3435 = vadd.f32 %v3431, %v3432
    %v3436 = vadd.f32 %v3435, %v3433
    %v3437 = vadd.f32 %v3436, %v3434
    %v3438 = vrot.slane %v3437, 4
    %v3439 = vadd.f32 %v3437, %v3438
    %v3440 = vrot.slane %v3439, 2
    %v3441 = vadd.f32 %v3439, %v3440
    %v3442 = vrot.slane %v3441, 1
    %v3443 = vadd.f32 %v3441, %v3442
    %v3444 = vmul.f32 %v3443, %v3173
    %v3445 = vsub.f32 %v3431, %v3444
    %v3446 = vsub.f32 %v3432, %v3444
    %v3447 = vsub.f32 %v3433, %v3444
    %v3448 = vsub.f32 %v3434, %v3444
    %v3449 = vmul.f32 %v3445, %v3445
    %v3450 = vmul.f32 %v3446, %v3446
    %v3451 = vmul.f32 %v3447, %v3447
    %v3452 = vmul.f32 %v3448, %v3448
    %v3453 = vadd.f32 %v3449, %v3450
    %v3454 = vadd.f32 %v3453, %v3451
    %v3455 = vadd.f32 %v3454, %v3452
    %v3456 = vrot.slane %v3455, 4
    %v3457 = vadd.f32 %v3455, %v3456
    %v3458 = vrot.slane %v3457, 2
    %v3459 = vadd.f32 %v3457, %v3458
    %v3460 = vrot.slane %v3459, 1
    %v3461 = vadd.f32 %v3459, %v3460
    %v3462 = vmul.f32 %v3461, %v3173
    %v3463 = vadd.f32 %v3462, 1e-05
    %v3464 = vrsqrt.pop %v3463
    %v3465 = vmul.f32 %v3464, %v3463
    %v3466 = vmul.f32 %v3465, %v3464
    %v3467 = vmul.f32 0.5, %v3466
    %v3468 = vsub.f32 1.5, %v3467
    %v3469 = vmul.f32 %v3464, %v3468
    %vm3470 = vweird.f32 %v3463
    %vm3471 = vweird.f32 %v3464
    %vm3472 = vmor %vm3470, %vm3471
    %v3473 = vsel %vm3472, %v3464, %v3469
    %v3474 = vmul.f32 %v3445, %v3473
    %v3475 = vmul.f32 %v3446, %v3473
    %v3476 = vmul.f32 %v3447, %v3473
    %v3477 = vmul.f32 %v3448, %v3473
    %3479 = vset.pattern.permute.xlu0 0
    %3480 = vperm.xlu0 %3479, %v194
    %v3481 = vpop.permute.xlu0 %3480
    %3484 = vset.pattern.permute.xlu0 0
    %3485 = vperm.xlu0 %3484, %v195
    %v3486 = vpop.permute.xlu0 %3485
    %3489 = vset.pattern.permute.xlu0 0
    %3490 = vperm.xlu0 %3489, %v196
    %v3491 = vpop.permute.xlu0 %3490
    %3494 = vset.pattern.permute.xlu0 0
    %3495 = vperm.xlu0 %3494, %v197
    %v3496 = vpop.permute.xlu0 %3495
    %v3498 = vmul.f32 %v3474, %v3481
    %v3499 = vmul.f32 %v3475, %v3486
    %v3500 = vmul.f32 %v3476, %v3491
    %v3501 = vmul.f32 %v3477, %v3496
    %3503 = vset.pattern.permute.xlu0 0
    %3504 = vperm.xlu0 %3503, %v198
    %v3505 = vpop.permute.xlu0 %3504
    %3508 = vset.pattern.permute.xlu0 0
    %3509 = vperm.xlu0 %3508, %v199
    %v3510 = vpop.permute.xlu0 %3509
    %3513 = vset.pattern.permute.xlu0 0
    %3514 = vperm.xlu0 %3513, %v200
    %v3515 = vpop.permute.xlu0 %3514
    %3518 = vset.pattern.permute.xlu0 0
    %3519 = vperm.xlu0 %3518, %v201
    %v3520 = vpop.permute.xlu0 %3519
    %v3522 = vadd.f32 %v3498, %v3505
    %v3523 = vadd.f32 %v3499, %v3510
    %v3524 = vadd.f32 %v3500, %v3515
    %v3525 = vadd.f32 %v3501, %v3520
    %3526 = vst [vmem:[#allocation2] sm:$0xff] %v3522
    %3527 = vst [vmem:[#allocation2 + $0x8] sm:$0xff] %v3523
    %3528 = vst [vmem:[#allocation2 + $0x10] sm:$0xff] %v3524
    %3529 = vst [vmem:[#allocation2 + $0x18] sm:$0xff] %v3525
    %s3530 = scalar_lea.vmem %s0, 32
    %v3531 = vld [vmem:[%s3530] sm:$0xff]
    %v3532 = vld [vmem:[%s3530 + $0x8] sm:$0xff]
    %v3533 = vld [vmem:[%s3530 + $0x10] sm:$0xff]
    %v3534 = vld [vmem:[%s3530 + $0x18] sm:$0xff]
    %s3535 = scalar_lea.vmem %s1, 32
    %v3536 = vld [vmem:[%s3535] sm:$0xff]
    %v3537 = vld [vmem:[%s3535 + $0x8] sm:$0xff]
    %v3538 = vld [vmem:[%s3535 + $0x10] sm:$0xff]
    %v3539 = vld [vmem:[%s3535 + $0x18] sm:$0xff]
    %v3540 = vadd.f32 %v3531, %v3536
    %v3541 = vadd.f32 %v3532, %v3537
    %v3542 = vadd.f32 %v3533, %v3538
    %v3543 = vadd.f32 %v3534, %v3539
    %3544 = vmatpush.msra.mxu0 0.0
    %3545 = vmatpush.msra.mxu0 0.0
    %3546 = vmatpush.msra.mxu0 0.0
    %3547 = vmatpush.msra.mxu0 0.0
    %3548 = vmatpush.msra.mxu0 0.0
    %3549 = vmatpush.msra.mxu0 0.0
    %3550 = vmatpush.msra.mxu0 0.0
    %3551 = vmatpush.msra.mxu0 0.0
    %3552 = vmatpush.msra.mxu0 0.0
    %3553 = vmatpush.msra.mxu0 0.0
    %3554 = vmatpush.msra.mxu0 0.0
    %3555 = vmatpush.msra.mxu0 0.0
    %3556 = vmatpush.msra.mxu0 %v3543
    %3557 = vmatpush.msra.mxu0 %v3542
    %3558 = vmatpush.msra.mxu0 %v3541
    %3559 = vmatpush.msra.mxu0 %v3540
    %3560 = vmatmul.f32.gmra.mxu0 %v256
    %v3561 = vpop.f32.mrf.mxu0
    %v3562 = vadd.f32 %v217, %v3561
    %3563 = vmatmul.f32.gmra.mxu0 %v259
    %v3564 = vpop.f32.mrf.mxu0
    %v3565 = vadd.f32 %v222, %v3564
    %3566 = vmatmul.f32.gmra.mxu0 %v262
    %v3567 = vpop.f32.mrf.mxu0
    %v3568 = vadd.f32 %v227, %v3567
    %3569 = vmatmul.f32.gmra.mxu0 %v265
    %v3570 = vpop.f32.mrf.mxu0
    %v3571 = vadd.f32 %v232, %v3570
    %3572 = vmatmul.f32.gmra.mxu0 %v268
    %v3573 = vpop.f32.mrf.mxu0
    %v3574 = vadd.f32 %v237, %v3573
    %3575 = vmatmul.f32.gmra.mxu0 %v271
    %v3576 = vpop.f32.mrf.mxu0
    %v3577 = vadd.f32 %v242, %v3576
    %3578 = vmatmul.f32.gmra.mxu0 %v274
    %v3579 = vpop.f32.mrf.mxu0
    %v3580 = vadd.f32 %v247, %v3579
    %3581 = vmatmul.f32.gmra.mxu0 %v277
    %v3582 = vpop.f32.mrf.mxu0
    %v3583 = vadd.f32 %v252, %v3582
    %3584 = vdwg.mxu0
    %3585 = vmatpush.msra.mxu0 0.0
    %3586 = vmatpush.msra.mxu0 0.0
    %3587 = vmatpush.msra.mxu0 0.0
    %3588 = vmatpush.msra.mxu0 0.0
    %3589 = vmatpush.msra.mxu0 0.0
    %3590 = vmatpush.msra.mxu0 0.0
    %3591 = vmatpush.msra.mxu0 0.0
    %3592 = vmatpush.msra.mxu0 0.0
    %3593 = vmatpush.msra.mxu0 0.0
    %3594 = vmatpush.msra.mxu0 0.0
    %3595 = vmatpush.msra.mxu0 0.0
    %3596 = vmatpush.msra.mxu0 0.0
    %3597 = vmatpush.msra.mxu0 %v3534
    %3598 = vmatpush.msra.mxu0 %v3533
    %3599 = vmatpush.msra.mxu0 %v3532
    %3600 = vmatpush.msra.mxu0 %v3531
    %3601 = vmatmul.f32.gmra.mxu0 %v341
    %v3602 = vpop.f32.mrf.mxu0
    %v3603 = vadd.f32 %v323, %v3602
    %3604 = vmatmul.f32.gmra.mxu0 %v344
    %v3605 = vpop.f32.mrf.mxu0
    %v3606 = vadd.f32 %v328, %v3605
    %3607 = vmatmul.f32.gmra.mxu0 %v347
    %v3608 = vpop.f32.mrf.mxu0
    %v3609 = vadd.f32 %v333, %v3608
    %3610 = vmatmul.f32.gmra.mxu0 %v350
    %v3611 = vpop.f32.mrf.mxu0
    %v3612 = vadd.f32 %v338, %v3611
    %3613 = vdwg.mxu0
    %v3614 = vmul.f32 %v3562, 0.35355338
    %v3615 = vmul.f32 %v3565, 0.35355338
    %v3616 = vmul.f32 %v3568, 0.35355338
    %v3617 = vmul.f32 %v3571, 0.35355338
    %3618 = vxpose.xlu0.b32.start [1/16] %v3614, 128
    %3619 = vxpose.xlu0.b32.cont [2/16] 0.0, 128
    %3620 = vxpose.xlu0.b32.cont [3/16] 0.0, 128
    %3621 = vxpose.xlu0.b32.cont [4/16] 0.0, 128
    %3622 = vxpose.xlu0.b32.cont [5/16] 0.0, 128
    %3623 = vxpose.xlu0.b32.cont [6/16] 0.0, 128
    %3624 = vxpose.xlu0.b32.cont [7/16] 0.0, 128
    %3625 = vxpose.xlu0.b32.cont [8/16] 0.0, 128
    %3626 = vxpose.xlu0.b32.cont [9/16] 0.0, 128
    %3627 = vxpose.xlu0.b32.cont [10/16] 0.0, 128
    %3628 = vxpose.xlu0.b32.cont [11/16] 0.0, 128
    %3629 = vxpose.xlu0.b32.cont [12/16] 0.0, 128
    %3630 = vxpose.xlu0.b32.cont [13/16] 0.0, 128
    %3631 = vxpose.xlu0.b32.cont [14/16] 0.0, 128
    %3632 = vxpose.xlu0.b32.cont [15/16] 0.0, 128
    %3633 = vxpose.xlu0.b32.end [16/16] 0.0, 128
    %v3634 = vpop.trf.xlu0
    %v3635 = vpop.trf.xlu0
    %v3636 = vpop.trf.xlu0
    %v3637 = vpop.trf.xlu0
    %v3638 = vpop.trf.xlu0
    %v3639 = vpop.trf.xlu0
    %v3640 = vpop.trf.xlu0
    %v3641 = vpop.trf.xlu0
    %v3642 = vpop.trf.xlu0
    %v3643 = vpop.trf.xlu0
    %v3644 = vpop.trf.xlu0
    %v3645 = vpop.trf.xlu0
    %v3646 = vpop.trf.xlu0
    %v3647 = vpop.trf.xlu0
    %v3648 = vpop.trf.xlu0
    %v3649 = vpop.trf.xlu0
    %v3651 = vsel %vm417, %v3634, 0
    %v3654 = vsel %vm417, %v3635, 0
    %v3657 = vsel %vm417, %v3636, 0
    %v3660 = vsel %vm417, %v3637, 0
    %v3663 = vsel %vm417, %v3638, 0
    %v3666 = vsel %vm417, %v3639, 0
    %v3669 = vsel %vm417, %v3640, 0
    %v3672 = vsel %vm417, %v3641, 0
    %v3675 = vsel %vm417, %v3642, 0
    %v3678 = vsel %vm417, %v3643, 0
    %v3681 = vsel %vm417, %v3644, 0
    %v3684 = vsel %vm417, %v3645, 0
    %v3687 = vsel %vm417, %v3646, 0
    %v3690 = vsel %vm417, %v3647, 0
    %v3693 = vsel %vm417, %v3648, 0
    %v3696 = vsel %vm417, %v3649, 0
    %3698 = vmatpush.msra.mxu0 0.0
    %3699 = vmatpush.msra.mxu0 0.0
    %3700 = vmatpush.msra.mxu0 0.0
    %3701 = vmatpush.msra.mxu0 0.0
    %3702 = vmatpush.msra.mxu0 0.0
    %3703 = vmatpush.msra.mxu0 0.0
    %3704 = vmatpush.msra.mxu0 0.0
    %3705 = vmatpush.msra.mxu0 0.0
    %3706 = vmatpush.msra.mxu0 0.0
    %3707 = vmatpush.msra.mxu0 0.0
    %3708 = vmatpush.msra.mxu0 0.0
    %3709 = vmatpush.msra.mxu0 0.0
    %3710 = vmatpush.msra.mxu0 0.0
    %3711 = vmatpush.msra.mxu0 0.0
    %3712 = vmatpush.msra.mxu0 0.0
    %3713 = vmatpush.msra.mxu0 %v3574
    %3714 = vmatmul.f32.gmra.mxu0 %v3651
    %v3715 = vpop.f32.mrf.mxu0
    %v3716 = vadd.f32 %v66, %v3715
    %3717 = vmatmul.f32.gmra.mxu0 %v3654
    %v3718 = vpop.f32.mrf.mxu0
    %v3719 = vadd.f32 %v67, %v3718
    %3720 = vmatmul.f32.gmra.mxu0 %v3657
    %v3721 = vpop.f32.mrf.mxu0
    %v3722 = vadd.f32 %v68, %v3721
    %3723 = vmatmul.f32.gmra.mxu0 %v3660
    %v3724 = vpop.f32.mrf.mxu0
    %v3725 = vadd.f32 %v69, %v3724
    %3726 = vmatmul.f32.gmra.mxu0 %v3663
    %v3727 = vpop.f32.mrf.mxu0
    %v3728 = vadd.f32 %v70, %v3727
    %3729 = vmatmul.f32.gmra.mxu0 %v3666
    %v3730 = vpop.f32.mrf.mxu0
    %v3731 = vadd.f32 %v71, %v3730
    %3732 = vmatmul.f32.gmra.mxu0 %v3669
    %v3733 = vpop.f32.mrf.mxu0
    %v3734 = vadd.f32 %v72, %v3733
    %3735 = vmatmul.f32.gmra.mxu0 %v3672
    %v3736 = vpop.f32.mrf.mxu0
    %v3737 = vadd.f32 %v73, %v3736
    %3738 = vmatmul.f32.gmra.mxu0 %v3675
    %v3739 = vpop.f32.mrf.mxu0
    %v3740 = vadd.f32 %v74, %v3739
    %3741 = vmatmul.f32.gmra.mxu0 %v3678
    %v3742 = vpop.f32.mrf.mxu0
    %v3743 = vadd.f32 %v75, %v3742
    %3744 = vmatmul.f32.gmra.mxu0 %v3681
    %v3745 = vpop.f32.mrf.mxu0
    %v3746 = vadd.f32 %v76, %v3745
    %3747 = vmatmul.f32.gmra.mxu0 %v3684
    %v3748 = vpop.f32.mrf.mxu0
    %v3749 = vadd.f32 %v77, %v3748
    %3750 = vmatmul.f32.gmra.mxu0 %v3687
    %v3751 = vpop.f32.mrf.mxu0
    %v3752 = vadd.f32 %v78, %v3751
    %3753 = vmatmul.f32.gmra.mxu0 %v3690
    %v3754 = vpop.f32.mrf.mxu0
    %v3755 = vadd.f32 %v79, %v3754
    %3756 = vmatmul.f32.gmra.mxu0 %v3693
    %v3757 = vpop.f32.mrf.mxu0
    %v3758 = vadd.f32 %v80, %v3757
    %3759 = vmatmul.f32.gmra.mxu0 %v3696
    %v3760 = vpop.f32.mrf.mxu0
    %v3761 = vadd.f32 %v81, %v3760
    %3762 = vdwg.mxu0
    %3763 = vmax.xlane.f32.xlu0 %v3716
    %v3764 = vpop.xlane.xlu0 %3763
    %3765 = vmax.xlane.f32.xlu0 %v3719
    %v3766 = vpop.xlane.xlu0 %3765
    %3767 = vmax.xlane.f32.xlu0 %v3722
    %v3768 = vpop.xlane.xlu0 %3767
    %3769 = vmax.xlane.f32.xlu0 %v3725
    %v3770 = vpop.xlane.xlu0 %3769
    %3771 = vmax.xlane.f32.xlu0 %v3728
    %v3772 = vpop.xlane.xlu0 %3771
    %3773 = vmax.xlane.f32.xlu0 %v3731
    %v3774 = vpop.xlane.xlu0 %3773
    %3775 = vmax.xlane.f32.xlu0 %v3734
    %v3776 = vpop.xlane.xlu0 %3775
    %3777 = vmax.xlane.f32.xlu0 %v3737
    %v3778 = vpop.xlane.xlu0 %3777
    %3779 = vmax.xlane.f32.xlu0 %v3740
    %v3780 = vpop.xlane.xlu0 %3779
    %3781 = vmax.xlane.f32.xlu0 %v3743
    %v3782 = vpop.xlane.xlu0 %3781
    %3783 = vmax.xlane.f32.xlu0 %v3746
    %v3784 = vpop.xlane.xlu0 %3783
    %3785 = vmax.xlane.f32.xlu0 %v3749
    %v3786 = vpop.xlane.xlu0 %3785
    %3787 = vmax.xlane.f32.xlu0 %v3752
    %v3788 = vpop.xlane.xlu0 %3787
    %3789 = vmax.xlane.f32.xlu0 %v3755
    %v3790 = vpop.xlane.xlu0 %3789
    %3791 = vmax.xlane.f32.xlu0 %v3758
    %v3792 = vpop.xlane.xlu0 %3791
    %3793 = vmax.xlane.f32.xlu0 %v3761
    %v3794 = vpop.xlane.xlu0 %3793
    %v3795 = vsub.f32 %v3716, %v3764
    %v3796 = vsub.f32 %v3719, %v3766
    %v3797 = vsub.f32 %v3722, %v3768
    %v3798 = vsub.f32 %v3725, %v3770
    %v3799 = vsub.f32 %v3728, %v3772
    %v3800 = vsub.f32 %v3731, %v3774
    %v3801 = vsub.f32 %v3734, %v3776
    %v3802 = vsub.f32 %v3737, %v3778
    %v3803 = vsub.f32 %v3740, %v3780
    %v3804 = vsub.f32 %v3743, %v3782
    %v3805 = vsub.f32 %v3746, %v3784
    %v3806 = vsub.f32 %v3749, %v3786
    %v3807 = vsub.f32 %v3752, %v3788
    %v3808 = vsub.f32 %v3755, %v3790
    %v3809 = vsub.f32 %v3758, %v3792
    %v3810 = vsub.f32 %v3761, %v3794
    %v3811 = vmul.f32 %v3795, 1.442695
    %v3812 = vpow.pop %v3811
    %v3813 = vmul.f32 %v3796, 1.442695
    %v3814 = vpow.pop %v3813
    %v3815 = vmul.f32 %v3797, 1.442695
    %v3816 = vpow.pop %v3815
    %v3817 = vmul.f32 %v3798, 1.442695
    %v3818 = vpow.pop %v3817
    %v3819 = vmul.f32 %v3799, 1.442695
    %v3820 = vpow.pop %v3819
    %v3821 = vmul.f32 %v3800, 1.442695
    %v3822 = vpow.pop %v3821
    %v3823 = vmul.f32 %v3801, 1.442695
    %v3824 = vpow.pop %v3823
    %v3825 = vmul.f32 %v3802, 1.442695
    %v3826 = vpow.pop %v3825
    %v3827 = vmul.f32 %v3803, 1.442695
    %v3828 = vpow.pop %v3827
    %v3829 = vmul.f32 %v3804, 1.442695
    %v3830 = vpow.pop %v3829
    %v3831 = vmul.f32 %v3805, 1.442695
    %v3832 = vpow.pop %v3831
    %v3833 = vmul.f32 %v3806, 1.442695
    %v3834 = vpow.pop %v3833
    %v3835 = vmul.f32 %v3807, 1.442695
    %v3836 = vpow.pop %v3835
    %v3837 = vmul.f32 %v3808, 1.442695
    %v3838 = vpow.pop %v3837
    %v3839 = vmul.f32 %v3809, 1.442695
    %v3840 = vpow.pop %v3839
    %v3841 = vmul.f32 %v3810, 1.442695
    %v3842 = vpow.pop %v3841
    %3843 = vadd.xlane.f32.xlu0 %v3812
    %v3844 = vpop.xlane.xlu0 %3843
    %3845 = vadd.xlane.f32.xlu0 %v3814
    %v3846 = vpop.xlane.xlu0 %3845
    %3847 = vadd.xlane.f32.xlu0 %v3816
    %v3848 = vpop.xlane.xlu0 %3847
    %3849 = vadd.xlane.f32.xlu0 %v3818
    %v3850 = vpop.xlane.xlu0 %3849
    %3851 = vadd.xlane.f32.xlu0 %v3820
    %v3852 = vpop.xlane.xlu0 %3851
    %3853 = vadd.xlane.f32.xlu0 %v3822
    %v3854 = vpop.xlane.xlu0 %3853
    %3855 = vadd.xlane.f32.xlu0 %v3824
    %v3856 = vpop.xlane.xlu0 %3855
    %3857 = vadd.xlane.f32.xlu0 %v3826
    %v3858 = vpop.xlane.xlu0 %3857
    %3859 = vadd.xlane.f32.xlu0 %v3828
    %v3860 = vpop.xlane.xlu0 %3859
    %3861 = vadd.xlane.f32.xlu0 %v3830
    %v3862 = vpop.xlane.xlu0 %3861
    %3863 = vadd.xlane.f32.xlu0 %v3832
    %v3864 = vpop.xlane.xlu0 %3863
    %3865 = vadd.xlane.f32.xlu0 %v3834
    %v3866 = vpop.xlane.xlu0 %3865
    %3867 = vadd.xlane.f32.xlu0 %v3836
    %v3868 = vpop.xlane.xlu0 %3867
    %3869 = vadd.xlane.f32.xlu0 %v3838
    %v3870 = vpop.xlane.xlu0 %3869
    %3871 = vadd.xlane.f32.xlu0 %v3840
    %v3872 = vpop.xlane.xlu0 %3871
    %3873 = vadd.xlane.f32.xlu0 %v3842
    %v3874 = vpop.xlane.xlu0 %3873
    %v3875 = vrcp.pop %v3844
    %v3876 = vrcp.pop %v3846
    %v3877 = vrcp.pop %v3848
    %v3878 = vrcp.pop %v3850
    %v3879 = vrcp.pop %v3852
    %v3880 = vrcp.pop %v3854
    %v3881 = vrcp.pop %v3856
    %v3882 = vrcp.pop %v3858
    %v3883 = vrcp.pop %v3860
    %v3884 = vrcp.pop %v3862
    %v3885 = vrcp.pop %v3864
    %v3886 = vrcp.pop %v3866
    %v3887 = vrcp.pop %v3868
    %v3888 = vrcp.pop %v3870
    %v3889 = vrcp.pop %v3872
    %v3890 = vrcp.pop %v3874
    %v3891 = vmul.f32 %v3812, %v3875
    %v3892 = vmul.f32 %v3814, %v3876
    %v3893 = vmul.f32 %v3816, %v3877
    %v3894 = vmul.f32 %v3818, %v3878
    %v3895 = vmul.f32 %v3820, %v3879
    %v3896 = vmul.f32 %v3822, %v3880
    %v3897 = vmul.f32 %v3824, %v3881
    %v3898 = vmul.f32 %v3826, %v3882
    %v3899 = vmul.f32 %v3828, %v3883
    %v3900 = vmul.f32 %v3830, %v3884
    %v3901 = vmul.f32 %v3832, %v3885
    %v3902 = vmul.f32 %v3834, %v3886
    %v3903 = vmul.f32 %v3836, %v3887
    %v3904 = vmul.f32 %v3838, %v3888
    %v3905 = vmul.f32 %v3840, %v3889
    %v3906 = vmul.f32 %v3842, %v3890
    %3907 = vmatpush.xpose.msra.mxu0 %v3906
    %3908 = vmatpush.xpose.msra.mxu0 %v3905
    %3909 = vmatpush.xpose.msra.mxu0 %v3904
    %3910 = vmatpush.xpose.msra.mxu0 %v3903
    %3911 = vmatpush.xpose.msra.mxu0 %v3902
    %3912 = vmatpush.xpose.msra.mxu0 %v3901
    %3913 = vmatpush.xpose.msra.mxu0 %v3900
    %3914 = vmatpush.xpose.msra.mxu0 %v3899
    %3915 = vmatpush.xpose.msra.mxu0 %v3898
    %3916 = vmatpush.xpose.msra.mxu0 %v3897
    %3917 = vmatpush.xpose.msra.mxu0 %v3896
    %3918 = vmatpush.xpose.msra.mxu0 %v3895
    %3919 = vmatpush.xpose.msra.mxu0 %v3894
    %3920 = vmatpush.xpose.msra.mxu0 %v3893
    %3921 = vmatpush.xpose.msra.mxu0 %v3892
    %3922 = vmatpush.xpose.msra.mxu0 %v3891
    %3923 = vmatmul.f32.gmra.mxu0 %v3603
    %v3924 = vpop.f32.mrf.mxu0
    %v3925 = vadd.f32 0.0, %v3924
    %3926 = vdwg.mxu0
    %3927 = vxpose.xlu0.b32.start [1/16] %v3615, 128
    %3928 = vxpose.xlu0.b32.cont [2/16] 0.0, 128
    %3929 = vxpose.xlu0.b32.cont [3/16] 0.0, 128
    %3930 = vxpose.xlu0.b32.cont [4/16] 0.0, 128
    %3931 = vxpose.xlu0.b32.cont [5/16] 0.0, 128
    %3932 = vxpose.xlu0.b32.cont [6/16] 0.0, 128
    %3933 = vxpose.xlu0.b32.cont [7/16] 0.0, 128
    %3934 = vxpose.xlu0.b32.cont [8/16] 0.0, 128
    %3935 = vxpose.xlu0.b32.cont [9/16] 0.0, 128
    %3936 = vxpose.xlu0.b32.cont [10/16] 0.0, 128
    %3937 = vxpose.xlu0.b32.cont [11/16] 0.0, 128
    %3938 = vxpose.xlu0.b32.cont [12/16] 0.0, 128
    %3939 = vxpose.xlu0.b32.cont [13/16] 0.0, 128
    %3940 = vxpose.xlu0.b32.cont [14/16] 0.0, 128
    %3941 = vxpose.xlu0.b32.cont [15/16] 0.0, 128
    %3942 = vxpose.xlu0.b32.end [16/16] 0.0, 128
    %v3943 = vpop.trf.xlu0
    %v3944 = vpop.trf.xlu0
    %v3945 = vpop.trf.xlu0
    %v3946 = vpop.trf.xlu0
    %v3947 = vpop.trf.xlu0
    %v3948 = vpop.trf.xlu0
    %v3949 = vpop.trf.xlu0
    %v3950 = vpop.trf.xlu0
    %v3951 = vpop.trf.xlu0
    %v3952 = vpop.trf.xlu0
    %v3953 = vpop.trf.xlu0
    %v3954 = vpop.trf.xlu0
    %v3955 = vpop.trf.xlu0
    %v3956 = vpop.trf.xlu0
    %v3957 = vpop.trf.xlu0
    %v3958 = vpop.trf.xlu0
    %v3960 = vsel %vm417, %v3943, 0
    %v3963 = vsel %vm417, %v3944, 0
    %v3966 = vsel %vm417, %v3945, 0
    %v3969 = vsel %vm417, %v3946, 0
    %v3972 = vsel %vm417, %v3947, 0
    %v3975 = vsel %vm417, %v3948, 0
    %v3978 = vsel %vm417, %v3949, 0
    %v3981 = vsel %vm417, %v3950, 0
    %v3984 = vsel %vm417, %v3951, 0
    %v3987 = vsel %vm417, %v3952, 0
    %v3990 = vsel %vm417, %v3953, 0
    %v3993 = vsel %vm417, %v3954, 0
    %v3996 = vsel %vm417, %v3955, 0
    %v3999 = vsel %vm417, %v3956, 0
    %v4002 = vsel %vm417, %v3957, 0
    %v4005 = vsel %vm417, %v3958, 0
    %4007 = vmatpush.msra.mxu0 0.0
    %4008 = vmatpush.msra.mxu0 0.0
    %4009 = vmatpush.msra.mxu0 0.0
    %4010 = vmatpush.msra.mxu0 0.0
    %4011 = vmatpush.msra.mxu0 0.0
    %4012 = vmatpush.msra.mxu0 0.0
    %4013 = vmatpush.msra.mxu0 0.0
    %4014 = vmatpush.msra.mxu0 0.0
    %4015 = vmatpush.msra.mxu0 0.0
    %4016 = vmatpush.msra.mxu0 0.0
    %4017 = vmatpush.msra.mxu0 0.0
    %4018 = vmatpush.msra.mxu0 0.0
    %4019 = vmatpush.msra.mxu0 0.0
    %4020 = vmatpush.msra.mxu0 0.0
    %4021 = vmatpush.msra.mxu0 0.0
    %4022 = vmatpush.msra.mxu0 %v3577
    %4023 = vmatmul.f32.gmra.mxu0 %v3960
    %v4024 = vpop.f32.mrf.mxu0
    %v4025 = vadd.f32 %v66, %v4024
    %4026 = vmatmul.f32.gmra.mxu0 %v3963
    %v4027 = vpop.f32.mrf.mxu0
    %v4028 = vadd.f32 %v67, %v4027
    %4029 = vmatmul.f32.gmra.mxu0 %v3966
    %v4030 = vpop.f32.mrf.mxu0
    %v4031 = vadd.f32 %v68, %v4030
    %4032 = vmatmul.f32.gmra.mxu0 %v3969
    %v4033 = vpop.f32.mrf.mxu0
    %v4034 = vadd.f32 %v69, %v4033
    %4035 = vmatmul.f32.gmra.mxu0 %v3972
    %v4036 = vpop.f32.mrf.mxu0
    %v4037 = vadd.f32 %v70, %v4036
    %4038 = vmatmul.f32.gmra.mxu0 %v3975
    %v4039 = vpop.f32.mrf.mxu0
    %v4040 = vadd.f32 %v71, %v4039
    %4041 = vmatmul.f32.gmra.mxu0 %v3978
    %v4042 = vpop.f32.mrf.mxu0
    %v4043 = vadd.f32 %v72, %v4042
    %4044 = vmatmul.f32.gmra.mxu0 %v3981
    %v4045 = vpop.f32.mrf.mxu0
    %v4046 = vadd.f32 %v73, %v4045
    %4047 = vmatmul.f32.gmra.mxu0 %v3984
    %v4048 = vpop.f32.mrf.mxu0
    %v4049 = vadd.f32 %v74, %v4048
    %4050 = vmatmul.f32.gmra.mxu0 %v3987
    %v4051 = vpop.f32.mrf.mxu0
    %v4052 = vadd.f32 %v75, %v4051
    %4053 = vmatmul.f32.gmra.mxu0 %v3990
    %v4054 = vpop.f32.mrf.mxu0
    %v4055 = vadd.f32 %v76, %v4054
    %4056 = vmatmul.f32.gmra.mxu0 %v3993
    %v4057 = vpop.f32.mrf.mxu0
    %v4058 = vadd.f32 %v77, %v4057
    %4059 = vmatmul.f32.gmra.mxu0 %v3996
    %v4060 = vpop.f32.mrf.mxu0
    %v4061 = vadd.f32 %v78, %v4060
    %4062 = vmatmul.f32.gmra.mxu0 %v3999
    %v4063 = vpop.f32.mrf.mxu0
    %v4064 = vadd.f32 %v79, %v4063
    %4065 = vmatmul.f32.gmra.mxu0 %v4002
    %v4066 = vpop.f32.mrf.mxu0
    %v4067 = vadd.f32 %v80, %v4066
    %4068 = vmatmul.f32.gmra.mxu0 %v4005
    %v4069 = vpop.f32.mrf.mxu0
    %v4070 = vadd.f32 %v81, %v4069
    %4071 = vdwg.mxu0
    %4072 = vmax.xlane.f32.xlu0 %v4025
    %v4073 = vpop.xlane.xlu0 %4072
    %4074 = vmax.xlane.f32.xlu0 %v4028
    %v4075 = vpop.xlane.xlu0 %4074
    %4076 = vmax.xlane.f32.xlu0 %v4031
    %v4077 = vpop.xlane.xlu0 %4076
    %4078 = vmax.xlane.f32.xlu0 %v4034
    %v4079 = vpop.xlane.xlu0 %4078
    %4080 = vmax.xlane.f32.xlu0 %v4037
    %v4081 = vpop.xlane.xlu0 %4080
    %4082 = vmax.xlane.f32.xlu0 %v4040
    %v4083 = vpop.xlane.xlu0 %4082
    %4084 = vmax.xlane.f32.xlu0 %v4043
    %v4085 = vpop.xlane.xlu0 %4084
    %4086 = vmax.xlane.f32.xlu0 %v4046
    %v4087 = vpop.xlane.xlu0 %4086
    %4088 = vmax.xlane.f32.xlu0 %v4049
    %v4089 = vpop.xlane.xlu0 %4088
    %4090 = vmax.xlane.f32.xlu0 %v4052
    %v4091 = vpop.xlane.xlu0 %4090
    %4092 = vmax.xlane.f32.xlu0 %v4055
    %v4093 = vpop.xlane.xlu0 %4092
    %4094 = vmax.xlane.f32.xlu0 %v4058
    %v4095 = vpop.xlane.xlu0 %4094
    %4096 = vmax.xlane.f32.xlu0 %v4061
    %v4097 = vpop.xlane.xlu0 %4096
    %4098 = vmax.xlane.f32.xlu0 %v4064
    %v4099 = vpop.xlane.xlu0 %4098
    %4100 = vmax.xlane.f32.xlu0 %v4067
    %v4101 = vpop.xlane.xlu0 %4100
    %4102 = vmax.xlane.f32.xlu0 %v4070
    %v4103 = vpop.xlane.xlu0 %4102
    %v4104 = vsub.f32 %v4025, %v4073
    %v4105 = vsub.f32 %v4028, %v4075
    %v4106 = vsub.f32 %v4031, %v4077
    %v4107 = vsub.f32 %v4034, %v4079
    %v4108 = vsub.f32 %v4037, %v4081
    %v4109 = vsub.f32 %v4040, %v4083
    %v4110 = vsub.f32 %v4043, %v4085
    %v4111 = vsub.f32 %v4046, %v4087
    %v4112 = vsub.f32 %v4049, %v4089
    %v4113 = vsub.f32 %v4052, %v4091
    %v4114 = vsub.f32 %v4055, %v4093
    %v4115 = vsub.f32 %v4058, %v4095
    %v4116 = vsub.f32 %v4061, %v4097
    %v4117 = vsub.f32 %v4064, %v4099
    %v4118 = vsub.f32 %v4067, %v4101
    %v4119 = vsub.f32 %v4070, %v4103
    %v4120 = vmul.f32 %v4104, 1.442695
    %v4121 = vpow.pop %v4120
    %v4122 = vmul.f32 %v4105, 1.442695
    %v4123 = vpow.pop %v4122
    %v4124 = vmul.f32 %v4106, 1.442695
    %v4125 = vpow.pop %v4124
    %v4126 = vmul.f32 %v4107, 1.442695
    %v4127 = vpow.pop %v4126
    %v4128 = vmul.f32 %v4108, 1.442695
    %v4129 = vpow.pop %v4128
    %v4130 = vmul.f32 %v4109, 1.442695
    %v4131 = vpow.pop %v4130
    %v4132 = vmul.f32 %v4110, 1.442695
    %v4133 = vpow.pop %v4132
    %v4134 = vmul.f32 %v4111, 1.442695
    %v4135 = vpow.pop %v4134
    %v4136 = vmul.f32 %v4112, 1.442695
    %v4137 = vpow.pop %v4136
    %v4138 = vmul.f32 %v4113, 1.442695
    %v4139 = vpow.pop %v4138
    %v4140 = vmul.f32 %v4114, 1.442695
    %v4141 = vpow.pop %v4140
    %v4142 = vmul.f32 %v4115, 1.442695
    %v4143 = vpow.pop %v4142
    %v4144 = vmul.f32 %v4116, 1.442695
    %v4145 = vpow.pop %v4144
    %v4146 = vmul.f32 %v4117, 1.442695
    %v4147 = vpow.pop %v4146
    %v4148 = vmul.f32 %v4118, 1.442695
    %v4149 = vpow.pop %v4148
    %v4150 = vmul.f32 %v4119, 1.442695
    %v4151 = vpow.pop %v4150
    %4152 = vadd.xlane.f32.xlu0 %v4121
    %v4153 = vpop.xlane.xlu0 %4152
    %4154 = vadd.xlane.f32.xlu0 %v4123
    %v4155 = vpop.xlane.xlu0 %4154
    %4156 = vadd.xlane.f32.xlu0 %v4125
    %v4157 = vpop.xlane.xlu0 %4156
    %4158 = vadd.xlane.f32.xlu0 %v4127
    %v4159 = vpop.xlane.xlu0 %4158
    %4160 = vadd.xlane.f32.xlu0 %v4129
    %v4161 = vpop.xlane.xlu0 %4160
    %4162 = vadd.xlane.f32.xlu0 %v4131
    %v4163 = vpop.xlane.xlu0 %4162
    %4164 = vadd.xlane.f32.xlu0 %v4133
    %v4165 = vpop.xlane.xlu0 %4164
    %4166 = vadd.xlane.f32.xlu0 %v4135
    %v4167 = vpop.xlane.xlu0 %4166
    %4168 = vadd.xlane.f32.xlu0 %v4137
    %v4169 = vpop.xlane.xlu0 %4168
    %4170 = vadd.xlane.f32.xlu0 %v4139
    %v4171 = vpop.xlane.xlu0 %4170
    %4172 = vadd.xlane.f32.xlu0 %v4141
    %v4173 = vpop.xlane.xlu0 %4172
    %4174 = vadd.xlane.f32.xlu0 %v4143
    %v4175 = vpop.xlane.xlu0 %4174
    %4176 = vadd.xlane.f32.xlu0 %v4145
    %v4177 = vpop.xlane.xlu0 %4176
    %4178 = vadd.xlane.f32.xlu0 %v4147
    %v4179 = vpop.xlane.xlu0 %4178
    %4180 = vadd.xlane.f32.xlu0 %v4149
    %v4181 = vpop.xlane.xlu0 %4180
    %4182 = vadd.xlane.f32.xlu0 %v4151
    %v4183 = vpop.xlane.xlu0 %4182
    %v4184 = vrcp.pop %v4153
    %v4185 = vrcp.pop %v4155
    %v4186 = vrcp.pop %v4157
    %v4187 = vrcp.pop %v4159
    %v4188 = vrcp.pop %v4161
    %v4189 = vrcp.pop %v4163
    %v4190 = vrcp.pop %v4165
    %v4191 = vrcp.pop %v4167
    %v4192 = vrcp.pop %v4169
    %v4193 = vrcp.pop %v4171
    %v4194 = vrcp.pop %v4173
    %v4195 = vrcp.pop %v4175
    %v4196 = vrcp.pop %v4177
    %v4197 = vrcp.pop %v4179
    %v4198 = vrcp.pop %v4181
    %v4199 = vrcp.pop %v4183
    %v4200 = vmul.f32 %v4121, %v4184
    %v4201 = vmul.f32 %v4123, %v4185
    %v4202 = vmul.f32 %v4125, %v4186
    %v4203 = vmul.f32 %v4127, %v4187
    %v4204 = vmul.f32 %v4129, %v4188
    %v4205 = vmul.f32 %v4131, %v4189
    %v4206 = vmul.f32 %v4133, %v4190
    %v4207 = vmul.f32 %v4135, %v4191
    %v4208 = vmul.f32 %v4137, %v4192
    %v4209 = vmul.f32 %v4139, %v4193
    %v4210 = vmul.f32 %v4141, %v4194
    %v4211 = vmul.f32 %v4143, %v4195
    %v4212 = vmul.f32 %v4145, %v4196
    %v4213 = vmul.f32 %v4147, %v4197
    %v4214 = vmul.f32 %v4149, %v4198
    %v4215 = vmul.f32 %v4151, %v4199
    %4216 = vmatpush.xpose.msra.mxu0 %v4215
    %4217 = vmatpush.xpose.msra.mxu0 %v4214
    %4218 = vmatpush.xpose.msra.mxu0 %v4213
    %4219 = vmatpush.xpose.msra.mxu0 %v4212
    %4220 = vmatpush.xpose.msra.mxu0 %v4211
    %4221 = vmatpush.xpose.msra.mxu0 %v4210
    %4222 = vmatpush.xpose.msra.mxu0 %v4209
    %4223 = vmatpush.xpose.msra.mxu0 %v4208
    %4224 = vmatpush.xpose.msra.mxu0 %v4207
    %4225 = vmatpush.xpose.msra.mxu0 %v4206
    %4226 = vmatpush.xpose.msra.mxu0 %v4205
    %4227 = vmatpush.xpose.msra.mxu0 %v4204
    %4228 = vmatpush.xpose.msra.mxu0 %v4203
    %4229 = vmatpush.xpose.msra.mxu0 %v4202
    %4230 = vmatpush.xpose.msra.mxu0 %v4201
    %4231 = vmatpush.xpose.msra.mxu0 %v4200
    %4232 = vmatmul.f32.gmra.mxu0 %v3606
    %v4233 = vpop.f32.mrf.mxu0
    %v4234 = vadd.f32 0.0, %v4233
    %4235 = vdwg.mxu0
    %4236 = vxpose.xlu0.b32.start [1/16] %v3616, 128
    %4237 = vxpose.xlu0.b32.cont [2/16] 0.0, 128
    %4238 = vxpose.xlu0.b32.cont [3/16] 0.0, 128
    %4239 = vxpose.xlu0.b32.cont [4/16] 0.0, 128
    %4240 = vxpose.xlu0.b32.cont [5/16] 0.0, 128
    %4241 = vxpose.xlu0.b32.cont [6/16] 0.0, 128
    %4242 = vxpose.xlu0.b32.cont [7/16] 0.0, 128
    %4243 = vxpose.xlu0.b32.cont [8/16] 0.0, 128
    %4244 = vxpose.xlu0.b32.cont [9/16] 0.0, 128
    %4245 = vxpose.xlu0.b32.cont [10/16] 0.0, 128
    %4246 = vxpose.xlu0.b32.cont [11/16] 0.0, 128
    %4247 = vxpose.xlu0.b32.cont [12/16] 0.0, 128
    %4248 = vxpose.xlu0.b32.cont [13/16] 0.0, 128
    %4249 = vxpose.xlu0.b32.cont [14/16] 0.0, 128
    %4250 = vxpose.xlu0.b32.cont [15/16] 0.0, 128
    %4251 = vxpose.xlu0.b32.end [16/16] 0.0, 128
    %v4252 = vpop.trf.xlu0
    %v4253 = vpop.trf.xlu0
    %v4254 = vpop.trf.xlu0
    %v4255 = vpop.trf.xlu0
    %v4256 = vpop.trf.xlu0
    %v4257 = vpop.trf.xlu0
    %v4258 = vpop.trf.xlu0
    %v4259 = vpop.trf.xlu0
    %v4260 = vpop.trf.xlu0
    %v4261 = vpop.trf.xlu0
    %v4262 = vpop.trf.xlu0
    %v4263 = vpop.trf.xlu0
    %v4264 = vpop.trf.xlu0
    %v4265 = vpop.trf.xlu0
    %v4266 = vpop.trf.xlu0
    %v4267 = vpop.trf.xlu0
    %v4269 = vsel %vm417, %v4252, 0
    %v4272 = vsel %vm417, %v4253, 0
    %v4275 = vsel %vm417, %v4254, 0
    %v4278 = vsel %vm417, %v4255, 0
    %v4281 = vsel %vm417, %v4256, 0
    %v4284 = vsel %vm417, %v4257, 0
    %v4287 = vsel %vm417, %v4258, 0
    %v4290 = vsel %vm417, %v4259, 0
    %v4293 = vsel %vm417, %v4260, 0
    %v4296 = vsel %vm417, %v4261, 0
    %v4299 = vsel %vm417, %v4262, 0
    %v4302 = vsel %vm417, %v4263, 0
    %v4305 = vsel %vm417, %v4264, 0
    %v4308 = vsel %vm417, %v4265, 0
    %v4311 = vsel %vm417, %v4266, 0
    %v4314 = vsel %vm417, %v4267, 0
    %4316 = vmatpush.msra.mxu0 0.0
    %4317 = vmatpush.msra.mxu0 0.0
    %4318 = vmatpush.msra.mxu0 0.0
    %4319 = vmatpush.msra.mxu0 0.0
    %4320 = vmatpush.msra.mxu0 0.0
    %4321 = vmatpush.msra.mxu0 0.0
    %4322 = vmatpush.msra.mxu0 0.0
    %4323 = vmatpush.msra.mxu0 0.0
    %4324 = vmatpush.msra.mxu0 0.0
    %4325 = vmatpush.msra.mxu0 0.0
    %4326 = vmatpush.msra.mxu0 0.0
    %4327 = vmatpush.msra.mxu0 0.0
    %4328 = vmatpush.msra.mxu0 0.0
    %4329 = vmatpush.msra.mxu0 0.0
    %4330 = vmatpush.msra.mxu0 0.0
    %4331 = vmatpush.msra.mxu0 %v3580
    %4332 = vmatmul.f32.gmra.mxu0 %v4269
    %v4333 = vpop.f32.mrf.mxu0
    %v4334 = vadd.f32 %v66, %v4333
    %4335 = vmatmul.f32.gmra.mxu0 %v4272
    %v4336 = vpop.f32.mrf.mxu0
    %v4337 = vadd.f32 %v67, %v4336
    %4338 = vmatmul.f32.gmra.mxu0 %v4275
    %v4339 = vpop.f32.mrf.mxu0
    %v4340 = vadd.f32 %v68, %v4339
    %4341 = vmatmul.f32.gmra.mxu0 %v4278
    %v4342 = vpop.f32.mrf.mxu0
    %v4343 = vadd.f32 %v69, %v4342
    %4344 = vmatmul.f32.gmra.mxu0 %v4281
    %v4345 = vpop.f32.mrf.mxu0
    %v4346 = vadd.f32 %v70, %v4345
    %4347 = vmatmul.f32.gmra.mxu0 %v4284
    %v4348 = vpop.f32.mrf.mxu0
    %v4349 = vadd.f32 %v71, %v4348
    %4350 = vmatmul.f32.gmra.mxu0 %v4287
    %v4351 = vpop.f32.mrf.mxu0
    %v4352 = vadd.f32 %v72, %v4351
    %4353 = vmatmul.f32.gmra.mxu0 %v4290
    %v4354 = vpop.f32.mrf.mxu0
    %v4355 = vadd.f32 %v73, %v4354
    %4356 = vmatmul.f32.gmra.mxu0 %v4293
    %v4357 = vpop.f32.mrf.mxu0
    %v4358 = vadd.f32 %v74, %v4357
    %4359 = vmatmul.f32.gmra.mxu0 %v4296
    %v4360 = vpop.f32.mrf.mxu0
    %v4361 = vadd.f32 %v75, %v4360
    %4362 = vmatmul.f32.gmra.mxu0 %v4299
    %v4363 = vpop.f32.mrf.mxu0
    %v4364 = vadd.f32 %v76, %v4363
    %4365 = vmatmul.f32.gmra.mxu0 %v4302
    %v4366 = vpop.f32.mrf.mxu0
    %v4367 = vadd.f32 %v77, %v4366
    %4368 = vmatmul.f32.gmra.mxu0 %v4305
    %v4369 = vpop.f32.mrf.mxu0
    %v4370 = vadd.f32 %v78, %v4369
    %4371 = vmatmul.f32.gmra.mxu0 %v4308
    %v4372 = vpop.f32.mrf.mxu0
    %v4373 = vadd.f32 %v79, %v4372
    %4374 = vmatmul.f32.gmra.mxu0 %v4311
    %v4375 = vpop.f32.mrf.mxu0
    %v4376 = vadd.f32 %v80, %v4375
    %4377 = vmatmul.f32.gmra.mxu0 %v4314
    %v4378 = vpop.f32.mrf.mxu0
    %v4379 = vadd.f32 %v81, %v4378
    %4380 = vdwg.mxu0
    %4381 = vmax.xlane.f32.xlu0 %v4334
    %v4382 = vpop.xlane.xlu0 %4381
    %4383 = vmax.xlane.f32.xlu0 %v4337
    %v4384 = vpop.xlane.xlu0 %4383
    %4385 = vmax.xlane.f32.xlu0 %v4340
    %v4386 = vpop.xlane.xlu0 %4385
    %4387 = vmax.xlane.f32.xlu0 %v4343
    %v4388 = vpop.xlane.xlu0 %4387
    %4389 = vmax.xlane.f32.xlu0 %v4346
    %v4390 = vpop.xlane.xlu0 %4389
    %4391 = vmax.xlane.f32.xlu0 %v4349
    %v4392 = vpop.xlane.xlu0 %4391
    %4393 = vmax.xlane.f32.xlu0 %v4352
    %v4394 = vpop.xlane.xlu0 %4393
    %4395 = vmax.xlane.f32.xlu0 %v4355
    %v4396 = vpop.xlane.xlu0 %4395
    %4397 = vmax.xlane.f32.xlu0 %v4358
    %v4398 = vpop.xlane.xlu0 %4397
    %4399 = vmax.xlane.f32.xlu0 %v4361
    %v4400 = vpop.xlane.xlu0 %4399
    %4401 = vmax.xlane.f32.xlu0 %v4364
    %v4402 = vpop.xlane.xlu0 %4401
    %4403 = vmax.xlane.f32.xlu0 %v4367
    %v4404 = vpop.xlane.xlu0 %4403
    %4405 = vmax.xlane.f32.xlu0 %v4370
    %v4406 = vpop.xlane.xlu0 %4405
    %4407 = vmax.xlane.f32.xlu0 %v4373
    %v4408 = vpop.xlane.xlu0 %4407
    %4409 = vmax.xlane.f32.xlu0 %v4376
    %v4410 = vpop.xlane.xlu0 %4409
    %4411 = vmax.xlane.f32.xlu0 %v4379
    %v4412 = vpop.xlane.xlu0 %4411
    %v4413 = vsub.f32 %v4334, %v4382
    %v4414 = vsub.f32 %v4337, %v4384
    %v4415 = vsub.f32 %v4340, %v4386
    %v4416 = vsub.f32 %v4343, %v4388
    %v4417 = vsub.f32 %v4346, %v4390
    %v4418 = vsub.f32 %v4349, %v4392
    %v4419 = vsub.f32 %v4352, %v4394
    %v4420 = vsub.f32 %v4355, %v4396
    %v4421 = vsub.f32 %v4358, %v4398
    %v4422 = vsub.f32 %v4361, %v4400
    %v4423 = vsub.f32 %v4364, %v4402
    %v4424 = vsub.f32 %v4367, %v4404
    %v4425 = vsub.f32 %v4370, %v4406
    %v4426 = vsub.f32 %v4373, %v4408
    %v4427 = vsub.f32 %v4376, %v4410
    %v4428 = vsub.f32 %v4379, %v4412
    %v4429 = vmul.f32 %v4413, 1.442695
    %v4430 = vpow.pop %v4429
    %v4431 = vmul.f32 %v4414, 1.442695
    %v4432 = vpow.pop %v4431
    %v4433 = vmul.f32 %v4415, 1.442695
    %v4434 = vpow.pop %v4433
    %v4435 = vmul.f32 %v4416, 1.442695
    %v4436 = vpow.pop %v4435
    %v4437 = vmul.f32 %v4417, 1.442695
    %v4438 = vpow.pop %v4437
    %v4439 = vmul.f32 %v4418, 1.442695
    %v4440 = vpow.pop %v4439
    %v4441 = vmul.f32 %v4419, 1.442695
    %v4442 = vpow.pop %v4441
    %v4443 = vmul.f32 %v4420, 1.442695
    %v4444 = vpow.pop %v4443
    %v4445 = vmul.f32 %v4421, 1.442695
    %v4446 = vpow.pop %v4445
    %v4447 = vmul.f32 %v4422, 1.442695
    %v4448 = vpow.pop %v4447
    %v4449 = vmul.f32 %v4423, 1.442695
    %v4450 = vpow.pop %v4449
    %v4451 = vmul.f32 %v4424, 1.442695
    %v4452 = vpow.pop %v4451
    %v4453 = vmul.f32 %v4425, 1.442695
    %v4454 = vpow.pop %v4453
    %v4455 = vmul.f32 %v4426, 1.442695
    %v4456 = vpow.pop %v4455
    %v4457 = vmul.f32 %v4427, 1.442695
    %v4458 = vpow.pop %v4457
    %v4459 = vmul.f32 %v4428, 1.442695
    %v4460 = vpow.pop %v4459
    %4461 = vadd.xlane.f32.xlu0 %v4430
    %v4462 = vpop.xlane.xlu0 %4461
    %4463 = vadd.xlane.f32.xlu0 %v4432
    %v4464 = vpop.xlane.xlu0 %4463
    %4465 = vadd.xlane.f32.xlu0 %v4434
    %v4466 = vpop.xlane.xlu0 %4465
    %4467 = vadd.xlane.f32.xlu0 %v4436
    %v4468 = vpop.xlane.xlu0 %4467
    %4469 = vadd.xlane.f32.xlu0 %v4438
    %v4470 = vpop.xlane.xlu0 %4469
    %4471 = vadd.xlane.f32.xlu0 %v4440
    %v4472 = vpop.xlane.xlu0 %4471
    %4473 = vadd.xlane.f32.xlu0 %v4442
    %v4474 = vpop.xlane.xlu0 %4473
    %4475 = vadd.xlane.f32.xlu0 %v4444
    %v4476 = vpop.xlane.xlu0 %4475
    %4477 = vadd.xlane.f32.xlu0 %v4446
    %v4478 = vpop.xlane.xlu0 %4477
    %4479 = vadd.xlane.f32.xlu0 %v4448
    %v4480 = vpop.xlane.xlu0 %4479
    %4481 = vadd.xlane.f32.xlu0 %v4450
    %v4482 = vpop.xlane.xlu0 %4481
    %4483 = vadd.xlane.f32.xlu0 %v4452
    %v4484 = vpop.xlane.xlu0 %4483
    %4485 = vadd.xlane.f32.xlu0 %v4454
    %v4486 = vpop.xlane.xlu0 %4485
    %4487 = vadd.xlane.f32.xlu0 %v4456
    %v4488 = vpop.xlane.xlu0 %4487
    %4489 = vadd.xlane.f32.xlu0 %v4458
    %v4490 = vpop.xlane.xlu0 %4489
    %4491 = vadd.xlane.f32.xlu0 %v4460
    %v4492 = vpop.xlane.xlu0 %4491
    %v4493 = vrcp.pop %v4462
    %v4494 = vrcp.pop %v4464
    %v4495 = vrcp.pop %v4466
    %v4496 = vrcp.pop %v4468
    %v4497 = vrcp.pop %v4470
    %v4498 = vrcp.pop %v4472
    %v4499 = vrcp.pop %v4474
    %v4500 = vrcp.pop %v4476
    %v4501 = vrcp.pop %v4478
    %v4502 = vrcp.pop %v4480
    %v4503 = vrcp.pop %v4482
    %v4504 = vrcp.pop %v4484
    %v4505 = vrcp.pop %v4486
    %v4506 = vrcp.pop %v4488
    %v4507 = vrcp.pop %v4490
    %v4508 = vrcp.pop %v4492
    %v4509 = vmul.f32 %v4430, %v4493
    %v4510 = vmul.f32 %v4432, %v4494
    %v4511 = vmul.f32 %v4434, %v4495
    %v4512 = vmul.f32 %v4436, %v4496
    %v4513 = vmul.f32 %v4438, %v4497
    %v4514 = vmul.f32 %v4440, %v4498
    %v4515 = vmul.f32 %v4442, %v4499
    %v4516 = vmul.f32 %v4444, %v4500
    %v4517 = vmul.f32 %v4446, %v4501
    %v4518 = vmul.f32 %v4448, %v4502
    %v4519 = vmul.f32 %v4450, %v4503
    %v4520 = vmul.f32 %v4452, %v4504
    %v4521 = vmul.f32 %v4454, %v4505
    %v4522 = vmul.f32 %v4456, %v4506
    %v4523 = vmul.f32 %v4458, %v4507
    %v4524 = vmul.f32 %v4460, %v4508
    %4525 = vmatpush.xpose.msra.mxu0 %v4524
    %4526 = vmatpush.xpose.msra.mxu0 %v4523
    %4527 = vmatpush.xpose.msra.mxu0 %v4522
    %4528 = vmatpush.xpose.msra.mxu0 %v4521
    %4529 = vmatpush.xpose.msra.mxu0 %v4520
    %4530 = vmatpush.xpose.msra.mxu0 %v4519
    %4531 = vmatpush.xpose.msra.mxu0 %v4518
    %4532 = vmatpush.xpose.msra.mxu0 %v4517
    %4533 = vmatpush.xpose.msra.mxu0 %v4516
    %4534 = vmatpush.xpose.msra.mxu0 %v4515
    %4535 = vmatpush.xpose.msra.mxu0 %v4514
    %4536 = vmatpush.xpose.msra.mxu0 %v4513
    %4537 = vmatpush.xpose.msra.mxu0 %v4512
    %4538 = vmatpush.xpose.msra.mxu0 %v4511
    %4539 = vmatpush.xpose.msra.mxu0 %v4510
    %4540 = vmatpush.xpose.msra.mxu0 %v4509
    %4541 = vmatmul.f32.gmra.mxu0 %v3609
    %v4542 = vpop.f32.mrf.mxu0
    %v4543 = vadd.f32 0.0, %v4542
    %4544 = vdwg.mxu0
    %4545 = vxpose.xlu0.b32.start [1/16] %v3617, 128
    %4546 = vxpose.xlu0.b32.cont [2/16] 0.0, 128
    %4547 = vxpose.xlu0.b32.cont [3/16] 0.0, 128
    %4548 = vxpose.xlu0.b32.cont [4/16] 0.0, 128
    %4549 = vxpose.xlu0.b32.cont [5/16] 0.0, 128
    %4550 = vxpose.xlu0.b32.cont [6/16] 0.0, 128
    %4551 = vxpose.xlu0.b32.cont [7/16] 0.0, 128
    %4552 = vxpose.xlu0.b32.cont [8/16] 0.0, 128
    %4553 = vxpose.xlu0.b32.cont [9/16] 0.0, 128
    %4554 = vxpose.xlu0.b32.cont [10/16] 0.0, 128
    %4555 = vxpose.xlu0.b32.cont [11/16] 0.0, 128
    %4556 = vxpose.xlu0.b32.cont [12/16] 0.0, 128
    %4557 = vxpose.xlu0.b32.cont [13/16] 0.0, 128
    %4558 = vxpose.xlu0.b32.cont [14/16] 0.0, 128
    %4559 = vxpose.xlu0.b32.cont [15/16] 0.0, 128
    %4560 = vxpose.xlu0.b32.end [16/16] 0.0, 128
    %v4561 = vpop.trf.xlu0
    %v4562 = vpop.trf.xlu0
    %v4563 = vpop.trf.xlu0
    %v4564 = vpop.trf.xlu0
    %v4565 = vpop.trf.xlu0
    %v4566 = vpop.trf.xlu0
    %v4567 = vpop.trf.xlu0
    %v4568 = vpop.trf.xlu0
    %v4569 = vpop.trf.xlu0
    %v4570 = vpop.trf.xlu0
    %v4571 = vpop.trf.xlu0
    %v4572 = vpop.trf.xlu0
    %v4573 = vpop.trf.xlu0
    %v4574 = vpop.trf.xlu0
    %v4575 = vpop.trf.xlu0
    %v4576 = vpop.trf.xlu0
    %v4578 = vsel %vm417, %v4561, 0
    %v4581 = vsel %vm417, %v4562, 0
    %v4584 = vsel %vm417, %v4563, 0
    %v4587 = vsel %vm417, %v4564, 0
    %v4590 = vsel %vm417, %v4565, 0
    %v4593 = vsel %vm417, %v4566, 0
    %v4596 = vsel %vm417, %v4567, 0
    %v4599 = vsel %vm417, %v4568, 0
    %v4602 = vsel %vm417, %v4569, 0
    %v4605 = vsel %vm417, %v4570, 0
    %v4608 = vsel %vm417, %v4571, 0
    %v4611 = vsel %vm417, %v4572, 0
    %v4614 = vsel %vm417, %v4573, 0
    %v4617 = vsel %vm417, %v4574, 0
    %v4620 = vsel %vm417, %v4575, 0
    %v4623 = vsel %vm417, %v4576, 0
    %4625 = vmatpush.msra.mxu0 0.0
    %4626 = vmatpush.msra.mxu0 0.0
    %4627 = vmatpush.msra.mxu0 0.0
    %4628 = vmatpush.msra.mxu0 0.0
    %4629 = vmatpush.msra.mxu0 0.0
    %4630 = vmatpush.msra.mxu0 0.0
    %4631 = vmatpush.msra.mxu0 0.0
    %4632 = vmatpush.msra.mxu0 0.0
    %4633 = vmatpush.msra.mxu0 0.0
    %4634 = vmatpush.msra.mxu0 0.0
    %4635 = vmatpush.msra.mxu0 0.0
    %4636 = vmatpush.msra.mxu0 0.0
    %4637 = vmatpush.msra.mxu0 0.0
    %4638 = vmatpush.msra.mxu0 0.0
    %4639 = vmatpush.msra.mxu0 0.0
    %4640 = vmatpush.msra.mxu0 %v3583
    %4641 = vmatmul.f32.gmra.mxu0 %v4578
    %v4642 = vpop.f32.mrf.mxu0
    %v4643 = vadd.f32 %v66, %v4642
    %4644 = vmatmul.f32.gmra.mxu0 %v4581
    %v4645 = vpop.f32.mrf.mxu0
    %v4646 = vadd.f32 %v67, %v4645
    %4647 = vmatmul.f32.gmra.mxu0 %v4584
    %v4648 = vpop.f32.mrf.mxu0
    %v4649 = vadd.f32 %v68, %v4648
    %4650 = vmatmul.f32.gmra.mxu0 %v4587
    %v4651 = vpop.f32.mrf.mxu0
    %v4652 = vadd.f32 %v69, %v4651
    %4653 = vmatmul.f32.gmra.mxu0 %v4590
    %v4654 = vpop.f32.mrf.mxu0
    %v4655 = vadd.f32 %v70, %v4654
    %4656 = vmatmul.f32.gmra.mxu0 %v4593
    %v4657 = vpop.f32.mrf.mxu0
    %v4658 = vadd.f32 %v71, %v4657
    %4659 = vmatmul.f32.gmra.mxu0 %v4596
    %v4660 = vpop.f32.mrf.mxu0
    %v4661 = vadd.f32 %v72, %v4660
    %4662 = vmatmul.f32.gmra.mxu0 %v4599
    %v4663 = vpop.f32.mrf.mxu0
    %v4664 = vadd.f32 %v73, %v4663
    %4665 = vmatmul.f32.gmra.mxu0 %v4602
    %v4666 = vpop.f32.mrf.mxu0
    %v4667 = vadd.f32 %v74, %v4666
    %4668 = vmatmul.f32.gmra.mxu0 %v4605
    %v4669 = vpop.f32.mrf.mxu0
    %v4670 = vadd.f32 %v75, %v4669
    %4671 = vmatmul.f32.gmra.mxu0 %v4608
    %v4672 = vpop.f32.mrf.mxu0
    %v4673 = vadd.f32 %v76, %v4672
    %4674 = vmatmul.f32.gmra.mxu0 %v4611
    %v4675 = vpop.f32.mrf.mxu0
    %v4676 = vadd.f32 %v77, %v4675
    %4677 = vmatmul.f32.gmra.mxu0 %v4614
    %v4678 = vpop.f32.mrf.mxu0
    %v4679 = vadd.f32 %v78, %v4678
    %4680 = vmatmul.f32.gmra.mxu0 %v4617
    %v4681 = vpop.f32.mrf.mxu0
    %v4682 = vadd.f32 %v79, %v4681
    %4683 = vmatmul.f32.gmra.mxu0 %v4620
    %v4684 = vpop.f32.mrf.mxu0
    %v4685 = vadd.f32 %v80, %v4684
    %4686 = vmatmul.f32.gmra.mxu0 %v4623
    %v4687 = vpop.f32.mrf.mxu0
    %v4688 = vadd.f32 %v81, %v4687
    %4689 = vdwg.mxu0
    %4690 = vmax.xlane.f32.xlu0 %v4643
    %v4691 = vpop.xlane.xlu0 %4690
    %4692 = vmax.xlane.f32.xlu0 %v4646
    %v4693 = vpop.xlane.xlu0 %4692
    %4694 = vmax.xlane.f32.xlu0 %v4649
    %v4695 = vpop.xlane.xlu0 %4694
    %4696 = vmax.xlane.f32.xlu0 %v4652
    %v4697 = vpop.xlane.xlu0 %4696
    %4698 = vmax.xlane.f32.xlu0 %v4655
    %v4699 = vpop.xlane.xlu0 %4698
    %4700 = vmax.xlane.f32.xlu0 %v4658
    %v4701 = vpop.xlane.xlu0 %4700
    %4702 = vmax.xlane.f32.xlu0 %v4661
    %v4703 = vpop.xlane.xlu0 %4702
    %4704 = vmax.xlane.f32.xlu0 %v4664
    %v4705 = vpop.xlane.xlu0 %4704
    %4706 = vmax.xlane.f32.xlu0 %v4667
    %v4707 = vpop.xlane.xlu0 %4706
    %4708 = vmax.xlane.f32.xlu0 %v4670
    %v4709 = vpop.xlane.xlu0 %4708
    %4710 = vmax.xlane.f32.xlu0 %v4673
    %v4711 = vpop.xlane.xlu0 %4710
    %4712 = vmax.xlane.f32.xlu0 %v4676
    %v4713 = vpop.xlane.xlu0 %4712
    %4714 = vmax.xlane.f32.xlu0 %v4679
    %v4715 = vpop.xlane.xlu0 %4714
    %4716 = vmax.xlane.f32.xlu0 %v4682
    %v4717 = vpop.xlane.xlu0 %4716
    %4718 = vmax.xlane.f32.xlu0 %v4685
    %v4719 = vpop.xlane.xlu0 %4718
    %4720 = vmax.xlane.f32.xlu0 %v4688
    %v4721 = vpop.xlane.xlu0 %4720
    %v4722 = vsub.f32 %v4643, %v4691
    %v4723 = vsub.f32 %v4646, %v4693
    %v4724 = vsub.f32 %v4649, %v4695
    %v4725 = vsub.f32 %v4652, %v4697
    %v4726 = vsub.f32 %v4655, %v4699
    %v4727 = vsub.f32 %v4658, %v4701
    %v4728 = vsub.f32 %v4661, %v4703
    %v4729 = vsub.f32 %v4664, %v4705
    %v4730 = vsub.f32 %v4667, %v4707
    %v4731 = vsub.f32 %v4670, %v4709
    %v4732 = vsub.f32 %v4673, %v4711
    %v4733 = vsub.f32 %v4676, %v4713
    %v4734 = vsub.f32 %v4679, %v4715
    %v4735 = vsub.f32 %v4682, %v4717
    %v4736 = vsub.f32 %v4685, %v4719
    %v4737 = vsub.f32 %v4688, %v4721
    %v4738 = vmul.f32 %v4722, 1.442695
    %v4739 = vpow.pop %v4738
    %v4740 = vmul.f32 %v4723, 1.442695
    %v4741 = vpow.pop %v4740
    %v4742 = vmul.f32 %v4724, 1.442695
    %v4743 = vpow.pop %v4742
    %v4744 = vmul.f32 %v4725, 1.442695
    %v4745 = vpow.pop %v4744
    %v4746 = vmul.f32 %v4726, 1.442695
    %v4747 = vpow.pop %v4746
    %v4748 = vmul.f32 %v4727, 1.442695
    %v4749 = vpow.pop %v4748
    %v4750 = vmul.f32 %v4728, 1.442695
    %v4751 = vpow.pop %v4750
    %v4752 = vmul.f32 %v4729, 1.442695
    %v4753 = vpow.pop %v4752
    %v4754 = vmul.f32 %v4730, 1.442695
    %v4755 = vpow.pop %v4754
    %v4756 = vmul.f32 %v4731, 1.442695
    %v4757 = vpow.pop %v4756
    %v4758 = vmul.f32 %v4732, 1.442695
    %v4759 = vpow.pop %v4758
    %v4760 = vmul.f32 %v4733, 1.442695
    %v4761 = vpow.pop %v4760
    %v4762 = vmul.f32 %v4734, 1.442695
    %v4763 = vpow.pop %v4762
    %v4764 = vmul.f32 %v4735, 1.442695
    %v4765 = vpow.pop %v4764
    %v4766 = vmul.f32 %v4736, 1.442695
    %v4767 = vpow.pop %v4766
    %v4768 = vmul.f32 %v4737, 1.442695
    %v4769 = vpow.pop %v4768
    %4770 = vadd.xlane.f32.xlu0 %v4739
    %v4771 = vpop.xlane.xlu0 %4770
    %4772 = vadd.xlane.f32.xlu0 %v4741
    %v4773 = vpop.xlane.xlu0 %4772
    %4774 = vadd.xlane.f32.xlu0 %v4743
    %v4775 = vpop.xlane.xlu0 %4774
    %4776 = vadd.xlane.f32.xlu0 %v4745
    %v4777 = vpop.xlane.xlu0 %4776
    %4778 = vadd.xlane.f32.xlu0 %v4747
    %v4779 = vpop.xlane.xlu0 %4778
    %4780 = vadd.xlane.f32.xlu0 %v4749
    %v4781 = vpop.xlane.xlu0 %4780
    %4782 = vadd.xlane.f32.xlu0 %v4751
    %v4783 = vpop.xlane.xlu0 %4782
    %4784 = vadd.xlane.f32.xlu0 %v4753
    %v4785 = vpop.xlane.xlu0 %4784
    %4786 = vadd.xlane.f32.xlu0 %v4755
    %v4787 = vpop.xlane.xlu0 %4786
    %4788 = vadd.xlane.f32.xlu0 %v4757
    %v4789 = vpop.xlane.xlu0 %4788
    %4790 = vadd.xlane.f32.xlu0 %v4759
    %v4791 = vpop.xlane.xlu0 %4790
    %4792 = vadd.xlane.f32.xlu0 %v4761
    %v4793 = vpop.xlane.xlu0 %4792
    %4794 = vadd.xlane.f32.xlu0 %v4763
    %v4795 = vpop.xlane.xlu0 %4794
    %4796 = vadd.xlane.f32.xlu0 %v4765
    %v4797 = vpop.xlane.xlu0 %4796
    %4798 = vadd.xlane.f32.xlu0 %v4767
    %v4799 = vpop.xlane.xlu0 %4798
    %4800 = vadd.xlane.f32.xlu0 %v4769
    %v4801 = vpop.xlane.xlu0 %4800
    %v4802 = vrcp.pop %v4771
    %v4803 = vrcp.pop %v4773
    %v4804 = vrcp.pop %v4775
    %v4805 = vrcp.pop %v4777
    %v4806 = vrcp.pop %v4779
    %v4807 = vrcp.pop %v4781
    %v4808 = vrcp.pop %v4783
    %v4809 = vrcp.pop %v4785
    %v4810 = vrcp.pop %v4787
    %v4811 = vrcp.pop %v4789
    %v4812 = vrcp.pop %v4791
    %v4813 = vrcp.pop %v4793
    %v4814 = vrcp.pop %v4795
    %v4815 = vrcp.pop %v4797
    %v4816 = vrcp.pop %v4799
    %v4817 = vrcp.pop %v4801
    %v4818 = vmul.f32 %v4739, %v4802
    %v4819 = vmul.f32 %v4741, %v4803
    %v4820 = vmul.f32 %v4743, %v4804
    %v4821 = vmul.f32 %v4745, %v4805
    %v4822 = vmul.f32 %v4747, %v4806
    %v4823 = vmul.f32 %v4749, %v4807
    %v4824 = vmul.f32 %v4751, %v4808
    %v4825 = vmul.f32 %v4753, %v4809
    %v4826 = vmul.f32 %v4755, %v4810
    %v4827 = vmul.f32 %v4757, %v4811
    %v4828 = vmul.f32 %v4759, %v4812
    %v4829 = vmul.f32 %v4761, %v4813
    %v4830 = vmul.f32 %v4763, %v4814
    %v4831 = vmul.f32 %v4765, %v4815
    %v4832 = vmul.f32 %v4767, %v4816
    %v4833 = vmul.f32 %v4769, %v4817
    %4834 = vmatpush.xpose.msra.mxu0 %v4833
    %4835 = vmatpush.xpose.msra.mxu0 %v4832
    %4836 = vmatpush.xpose.msra.mxu0 %v4831
    %4837 = vmatpush.xpose.msra.mxu0 %v4830
    %4838 = vmatpush.xpose.msra.mxu0 %v4829
    %4839 = vmatpush.xpose.msra.mxu0 %v4828
    %4840 = vmatpush.xpose.msra.mxu0 %v4827
    %4841 = vmatpush.xpose.msra.mxu0 %v4826
    %4842 = vmatpush.xpose.msra.mxu0 %v4825
    %4843 = vmatpush.xpose.msra.mxu0 %v4824
    %4844 = vmatpush.xpose.msra.mxu0 %v4823
    %4845 = vmatpush.xpose.msra.mxu0 %v4822
    %4846 = vmatpush.xpose.msra.mxu0 %v4821
    %4847 = vmatpush.xpose.msra.mxu0 %v4820
    %4848 = vmatpush.xpose.msra.mxu0 %v4819
    %4849 = vmatpush.xpose.msra.mxu0 %v4818
    %4850 = vmatmul.f32.gmra.mxu0 %v3612
    %v4851 = vpop.f32.mrf.mxu0
    %v4852 = vadd.f32 0.0, %v4851
    %4853 = vdwg.mxu0
    %4854 = vmatpush.msra.mxu0 0.0
    %4855 = vmatpush.msra.mxu0 0.0
    %4856 = vmatpush.msra.mxu0 0.0
    %4857 = vmatpush.msra.mxu0 0.0
    %4858 = vmatpush.msra.mxu0 0.0
    %4859 = vmatpush.msra.mxu0 0.0
    %4860 = vmatpush.msra.mxu0 0.0
    %4861 = vmatpush.msra.mxu0 0.0
    %4862 = vmatpush.msra.mxu0 0.0
    %4863 = vmatpush.msra.mxu0 0.0
    %4864 = vmatpush.msra.mxu0 0.0
    %4865 = vmatpush.msra.mxu0 0.0
    %4866 = vmatpush.msra.mxu0 %v4852
    %4867 = vmatpush.msra.mxu0 %v4543
    %4868 = vmatpush.msra.mxu0 %v4234
    %4869 = vmatpush.msra.mxu0 %v3925
    %4870 = vmatmul.f32.gmra.mxu0 %v1643
    %v4871 = vpop.f32.mrf.mxu0
    %v4872 = vadd.f32 %v1625, %v4871
    %4873 = vmatmul.f32.gmra.mxu0 %v1646
    %v4874 = vpop.f32.mrf.mxu0
    %v4875 = vadd.f32 %v1630, %v4874
    %4876 = vmatmul.f32.gmra.mxu0 %v1649
    %v4877 = vpop.f32.mrf.mxu0
    %v4878 = vadd.f32 %v1635, %v4877
    %4879 = vmatmul.f32.gmra.mxu0 %v1652
    %v4880 = vpop.f32.mrf.mxu0
    %v4881 = vadd.f32 %v1640, %v4880
    %4882 = vdwg.mxu0
    %v4883 = vadd.f32 %v4872, %v3536
    %v4884 = vadd.f32 %v4875, %v3537
    %v4885 = vadd.f32 %v4878, %v3538
    %v4886 = vadd.f32 %v4881, %v3539
    %4887 = vmatpush.msra.mxu0 0.0
    %4888 = vmatpush.msra.mxu0 0.0
    %4889 = vmatpush.msra.mxu0 0.0
    %4890 = vmatpush.msra.mxu0 0.0
    %4891 = vmatpush.msra.mxu0 0.0
    %4892 = vmatpush.msra.mxu0 0.0
    %4893 = vmatpush.msra.mxu0 0.0
    %4894 = vmatpush.msra.mxu0 0.0
    %4895 = vmatpush.msra.mxu0 0.0
    %4896 = vmatpush.msra.mxu0 0.0
    %4897 = vmatpush.msra.mxu0 0.0
    %4898 = vmatpush.msra.mxu0 0.0
    %4899 = vmatpush.msra.mxu0 %v4886
    %4900 = vmatpush.msra.mxu0 %v4885
    %4901 = vmatpush.msra.mxu0 %v4884
    %4902 = vmatpush.msra.mxu0 %v4883
    %4903 = vmatmul.f32.gmra.mxu0 %v1728
    %v4904 = vpop.f32.mrf.mxu0
    %v4905 = vadd.f32 %v1690, %v4904
    %4906 = vmatmul.f32.gmra.mxu0 %v1731
    %v4907 = vpop.f32.mrf.mxu0
    %v4908 = vadd.f32 %v1695, %v4907
    %4909 = vmatmul.f32.gmra.mxu0 %v1734
    %v4910 = vpop.f32.mrf.mxu0
    %v4911 = vadd.f32 %v1700, %v4910
    %4912 = vmatmul.f32.gmra.mxu0 %v1737
    %v4913 = vpop.f32.mrf.mxu0
    %v4914 = vadd.f32 %v1705, %v4913
    %4915 = vmatmul.f32.gmra.mxu0 %v1740
    %v4916 = vpop.f32.mrf.mxu0
    %v4917 = vadd.f32 %v1710, %v4916
    %4918 = vmatmul.f32.gmra.mxu0 %v1743
    %v4919 = vpop.f32.mrf.mxu0
    %v4920 = vadd.f32 %v1715, %v4919
    %4921 = vmatmul.f32.gmra.mxu0 %v1746
    %v4922 = vpop.f32.mrf.mxu0
    %v4923 = vadd.f32 %v1720, %v4922
    %4924 = vmatmul.f32.gmra.mxu0 %v1749
    %v4925 = vpop.f32.mrf.mxu0
    %v4926 = vadd.f32 %v1725, %v4925
    %4927 = vdwg.mxu0
    %4928 = vmatpush.msra.mxu0 0.0
    %4929 = vmatpush.msra.mxu0 0.0
    %4930 = vmatpush.msra.mxu0 0.0
    %4931 = vmatpush.msra.mxu0 0.0
    %4932 = vmatpush.msra.mxu0 0.0
    %4933 = vmatpush.msra.mxu0 0.0
    %4934 = vmatpush.msra.mxu0 0.0
    %4935 = vmatpush.msra.mxu0 0.0
    %4936 = vmatpush.msra.mxu0 0.0
    %4937 = vmatpush.msra.mxu0 0.0
    %4938 = vmatpush.msra.mxu0 0.0
    %4939 = vmatpush.msra.mxu0 0.0
    %4940 = vmatpush.msra.mxu0 %v4881
    %4941 = vmatpush.msra.mxu0 %v4878
    %4942 = vmatpush.msra.mxu0 %v4875
    %4943 = vmatpush.msra.mxu0 %v4872
    %4944 = vmatmul.f32.gmra.mxu0 %v1813
    %v4945 = vpop.f32.mrf.mxu0
    %v4946 = vadd.f32 %v1795, %v4945
    %4947 = vmatmul.f32.gmra.mxu0 %v1816
    %v4948 = vpop.f32.mrf.mxu0
    %v4949 = vadd.f32 %v1800, %v4948
    %4950 = vmatmul.f32.gmra.mxu0 %v1819
    %v4951 = vpop.f32.mrf.mxu0
    %v4952 = vadd.f32 %v1805, %v4951
    %4953 = vmatmul.f32.gmra.mxu0 %v1822
    %v4954 = vpop.f32.mrf.mxu0
    %v4955 = vadd.f32 %v1810, %v4954
    %4956 = vdwg.mxu0
    %v4957 = vmul.f32 %v4905, 0.35355338
    %v4958 = vmul.f32 %v4908, 0.35355338
    %v4959 = vmul.f32 %v4911, 0.35355338
    %v4960 = vmul.f32 %v4914, 0.35355338
    %4961 = vxpose.xlu0.b32.start [1/16] %v4957, 128
    %4962 = vxpose.xlu0.b32.cont [2/16] 0.0, 128
    %4963 = vxpose.xlu0.b32.cont [3/16] 0.0, 128
    %4964 = vxpose.xlu0.b32.cont [4/16] 0.0, 128
    %4965 = vxpose.xlu0.b32.cont [5/16] 0.0, 128
    %4966 = vxpose.xlu0.b32.cont [6/16] 0.0, 128
    %4967 = vxpose.xlu0.b32.cont [7/16] 0.0, 128
    %4968 = vxpose.xlu0.b32.cont [8/16] 0.0, 128
    %4969 = vxpose.xlu0.b32.cont [9/16] 0.0, 128
    %4970 = vxpose.xlu0.b32.cont [10/16] 0.0, 128
    %4971 = vxpose.xlu0.b32.cont [11/16] 0.0, 128
    %4972 = vxpose.xlu0.b32.cont [12/16] 0.0, 128
    %4973 = vxpose.xlu0.b32.cont [13/16] 0.0, 128
    %4974 = vxpose.xlu0.b32.cont [14/16] 0.0, 128
    %4975 = vxpose.xlu0.b32.cont [15/16] 0.0, 128
    %4976 = vxpose.xlu0.b32.end [16/16] 0.0, 128
    %v4977 = vpop.trf.xlu0
    %v4978 = vpop.trf.xlu0
    %v4979 = vpop.trf.xlu0
    %v4980 = vpop.trf.xlu0
    %v4981 = vpop.trf.xlu0
    %v4982 = vpop.trf.xlu0
    %v4983 = vpop.trf.xlu0
    %v4984 = vpop.trf.xlu0
    %v4985 = vpop.trf.xlu0
    %v4986 = vpop.trf.xlu0
    %v4987 = vpop.trf.xlu0
    %v4988 = vpop.trf.xlu0
    %v4989 = vpop.trf.xlu0
    %v4990 = vpop.trf.xlu0
    %v4991 = vpop.trf.xlu0
    %v4992 = vpop.trf.xlu0
    %v4994 = vsel %vm417, %v4977, 0
    %v4997 = vsel %vm417, %v4978, 0
    %v5000 = vsel %vm417, %v4979, 0
    %v5003 = vsel %vm417, %v4980, 0
    %v5006 = vsel %vm417, %v4981, 0
    %v5009 = vsel %vm417, %v4982, 0
    %v5012 = vsel %vm417, %v4983, 0
    %v5015 = vsel %vm417, %v4984, 0
    %v5018 = vsel %vm417, %v4985, 0
    %v5021 = vsel %vm417, %v4986, 0
    %v5024 = vsel %vm417, %v4987, 0
    %v5027 = vsel %vm417, %v4988, 0
    %v5030 = vsel %vm417, %v4989, 0
    %v5033 = vsel %vm417, %v4990, 0
    %v5036 = vsel %vm417, %v4991, 0
    %v5039 = vsel %vm417, %v4992, 0
    %5041 = vmatpush.msra.mxu0 0.0
    %5042 = vmatpush.msra.mxu0 0.0
    %5043 = vmatpush.msra.mxu0 0.0
    %5044 = vmatpush.msra.mxu0 0.0
    %5045 = vmatpush.msra.mxu0 0.0
    %5046 = vmatpush.msra.mxu0 0.0
    %5047 = vmatpush.msra.mxu0 0.0
    %5048 = vmatpush.msra.mxu0 0.0
    %5049 = vmatpush.msra.mxu0 0.0
    %5050 = vmatpush.msra.mxu0 0.0
    %5051 = vmatpush.msra.mxu0 0.0
    %5052 = vmatpush.msra.mxu0 0.0
    %5053 = vmatpush.msra.mxu0 0.0
    %5054 = vmatpush.msra.mxu0 0.0
    %5055 = vmatpush.msra.mxu0 0.0
    %5056 = vmatpush.msra.mxu0 %v4917
    %5057 = vmatmul.f32.gmra.mxu0 %v4994
    %v5058 = vpop.f32.mrf.mxu0
    %v5059 = vadd.f32 %v82, %v5058
    %5060 = vmatmul.f32.gmra.mxu0 %v4997
    %v5061 = vpop.f32.mrf.mxu0
    %v5062 = vadd.f32 %v83, %v5061
    %5063 = vmatmul.f32.gmra.mxu0 %v5000
    %v5064 = vpop.f32.mrf.mxu0
    %v5065 = vadd.f32 %v84, %v5064
    %5066 = vmatmul.f32.gmra.mxu0 %v5003
    %v5067 = vpop.f32.mrf.mxu0
    %v5068 = vadd.f32 %v85, %v5067
    %5069 = vmatmul.f32.gmra.mxu0 %v5006
    %v5070 = vpop.f32.mrf.mxu0
    %v5071 = vadd.f32 %v86, %v5070
    %5072 = vmatmul.f32.gmra.mxu0 %v5009
    %v5073 = vpop.f32.mrf.mxu0
    %v5074 = vadd.f32 %v87, %v5073
    %5075 = vmatmul.f32.gmra.mxu0 %v5012
    %v5076 = vpop.f32.mrf.mxu0
    %v5077 = vadd.f32 %v88, %v5076
    %5078 = vmatmul.f32.gmra.mxu0 %v5015
    %v5079 = vpop.f32.mrf.mxu0
    %v5080 = vadd.f32 %v89, %v5079
    %5081 = vmatmul.f32.gmra.mxu0 %v5018
    %v5082 = vpop.f32.mrf.mxu0
    %v5083 = vadd.f32 %v90, %v5082
    %5084 = vmatmul.f32.gmra.mxu0 %v5021
    %v5085 = vpop.f32.mrf.mxu0
    %v5086 = vadd.f32 %v91, %v5085
    %5087 = vmatmul.f32.gmra.mxu0 %v5024
    %v5088 = vpop.f32.mrf.mxu0
    %v5089 = vadd.f32 %v92, %v5088
    %5090 = vmatmul.f32.gmra.mxu0 %v5027
    %v5091 = vpop.f32.mrf.mxu0
    %v5092 = vadd.f32 %v93, %v5091
    %5093 = vmatmul.f32.gmra.mxu0 %v5030
    %v5094 = vpop.f32.mrf.mxu0
    %v5095 = vadd.f32 %v94, %v5094
    %5096 = vmatmul.f32.gmra.mxu0 %v5033
    %v5097 = vpop.f32.mrf.mxu0
    %v5098 = vadd.f32 %v95, %v5097
    %5099 = vmatmul.f32.gmra.mxu0 %v5036
    %v5100 = vpop.f32.mrf.mxu0
    %v5101 = vadd.f32 %v96, %v5100
    %5102 = vmatmul.f32.gmra.mxu0 %v5039
    %v5103 = vpop.f32.mrf.mxu0
    %v5104 = vadd.f32 %v97, %v5103
    %5105 = vdwg.mxu0
    %5106 = vmax.xlane.f32.xlu0 %v5059
    %v5107 = vpop.xlane.xlu0 %5106
    %5108 = vmax.xlane.f32.xlu0 %v5062
    %v5109 = vpop.xlane.xlu0 %5108
    %5110 = vmax.xlane.f32.xlu0 %v5065
    %v5111 = vpop.xlane.xlu0 %5110
    %5112 = vmax.xlane.f32.xlu0 %v5068
    %v5113 = vpop.xlane.xlu0 %5112
    %5114 = vmax.xlane.f32.xlu0 %v5071
    %v5115 = vpop.xlane.xlu0 %5114
    %5116 = vmax.xlane.f32.xlu0 %v5074
    %v5117 = vpop.xlane.xlu0 %5116
    %5118 = vmax.xlane.f32.xlu0 %v5077
    %v5119 = vpop.xlane.xlu0 %5118
    %5120 = vmax.xlane.f32.xlu0 %v5080
    %v5121 = vpop.xlane.xlu0 %5120
    %5122 = vmax.xlane.f32.xlu0 %v5083
    %v5123 = vpop.xlane.xlu0 %5122
    %5124 = vmax.xlane.f32.xlu0 %v5086
    %v5125 = vpop.xlane.xlu0 %5124
    %5126 = vmax.xlane.f32.xlu0 %v5089
    %v5127 = vpop.xlane.xlu0 %5126
    %5128 = vmax.xlane.f32.xlu0 %v5092
    %v5129 = vpop.xlane.xlu0 %5128
    %5130 = vmax.xlane.f32.xlu0 %v5095
    %v5131 = vpop.xlane.xlu0 %5130
    %5132 = vmax.xlane.f32.xlu0 %v5098
    %v5133 = vpop.xlane.xlu0 %5132
    %5134 = vmax.xlane.f32.xlu0 %v5101
    %v5135 = vpop.xlane.xlu0 %5134
    %5136 = vmax.xlane.f32.xlu0 %v5104
    %v5137 = vpop.xlane.xlu0 %5136
    %v5138 = vsub.f32 %v5059, %v5107
    %v5139 = vsub.f32 %v5062, %v5109
    %v5140 = vsub.f32 %v5065, %v5111
    %v5141 = vsub.f32 %v5068, %v5113
    %v5142 = vsub.f32 %v5071, %v5115
    %v5143 = vsub.f32 %v5074, %v5117
    %v5144 = vsub.f32 %v5077, %v5119
    %v5145 = vsub.f32 %v5080, %v5121
    %v5146 = vsub.f32 %v5083, %v5123
    %v5147 = vsub.f32 %v5086, %v5125
    %v5148 = vsub.f32 %v5089, %v5127
    %v5149 = vsub.f32 %v5092, %v5129
    %v5150 = vsub.f32 %v5095, %v5131
    %v5151 = vsub.f32 %v5098, %v5133
    %v5152 = vsub.f32 %v5101, %v5135
    %v5153 = vsub.f32 %v5104, %v5137
    %v5154 = vmul.f32 %v5138, 1.442695
    %v5155 = vpow.pop %v5154
    %v5156 = vmul.f32 %v5139, 1.442695
    %v5157 = vpow.pop %v5156
    %v5158 = vmul.f32 %v5140, 1.442695
    %v5159 = vpow.pop %v5158
    %v5160 = vmul.f32 %v5141, 1.442695
    %v5161 = vpow.pop %v5160
    %v5162 = vmul.f32 %v5142, 1.442695
    %v5163 = vpow.pop %v5162
    %v5164 = vmul.f32 %v5143, 1.442695
    %v5165 = vpow.pop %v5164
    %v5166 = vmul.f32 %v5144, 1.442695
    %v5167 = vpow.pop %v5166
    %v5168 = vmul.f32 %v5145, 1.442695
    %v5169 = vpow.pop %v5168
    %v5170 = vmul.f32 %v5146, 1.442695
    %v5171 = vpow.pop %v5170
    %v5172 = vmul.f32 %v5147, 1.442695
    %v5173 = vpow.pop %v5172
    %v5174 = vmul.f32 %v5148, 1.442695
    %v5175 = vpow.pop %v5174
    %v5176 = vmul.f32 %v5149, 1.442695
    %v5177 = vpow.pop %v5176
    %v5178 = vmul.f32 %v5150, 1.442695
    %v5179 = vpow.pop %v5178
    %v5180 = vmul.f32 %v5151, 1.442695
    %v5181 = vpow.pop %v5180
    %v5182 = vmul.f32 %v5152, 1.442695
    %v5183 = vpow.pop %v5182
    %v5184 = vmul.f32 %v5153, 1.442695
    %v5185 = vpow.pop %v5184
    %5186 = vadd.xlane.f32.xlu0 %v5155
    %v5187 = vpop.xlane.xlu0 %5186
    %5188 = vadd.xlane.f32.xlu0 %v5157
    %v5189 = vpop.xlane.xlu0 %5188
    %5190 = vadd.xlane.f32.xlu0 %v5159
    %v5191 = vpop.xlane.xlu0 %5190
    %5192 = vadd.xlane.f32.xlu0 %v5161
    %v5193 = vpop.xlane.xlu0 %5192
    %5194 = vadd.xlane.f32.xlu0 %v5163
    %v5195 = vpop.xlane.xlu0 %5194
    %5196 = vadd.xlane.f32.xlu0 %v5165
    %v5197 = vpop.xlane.xlu0 %5196
    %5198 = vadd.xlane.f32.xlu0 %v5167
    %v5199 = vpop.xlane.xlu0 %5198
    %5200 = vadd.xlane.f32.xlu0 %v5169
    %v5201 = vpop.xlane.xlu0 %5200
    %5202 = vadd.xlane.f32.xlu0 %v5171
    %v5203 = vpop.xlane.xlu0 %5202
    %5204 = vadd.xlane.f32.xlu0 %v5173
    %v5205 = vpop.xlane.xlu0 %5204
    %5206 = vadd.xlane.f32.xlu0 %v5175
    %v5207 = vpop.xlane.xlu0 %5206
    %5208 = vadd.xlane.f32.xlu0 %v5177
    %v5209 = vpop.xlane.xlu0 %5208
    %5210 = vadd.xlane.f32.xlu0 %v5179
    %v5211 = vpop.xlane.xlu0 %5210
    %5212 = vadd.xlane.f32.xlu0 %v5181
    %v5213 = vpop.xlane.xlu0 %5212
    %5214 = vadd.xlane.f32.xlu0 %v5183
    %v5215 = vpop.xlane.xlu0 %5214
    %5216 = vadd.xlane.f32.xlu0 %v5185
    %v5217 = vpop.xlane.xlu0 %5216
    %v5218 = vrcp.pop %v5187
    %v5219 = vrcp.pop %v5189
    %v5220 = vrcp.pop %v5191
    %v5221 = vrcp.pop %v5193
    %v5222 = vrcp.pop %v5195
    %v5223 = vrcp.pop %v5197
    %v5224 = vrcp.pop %v5199
    %v5225 = vrcp.pop %v5201
    %v5226 = vrcp.pop %v5203
    %v5227 = vrcp.pop %v5205
    %v5228 = vrcp.pop %v5207
    %v5229 = vrcp.pop %v5209
    %v5230 = vrcp.pop %v5211
    %v5231 = vrcp.pop %v5213
    %v5232 = vrcp.pop %v5215
    %v5233 = vrcp.pop %v5217
    %v5234 = vmul.f32 %v5155, %v5218
    %v5235 = vmul.f32 %v5157, %v5219
    %v5236 = vmul.f32 %v5159, %v5220
    %v5237 = vmul.f32 %v5161, %v5221
    %v5238 = vmul.f32 %v5163, %v5222
    %v5239 = vmul.f32 %v5165, %v5223
    %v5240 = vmul.f32 %v5167, %v5224
    %v5241 = vmul.f32 %v5169, %v5225
    %v5242 = vmul.f32 %v5171, %v5226
    %v5243 = vmul.f32 %v5173, %v5227
    %v5244 = vmul.f32 %v5175, %v5228
    %v5245 = vmul.f32 %v5177, %v5229
    %v5246 = vmul.f32 %v5179, %v5230
    %v5247 = vmul.f32 %v5181, %v5231
    %v5248 = vmul.f32 %v5183, %v5232
    %v5249 = vmul.f32 %v5185, %v5233
    %5250 = vmatpush.xpose.msra.mxu0 %v5249
    %5251 = vmatpush.xpose.msra.mxu0 %v5248
    %5252 = vmatpush.xpose.msra.mxu0 %v5247
    %5253 = vmatpush.xpose.msra.mxu0 %v5246
    %5254 = vmatpush.xpose.msra.mxu0 %v5245
    %5255 = vmatpush.xpose.msra.mxu0 %v5244
    %5256 = vmatpush.xpose.msra.mxu0 %v5243
    %5257 = vmatpush.xpose.msra.mxu0 %v5242
    %5258 = vmatpush.xpose.msra.mxu0 %v5241
    %5259 = vmatpush.xpose.msra.mxu0 %v5240
    %5260 = vmatpush.xpose.msra.mxu0 %v5239
    %5261 = vmatpush.xpose.msra.mxu0 %v5238
    %5262 = vmatpush.xpose.msra.mxu0 %v5237
    %5263 = vmatpush.xpose.msra.mxu0 %v5236
    %5264 = vmatpush.xpose.msra.mxu0 %v5235
    %5265 = vmatpush.xpose.msra.mxu0 %v5234
    %5266 = vmatmul.f32.gmra.mxu0 %v4946
    %v5267 = vpop.f32.mrf.mxu0
    %v5268 = vadd.f32 0.0, %v5267
    %5269 = vdwg.mxu0
    %5270 = vxpose.xlu0.b32.start [1/16] %v4958, 128
    %5271 = vxpose.xlu0.b32.cont [2/16] 0.0, 128
    %5272 = vxpose.xlu0.b32.cont [3/16] 0.0, 128
    %5273 = vxpose.xlu0.b32.cont [4/16] 0.0, 128
    %5274 = vxpose.xlu0.b32.cont [5/16] 0.0, 128
    %5275 = vxpose.xlu0.b32.cont [6/16] 0.0, 128
    %5276 = vxpose.xlu0.b32.cont [7/16] 0.0, 128
    %5277 = vxpose.xlu0.b32.cont [8/16] 0.0, 128
    %5278 = vxpose.xlu0.b32.cont [9/16] 0.0, 128
    %5279 = vxpose.xlu0.b32.cont [10/16] 0.0, 128
    %5280 = vxpose.xlu0.b32.cont [11/16] 0.0, 128
    %5281 = vxpose.xlu0.b32.cont [12/16] 0.0, 128
    %5282 = vxpose.xlu0.b32.cont [13/16] 0.0, 128
    %5283 = vxpose.xlu0.b32.cont [14/16] 0.0, 128
    %5284 = vxpose.xlu0.b32.cont [15/16] 0.0, 128
    %5285 = vxpose.xlu0.b32.end [16/16] 0.0, 128
    %v5286 = vpop.trf.xlu0
    %v5287 = vpop.trf.xlu0
    %v5288 = vpop.trf.xlu0
    %v5289 = vpop.trf.xlu0
    %v5290 = vpop.trf.xlu0
    %v5291 = vpop.trf.xlu0
    %v5292 = vpop.trf.xlu0
    %v5293 = vpop.trf.xlu0
    %v5294 = vpop.trf.xlu0
    %v5295 = vpop.trf.xlu0
    %v5296 = vpop.trf.xlu0
    %v5297 = vpop.trf.xlu0
    %v5298 = vpop.trf.xlu0
    %v5299 = vpop.trf.xlu0
    %v5300 = vpop.trf.xlu0
    %v5301 = vpop.trf.xlu0
    %v5303 = vsel %vm417, %v5286, 0
    %v5306 = vsel %vm417, %v5287, 0
    %v5309 = vsel %vm417, %v5288, 0
    %v5312 = vsel %vm417, %v5289, 0
    %v5315 = vsel %vm417, %v5290, 0
    %v5318 = vsel %vm417, %v5291, 0
    %v5321 = vsel %vm417, %v5292, 0
    %v5324 = vsel %vm417, %v5293, 0
    %v5327 = vsel %vm417, %v5294, 0
    %v5330 = vsel %vm417, %v5295, 0
    %v5333 = vsel %vm417, %v5296, 0
    %v5336 = vsel %vm417, %v5297, 0
    %v5339 = vsel %vm417, %v5298, 0
    %v5342 = vsel %vm417, %v5299, 0
    %v5345 = vsel %vm417, %v5300, 0
    %v5348 = vsel %vm417, %v5301, 0
    %5350 = vmatpush.msra.mxu0 0.0
    %5351 = vmatpush.msra.mxu0 0.0
    %5352 = vmatpush.msra.mxu0 0.0
    %5353 = vmatpush.msra.mxu0 0.0
    %5354 = vmatpush.msra.mxu0 0.0
    %5355 = vmatpush.msra.mxu0 0.0
    %5356 = vmatpush.msra.mxu0 0.0
    %5357 = vmatpush.msra.mxu0 0.0
    %5358 = vmatpush.msra.mxu0 0.0
    %5359 = vmatpush.msra.mxu0 0.0
    %5360 = vmatpush.msra.mxu0 0.0
    %5361 = vmatpush.msra.mxu0 0.0
    %5362 = vmatpush.msra.mxu0 0.0
    %5363 = vmatpush.msra.mxu0 0.0
    %5364 = vmatpush.msra.mxu0 0.0
    %5365 = vmatpush.msra.mxu0 %v4920
    %5366 = vmatmul.f32.gmra.mxu0 %v5303
    %v5367 = vpop.f32.mrf.mxu0
    %v5368 = vadd.f32 %v82, %v5367
    %5369 = vmatmul.f32.gmra.mxu0 %v5306
    %v5370 = vpop.f32.mrf.mxu0
    %v5371 = vadd.f32 %v83, %v5370
    %5372 = vmatmul.f32.gmra.mxu0 %v5309
    %v5373 = vpop.f32.mrf.mxu0
    %v5374 = vadd.f32 %v84, %v5373
    %5375 = vmatmul.f32.gmra.mxu0 %v5312
    %v5376 = vpop.f32.mrf.mxu0
    %v5377 = vadd.f32 %v85, %v5376
    %5378 = vmatmul.f32.gmra.mxu0 %v5315
    %v5379 = vpop.f32.mrf.mxu0
    %v5380 = vadd.f32 %v86, %v5379
    %5381 = vmatmul.f32.gmra.mxu0 %v5318
    %v5382 = vpop.f32.mrf.mxu0
    %v5383 = vadd.f32 %v87, %v5382
    %5384 = vmatmul.f32.gmra.mxu0 %v5321
    %v5385 = vpop.f32.mrf.mxu0
    %v5386 = vadd.f32 %v88, %v5385
    %5387 = vmatmul.f32.gmra.mxu0 %v5324
    %v5388 = vpop.f32.mrf.mxu0
    %v5389 = vadd.f32 %v89, %v5388
    %5390 = vmatmul.f32.gmra.mxu0 %v5327
    %v5391 = vpop.f32.mrf.mxu0
    %v5392 = vadd.f32 %v90, %v5391
    %5393 = vmatmul.f32.gmra.mxu0 %v5330
    %v5394 = vpop.f32.mrf.mxu0
    %v5395 = vadd.f32 %v91, %v5394
    %5396 = vmatmul.f32.gmra.mxu0 %v5333
    %v5397 = vpop.f32.mrf.mxu0
    %v5398 = vadd.f32 %v92, %v5397
    %5399 = vmatmul.f32.gmra.mxu0 %v5336
    %v5400 = vpop.f32.mrf.mxu0
    %v5401 = vadd.f32 %v93, %v5400
    %5402 = vmatmul.f32.gmra.mxu0 %v5339
    %v5403 = vpop.f32.mrf.mxu0
    %v5404 = vadd.f32 %v94, %v5403
    %5405 = vmatmul.f32.gmra.mxu0 %v5342
    %v5406 = vpop.f32.mrf.mxu0
    %v5407 = vadd.f32 %v95, %v5406
    %5408 = vmatmul.f32.gmra.mxu0 %v5345
    %v5409 = vpop.f32.mrf.mxu0
    %v5410 = vadd.f32 %v96, %v5409
    %5411 = vmatmul.f32.gmra.mxu0 %v5348
    %v5412 = vpop.f32.mrf.mxu0
    %v5413 = vadd.f32 %v97, %v5412
    %5414 = vdwg.mxu0
    %5415 = vmax.xlane.f32.xlu0 %v5368
    %v5416 = vpop.xlane.xlu0 %5415
    %5417 = vmax.xlane.f32.xlu0 %v5371
    %v5418 = vpop.xlane.xlu0 %5417
    %5419 = vmax.xlane.f32.xlu0 %v5374
    %v5420 = vpop.xlane.xlu0 %5419
    %5421 = vmax.xlane.f32.xlu0 %v5377
    %v5422 = vpop.xlane.xlu0 %5421
    %5423 = vmax.xlane.f32.xlu0 %v5380
    %v5424 = vpop.xlane.xlu0 %5423
    %5425 = vmax.xlane.f32.xlu0 %v5383
    %v5426 = vpop.xlane.xlu0 %5425
    %5427 = vmax.xlane.f32.xlu0 %v5386
    %v5428 = vpop.xlane.xlu0 %5427
    %5429 = vmax.xlane.f32.xlu0 %v5389
    %v5430 = vpop.xlane.xlu0 %5429
    %5431 = vmax.xlane.f32.xlu0 %v5392
    %v5432 = vpop.xlane.xlu0 %5431
    %5433 = vmax.xlane.f32.xlu0 %v5395
    %v5434 = vpop.xlane.xlu0 %5433
    %5435 = vmax.xlane.f32.xlu0 %v5398
    %v5436 = vpop.xlane.xlu0 %5435
    %5437 = vmax.xlane.f32.xlu0 %v5401
    %v5438 = vpop.xlane.xlu0 %5437
    %5439 = vmax.xlane.f32.xlu0 %v5404
    %v5440 = vpop.xlane.xlu0 %5439
    %5441 = vmax.xlane.f32.xlu0 %v5407
    %v5442 = vpop.xlane.xlu0 %5441
    %5443 = vmax.xlane.f32.xlu0 %v5410
    %v5444 = vpop.xlane.xlu0 %5443
    %5445 = vmax.xlane.f32.xlu0 %v5413
    %v5446 = vpop.xlane.xlu0 %5445
    %v5447 = vsub.f32 %v5368, %v5416
    %v5448 = vsub.f32 %v5371, %v5418
    %v5449 = vsub.f32 %v5374, %v5420
    %v5450 = vsub.f32 %v5377, %v5422
    %v5451 = vsub.f32 %v5380, %v5424
    %v5452 = vsub.f32 %v5383, %v5426
    %v5453 = vsub.f32 %v5386, %v5428
    %v5454 = vsub.f32 %v5389, %v5430
    %v5455 = vsub.f32 %v5392, %v5432
    %v5456 = vsub.f32 %v5395, %v5434
    %v5457 = vsub.f32 %v5398, %v5436
    %v5458 = vsub.f32 %v5401, %v5438
    %v5459 = vsub.f32 %v5404, %v5440
    %v5460 = vsub.f32 %v5407, %v5442
    %v5461 = vsub.f32 %v5410, %v5444
    %v5462 = vsub.f32 %v5413, %v5446
    %v5463 = vmul.f32 %v5447, 1.442695
    %v5464 = vpow.pop %v5463
    %v5465 = vmul.f32 %v5448, 1.442695
    %v5466 = vpow.pop %v5465
    %v5467 = vmul.f32 %v5449, 1.442695
    %v5468 = vpow.pop %v5467
    %v5469 = vmul.f32 %v5450, 1.442695
    %v5470 = vpow.pop %v5469
    %v5471 = vmul.f32 %v5451, 1.442695
    %v5472 = vpow.pop %v5471
    %v5473 = vmul.f32 %v5452, 1.442695
    %v5474 = vpow.pop %v5473
    %v5475 = vmul.f32 %v5453, 1.442695
    %v5476 = vpow.pop %v5475
    %v5477 = vmul.f32 %v5454, 1.442695
    %v5478 = vpow.pop %v5477
    %v5479 = vmul.f32 %v5455, 1.442695
    %v5480 = vpow.pop %v5479
    %v5481 = vmul.f32 %v5456, 1.442695
    %v5482 = vpow.pop %v5481
    %v5483 = vmul.f32 %v5457, 1.442695
    %v5484 = vpow.pop %v5483
    %v5485 = vmul.f32 %v5458, 1.442695
    %v5486 = vpow.pop %v5485
    %v5487 = vmul.f32 %v5459, 1.442695
    %v5488 = vpow.pop %v5487
    %v5489 = vmul.f32 %v5460, 1.442695
    %v5490 = vpow.pop %v5489
    %v5491 = vmul.f32 %v5461, 1.442695
    %v5492 = vpow.pop %v5491
    %v5493 = vmul.f32 %v5462, 1.442695
    %v5494 = vpow.pop %v5493
    %5495 = vadd.xlane.f32.xlu0 %v5464
    %v5496 = vpop.xlane.xlu0 %5495
    %5497 = vadd.xlane.f32.xlu0 %v5466
    %v5498 = vpop.xlane.xlu0 %5497
    %5499 = vadd.xlane.f32.xlu0 %v5468
    %v5500 = vpop.xlane.xlu0 %5499
    %5501 = vadd.xlane.f32.xlu0 %v5470
    %v5502 = vpop.xlane.xlu0 %5501
    %5503 = vadd.xlane.f32.xlu0 %v5472
    %v5504 = vpop.xlane.xlu0 %5503
    %5505 = vadd.xlane.f32.xlu0 %v5474
    %v5506 = vpop.xlane.xlu0 %5505
    %5507 = vadd.xlane.f32.xlu0 %v5476
    %v5508 = vpop.xlane.xlu0 %5507
    %5509 = vadd.xlane.f32.xlu0 %v5478
    %v5510 = vpop.xlane.xlu0 %5509
    %5511 = vadd.xlane.f32.xlu0 %v5480
    %v5512 = vpop.xlane.xlu0 %5511
    %5513 = vadd.xlane.f32.xlu0 %v5482
    %v5514 = vpop.xlane.xlu0 %5513
    %5515 = vadd.xlane.f32.xlu0 %v5484
    %v5516 = vpop.xlane.xlu0 %5515
    %5517 = vadd.xlane.f32.xlu0 %v5486
    %v5518 = vpop.xlane.xlu0 %5517
    %5519 = vadd.xlane.f32.xlu0 %v5488
    %v5520 = vpop.xlane.xlu0 %5519
    %5521 = vadd.xlane.f32.xlu0 %v5490
    %v5522 = vpop.xlane.xlu0 %5521
    %5523 = vadd.xlane.f32.xlu0 %v5492
    %v5524 = vpop.xlane.xlu0 %5523
    %5525 = vadd.xlane.f32.xlu0 %v5494
    %v5526 = vpop.xlane.xlu0 %5525
    %v5527 = vrcp.pop %v5496
    %v5528 = vrcp.pop %v5498
    %v5529 = vrcp.pop %v5500
    %v5530 = vrcp.pop %v5502
    %v5531 = vrcp.pop %v5504
    %v5532 = vrcp.pop %v5506
    %v5533 = vrcp.pop %v5508
    %v5534 = vrcp.pop %v5510
    %v5535 = vrcp.pop %v5512
    %v5536 = vrcp.pop %v5514
    %v5537 = vrcp.pop %v5516
    %v5538 = vrcp.pop %v5518
    %v5539 = vrcp.pop %v5520
    %v5540 = vrcp.pop %v5522
    %v5541 = vrcp.pop %v5524
    %v5542 = vrcp.pop %v5526
    %v5543 = vmul.f32 %v5464, %v5527
    %v5544 = vmul.f32 %v5466, %v5528
    %v5545 = vmul.f32 %v5468, %v5529
    %v5546 = vmul.f32 %v5470, %v5530
    %v5547 = vmul.f32 %v5472, %v5531
    %v5548 = vmul.f32 %v5474, %v5532
    %v5549 = vmul.f32 %v5476, %v5533
    %v5550 = vmul.f32 %v5478, %v5534
    %v5551 = vmul.f32 %v5480, %v5535
    %v5552 = vmul.f32 %v5482, %v5536
    %v5553 = vmul.f32 %v5484, %v5537
    %v5554 = vmul.f32 %v5486, %v5538
    %v5555 = vmul.f32 %v5488, %v5539
    %v5556 = vmul.f32 %v5490, %v5540
    %v5557 = vmul.f32 %v5492, %v5541
    %v5558 = vmul.f32 %v5494, %v5542
    %5559 = vmatpush.xpose.msra.mxu0 %v5558
    %5560 = vmatpush.xpose.msra.mxu0 %v5557
    %5561 = vmatpush.xpose.msra.mxu0 %v5556
    %5562 = vmatpush.xpose.msra.mxu0 %v5555
    %5563 = vmatpush.xpose.msra.mxu0 %v5554
    %5564 = vmatpush.xpose.msra.mxu0 %v5553
    %5565 = vmatpush.xpose.msra.mxu0 %v5552
    %5566 = vmatpush.xpose.msra.mxu0 %v5551
    %5567 = vmatpush.xpose.msra.mxu0 %v5550
    %5568 = vmatpush.xpose.msra.mxu0 %v5549
    %5569 = vmatpush.xpose.msra.mxu0 %v5548
    %5570 = vmatpush.xpose.msra.mxu0 %v5547
    %5571 = vmatpush.xpose.msra.mxu0 %v5546
    %5572 = vmatpush.xpose.msra.mxu0 %v5545
    %5573 = vmatpush.xpose.msra.mxu0 %v5544
    %5574 = vmatpush.xpose.msra.mxu0 %v5543
    %5575 = vmatmul.f32.gmra.mxu0 %v4949
    %v5576 = vpop.f32.mrf.mxu0
    %v5577 = vadd.f32 0.0, %v5576
    %5578 = vdwg.mxu0
    %5579 = vxpose.xlu0.b32.start [1/16] %v4959, 128
    %5580 = vxpose.xlu0.b32.cont [2/16] 0.0, 128
    %5581 = vxpose.xlu0.b32.cont [3/16] 0.0, 128
    %5582 = vxpose.xlu0.b32.cont [4/16] 0.0, 128
    %5583 = vxpose.xlu0.b32.cont [5/16] 0.0, 128
    %5584 = vxpose.xlu0.b32.cont [6/16] 0.0, 128
    %5585 = vxpose.xlu0.b32.cont [7/16] 0.0, 128
    %5586 = vxpose.xlu0.b32.cont [8/16] 0.0, 128
    %5587 = vxpose.xlu0.b32.cont [9/16] 0.0, 128
    %5588 = vxpose.xlu0.b32.cont [10/16] 0.0, 128
    %5589 = vxpose.xlu0.b32.cont [11/16] 0.0, 128
    %5590 = vxpose.xlu0.b32.cont [12/16] 0.0, 128
    %5591 = vxpose.xlu0.b32.cont [13/16] 0.0, 128
    %5592 = vxpose.xlu0.b32.cont [14/16] 0.0, 128
    %5593 = vxpose.xlu0.b32.cont [15/16] 0.0, 128
    %5594 = vxpose.xlu0.b32.end [16/16] 0.0, 128
    %v5595 = vpop.trf.xlu0
    %v5596 = vpop.trf.xlu0
    %v5597 = vpop.trf.xlu0
    %v5598 = vpop.trf.xlu0
    %v5599 = vpop.trf.xlu0
    %v5600 = vpop.trf.xlu0
    %v5601 = vpop.trf.xlu0
    %v5602 = vpop.trf.xlu0
    %v5603 = vpop.trf.xlu0
    %v5604 = vpop.trf.xlu0
    %v5605 = vpop.trf.xlu0
    %v5606 = vpop.trf.xlu0
    %v5607 = vpop.trf.xlu0
    %v5608 = vpop.trf.xlu0
    %v5609 = vpop.trf.xlu0
    %v5610 = vpop.trf.xlu0
    %v5612 = vsel %vm417, %v5595, 0
    %v5615 = vsel %vm417, %v5596, 0
    %v5618 = vsel %vm417, %v5597, 0
    %v5621 = vsel %vm417, %v5598, 0
    %v5624 = vsel %vm417, %v5599, 0
    %v5627 = vsel %vm417, %v5600, 0
    %v5630 = vsel %vm417, %v5601, 0
    %v5633 = vsel %vm417, %v5602, 0
    %v5636 = vsel %vm417, %v5603, 0
    %v5639 = vsel %vm417, %v5604, 0
    %v5642 = vsel %vm417, %v5605, 0
    %v5645 = vsel %vm417, %v5606, 0
    %v5648 = vsel %vm417, %v5607, 0
    %v5651 = vsel %vm417, %v5608, 0
    %v5654 = vsel %vm417, %v5609, 0
    %v5657 = vsel %vm417, %v5610, 0
    %5659 = vmatpush.msra.mxu0 0.0
    %5660 = vmatpush.msra.mxu0 0.0
    %5661 = vmatpush.msra.mxu0 0.0
    %5662 = vmatpush.msra.mxu0 0.0
    %5663 = vmatpush.msra.mxu0 0.0
    %5664 = vmatpush.msra.mxu0 0.0
    %5665 = vmatpush.msra.mxu0 0.0
    %5666 = vmatpush.msra.mxu0 0.0
    %5667 = vmatpush.msra.mxu0 0.0
    %5668 = vmatpush.msra.mxu0 0.0
    %5669 = vmatpush.msra.mxu0 0.0
    %5670 = vmatpush.msra.mxu0 0.0
    %5671 = vmatpush.msra.mxu0 0.0
    %5672 = vmatpush.msra.mxu0 0.0
    %5673 = vmatpush.msra.mxu0 0.0
    %5674 = vmatpush.msra.mxu0 %v4923
    %5675 = vmatmul.f32.gmra.mxu0 %v5612
    %v5676 = vpop.f32.mrf.mxu0
    %v5677 = vadd.f32 %v82, %v5676
    %5678 = vmatmul.f32.gmra.mxu0 %v5615
    %v5679 = vpop.f32.mrf.mxu0
    %v5680 = vadd.f32 %v83, %v5679
    %5681 = vmatmul.f32.gmra.mxu0 %v5618
    %v5682 = vpop.f32.mrf.mxu0
    %v5683 = vadd.f32 %v84, %v5682
    %5684 = vmatmul.f32.gmra.mxu0 %v5621
    %v5685 = vpop.f32.mrf.mxu0
    %v5686 = vadd.f32 %v85, %v5685
    %5687 = vmatmul.f32.gmra.mxu0 %v5624
    %v5688 = vpop.f32.mrf.mxu0
    %v5689 = vadd.f32 %v86, %v5688
    %5690 = vmatmul.f32.gmra.mxu0 %v5627
    %v5691 = vpop.f32.mrf.mxu0
    %v5692 = vadd.f32 %v87, %v5691
    %5693 = vmatmul.f32.gmra.mxu0 %v5630
    %v5694 = vpop.f32.mrf.mxu0
    %v5695 = vadd.f32 %v88, %v5694
    %5696 = vmatmul.f32.gmra.mxu0 %v5633
    %v5697 = vpop.f32.mrf.mxu0
    %v5698 = vadd.f32 %v89, %v5697
    %5699 = vmatmul.f32.gmra.mxu0 %v5636
    %v5700 = vpop.f32.mrf.mxu0
    %v5701 = vadd.f32 %v90, %v5700
    %5702 = vmatmul.f32.gmra.mxu0 %v5639
    %v5703 = vpop.f32.mrf.mxu0
    %v5704 = vadd.f32 %v91, %v5703
    %5705 = vmatmul.f32.gmra.mxu0 %v5642
    %v5706 = vpop.f32.mrf.mxu0
    %v5707 = vadd.f32 %v92, %v5706
    %5708 = vmatmul.f32.gmra.mxu0 %v5645
    %v5709 = vpop.f32.mrf.mxu0
    %v5710 = vadd.f32 %v93, %v5709
    %5711 = vmatmul.f32.gmra.mxu0 %v5648
    %v5712 = vpop.f32.mrf.mxu0
    %v5713 = vadd.f32 %v94, %v5712
    %5714 = vmatmul.f32.gmra.mxu0 %v5651
    %v5715 = vpop.f32.mrf.mxu0
    %v5716 = vadd.f32 %v95, %v5715
    %5717 = vmatmul.f32.gmra.mxu0 %v5654
    %v5718 = vpop.f32.mrf.mxu0
    %v5719 = vadd.f32 %v96, %v5718
    %5720 = vmatmul.f32.gmra.mxu0 %v5657
    %v5721 = vpop.f32.mrf.mxu0
    %v5722 = vadd.f32 %v97, %v5721
    %5723 = vdwg.mxu0
    %5724 = vmax.xlane.f32.xlu0 %v5677
    %v5725 = vpop.xlane.xlu0 %5724
    %5726 = vmax.xlane.f32.xlu0 %v5680
    %v5727 = vpop.xlane.xlu0 %5726
    %5728 = vmax.xlane.f32.xlu0 %v5683
    %v5729 = vpop.xlane.xlu0 %5728
    %5730 = vmax.xlane.f32.xlu0 %v5686
    %v5731 = vpop.xlane.xlu0 %5730
    %5732 = vmax.xlane.f32.xlu0 %v5689
    %v5733 = vpop.xlane.xlu0 %5732
    %5734 = vmax.xlane.f32.xlu0 %v5692
    %v5735 = vpop.xlane.xlu0 %5734
    %5736 = vmax.xlane.f32.xlu0 %v5695
    %v5737 = vpop.xlane.xlu0 %5736
    %5738 = vmax.xlane.f32.xlu0 %v5698
    %v5739 = vpop.xlane.xlu0 %5738
    %5740 = vmax.xlane.f32.xlu0 %v5701
    %v5741 = vpop.xlane.xlu0 %5740
    %5742 = vmax.xlane.f32.xlu0 %v5704
    %v5743 = vpop.xlane.xlu0 %5742
    %5744 = vmax.xlane.f32.xlu0 %v5707
    %v5745 = vpop.xlane.xlu0 %5744
    %5746 = vmax.xlane.f32.xlu0 %v5710
    %v5747 = vpop.xlane.xlu0 %5746
    %5748 = vmax.xlane.f32.xlu0 %v5713
    %v5749 = vpop.xlane.xlu0 %5748
    %5750 = vmax.xlane.f32.xlu0 %v5716
    %v5751 = vpop.xlane.xlu0 %5750
    %5752 = vmax.xlane.f32.xlu0 %v5719
    %v5753 = vpop.xlane.xlu0 %5752
    %5754 = vmax.xlane.f32.xlu0 %v5722
    %v5755 = vpop.xlane.xlu0 %5754
    %v5756 = vsub.f32 %v5677, %v5725
    %v5757 = vsub.f32 %v5680, %v5727
    %v5758 = vsub.f32 %v5683, %v5729
    %v5759 = vsub.f32 %v5686, %v5731
    %v5760 = vsub.f32 %v5689, %v5733
    %v5761 = vsub.f32 %v5692, %v5735
    %v5762 = vsub.f32 %v5695, %v5737
    %v5763 = vsub.f32 %v5698, %v5739
    %v5764 = vsub.f32 %v5701, %v5741
    %v5765 = vsub.f32 %v5704, %v5743
    %v5766 = vsub.f32 %v5707, %v5745
    %v5767 = vsub.f32 %v5710, %v5747
    %v5768 = vsub.f32 %v5713, %v5749
    %v5769 = vsub.f32 %v5716, %v5751
    %v5770 = vsub.f32 %v5719, %v5753
    %v5771 = vsub.f32 %v5722, %v5755
    %v5772 = vmul.f32 %v5756, 1.442695
    %v5773 = vpow.pop %v5772
    %v5774 = vmul.f32 %v5757, 1.442695
    %v5775 = vpow.pop %v5774
    %v5776 = vmul.f32 %v5758, 1.442695
    %v5777 = vpow.pop %v5776
    %v5778 = vmul.f32 %v5759, 1.442695
    %v5779 = vpow.pop %v5778
    %v5780 = vmul.f32 %v5760, 1.442695
    %v5781 = vpow.pop %v5780
    %v5782 = vmul.f32 %v5761, 1.442695
    %v5783 = vpow.pop %v5782
    %v5784 = vmul.f32 %v5762, 1.442695
    %v5785 = vpow.pop %v5784
    %v5786 = vmul.f32 %v5763, 1.442695
    %v5787 = vpow.pop %v5786
    %v5788 = vmul.f32 %v5764, 1.442695
    %v5789 = vpow.pop %v5788
    %v5790 = vmul.f32 %v5765, 1.442695
    %v5791 = vpow.pop %v5790
    %v5792 = vmul.f32 %v5766, 1.442695
    %v5793 = vpow.pop %v5792
    %v5794 = vmul.f32 %v5767, 1.442695
    %v5795 = vpow.pop %v5794
    %v5796 = vmul.f32 %v5768, 1.442695
    %v5797 = vpow.pop %v5796
    %v5798 = vmul.f32 %v5769, 1.442695
    %v5799 = vpow.pop %v5798
    %v5800 = vmul.f32 %v5770, 1.442695
    %v5801 = vpow.pop %v5800
    %v5802 = vmul.f32 %v5771, 1.442695
    %v5803 = vpow.pop %v5802
    %5804 = vadd.xlane.f32.xlu0 %v5773
    %v5805 = vpop.xlane.xlu0 %5804
    %5806 = vadd.xlane.f32.xlu0 %v5775
    %v5807 = vpop.xlane.xlu0 %5806
    %5808 = vadd.xlane.f32.xlu0 %v5777
    %v5809 = vpop.xlane.xlu0 %5808
    %5810 = vadd.xlane.f32.xlu0 %v5779
    %v5811 = vpop.xlane.xlu0 %5810
    %5812 = vadd.xlane.f32.xlu0 %v5781
    %v5813 = vpop.xlane.xlu0 %5812
    %5814 = vadd.xlane.f32.xlu0 %v5783
    %v5815 = vpop.xlane.xlu0 %5814
    %5816 = vadd.xlane.f32.xlu0 %v5785
    %v5817 = vpop.xlane.xlu0 %5816
    %5818 = vadd.xlane.f32.xlu0 %v5787
    %v5819 = vpop.xlane.xlu0 %5818
    %5820 = vadd.xlane.f32.xlu0 %v5789
    %v5821 = vpop.xlane.xlu0 %5820
    %5822 = vadd.xlane.f32.xlu0 %v5791
    %v5823 = vpop.xlane.xlu0 %5822
    %5824 = vadd.xlane.f32.xlu0 %v5793
    %v5825 = vpop.xlane.xlu0 %5824
    %5826 = vadd.xlane.f32.xlu0 %v5795
    %v5827 = vpop.xlane.xlu0 %5826
    %5828 = vadd.xlane.f32.xlu0 %v5797
    %v5829 = vpop.xlane.xlu0 %5828
    %5830 = vadd.xlane.f32.xlu0 %v5799
    %v5831 = vpop.xlane.xlu0 %5830
    %5832 = vadd.xlane.f32.xlu0 %v5801
    %v5833 = vpop.xlane.xlu0 %5832
    %5834 = vadd.xlane.f32.xlu0 %v5803
    %v5835 = vpop.xlane.xlu0 %5834
    %v5836 = vrcp.pop %v5805
    %v5837 = vrcp.pop %v5807
    %v5838 = vrcp.pop %v5809
    %v5839 = vrcp.pop %v5811
    %v5840 = vrcp.pop %v5813
    %v5841 = vrcp.pop %v5815
    %v5842 = vrcp.pop %v5817
    %v5843 = vrcp.pop %v5819
    %v5844 = vrcp.pop %v5821
    %v5845 = vrcp.pop %v5823
    %v5846 = vrcp.pop %v5825
    %v5847 = vrcp.pop %v5827
    %v5848 = vrcp.pop %v5829
    %v5849 = vrcp.pop %v5831
    %v5850 = vrcp.pop %v5833
    %v5851 = vrcp.pop %v5835
    %v5852 = vmul.f32 %v5773, %v5836
    %v5853 = vmul.f32 %v5775, %v5837
    %v5854 = vmul.f32 %v5777, %v5838
    %v5855 = vmul.f32 %v5779, %v5839
    %v5856 = vmul.f32 %v5781, %v5840
    %v5857 = vmul.f32 %v5783, %v5841
    %v5858 = vmul.f32 %v5785, %v5842
    %v5859 = vmul.f32 %v5787, %v5843
    %v5860 = vmul.f32 %v5789, %v5844
    %v5861 = vmul.f32 %v5791, %v5845
    %v5862 = vmul.f32 %v5793, %v5846
    %v5863 = vmul.f32 %v5795, %v5847
    %v5864 = vmul.f32 %v5797, %v5848
    %v5865 = vmul.f32 %v5799, %v5849
    %v5866 = vmul.f32 %v5801, %v5850
    %v5867 = vmul.f32 %v5803, %v5851
    %5868 = vmatpush.xpose.msra.mxu0 %v5867
    %5869 = vmatpush.xpose.msra.mxu0 %v5866
    %5870 = vmatpush.xpose.msra.mxu0 %v5865
    %5871 = vmatpush.xpose.msra.mxu0 %v5864
    %5872 = vmatpush.xpose.msra.mxu0 %v5863
    %5873 = vmatpush.xpose.msra.mxu0 %v5862
    %5874 = vmatpush.xpose.msra.mxu0 %v5861
    %5875 = vmatpush.xpose.msra.mxu0 %v5860
    %5876 = vmatpush.xpose.msra.mxu0 %v5859
    %5877 = vmatpush.xpose.msra.mxu0 %v5858
    %5878 = vmatpush.xpose.msra.mxu0 %v5857
    %5879 = vmatpush.xpose.msra.mxu0 %v5856
    %5880 = vmatpush.xpose.msra.mxu0 %v5855
    %5881 = vmatpush.xpose.msra.mxu0 %v5854
    %5882 = vmatpush.xpose.msra.mxu0 %v5853
    %5883 = vmatpush.xpose.msra.mxu0 %v5852
    %5884 = vmatmul.f32.gmra.mxu0 %v4952
    %v5885 = vpop.f32.mrf.mxu0
    %v5886 = vadd.f32 0.0, %v5885
    %5887 = vdwg.mxu0
    %5888 = vxpose.xlu0.b32.start [1/16] %v4960, 128
    %5889 = vxpose.xlu0.b32.cont [2/16] 0.0, 128
    %5890 = vxpose.xlu0.b32.cont [3/16] 0.0, 128
    %5891 = vxpose.xlu0.b32.cont [4/16] 0.0, 128
    %5892 = vxpose.xlu0.b32.cont [5/16] 0.0, 128
    %5893 = vxpose.xlu0.b32.cont [6/16] 0.0, 128
    %5894 = vxpose.xlu0.b32.cont [7/16] 0.0, 128
    %5895 = vxpose.xlu0.b32.cont [8/16] 0.0, 128
    %5896 = vxpose.xlu0.b32.cont [9/16] 0.0, 128
    %5897 = vxpose.xlu0.b32.cont [10/16] 0.0, 128
    %5898 = vxpose.xlu0.b32.cont [11/16] 0.0, 128
    %5899 = vxpose.xlu0.b32.cont [12/16] 0.0, 128
    %5900 = vxpose.xlu0.b32.cont [13/16] 0.0, 128
    %5901 = vxpose.xlu0.b32.cont [14/16] 0.0, 128
    %5902 = vxpose.xlu0.b32.cont [15/16] 0.0, 128
    %5903 = vxpose.xlu0.b32.end [16/16] 0.0, 128
    %v5904 = vpop.trf.xlu0
    %v5905 = vpop.trf.xlu0
    %v5906 = vpop.trf.xlu0
    %v5907 = vpop.trf.xlu0
    %v5908 = vpop.trf.xlu0
    %v5909 = vpop.trf.xlu0
    %v5910 = vpop.trf.xlu0
    %v5911 = vpop.trf.xlu0
    %v5912 = vpop.trf.xlu0
    %v5913 = vpop.trf.xlu0
    %v5914 = vpop.trf.xlu0
    %v5915 = vpop.trf.xlu0
    %v5916 = vpop.trf.xlu0
    %v5917 = vpop.trf.xlu0
    %v5918 = vpop.trf.xlu0
    %v5919 = vpop.trf.xlu0
    %v5921 = vsel %vm417, %v5904, 0
    %v5924 = vsel %vm417, %v5905, 0
    %v5927 = vsel %vm417, %v5906, 0
    %v5930 = vsel %vm417, %v5907, 0
    %v5933 = vsel %vm417, %v5908, 0
    %v5936 = vsel %vm417, %v5909, 0
    %v5939 = vsel %vm417, %v5910, 0
    %v5942 = vsel %vm417, %v5911, 0
    %v5945 = vsel %vm417, %v5912, 0
    %v5948 = vsel %vm417, %v5913, 0
    %v5951 = vsel %vm417, %v5914, 0
    %v5954 = vsel %vm417, %v5915, 0
    %v5957 = vsel %vm417, %v5916, 0
    %v5960 = vsel %vm417, %v5917, 0
    %v5963 = vsel %vm417, %v5918, 0
    %v5966 = vsel %vm417, %v5919, 0
    %5968 = vmatpush.msra.mxu0 0.0
    %5969 = vmatpush.msra.mxu0 0.0
    %5970 = vmatpush.msra.mxu0 0.0
    %5971 = vmatpush.msra.mxu0 0.0
    %5972 = vmatpush.msra.mxu0 0.0
    %5973 = vmatpush.msra.mxu0 0.0
    %5974 = vmatpush.msra.mxu0 0.0
    %5975 = vmatpush.msra.mxu0 0.0
    %5976 = vmatpush.msra.mxu0 0.0
    %5977 = vmatpush.msra.mxu0 0.0
    %5978 = vmatpush.msra.mxu0 0.0
    %5979 = vmatpush.msra.mxu0 0.0
    %5980 = vmatpush.msra.mxu0 0.0
    %5981 = vmatpush.msra.mxu0 0.0
    %5982 = vmatpush.msra.mxu0 0.0
    %5983 = vmatpush.msra.mxu0 %v4926
    %5984 = vmatmul.f32.gmra.mxu0 %v5921
    %v5985 = vpop.f32.mrf.mxu0
    %v5986 = vadd.f32 %v82, %v5985
    %5987 = vmatmul.f32.gmra.mxu0 %v5924
    %v5988 = vpop.f32.mrf.mxu0
    %v5989 = vadd.f32 %v83, %v5988
    %5990 = vmatmul.f32.gmra.mxu0 %v5927
    %v5991 = vpop.f32.mrf.mxu0
    %v5992 = vadd.f32 %v84, %v5991
    %5993 = vmatmul.f32.gmra.mxu0 %v5930
    %v5994 = vpop.f32.mrf.mxu0
    %v5995 = vadd.f32 %v85, %v5994
    %5996 = vmatmul.f32.gmra.mxu0 %v5933
    %v5997 = vpop.f32.mrf.mxu0
    %v5998 = vadd.f32 %v86, %v5997
    %5999 = vmatmul.f32.gmra.mxu0 %v5936
    %v6000 = vpop.f32.mrf.mxu0
    %v6001 = vadd.f32 %v87, %v6000
    %6002 = vmatmul.f32.gmra.mxu0 %v5939
    %v6003 = vpop.f32.mrf.mxu0
    %v6004 = vadd.f32 %v88, %v6003
    %6005 = vmatmul.f32.gmra.mxu0 %v5942
    %v6006 = vpop.f32.mrf.mxu0
    %v6007 = vadd.f32 %v89, %v6006
    %6008 = vmatmul.f32.gmra.mxu0 %v5945
    %v6009 = vpop.f32.mrf.mxu0
    %v6010 = vadd.f32 %v90, %v6009
    %6011 = vmatmul.f32.gmra.mxu0 %v5948
    %v6012 = vpop.f32.mrf.mxu0
    %v6013 = vadd.f32 %v91, %v6012
    %6014 = vmatmul.f32.gmra.mxu0 %v5951
    %v6015 = vpop.f32.mrf.mxu0
    %v6016 = vadd.f32 %v92, %v6015
    %6017 = vmatmul.f32.gmra.mxu0 %v5954
    %v6018 = vpop.f32.mrf.mxu0
    %v6019 = vadd.f32 %v93, %v6018
    %6020 = vmatmul.f32.gmra.mxu0 %v5957
    %v6021 = vpop.f32.mrf.mxu0
    %v6022 = vadd.f32 %v94, %v6021
    %6023 = vmatmul.f32.gmra.mxu0 %v5960
    %v6024 = vpop.f32.mrf.mxu0
    %v6025 = vadd.f32 %v95, %v6024
    %6026 = vmatmul.f32.gmra.mxu0 %v5963
    %v6027 = vpop.f32.mrf.mxu0
    %v6028 = vadd.f32 %v96, %v6027
    %6029 = vmatmul.f32.gmra.mxu0 %v5966
    %v6030 = vpop.f32.mrf.mxu0
    %v6031 = vadd.f32 %v97, %v6030
    %6032 = vdwg.mxu0
    %6033 = vmax.xlane.f32.xlu0 %v5986
    %v6034 = vpop.xlane.xlu0 %6033
    %6035 = vmax.xlane.f32.xlu0 %v5989
    %v6036 = vpop.xlane.xlu0 %6035
    %6037 = vmax.xlane.f32.xlu0 %v5992
    %v6038 = vpop.xlane.xlu0 %6037
    %6039 = vmax.xlane.f32.xlu0 %v5995
    %v6040 = vpop.xlane.xlu0 %6039
    %6041 = vmax.xlane.f32.xlu0 %v5998
    %v6042 = vpop.xlane.xlu0 %6041
    %6043 = vmax.xlane.f32.xlu0 %v6001
    %v6044 = vpop.xlane.xlu0 %6043
    %6045 = vmax.xlane.f32.xlu0 %v6004
    %v6046 = vpop.xlane.xlu0 %6045
    %6047 = vmax.xlane.f32.xlu0 %v6007
    %v6048 = vpop.xlane.xlu0 %6047
    %6049 = vmax.xlane.f32.xlu0 %v6010
    %v6050 = vpop.xlane.xlu0 %6049
    %6051 = vmax.xlane.f32.xlu0 %v6013
    %v6052 = vpop.xlane.xlu0 %6051
    %6053 = vmax.xlane.f32.xlu0 %v6016
    %v6054 = vpop.xlane.xlu0 %6053
    %6055 = vmax.xlane.f32.xlu0 %v6019
    %v6056 = vpop.xlane.xlu0 %6055
    %6057 = vmax.xlane.f32.xlu0 %v6022
    %v6058 = vpop.xlane.xlu0 %6057
    %6059 = vmax.xlane.f32.xlu0 %v6025
    %v6060 = vpop.xlane.xlu0 %6059
    %6061 = vmax.xlane.f32.xlu0 %v6028
    %v6062 = vpop.xlane.xlu0 %6061
    %6063 = vmax.xlane.f32.xlu0 %v6031
    %v6064 = vpop.xlane.xlu0 %6063
    %v6065 = vsub.f32 %v5986, %v6034
    %v6066 = vsub.f32 %v5989, %v6036
    %v6067 = vsub.f32 %v5992, %v6038
    %v6068 = vsub.f32 %v5995, %v6040
    %v6069 = vsub.f32 %v5998, %v6042
    %v6070 = vsub.f32 %v6001, %v6044
    %v6071 = vsub.f32 %v6004, %v6046
    %v6072 = vsub.f32 %v6007, %v6048
    %v6073 = vsub.f32 %v6010, %v6050
    %v6074 = vsub.f32 %v6013, %v6052
    %v6075 = vsub.f32 %v6016, %v6054
    %v6076 = vsub.f32 %v6019, %v6056
    %v6077 = vsub.f32 %v6022, %v6058
    %v6078 = vsub.f32 %v6025, %v6060
    %v6079 = vsub.f32 %v6028, %v6062
    %v6080 = vsub.f32 %v6031, %v6064
    %v6081 = vmul.f32 %v6065, 1.442695
    %v6082 = vpow.pop %v6081
    %v6083 = vmul.f32 %v6066, 1.442695
    %v6084 = vpow.pop %v6083
    %v6085 = vmul.f32 %v6067, 1.442695
    %v6086 = vpow.pop %v6085
    %v6087 = vmul.f32 %v6068, 1.442695
    %v6088 = vpow.pop %v6087
    %v6089 = vmul.f32 %v6069, 1.442695
    %v6090 = vpow.pop %v6089
    %v6091 = vmul.f32 %v6070, 1.442695
    %v6092 = vpow.pop %v6091
    %v6093 = vmul.f32 %v6071, 1.442695
    %v6094 = vpow.pop %v6093
    %v6095 = vmul.f32 %v6072, 1.442695
    %v6096 = vpow.pop %v6095
    %v6097 = vmul.f32 %v6073, 1.442695
    %v6098 = vpow.pop %v6097
    %v6099 = vmul.f32 %v6074, 1.442695
    %v6100 = vpow.pop %v6099
    %v6101 = vmul.f32 %v6075, 1.442695
    %v6102 = vpow.pop %v6101
    %v6103 = vmul.f32 %v6076, 1.442695
    %v6104 = vpow.pop %v6103
    %v6105 = vmul.f32 %v6077, 1.442695
    %v6106 = vpow.pop %v6105
    %v6107 = vmul.f32 %v6078, 1.442695
    %v6108 = vpow.pop %v6107
    %v6109 = vmul.f32 %v6079, 1.442695
    %v6110 = vpow.pop %v6109
    %v6111 = vmul.f32 %v6080, 1.442695
    %v6112 = vpow.pop %v6111
    %6113 = vadd.xlane.f32.xlu0 %v6082
    %v6114 = vpop.xlane.xlu0 %6113
    %6115 = vadd.xlane.f32.xlu0 %v6084
    %v6116 = vpop.xlane.xlu0 %6115
    %6117 = vadd.xlane.f32.xlu0 %v6086
    %v6118 = vpop.xlane.xlu0 %6117
    %6119 = vadd.xlane.f32.xlu0 %v6088
    %v6120 = vpop.xlane.xlu0 %6119
    %6121 = vadd.xlane.f32.xlu0 %v6090
    %v6122 = vpop.xlane.xlu0 %6121
    %6123 = vadd.xlane.f32.xlu0 %v6092
    %v6124 = vpop.xlane.xlu0 %6123
    %6125 = vadd.xlane.f32.xlu0 %v6094
    %v6126 = vpop.xlane.xlu0 %6125
    %6127 = vadd.xlane.f32.xlu0 %v6096
    %v6128 = vpop.xlane.xlu0 %6127
    %6129 = vadd.xlane.f32.xlu0 %v6098
    %v6130 = vpop.xlane.xlu0 %6129
    %6131 = vadd.xlane.f32.xlu0 %v6100
    %v6132 = vpop.xlane.xlu0 %6131
    %6133 = vadd.xlane.f32.xlu0 %v6102
    %v6134 = vpop.xlane.xlu0 %6133
    %6135 = vadd.xlane.f32.xlu0 %v6104
    %v6136 = vpop.xlane.xlu0 %6135
    %6137 = vadd.xlane.f32.xlu0 %v6106
    %v6138 = vpop.xlane.xlu0 %6137
    %6139 = vadd.xlane.f32.xlu0 %v6108
    %v6140 = vpop.xlane.xlu0 %6139
    %6141 = vadd.xlane.f32.xlu0 %v6110
    %v6142 = vpop.xlane.xlu0 %6141
    %6143 = vadd.xlane.f32.xlu0 %v6112
    %v6144 = vpop.xlane.xlu0 %6143
    %v6145 = vrcp.pop %v6114
    %v6146 = vrcp.pop %v6116
    %v6147 = vrcp.pop %v6118
    %v6148 = vrcp.pop %v6120
    %v6149 = vrcp.pop %v6122
    %v6150 = vrcp.pop %v6124
    %v6151 = vrcp.pop %v6126
    %v6152 = vrcp.pop %v6128
    %v6153 = vrcp.pop %v6130
    %v6154 = vrcp.pop %v6132
    %v6155 = vrcp.pop %v6134
    %v6156 = vrcp.pop %v6136
    %v6157 = vrcp.pop %v6138
    %v6158 = vrcp.pop %v6140
    %v6159 = vrcp.pop %v6142
    %v6160 = vrcp.pop %v6144
    %v6161 = vmul.f32 %v6082, %v6145
    %v6162 = vmul.f32 %v6084, %v6146
    %v6163 = vmul.f32 %v6086, %v6147
    %v6164 = vmul.f32 %v6088, %v6148
    %v6165 = vmul.f32 %v6090, %v6149
    %v6166 = vmul.f32 %v6092, %v6150
    %v6167 = vmul.f32 %v6094, %v6151
    %v6168 = vmul.f32 %v6096, %v6152
    %v6169 = vmul.f32 %v6098, %v6153
    %v6170 = vmul.f32 %v6100, %v6154
    %v6171 = vmul.f32 %v6102, %v6155
    %v6172 = vmul.f32 %v6104, %v6156
    %v6173 = vmul.f32 %v6106, %v6157
    %v6174 = vmul.f32 %v6108, %v6158
    %v6175 = vmul.f32 %v6110, %v6159
    %v6176 = vmul.f32 %v6112, %v6160
    %6177 = vmatpush.xpose.msra.mxu0 %v6176
    %6178 = vmatpush.xpose.msra.mxu0 %v6175
    %6179 = vmatpush.xpose.msra.mxu0 %v6174
    %6180 = vmatpush.xpose.msra.mxu0 %v6173
    %6181 = vmatpush.xpose.msra.mxu0 %v6172
    %6182 = vmatpush.xpose.msra.mxu0 %v6171
    %6183 = vmatpush.xpose.msra.mxu0 %v6170
    %6184 = vmatpush.xpose.msra.mxu0 %v6169
    %6185 = vmatpush.xpose.msra.mxu0 %v6168
    %6186 = vmatpush.xpose.msra.mxu0 %v6167
    %6187 = vmatpush.xpose.msra.mxu0 %v6166
    %6188 = vmatpush.xpose.msra.mxu0 %v6165
    %6189 = vmatpush.xpose.msra.mxu0 %v6164
    %6190 = vmatpush.xpose.msra.mxu0 %v6163
    %6191 = vmatpush.xpose.msra.mxu0 %v6162
    %6192 = vmatpush.xpose.msra.mxu0 %v6161
    %6193 = vmatmul.f32.gmra.mxu0 %v4955
    %v6194 = vpop.f32.mrf.mxu0
    %v6195 = vadd.f32 0.0, %v6194
    %6196 = vdwg.mxu0
    %6197 = vmatpush.msra.mxu0 0.0
    %6198 = vmatpush.msra.mxu0 0.0
    %6199 = vmatpush.msra.mxu0 0.0
    %6200 = vmatpush.msra.mxu0 0.0
    %6201 = vmatpush.msra.mxu0 0.0
    %6202 = vmatpush.msra.mxu0 0.0
    %6203 = vmatpush.msra.mxu0 0.0
    %6204 = vmatpush.msra.mxu0 0.0
    %6205 = vmatpush.msra.mxu0 0.0
    %6206 = vmatpush.msra.mxu0 0.0
    %6207 = vmatpush.msra.mxu0 0.0
    %6208 = vmatpush.msra.mxu0 0.0
    %6209 = vmatpush.msra.mxu0 %v6195
    %6210 = vmatpush.msra.mxu0 %v5886
    %6211 = vmatpush.msra.mxu0 %v5577
    %6212 = vmatpush.msra.mxu0 %v5268
    %6213 = vmatmul.f32.gmra.mxu0 %v3114
    %v6214 = vpop.f32.mrf.mxu0
    %v6215 = vadd.f32 %v3096, %v6214
    %6216 = vmatmul.f32.gmra.mxu0 %v3117
    %v6217 = vpop.f32.mrf.mxu0
    %v6218 = vadd.f32 %v3101, %v6217
    %6219 = vmatmul.f32.gmra.mxu0 %v3120
    %v6220 = vpop.f32.mrf.mxu0
    %v6221 = vadd.f32 %v3106, %v6220
    %6222 = vmatmul.f32.gmra.mxu0 %v3123
    %v6223 = vpop.f32.mrf.mxu0
    %v6224 = vadd.f32 %v3111, %v6223
    %6225 = vdwg.mxu0
    %v6226 = vadd.f32 %v3531, %v6215
    %v6227 = vadd.f32 %v3532, %v6218
    %v6228 = vadd.f32 %v3533, %v6221
    %v6229 = vadd.f32 %v3534, %v6224
    %v6230 = vadd.f32 %v6226, %v6227
    %v6231 = vadd.f32 %v6230, %v6228
    %v6232 = vadd.f32 %v6231, %v6229
    %v6233 = vrot.slane %v6232, 4
    %v6234 = vadd.f32 %v6232, %v6233
    %v6235 = vrot.slane %v6234, 2
    %v6236 = vadd.f32 %v6234, %v6235
    %v6237 = vrot.slane %v6236, 1
    %v6238 = vadd.f32 %v6236, %v6237
    %v6239 = vmul.f32 %v6238, %v3173
    %v6240 = vsub.f32 %v6226, %v6239
    %v6241 = vsub.f32 %v6227, %v6239
    %v6242 = vsub.f32 %v6228, %v6239
    %v6243 = vsub.f32 %v6229, %v6239
    %v6244 = vmul.f32 %v6240, %v6240
    %v6245 = vmul.f32 %v6241, %v6241
    %v6246 = vmul.f32 %v6242, %v6242
    %v6247 = vmul.f32 %v6243, %v6243
    %v6248 = vadd.f32 %v6244, %v6245
    %v6249 = vadd.f32 %v6248, %v6246
    %v6250 = vadd.f32 %v6249, %v6247
    %v6251 = vrot.slane %v6250, 4
    %v6252 = vadd.f32 %v6250, %v6251
    %v6253 = vrot.slane %v6252, 2
    %v6254 = vadd.f32 %v6252, %v6253
    %v6255 = vrot.slane %v6254, 1
    %v6256 = vadd.f32 %v6254, %v6255
    %v6257 = vmul.f32 %v6256, %v3173
    %v6258 = vadd.f32 %v6257, 1e-05
    %v6259 = vrsqrt.pop %v6258
    %v6260 = vmul.f32 %v6259, %v6258
    %v6261 = vmul.f32 %v6260, %v6259
    %v6262 = vmul.f32 0.5, %v6261
    %v6263 = vsub.f32 1.5, %v6262
    %v6264 = vmul.f32 %v6259, %v6263
    %vm6265 = vweird.f32 %v6258
    %vm6266 = vweird.f32 %v6259
    %vm6267 = vmor %vm6265, %vm6266
    %v6268 = vsel %vm6267, %v6259, %v6264
    %v6269 = vmul.f32 %v6240, %v6268
    %v6270 = vmul.f32 %v6241, %v6268
    %v6271 = vmul.f32 %v6242, %v6268
    %v6272 = vmul.f32 %v6243, %v6268
    %v6273 = vmul.f32 %v6269, %v3211
    %v6274 = vmul.f32 %v6270, %v3216
    %v6275 = vmul.f32 %v6271, %v3221
    %v6276 = vmul.f32 %v6272, %v3226
    %v6277 = vadd.f32 %v6273, %v3235
    %v6278 = vadd.f32 %v6274, %v3240
    %v6279 = vadd.f32 %v6275, %v3245
    %v6280 = vadd.f32 %v6276, %v3250
    %6281 = vmatpush.msra.mxu0 0.0
    %6282 = vmatpush.msra.mxu0 0.0
    %6283 = vmatpush.msra.mxu0 0.0
    %6284 = vmatpush.msra.mxu0 0.0
    %6285 = vmatpush.msra.mxu0 0.0
    %6286 = vmatpush.msra.mxu0 0.0
    %6287 = vmatpush.msra.mxu0 0.0
    %6288 = vmatpush.msra.mxu0 0.0
    %6289 = vmatpush.msra.mxu0 0.0
    %6290 = vmatpush.msra.mxu0 0.0
    %6291 = vmatpush.msra.mxu0 0.0
    %6292 = vmatpush.msra.mxu0 0.0
    %6293 = vmatpush.msra.mxu0 %v6280
    %6294 = vmatpush.msra.mxu0 %v6279
    %6295 = vmatpush.msra.mxu0 %v6278
    %6296 = vmatpush.msra.mxu0 %v6277
    %6297 = vmatmul.f32.gmra.mxu0 %v3297
    %v6298 = vpop.f32.mrf.mxu0
    %v6299 = vadd.f32 %v3259, %v6298
    %6300 = vmatmul.f32.gmra.mxu0 %v3300
    %v6301 = vpop.f32.mrf.mxu0
    %v6302 = vadd.f32 %v3264, %v6301
    %6303 = vmatmul.f32.gmra.mxu0 %v3303
    %v6304 = vpop.f32.mrf.mxu0
    %v6305 = vadd.f32 %v3269, %v6304
    %6306 = vmatmul.f32.gmra.mxu0 %v3306
    %v6307 = vpop.f32.mrf.mxu0
    %v6308 = vadd.f32 %v3274, %v6307
    %6309 = vmatmul.f32.gmra.mxu0 %v3309
    %v6310 = vpop.f32.mrf.mxu0
    %v6311 = vadd.f32 %v3279, %v6310
    %6312 = vmatmul.f32.gmra.mxu0 %v3312
    %v6313 = vpop.f32.mrf.mxu0
    %v6314 = vadd.f32 %v3284, %v6313
    %6315 = vmatmul.f32.gmra.mxu0 %v3315
    %v6316 = vpop.f32.mrf.mxu0
    %v6317 = vadd.f32 %v3289, %v6316
    %6318 = vmatmul.f32.gmra.mxu0 %v3318
    %v6319 = vpop.f32.mrf.mxu0
    %v6320 = vadd.f32 %v3294, %v6319
    %6321 = vdwg.mxu0
    %v6322 = vmax.f32 %v6299, 0.0
    %v6323 = vmax.f32 %v6302, 0.0
    %v6324 = vmax.f32 %v6305, 0.0
    %v6325 = vmax.f32 %v6308, 0.0
    %v6326 = vmax.f32 %v6311, 0.0
    %v6327 = vmax.f32 %v6314, 0.0
    %v6328 = vmax.f32 %v6317, 0.0
    %v6329 = vmax.f32 %v6320, 0.0
    %6330 = vmatpush.msra.mxu0 0.0
    %6331 = vmatpush.msra.mxu0 0.0
    %6332 = vmatpush.msra.mxu0 0.0
    %6333 = vmatpush.msra.mxu0 0.0
    %6334 = vmatpush.msra.mxu0 0.0
    %6335 = vmatpush.msra.mxu0 0.0
    %6336 = vmatpush.msra.mxu0 0.0
    %6337 = vmatpush.msra.mxu0 0.0
    %6338 = vmatpush.msra.mxu0 %v6329
    %6339 = vmatpush.msra.mxu0 %v6328
    %6340 = vmatpush.msra.mxu0 %v6327
    %6341 = vmatpush.msra.mxu0 %v6326
    %6342 = vmatpush.msra.mxu0 %v6325
    %6343 = vmatpush.msra.mxu0 %v6324
    %6344 = vmatpush.msra.mxu0 %v6323
    %6345 = vmatpush.msra.mxu0 %v6322
    %6346 = vmatmul.f32.gmra.mxu0 %v3391
    %v6347 = vpop.f32.mrf.mxu0
    %v6348 = vadd.f32 %v3372, %v6347
    %6349 = vmatmul.f32.gmra.mxu0 %v3394
    %v6350 = vpop.f32.mrf.mxu0
    %v6351 = vadd.f32 %v3377, %v6350
    %6352 = vmatmul.f32.gmra.mxu0 %v3397
    %v6353 = vpop.f32.mrf.mxu0
    %v6354 = vadd.f32 %v3382, %v6353
    %6355 = vmatmul.f32.gmra.mxu0 %v3400
    %v6356 = vpop.f32.mrf.mxu0
    %v6357 = vadd.f32 %v3387, %v6356
    %6358 = vdwg.mxu0
    %v6359 = vadd.f32 %v6277, %v6348
    %v6360 = vadd.f32 %v6278, %v6351
    %v6361 = vadd.f32 %v6279, %v6354
    %v6362 = vadd.f32 %v6280, %v6357
    %v6363 = vadd.f32 %v6359, %v6360
    %v6364 = vadd.f32 %v6363, %v6361
    %v6365 = vadd.f32 %v6364, %v6362
    %v6366 = vrot.slane %v6365, 4
    %v6367 = vadd.f32 %v6365, %v6366
    %v6368 = vrot.slane %v6367, 2
    %v6369 = vadd.f32 %v6367, %v6368
    %v6370 = vrot.slane %v6369, 1
    %v6371 = vadd.f32 %v6369, %v6370
    %v6372 = vmul.f32 %v6371, %v3173
    %v6373 = vsub.f32 %v6359, %v6372
    %v6374 = vsub.f32 %v6360, %v6372
    %v6375 = vsub.f32 %v6361, %v6372
    %v6376 = vsub.f32 %v6362, %v6372
    %v6377 = vmul.f32 %v6373, %v6373
    %v6378 = vmul.f32 %v6374, %v6374
    %v6379 = vmul.f32 %v6375, %v6375
    %v6380 = vmul.f32 %v6376, %v6376
    %v6381 = vadd.f32 %v6377, %v6378
    %v6382 = vadd.f32 %v6381, %v6379
    %v6383 = vadd.f32 %v6382, %v6380
    %v6384 = vrot.slane %v6383, 4
    %v6385 = vadd.f32 %v6383, %v6384
    %v6386 = vrot.slane %v6385, 2
    %v6387 = vadd.f32 %v6385, %v6386
    %v6388 = vrot.slane %v6387, 1
    %v6389 = vadd.f32 %v6387, %v6388
    %v6390 = vmul.f32 %v6389, %v3173
    %v6391 = vadd.f32 %v6390, 1e-05
    %v6392 = vrsqrt.pop %v6391
    %v6393 = vmul.f32 %v6392, %v6391
    %v6394 = vmul.f32 %v6393, %v6392
    %v6395 = vmul.f32 0.5, %v6394
    %v6396 = vsub.f32 1.5, %v6395
    %v6397 = vmul.f32 %v6392, %v6396
    %vm6398 = vweird.f32 %v6391
    %vm6399 = vweird.f32 %v6392
    %vm6400 = vmor %vm6398, %vm6399
    %v6401 = vsel %vm6400, %v6392, %v6397
    %v6402 = vmul.f32 %v6373, %v6401
    %v6403 = vmul.f32 %v6374, %v6401
    %v6404 = vmul.f32 %v6375, %v6401
    %v6405 = vmul.f32 %v6376, %v6401
    %v6406 = vmul.f32 %v6402, %v3481
    %v6407 = vmul.f32 %v6403, %v3486
    %v6408 = vmul.f32 %v6404, %v3491
    %v6409 = vmul.f32 %v6405, %v3496
    %v6410 = vadd.f32 %v6406, %v3505
    %v6411 = vadd.f32 %v6407, %v3510
    %v6412 = vadd.f32 %v6408, %v3515
    %v6413 = vadd.f32 %v6409, %v3520
    %s6414 = scalar_lea.vmem [#allocation2], 32
    %6415 = vst [vmem:[%s6414] sm:$0xff] %v6410
    %6416 = vst [vmem:[%s6414 + $0x8] sm:$0xff] %v6411
    %6417 = vst [vmem:[%s6414 + $0x10] sm:$0xff] %v6412
    %6418 = vst [vmem:[%s6414 + $0x18] sm:$0xff] %v6413
    // Predicated region
    $region82: #{tpu_custom_call.1} parent=1 // pred_check
      _
    $region83: #{tpu_custom_call.1} parent=1 // pred_check_branch
      %6420 = sbr.rel (0) target = $region85
    $region84: #{tpu_custom_call.1} parent=1 // pred_region
      %6422 = vsyncadd [#allocation3], 0
      %s6423 = sshll.u32 [#allocation2], 4
      %s6424 = int_to_ptr.vmem [resolvable:$true] %s6423
      %s6425 = sshll.u32 %s20, 4
      %s6426 = int_to_ptr.hbm [resolvable:$true] %s6425
      %6431 = dma.vmem_to_hbm [thread:$0]  %s6424, 1024, %s6426, [#allocation3], 128, 128, 8
    $region85: #{tpu_custom_call.1} parent=1 // pred_fallthru
      _
    // Predicated region
    $region86: #{tpu_custom_call.1} parent=1 // pred_check
      _
    $region87: #{tpu_custom_call.1} parent=1 // pred_check_branch
      %6433 = sbr.rel (0) target = $region89
    $region88: #{tpu_custom_call.1} parent=1 // pred_region
      %6435 = dma.done [#allocation3], 1024
    $region89: #{tpu_custom_call.1} parent=1 // pred_fallthru
      _
    %6436 = vsyncpa [#allocation3], 1

</llo_original>
